<compile_context>
chip_gen: v7x
topology: tpu7x:2x2x1
jax: 0.10.0
libtpu: 0.0.40
codegen_flags: <defaults>
</compile_context>

<pallas_src>
import functools

import jax
import jax.numpy as jnp
from jax.experimental import pallas as pl
from jax.experimental.pallas import tpu as pltpu


# ----------------------------- in-kernel helpers ----------------------------

def _pad_hw1(x):
    """Zero-pad a (H, W, C) value by 1 on each side of H and W (stays in VMEM)."""
    h, w, c = x.shape
    zr = jnp.zeros((1, w, c), x.dtype)
    x = jnp.concatenate([zr, x, zr], axis=0)
    zc = jnp.zeros((h + 2, 1, c), x.dtype)
    return jnp.concatenate([zc, x, zc], axis=1)


def _conv3x3_folded(padded, w_ref, oh, ow, cout):
    """3x3 / stride 1 conv on a pre-padded (oh+2, ow+2, cin) value.

    kx is folded into the contraction: 3 MXU matmuls of K = 3*cin instead of
    9 of K = cin.  The MXU is fed bf16, accumulation is f32.
    w_ref: (3, 3*cin, cout) bf16 (ky-indexed, kx-major / cin-minor).
    """
    cin = padded.shape[-1]
    acc = jnp.zeros((oh * ow, cout), jnp.float32)
    for ky in range(3):
        row = padded[ky:ky + oh]                               # (oh, ow+2, cin)
        patch = jnp.concatenate(
            [row[:, 0:ow, :], row[:, 1:ow + 1, :], row[:, 2:ow + 2, :]],
            axis=-1).reshape(oh * ow, 3 * cin).astype(jnp.bfloat16)
        acc = acc + jnp.dot(patch, w_ref[ky],
                            preferred_element_type=jnp.float32)
    return acc


def _fold_bn(s, q, g, b, count, eps):
    """Training-mode BN folded to per-channel scale/bias from sum / sum-of-squares."""
    mean = s / count
    var = jnp.maximum(q / count - mean * mean, 0.0)   # clamp cancellation error
    scale = g * jax.lax.rsqrt(var + eps)
    bias = b - mean * scale
    return scale, bias


def _bn_relu(x, s, q, g, b, count, eps):
    scale, bias = _fold_bn(s, q, g, b, count, eps)
    c = scale.shape[1]
    return jnp.maximum(x * scale.reshape(1, 1, c) + bias.reshape(1, 1, c), 0.0)


def _accumulate_stats(acc, sum_ref, sq_ref):
    sum_ref[...] += jnp.sum(acc, axis=0, keepdims=True)
    sq_ref[...] += jnp.sum(acc * acc, axis=0, keepdims=True)


# ------------------------------- Pallas kernels ------------------------------

def _up_conv_kernel(m_ref, x_ref, w_ref, y_ref, sum_ref, sq_ref):
    """Bilinear 2x upsample (align_corners=True) + 3x3 conv + BN-stats epilogue."""
    n = pl.program_id(0)
    _, h, w, cin = x_ref.shape
    _, oh, ow, cout = y_ref.shape

    @pl.when(n == 0)
    def _():
        sum_ref[...] = jnp.zeros_like(sum_ref)
        sq_ref[...] = jnp.zeros_like(sq_ref)

    # Separable bilinear interpolation folded into one (oh*ow, h*w) matrix so
    # the whole image upsamples in a single MXU matmul (no per-channel loop).
    x_flat = x_ref[0].reshape(h * w, cin)
    up = jnp.dot(m_ref[...], x_flat, preferred_element_type=jnp.float32)

    acc = _conv3x3_folded(_pad_hw1(up.reshape(oh, ow, cin)), w_ref, oh, ow, cout)
    y_ref[0] = acc.reshape(oh, ow, cout)
    _accumulate_stats(acc, sum_ref, sq_ref)


def _concat_conv_kernel(x2_ref, y1_ref, s_ref, q_ref, g_ref, b_ref,
                        w2_ref, w1_ref, y_ref, sum_ref, sq_ref, *, count, eps):
    """BN+ReLU of the upsample branch folded into its load; channel concat fused
    by splitting the Cin contraction; conv1 of CBR_2 + BN-stats epilogue."""
    n = pl.program_id(0)
    _, oh, ow, cout = y_ref.shape

    @pl.when(n == 0)
    def _():
        sum_ref[...] = jnp.zeros_like(sum_ref)
        sq_ref[...] = jnp.zeros_like(sq_ref)

    x1u = _bn_relu(y1_ref[0], s_ref[...], q_ref[...], g_ref[...], b_ref[...],
                   count, eps)
    acc = (_conv3x3_folded(_pad_hw1(x2_ref[0]), w2_ref, oh, ow, cout)
           + _conv3x3_folded(_pad_hw1(x1u), w1_ref, oh, ow, cout))
    y_ref[0] = acc.reshape(oh, ow, cout)
    _accumulate_stats(acc, sum_ref, sq_ref)


def _bn_conv_kernel(x_ref, s_ref, q_ref, g_ref, b_ref, w_ref,
                    y_ref, sum_ref, sq_ref, *, count, eps):
    """BN+ReLU of the previous conv folded into the load; conv2 of CBR_2 + stats."""
    n = pl.program_id(0)
    _, oh, ow, cout = y_ref.shape

    @pl.when(n == 0)
    def _():
        sum_ref[...] = jnp.zeros_like(sum_ref)
        sq_ref[...] = jnp.zeros_like(sq_ref)

    xin = _bn_relu(x_ref[0], s_ref[...], q_ref[...], g_ref[...], b_ref[...],
                   count, eps)
    acc = _conv3x3_folded(_pad_hw1(xin), w_ref, oh, ow, cout)
    y_ref[0] = acc.reshape(oh, ow, cout)
    _accumulate_stats(acc, sum_ref, sq_ref)


def _bn_relu_kernel(x_ref, s_ref, q_ref, g_ref, b_ref, o_ref, *, count, eps):
    o_ref[0] = _bn_relu(x_ref[0], s_ref[...], q_ref[...], g_ref[...], b_ref[...],
                        count, eps)


# ------------------------------- host helpers --------------------------------

def _interp_matrix(in_size, out_size):
    # PyTorch 'bilinear', align_corners=True: src = i * (in - 1) / (out - 1)
    i = jnp.arange(out_size, dtype=jnp.float32)
    src = i * (in_size - 1) / max(out_size - 1, 1)
    lo = jnp.clip(jnp.floor(src).astype(jnp.int32), 0, max(in_size - 2, 0))
    frac = src - lo.astype(jnp.float32)
    rows = jnp.arange(out_size)
    a = jnp.zeros((out_size, in_size), jnp.float32)
    a = a.at[rows, lo].add(1.0 - frac)
    a = a.at[rows, jnp.minimum(lo + 1, in_size - 1)].add(frac)
    return a


def _fold_kx(w):
    """(3, 3, cin, cout) -> (3, 3*cin, cout) (kx-major / cin-minor), bf16 for MXU."""
    return w.reshape(3, 3 * w.shape[2], w.shape[3]).astype(jnp.bfloat16)


def _vec_spec(c):
    return pl.BlockSpec((1, c), lambda i: (0, 0))


# ----------------------------- Feature_Up module -----------------------------

def init_feature_up_params(key, inchannel, outchannel):
    ks = jax.random.split(key, 9)

    def conv_w(k, cin, cout):
        # PyTorch Conv2d weight (cout, cin, 3, 3) -> kernel layout (3, 3, cin, cout)
        w = jax.random.normal(k, (cout, cin, 3, 3), jnp.float32) * 0.1
        return jnp.transpose(w, (2, 3, 1, 0))

    return {
        "up_w": conv_w(ks[0], inchannel, outchannel),
        "up_gamma": 1.0 + 0.1 * jax.random.normal(ks[1], (outchannel,), jnp.float32),
        "up_beta": 0.1 * jax.random.normal(ks[2], (outchannel,), jnp.float32),
        "c1_w": conv_w(ks[3], inchannel, outchannel),
        "c1_gamma": 1.0 + 0.1 * jax.random.normal(ks[4], (outchannel,), jnp.float32),
        "c1_beta": 0.1 * jax.random.normal(ks[5], (outchannel,), jnp.float32),
        "c2_w": conv_w(ks[6], outchannel, outchannel),
        "c2_gamma": 1.0 + 0.1 * jax.random.normal(ks[7], (outchannel,), jnp.float32),
        "c2_beta": 0.1 * jax.random.normal(ks[8], (outchannel,), jnp.float32),
    }


def feature_up_forward(params, x1_nchw, x2_nchw, eps=1e-5):
    """x1: (N, inC, H, W); x2: (N, inC - outC, 2H, 2W) -> (N, outC, 2H, 2W)."""
    n, in_c, h, w = x1_nchw.shape
    c2 = x2_nchw.shape[1]
    out_c = params["up_gamma"].shape[0]
    oh, ow = 2 * h, 2 * w
    cnt = float(n * oh * ow)

    # one layout change per input; all intermediates stay NHWC in HBM
    x1 = jnp.transpose(x1_nchw.astype(jnp.float32), (0, 2, 3, 1))
    x2 = jnp.transpose(x2_nchw.astype(jnp.float32), (0, 2, 3, 1))

    # Kronecker-folded bilinear (align_corners=True) interpolation matrix
    m = jnp.kron(_interp_matrix(h, oh), _interp_matrix(w, ow))    # (oh*ow, h*w)

    # fold kx into the contraction and split c1_w for the fused concat
    w_up = _fold_kx(params["up_w"])
    w_c1_x2 = _fold_kx(params["c1_w"][:, :, :c2, :])    # skip-branch channels
    w_c1_x1 = _fold_kx(params["c1_w"][:, :, c2:, :])    # upsample-branch channels
    w_c2 = _fold_kx(params["c2_w"])

    g_up = params["up_gamma"].reshape(1, out_c)
    b_up = params["up_beta"].reshape(1, out_c)
    g_c1 = params["c1_gamma"].reshape(1, out_c)
    b_c1 = params["c1_beta"].reshape(1, out_c)
    g_c2 = params["c2_gamma"].reshape(1, out_c)
    b_c2 = params["c2_beta"].reshape(1, out_c)

    act_shape = jax.ShapeDtypeStruct((n, oh, ow, out_c), jnp.float32)
    vec_shape = jax.ShapeDtypeStruct((1, out_c), jnp.float32)
    act_out_spec = pl.BlockSpec((1, oh, ow, out_c), lambda i: (i, 0, 0, 0))
    # batch axis is a reduction axis for the BN-stats outputs -> "arbitrary"
    arb = pltpu.CompilerParams(dimension_semantics=("arbitrary",))

    # K1: bilinear-2x upsample + upsample_conv (pre-BN) + channel stats
    y1, s1, q1 = pl.pallas_call(
        _up_conv_kernel,
        out_shape=(act_shape, vec_shape, vec_shape),
        grid=(n,),
        in_specs=[
            pl.BlockSpec((oh * ow, h * w), lambda i: (0, 0)),
            pl.BlockSpec((1, h, w, in_c), lambda i: (i, 0, 0, 0)),
            pl.BlockSpec((3, 3 * in_c, out_c), lambda i: (0, 0, 0)),
        ],
        out_specs=(act_out_spec, _vec_spec(out_c), _vec_spec(out_c)),
        compiler_params=arb,
    )(m, x1, w_up)

    # K2: BN(up)+ReLU folded into load, concat fused, conv1 of CBR_2 + stats
    y2, s2, q2 = pl.pallas_call(
        functools.partial(_concat_conv_kernel, count=cnt, eps=eps),
        out_shape=(act_shape, vec_shape, vec_shape),
        grid=(n,),
        in_specs=[
            pl.BlockSpec((1, oh, ow, c2), lambda i: (i, 0, 0, 0)),
            pl.BlockSpec((1, oh, ow, out_c), lambda i: (i, 0, 0, 0)),
            _vec_spec(out_c), _vec_spec(out_c), _vec_spec(out_c), _vec_spec(out_c),
            pl.BlockSpec((3, 3 * c2, out_c), lambda i: (0, 0, 0)),
            pl.BlockSpec((3, 3 * out_c, out_c), lambda i: (0, 0, 0)),
        ],
        out_specs=(act_out_spec, _vec_spec(out_c), _vec_spec(out_c)),
        compiler_params=arb,
    )(x2, y1, s1, q1, g_up, b_up, w_c1_x2, w_c1_x1)

    # K3: BN(c1)+ReLU folded into load, conv2 of CBR_2 + stats
    y3, s3, q3 = pl.pallas_call(
        functools.partial(_bn_conv_kernel, count=cnt, eps=eps),
        out_shape=(act_shape, vec_shape, vec_shape),
        grid=(n,),
        in_specs=[
            pl.BlockSpec((1, oh, ow, out_c), lambda i: (i, 0, 0, 0)),
            _vec_spec(out_c), _vec_spec(out_c), _vec_spec(out_c), _vec_spec(out_c),
            pl.BlockSpec((3, 3 * out_c, out_c), lambda i: (0, 0, 0)),
        ],
        out_specs=(act_out_spec, _vec_spec(out_c), _vec_spec(out_c)),
        compiler_params=arb,
    )(y2, s2, q2, g_c1, b_c1, w_c2)

    # K4: final BN + ReLU
    out_nhwc = pl.pallas_call(
        functools.partial(_bn_relu_kernel, count=cnt, eps=eps),
        out_shape=act_shape,
        grid=(n,),
        in_specs=[
            pl.BlockSpec((1, oh, ow, out_c), lambda i: (i, 0, 0, 0)),
            _vec_spec(out_c), _vec_spec(out_c), _vec_spec(out_c), _vec_spec(out_c),
        ],
        out_specs=act_out_spec,
        compiler_params=pltpu.CompilerParams(dimension_semantics=("parallel",)),
    )(y3, s3, q3, g_c2, b_c2)

    # single layout change back to the module's NCHW interface
    return jnp.transpose(out_nhwc, (0, 3, 1, 2))


if __name__ == "__main__":
    key = jax.random.PRNGKey(0)
    k1, k2, kp = jax.random.split(key, 3)
    # UNet-style shapes: inC = 2 * outC, x2 carries the skip (inC - outC channels).
    N, inC, outC, H, W = 2, 8, 4, 8, 8
    x1 = jax.random.normal(k1, (N, inC, H, W), jnp.float32)
    x2 = jax.random.normal(k2, (N, inC - outC, 2 * H, 2 * W), jnp.float32)
    params = init_feature_up_params(kp, inC, outC)

    out = jax.jit(feature_up_forward)(params, x1, x2)
    out = jax.block_until_ready(out)

    assert out.shape == (N, outC, 2 * H, 2 * W), out.shape
    assert bool(jnp.all(jnp.isfinite(out)))
    print("KERNEL_OK")
</pallas_src>

<mosaic_0001>
module attributes {stable_mosaic.version = 11 : i64} {
  func.func private @main(%arg0: i32) attributes {dimension_semantics = [#tpu.dimension_semantics<core_parallel>], iteration_bounds = array<i64: 2>, tpu.core_type = #tpu.core_type<sc_scalar_subcore>, window_params = []} {
    return
  }
}

module attributes {stable_mosaic.version = 11 : i64} {
  func.func private @main(%arg0: i32) attributes {dimension_semantics = [#tpu.dimension_semantics<core_parallel>], iteration_bounds = array<i64: 2>, tpu.core_type = #tpu.core_type<sc_scalar_subcore>, window_params = []} {
    return
  }
}

module attributes {stable_mosaic.version = 11 : i64} {
  func.func @_bn_conv_kernel(%arg0: i32, %arg1: memref<1x16x16x4xf32, #tpu.memory_space<vmem>>, %arg2: memref<1x4xf32, #tpu.memory_space<vmem>>, %arg3: memref<1x4xf32, #tpu.memory_space<vmem>>, %arg4: memref<1x4xf32, #tpu.memory_space<vmem>>, %arg5: memref<1x4xf32, #tpu.memory_space<vmem>>, %arg6: memref<3x12x4xbf16, #tpu.memory_space<vmem>>, %arg7: memref<1x16x16x4xf32, #tpu.memory_space<vmem>>, %arg8: memref<1x4xf32, #tpu.memory_space<vmem>>, %arg9: memref<1x4xf32, #tpu.memory_space<vmem>>) attributes {dimension_semantics = [#tpu.dimension_semantics<arbitrary>], iteration_bounds = array<i64: 2>, scalar_prefetch = 0 : i64, scratch_operands = 0 : i64, tpu.core_type = #tpu.core_type<tc>, window_params = [{transform_indices = @transform_0, window_bounds = array<i64: 1, 16, 16, 4>}, {pipeline_mode = #tpu.pipeline_mode<synchronous>, transform_indices = @transform_1, window_bounds = array<i64: 1, 4>}, {pipeline_mode = #tpu.pipeline_mode<synchronous>, transform_indices = @transform_2, window_bounds = array<i64: 1, 4>}, {pipeline_mode = #tpu.pipeline_mode<synchronous>, transform_indices = @transform_3, window_bounds = array<i64: 1, 4>}, {pipeline_mode = #tpu.pipeline_mode<synchronous>, transform_indices = @transform_4, window_bounds = array<i64: 1, 4>}, {pipeline_mode = #tpu.pipeline_mode<synchronous>, transform_indices = @transform_5, window_bounds = array<i64: 3, 12, 4>}, {transform_indices = @transform_6, window_bounds = array<i64: 1, 16, 16, 4>}, {pipeline_mode = #tpu.pipeline_mode<synchronous>, transform_indices = @transform_7, window_bounds = array<i64: 1, 4>}, {pipeline_mode = #tpu.pipeline_mode<synchronous>, transform_indices = @transform_8, window_bounds = array<i64: 1, 4>}]} {
    %c0_i32 = arith.constant 0 : i32
    %0 = arith.cmpi eq, %arg0, %c0_i32 : i32
    %1 = arith.extui %0 : i1 to i32
    %c0_i32_0 = arith.constant 0 : i32
    %2 = arith.cmpi ne, %1, %c0_i32_0 : i32
    scf.if %2 {
      %cst_43 = arith.constant 0.000000e+00 : f32
      %84 = vector.broadcast %cst_43 : f32 to vector<1x4xf32>
      %c0_44 = arith.constant 0 : index
      %c0_45 = arith.constant 0 : index
      %85 = vector.load %arg8[%c0_44, %c0_45] : memref<1x4xf32, #tpu.memory_space<vmem>>, vector<1x4xf32>
      tpu.vector_store %arg8[%c0_44, %c0_45], %84 {strides = array<i32>} : memref<1x4xf32, #tpu.memory_space<vmem>>, vector<1x4xf32>,
      %cst_46 = arith.constant 0.000000e+00 : f32
      %86 = vector.broadcast %cst_46 : f32 to vector<1x4xf32>
      %c0_47 = arith.constant 0 : index
      %c0_48 = arith.constant 0 : index
      %87 = vector.load %arg9[%c0_47, %c0_48] : memref<1x4xf32, #tpu.memory_space<vmem>>, vector<1x4xf32>
      tpu.vector_store %arg9[%c0_47, %c0_48], %86 {strides = array<i32>} : memref<1x4xf32, #tpu.memory_space<vmem>>, vector<1x4xf32>,
    } else {
    }
    %c0 = arith.constant 0 : index
    %c0_1 = arith.constant 0 : index
    %c0_2 = arith.constant 0 : index
    %c0_3 = arith.constant 0 : index
    %3 = vector.load %arg1[%c0, %c0_1, %c0_2, %c0_3] : memref<1x16x16x4xf32, #tpu.memory_space<vmem>>, vector<1x16x16x4xf32>
    %4 = vector.shape_cast %3 : vector<1x16x16x4xf32> to vector<16x16x4xf32>
    %c0_4 = arith.constant 0 : index
    %c0_5 = arith.constant 0 : index
    %5 = vector.load %arg2[%c0_4, %c0_5] : memref<1x4xf32, #tpu.memory_space<vmem>>, vector<1x4xf32>
    %c0_6 = arith.constant 0 : index
    %c0_7 = arith.constant 0 : index
    %6 = vector.load %arg3[%c0_6, %c0_7] : memref<1x4xf32, #tpu.memory_space<vmem>>, vector<1x4xf32>
    %c0_8 = arith.constant 0 : index
    %c0_9 = arith.constant 0 : index
    %7 = vector.load %arg4[%c0_8, %c0_9] : memref<1x4xf32, #tpu.memory_space<vmem>>, vector<1x4xf32>
    %c0_10 = arith.constant 0 : index
    %c0_11 = arith.constant 0 : index
    %8 = vector.load %arg5[%c0_10, %c0_11] : memref<1x4xf32, #tpu.memory_space<vmem>>, vector<1x4xf32>
    %cst = arith.constant 5.120000e+02 : f32
    %9 = vector.broadcast %cst : f32 to vector<1x4xf32>
    %10 = arith.divf %5, %9 : vector<1x4xf32>
    %cst_12 = arith.constant 5.120000e+02 : f32
    %11 = vector.broadcast %cst_12 : f32 to vector<1x4xf32>
    %12 = arith.divf %6, %11 : vector<1x4xf32>
    %13 = arith.mulf %10, %10 : vector<1x4xf32>
    %14 = arith.subf %12, %13 : vector<1x4xf32>
    %cst_13 = arith.constant 0.000000e+00 : f32
    %15 = vector.broadcast %cst_13 : f32 to vector<1x4xf32>
    %16 = arith.maximumf %14, %15 : vector<1x4xf32>
    %cst_14 = arith.constant 9.99999974E-6 : f32
    %17 = vector.broadcast %cst_14 : f32 to vector<1x4xf32>
    %18 = arith.addf %16, %17 : vector<1x4xf32>
    %19 = math.rsqrt %18 : vector<1x4xf32>
    %20 = arith.mulf %7, %19 : vector<1x4xf32>
    %21 = arith.mulf %10, %20 : vector<1x4xf32>
    %22 = arith.subf %8, %21 : vector<1x4xf32>
    %23 = vector.shape_cast %20 : vector<1x4xf32> to vector<1x1x4xf32>
    %24 = vector.broadcast %23 : vector<1x1x4xf32> to vector<16x16x4xf32>
    %25 = arith.mulf %4, %24 : vector<16x16x4xf32>
    %26 = vector.shape_cast %22 : vector<1x4xf32> to vector<1x1x4xf32>
    %27 = vector.broadcast %26 : vector<1x1x4xf32> to vector<16x16x4xf32>
    %28 = arith.addf %25, %27 : vector<16x16x4xf32>
    %cst_15 = arith.constant 0.000000e+00 : f32
    %29 = vector.broadcast %cst_15 : f32 to vector<16x16x4xf32>
    %30 = arith.maximumf %28, %29 : vector<16x16x4xf32>
    %cst_16 = arith.constant 0.000000e+00 : f32
    %31 = vector.broadcast %cst_16 : f32 to vector<1x16x4xf32>
    %32 = tpu.concatenate %31, %30, %31 in 0 : vector<1x16x4xf32>, vector<16x16x4xf32>, vector<1x16x4xf32> -> vector<18x16x4xf32>
    %cst_17 = arith.constant 0.000000e+00 : f32
    %33 = vector.broadcast %cst_17 : f32 to vector<18x1x4xf32>
    %34 = tpu.concatenate %33, %32, %33 in 1 : vector<18x1x4xf32>, vector<18x16x4xf32>, vector<18x1x4xf32> -> vector<18x18x4xf32>
    %cst_18 = arith.constant 0.000000e+00 : f32
    %35 = vector.broadcast %cst_18 : f32 to vector<256x4xf32>
    %36 = vector.extract_strided_slice %34 {offsets = [0, 0, 0], sizes = [16, 18, 4], strides = [1, 1, 1]} : vector<18x18x4xf32> to vector<16x18x4xf32>
    %37 = vector.extract_strided_slice %36 {offsets = [0, 0, 0], sizes = [16, 16, 4], strides = [1, 1, 1]} : vector<16x18x4xf32> to vector<16x16x4xf32>
    %38 = vector.extract_strided_slice %36 {offsets = [0, 1, 0], sizes = [16, 16, 4], strides = [1, 1, 1]} : vector<16x18x4xf32> to vector<16x16x4xf32>
    %39 = vector.extract_strided_slice %36 {offsets = [0, 2, 0], sizes = [16, 16, 4], strides = [1, 1, 1]} : vector<16x18x4xf32> to vector<16x16x4xf32>
    %40 = tpu.concatenate %37, %38, %39 in 2 : vector<16x16x4xf32>, vector<16x16x4xf32>, vector<16x16x4xf32> -> vector<16x16x12xf32>
    %41 = vector.shape_cast %40 : vector<16x16x12xf32> to vector<256x12xf32>
    %42 = arith.truncf %41 : vector<256x12xf32> to vector<256x12xbf16>
    %c0_19 = arith.constant 0 : index
    %c0_20 = arith.constant 0 : index
    %c0_21 = arith.constant 0 : index
    %43 = vector.load %arg6[%c0_19, %c0_20, %c0_21] : memref<3x12x4xbf16, #tpu.memory_space<vmem>>, vector<1x12x4xbf16>
    %44 = vector.shape_cast %43 : vector<1x12x4xbf16> to vector<12x4xbf16>
    %cst_22 = arith.constant dense<0.000000e+00> : vector<256x4xf32>
    %45 = tpu.matmul %42, %44, %cst_22 {dimension_numbers = #tpu.dot_dimension_numbers<[1], [0], [0], [1], [0, 0, 1, 1], [], []>} : vector<256x12xbf16>, vector<12x4xbf16>, vector<256x4xf32> -> vector<256x4xf32>
    %46 = arith.addf %35, %45 : vector<256x4xf32>
    %47 = vector.extract_strided_slice %34 {offsets = [1, 0, 0], sizes = [16, 18, 4], strides = [1, 1, 1]} : vector<18x18x4xf32> to vector<16x18x4xf32>
    %48 = vector.extract_strided_slice %47 {offsets = [0, 0, 0], sizes = [16, 16, 4], strides = [1, 1, 1]} : vector<16x18x4xf32> to vector<16x16x4xf32>
    %49 = vector.extract_strided_slice %47 {offsets = [0, 1, 0], sizes = [16, 16, 4], strides = [1, 1, 1]} : vector<16x18x4xf32> to vector<16x16x4xf32>
    %50 = vector.extract_strided_slice %47 {offsets = [0, 2, 0], sizes = [16, 16, 4], strides = [1, 1, 1]} : vector<16x18x4xf32> to vector<16x16x4xf32>
    %51 = tpu.concatenate %48, %49, %50 in 2 : vector<16x16x4xf32>, vector<16x16x4xf32>, vector<16x16x4xf32> -> vector<16x16x12xf32>
    %52 = vector.shape_cast %51 : vector<16x16x12xf32> to vector<256x12xf32>
    %53 = arith.truncf %52 : vector<256x12xf32> to vector<256x12xbf16>
    %c1 = arith.constant 1 : index
    %c0_23 = arith.constant 0 : index
    %c0_24 = arith.constant 0 : index
    %54 = vector.load %arg6[%c1, %c0_23, %c0_24] : memref<3x12x4xbf16, #tpu.memory_space<vmem>>, vector<1x12x4xbf16>
    %55 = vector.shape_cast %54 : vector<1x12x4xbf16> to vector<12x4xbf16>
    %cst_25 = arith.constant dense<0.000000e+00> : vector<256x4xf32>
    %56 = tpu.matmul %53, %55, %cst_25 {dimension_numbers = #tpu.dot_dimension_numbers<[1], [0], [0], [1], [0, 0, 1, 1], [], []>} : vector<256x12xbf16>, vector<12x4xbf16>, vector<256x4xf32> -> vector<256x4xf32>
    %57 = arith.addf %46, %56 : vector<256x4xf32>
    %58 = vector.extract_strided_slice %34 {offsets = [2, 0, 0], sizes = [16, 18, 4], strides = [1, 1, 1]} : vector<18x18x4xf32> to vector<16x18x4xf32>
    %59 = vector.extract_strided_slice %58 {offsets = [0, 0, 0], sizes = [16, 16, 4], strides = [1, 1, 1]} : vector<16x18x4xf32> to vector<16x16x4xf32>
    %60 = vector.extract_strided_slice %58 {offsets = [0, 1, 0], sizes = [16, 16, 4], strides = [1, 1, 1]} : vector<16x18x4xf32> to vector<16x16x4xf32>
    %61 = vector.extract_strided_slice %58 {offsets = [0, 2, 0], sizes = [16, 16, 4], strides = [1, 1, 1]} : vector<16x18x4xf32> to vector<16x16x4xf32>
    %62 = tpu.concatenate %59, %60, %61 in 2 : vector<16x16x4xf32>, vector<16x16x4xf32>, vector<16x16x4xf32> -> vector<16x16x12xf32>
    %63 = vector.shape_cast %62 : vector<16x16x12xf32> to vector<256x12xf32>
    %64 = arith.truncf %63 : vector<256x12xf32> to vector<256x12xbf16>
    %c2 = arith.constant 2 : index
    %c0_26 = arith.constant 0 : index
    %c0_27 = arith.constant 0 : index
    %65 = vector.load %arg6[%c2, %c0_26, %c0_27] : memref<3x12x4xbf16, #tpu.memory_space<vmem>>, vector<1x12x4xbf16>
    %66 = vector.shape_cast %65 : vector<1x12x4xbf16> to vector<12x4xbf16>
    %cst_28 = arith.constant dense<0.000000e+00> : vector<256x4xf32>
    %67 = tpu.matmul %64, %66, %cst_28 {dimension_numbers = #tpu.dot_dimension_numbers<[1], [0], [0], [1], [0, 0, 1, 1], [], []>} : vector<256x12xbf16>, vector<12x4xbf16>, vector<256x4xf32> -> vector<256x4xf32>
    %68 = arith.addf %57, %67 : vector<256x4xf32>
    %69 = vector.shape_cast %68 : vector<256x4xf32> to vector<16x16x4xf32>
    %c0_29 = arith.constant 0 : index
    %c0_30 = arith.constant 0 : index
    %c0_31 = arith.constant 0 : index
    %c0_32 = arith.constant 0 : index
    %70 = vector.load %arg7[%c0_29, %c0_30, %c0_31, %c0_32] : memref<1x16x16x4xf32, #tpu.memory_space<vmem>>, vector<1x16x16x4xf32>
    %71 = vector.shape_cast %70 : vector<1x16x16x4xf32> to vector<16x16x4xf32>
    %72 = vector.shape_cast %69 : vector<16x16x4xf32> to vector<1x16x16x4xf32>
    tpu.vector_store %arg7[%c0_29, %c0_30, %c0_31, %c0_32], %72 {strides = array<i32>} : memref<1x16x16x4xf32, #tpu.memory_space<vmem>>, vector<1x16x16x4xf32>,
    %c0_33 = arith.constant 0 : index
    %c0_34 = arith.constant 0 : index
    %73 = vector.load %arg8[%c0_33, %c0_34] : memref<1x4xf32, #tpu.memory_space<vmem>>, vector<1x4xf32>
    %cst_35 = arith.constant dense<0.000000e+00> : vector<4xf32>
    %74 = vector.multi_reduction <add>, %68, %cst_35 [0] : vector<256x4xf32> to vector<4xf32>
    %75 = vector.shape_cast %74 : vector<4xf32> to vector<1x4xf32>
    %76 = arith.addf %73, %75 : vector<1x4xf32>
    %c0_36 = arith.constant 0 : index
    %c0_37 = arith.constant 0 : index
    %77 = vector.load %arg8[%c0_36, %c0_37] : memref<1x4xf32, #tpu.memory_space<vmem>>, vector<1x4xf32>
    tpu.vector_store %arg8[%c0_36, %c0_37], %76 {strides = array<i32>} : memref<1x4xf32, #tpu.memory_space<vmem>>, vector<1x4xf32>,
    %c0_38 = arith.constant 0 : index
    %c0_39 = arith.constant 0 : index
    %78 = vector.load %arg9[%c0_38, %c0_39] : memref<1x4xf32, #tpu.memory_space<vmem>>, vector<1x4xf32>
    %79 = arith.mulf %68, %68 : vector<256x4xf32>
    %cst_40 = arith.constant dense<0.000000e+00> : vector<4xf32>
    %80 = vector.multi_reduction <add>, %79, %cst_40 [0] : vector<256x4xf32> to vector<4xf32>
    %81 = vector.shape_cast %80 : vector<4xf32> to vector<1x4xf32>
    %82 = arith.addf %78, %81 : vector<1x4xf32>
    %c0_41 = arith.constant 0 : index
    %c0_42 = arith.constant 0 : index
    %83 = vector.load %arg9[%c0_41, %c0_42] : memref<1x4xf32, #tpu.memory_space<vmem>>, vector<1x4xf32>
    tpu.vector_store %arg9[%c0_41, %c0_42], %82 {strides = array<i32>} : memref<1x4xf32, #tpu.memory_space<vmem>>, vector<1x4xf32>,
    return
  }
  func.func @transform_0(%arg0: i32) -> (i32, i32, i32, i32) {
    %c0_i32 = arith.constant 0 : i32
    %c0_i32_0 = arith.constant 0 : i32
    %c0_i32_1 = arith.constant 0 : i32
    %c0_i32_2 = arith.constant 0 : i32
    return %arg0, %c0_i32, %c0_i32_0, %c0_i32_1 : i32, i32, i32, i32
  }
  func.func @transform_1(%arg0: i32) -> (i32, i32) {
    %c0_i32 = arith.constant 0 : i32
    %c0_i32_0 = arith.constant 0 : i32
    %c0_i32_1 = arith.constant 0 : i32
    return %c0_i32, %c0_i32_0 : i32, i32
  }
  func.func @transform_2(%arg0: i32) -> (i32, i32) {
    %c0_i32 = arith.constant 0 : i32
    %c0_i32_0 = arith.constant 0 : i32
    %c0_i32_1 = arith.constant 0 : i32
    return %c0_i32, %c0_i32_0 : i32, i32
  }
  func.func @transform_3(%arg0: i32) -> (i32, i32) {
    %c0_i32 = arith.constant 0 : i32
    %c0_i32_0 = arith.constant 0 : i32
    %c0_i32_1 = arith.constant 0 : i32
    return %c0_i32, %c0_i32_0 : i32, i32
  }
  func.func @transform_4(%arg0: i32) -> (i32, i32) {
    %c0_i32 = arith.constant 0 : i32
    %c0_i32_0 = arith.constant 0 : i32
    %c0_i32_1 = arith.constant 0 : i32
    return %c0_i32, %c0_i32_0 : i32, i32
  }
  func.func @transform_5(%arg0: i32) -> (i32, i32, i32) {
    %c0_i32 = arith.constant 0 : i32
    %c0_i32_0 = arith.constant 0 : i32
    %c0_i32_1 = arith.constant 0 : i32
    %c0_i32_2 = arith.constant 0 : i32
    return %c0_i32, %c0_i32_0, %c0_i32_1 : i32, i32, i32
  }
  func.func @transform_6(%arg0: i32) -> (i32, i32, i32, i32) {
    %c0_i32 = arith.constant 0 : i32
    %c0_i32_0 = arith.constant 0 : i32
    %c0_i32_1 = arith.constant 0 : i32
    %c0_i32_2 = arith.constant 0 : i32
    return %arg0, %c0_i32, %c0_i32_0, %c0_i32_1 : i32, i32, i32, i32
  }
  func.func @transform_7(%arg0: i32) -> (i32, i32) {
    %c0_i32 = arith.constant 0 : i32
    %c0_i32_0 = arith.constant 0 : i32
    %c0_i32_1 = arith.constant 0 : i32
    return %c0_i32, %c0_i32_0 : i32, i32
  }
  func.func @transform_8(%arg0: i32) -> (i32, i32) {
    %c0_i32 = arith.constant 0 : i32
    %c0_i32_0 = arith.constant 0 : i32
    %c0_i32_1 = arith.constant 0 : i32
    return %c0_i32, %c0_i32_0 : i32, i32
  }
}

module attributes {stable_mosaic.version = 11 : i64} {
  func.func @_up_conv_kernel(%arg0: i32, %arg1: memref<256x64xf32, #tpu.memory_space<vmem>>, %arg2: memref<1x8x8x8xf32, #tpu.memory_space<vmem>>, %arg3: memref<3x24x4xbf16, #tpu.memory_space<vmem>>, %arg4: memref<1x16x16x4xf32, #tpu.memory_space<vmem>>, %arg5: memref<1x4xf32, #tpu.memory_space<vmem>>, %arg6: memref<1x4xf32, #tpu.memory_space<vmem>>) attributes {dimension_semantics = [#tpu.dimension_semantics<arbitrary>], iteration_bounds = array<i64: 2>, scalar_prefetch = 0 : i64, scratch_operands = 0 : i64, tpu.core_type = #tpu.core_type<tc>, window_params = [{pipeline_mode = #tpu.pipeline_mode<synchronous>, transform_indices = @transform_0, window_bounds = array<i64: 256, 64>}, {transform_indices = @transform_1, window_bounds = array<i64: 1, 8, 8, 8>}, {pipeline_mode = #tpu.pipeline_mode<synchronous>, transform_indices = @transform_2, window_bounds = array<i64: 3, 24, 4>}, {transform_indices = @transform_3, window_bounds = array<i64: 1, 16, 16, 4>}, {pipeline_mode = #tpu.pipeline_mode<synchronous>, transform_indices = @transform_4, window_bounds = array<i64: 1, 4>}, {pipeline_mode = #tpu.pipeline_mode<synchronous>, transform_indices = @transform_5, window_bounds = array<i64: 1, 4>}]} {
    %c0_i32 = arith.constant 0 : i32
    %0 = arith.cmpi eq, %arg0, %c0_i32 : i32
    %1 = arith.extui %0 : i1 to i32
    %c0_i32_0 = arith.constant 0 : i32
    %2 = arith.cmpi ne, %1, %c0_i32_0 : i32
    scf.if %2 {
      %cst_33 = arith.constant 0.000000e+00 : f32
      %62 = vector.broadcast %cst_33 : f32 to vector<1x4xf32>
      %c0_34 = arith.constant 0 : index
      %c0_35 = arith.constant 0 : index
      %63 = vector.load %arg5[%c0_34, %c0_35] : memref<1x4xf32, #tpu.memory_space<vmem>>, vector<1x4xf32>
      tpu.vector_store %arg5[%c0_34, %c0_35], %62 {strides = array<i32>} : memref<1x4xf32, #tpu.memory_space<vmem>>, vector<1x4xf32>,
      %cst_36 = arith.constant 0.000000e+00 : f32
      %64 = vector.broadcast %cst_36 : f32 to vector<1x4xf32>
      %c0_37 = arith.constant 0 : index
      %c0_38 = arith.constant 0 : index
      %65 = vector.load %arg6[%c0_37, %c0_38] : memref<1x4xf32, #tpu.memory_space<vmem>>, vector<1x4xf32>
      tpu.vector_store %arg6[%c0_37, %c0_38], %64 {strides = array<i32>} : memref<1x4xf32, #tpu.memory_space<vmem>>, vector<1x4xf32>,
    } else {
    }
    %c0 = arith.constant 0 : index
    %c0_1 = arith.constant 0 : index
    %c0_2 = arith.constant 0 : index
    %c0_3 = arith.constant 0 : index
    %3 = vector.load %arg2[%c0, %c0_1, %c0_2, %c0_3] : memref<1x8x8x8xf32, #tpu.memory_space<vmem>>, vector<1x8x8x8xf32>
    %4 = vector.shape_cast %3 : vector<1x8x8x8xf32> to vector<8x8x8xf32>
    %5 = vector.shape_cast %4 : vector<8x8x8xf32> to vector<64x8xf32>
    %c0_4 = arith.constant 0 : index
    %c0_5 = arith.constant 0 : index
    %6 = vector.load %arg1[%c0_4, %c0_5] : memref<256x64xf32, #tpu.memory_space<vmem>>, vector<256x64xf32>
    %cst = arith.constant dense<0.000000e+00> : vector<256x8xf32>
    %7 = tpu.matmul %6, %5, %cst {dimension_numbers = #tpu.dot_dimension_numbers<[1], [0], [0], [1], [0, 0, 1, 1], [], []>} : vector<256x64xf32>, vector<64x8xf32>, vector<256x8xf32> -> vector<256x8xf32>
    %8 = vector.shape_cast %7 : vector<256x8xf32> to vector<16x16x8xf32>
    %cst_6 = arith.constant 0.000000e+00 : f32
    %9 = vector.broadcast %cst_6 : f32 to vector<1x16x8xf32>
    %10 = tpu.concatenate %9, %8, %9 in 0 : vector<1x16x8xf32>, vector<16x16x8xf32>, vector<1x16x8xf32> -> vector<18x16x8xf32>
    %cst_7 = arith.constant 0.000000e+00 : f32
    %11 = vector.broadcast %cst_7 : f32 to vector<18x1x8xf32>
    %12 = tpu.concatenate %11, %10, %11 in 1 : vector<18x1x8xf32>, vector<18x16x8xf32>, vector<18x1x8xf32> -> vector<18x18x8xf32>
    %cst_8 = arith.constant 0.000000e+00 : f32
    %13 = vector.broadcast %cst_8 : f32 to vector<256x4xf32>
    %14 = vector.extract_strided_slice %12 {offsets = [0, 0, 0], sizes = [16, 18, 8], strides = [1, 1, 1]} : vector<18x18x8xf32> to vector<16x18x8xf32>
    %15 = vector.extract_strided_slice %14 {offsets = [0, 0, 0], sizes = [16, 16, 8], strides = [1, 1, 1]} : vector<16x18x8xf32> to vector<16x16x8xf32>
    %16 = vector.extract_strided_slice %14 {offsets = [0, 1, 0], sizes = [16, 16, 8], strides = [1, 1, 1]} : vector<16x18x8xf32> to vector<16x16x8xf32>
    %17 = vector.extract_strided_slice %14 {offsets = [0, 2, 0], sizes = [16, 16, 8], strides = [1, 1, 1]} : vector<16x18x8xf32> to vector<16x16x8xf32>
    %18 = tpu.concatenate %15, %16, %17 in 2 : vector<16x16x8xf32>, vector<16x16x8xf32>, vector<16x16x8xf32> -> vector<16x16x24xf32>
    %19 = vector.shape_cast %18 : vector<16x16x24xf32> to vector<256x24xf32>
    %20 = arith.truncf %19 : vector<256x24xf32> to vector<256x24xbf16>
    %c0_9 = arith.constant 0 : index
    %c0_10 = arith.constant 0 : index
    %c0_11 = arith.constant 0 : index
    %21 = vector.load %arg3[%c0_9, %c0_10, %c0_11] : memref<3x24x4xbf16, #tpu.memory_space<vmem>>, vector<1x24x4xbf16>
    %22 = vector.shape_cast %21 : vector<1x24x4xbf16> to vector<24x4xbf16>
    %cst_12 = arith.constant dense<0.000000e+00> : vector<256x4xf32>
    %23 = tpu.matmul %20, %22, %cst_12 {dimension_numbers = #tpu.dot_dimension_numbers<[1], [0], [0], [1], [0, 0, 1, 1], [], []>} : vector<256x24xbf16>, vector<24x4xbf16>, vector<256x4xf32> -> vector<256x4xf32>
    %24 = arith.addf %13, %23 : vector<256x4xf32>
    %25 = vector.extract_strided_slice %12 {offsets = [1, 0, 0], sizes = [16, 18, 8], strides = [1, 1, 1]} : vector<18x18x8xf32> to vector<16x18x8xf32>
    %26 = vector.extract_strided_slice %25 {offsets = [0, 0, 0], sizes = [16, 16, 8], strides = [1, 1, 1]} : vector<16x18x8xf32> to vector<16x16x8xf32>
    %27 = vector.extract_strided_slice %25 {offsets = [0, 1, 0], sizes = [16, 16, 8], strides = [1, 1, 1]} : vector<16x18x8xf32> to vector<16x16x8xf32>
    %28 = vector.extract_strided_slice %25 {offsets = [0, 2, 0], sizes = [16, 16, 8], strides = [1, 1, 1]} : vector<16x18x8xf32> to vector<16x16x8xf32>
    %29 = tpu.concatenate %26, %27, %28 in 2 : vector<16x16x8xf32>, vector<16x16x8xf32>, vector<16x16x8xf32> -> vector<16x16x24xf32>
    %30 = vector.shape_cast %29 : vector<16x16x24xf32> to vector<256x24xf32>
    %31 = arith.truncf %30 : vector<256x24xf32> to vector<256x24xbf16>
    %c1 = arith.constant 1 : index
    %c0_13 = arith.constant 0 : index
    %c0_14 = arith.constant 0 : index
    %32 = vector.load %arg3[%c1, %c0_13, %c0_14] : memref<3x24x4xbf16, #tpu.memory_space<vmem>>, vector<1x24x4xbf16>
    %33 = vector.shape_cast %32 : vector<1x24x4xbf16> to vector<24x4xbf16>
    %cst_15 = arith.constant dense<0.000000e+00> : vector<256x4xf32>
    %34 = tpu.matmul %31, %33, %cst_15 {dimension_numbers = #tpu.dot_dimension_numbers<[1], [0], [0], [1], [0, 0, 1, 1], [], []>} : vector<256x24xbf16>, vector<24x4xbf16>, vector<256x4xf32> -> vector<256x4xf32>
    %35 = arith.addf %24, %34 : vector<256x4xf32>
    %36 = vector.extract_strided_slice %12 {offsets = [2, 0, 0], sizes = [16, 18, 8], strides = [1, 1, 1]} : vector<18x18x8xf32> to vector<16x18x8xf32>
    %37 = vector.extract_strided_slice %36 {offsets = [0, 0, 0], sizes = [16, 16, 8], strides = [1, 1, 1]} : vector<16x18x8xf32> to vector<16x16x8xf32>
    %38 = vector.extract_strided_slice %36 {offsets = [0, 1, 0], sizes = [16, 16, 8], strides = [1, 1, 1]} : vector<16x18x8xf32> to vector<16x16x8xf32>
    %39 = vector.extract_strided_slice %36 {offsets = [0, 2, 0], sizes = [16, 16, 8], strides = [1, 1, 1]} : vector<16x18x8xf32> to vector<16x16x8xf32>
    %40 = tpu.concatenate %37, %38, %39 in 2 : vector<16x16x8xf32>, vector<16x16x8xf32>, vector<16x16x8xf32> -> vector<16x16x24xf32>
    %41 = vector.shape_cast %40 : vector<16x16x24xf32> to vector<256x24xf32>
    %42 = arith.truncf %41 : vector<256x24xf32> to vector<256x24xbf16>
    %c2 = arith.constant 2 : index
    %c0_16 = arith.constant 0 : index
    %c0_17 = arith.constant 0 : index
    %43 = vector.load %arg3[%c2, %c0_16, %c0_17] : memref<3x24x4xbf16, #tpu.memory_space<vmem>>, vector<1x24x4xbf16>
    %44 = vector.shape_cast %43 : vector<1x24x4xbf16> to vector<24x4xbf16>
    %cst_18 = arith.constant dense<0.000000e+00> : vector<256x4xf32>
    %45 = tpu.matmul %42, %44, %cst_18 {dimension_numbers = #tpu.dot_dimension_numbers<[1], [0], [0], [1], [0, 0, 1, 1], [], []>} : vector<256x24xbf16>, vector<24x4xbf16>, vector<256x4xf32> -> vector<256x4xf32>
    %46 = arith.addf %35, %45 : vector<256x4xf32>
    %47 = vector.shape_cast %46 : vector<256x4xf32> to vector<16x16x4xf32>
    %c0_19 = arith.constant 0 : index
    %c0_20 = arith.constant 0 : index
    %c0_21 = arith.constant 0 : index
    %c0_22 = arith.constant 0 : index
    %48 = vector.load %arg4[%c0_19, %c0_20, %c0_21, %c0_22] : memref<1x16x16x4xf32, #tpu.memory_space<vmem>>, vector<1x16x16x4xf32>
    %49 = vector.shape_cast %48 : vector<1x16x16x4xf32> to vector<16x16x4xf32>
    %50 = vector.shape_cast %47 : vector<16x16x4xf32> to vector<1x16x16x4xf32>
    tpu.vector_store %arg4[%c0_19, %c0_20, %c0_21, %c0_22], %50 {strides = array<i32>} : memref<1x16x16x4xf32, #tpu.memory_space<vmem>>, vector<1x16x16x4xf32>,
    %c0_23 = arith.constant 0 : index
    %c0_24 = arith.constant 0 : index
    %51 = vector.load %arg5[%c0_23, %c0_24] : memref<1x4xf32, #tpu.memory_space<vmem>>, vector<1x4xf32>
    %cst_25 = arith.constant dense<0.000000e+00> : vector<4xf32>
    %52 = vector.multi_reduction <add>, %46, %cst_25 [0] : vector<256x4xf32> to vector<4xf32>
    %53 = vector.shape_cast %52 : vector<4xf32> to vector<1x4xf32>
    %54 = arith.addf %51, %53 : vector<1x4xf32>
    %c0_26 = arith.constant 0 : index
    %c0_27 = arith.constant 0 : index
    %55 = vector.load %arg5[%c0_26, %c0_27] : memref<1x4xf32, #tpu.memory_space<vmem>>, vector<1x4xf32>
    tpu.vector_store %arg5[%c0_26, %c0_27], %54 {strides = array<i32>} : memref<1x4xf32, #tpu.memory_space<vmem>>, vector<1x4xf32>,
    %c0_28 = arith.constant 0 : index
    %c0_29 = arith.constant 0 : index
    %56 = vector.load %arg6[%c0_28, %c0_29] : memref<1x4xf32, #tpu.memory_space<vmem>>, vector<1x4xf32>
    %57 = arith.mulf %46, %46 : vector<256x4xf32>
    %cst_30 = arith.constant dense<0.000000e+00> : vector<4xf32>
    %58 = vector.multi_reduction <add>, %57, %cst_30 [0] : vector<256x4xf32> to vector<4xf32>
    %59 = vector.shape_cast %58 : vector<4xf32> to vector<1x4xf32>
    %60 = arith.addf %56, %59 : vector<1x4xf32>
    %c0_31 = arith.constant 0 : index
    %c0_32 = arith.constant 0 : index
    %61 = vector.load %arg6[%c0_31, %c0_32] : memref<1x4xf32, #tpu.memory_space<vmem>>, vector<1x4xf32>
    tpu.vector_store %arg6[%c0_31, %c0_32], %60 {strides = array<i32>} : memref<1x4xf32, #tpu.memory_space<vmem>>, vector<1x4xf32>,
    return
  }
  func.func @transform_0(%arg0: i32) -> (i32, i32) {
    %c0_i32 = arith.constant 0 : i32
    %c0_i32_0 = arith.constant 0 : i32
    %c0_i32_1 = arith.constant 0 : i32
    return %c0_i32, %c0_i32_0 : i32, i32
  }
  func.func @transform_1(%arg0: i32) -> (i32, i32, i32, i32) {
    %c0_i32 = arith.constant 0 : i32
    %c0_i32_0 = arith.constant 0 : i32
    %c0_i32_1 = arith.constant 0 : i32
    %c0_i32_2 = arith.constant 0 : i32
    return %arg0, %c0_i32, %c0_i32_0, %c0_i32_1 : i32, i32, i32, i32
  }
  func.func @transform_2(%arg0: i32) -> (i32, i32, i32) {
    %c0_i32 = arith.constant 0 : i32
    %c0_i32_0 = arith.constant 0 : i32
    %c0_i32_1 = arith.constant 0 : i32
    %c0_i32_2 = arith.constant 0 : i32
    return %c0_i32, %c0_i32_0, %c0_i32_1 : i32, i32, i32
  }
  func.func @transform_3(%arg0: i32) -> (i32, i32, i32, i32) {
    %c0_i32 = arith.constant 0 : i32
    %c0_i32_0 = arith.constant 0 : i32
    %c0_i32_1 = arith.constant 0 : i32
    %c0_i32_2 = arith.constant 0 : i32
    return %arg0, %c0_i32, %c0_i32_0, %c0_i32_1 : i32, i32, i32, i32
  }
  func.func @transform_4(%arg0: i32) -> (i32, i32) {
    %c0_i32 = arith.constant 0 : i32
    %c0_i32_0 = arith.constant 0 : i32
    %c0_i32_1 = arith.constant 0 : i32
    return %c0_i32, %c0_i32_0 : i32, i32
  }
  func.func @transform_5(%arg0: i32) -> (i32, i32) {
    %c0_i32 = arith.constant 0 : i32
    %c0_i32_0 = arith.constant 0 : i32
    %c0_i32_1 = arith.constant 0 : i32
    return %c0_i32, %c0_i32_0 : i32, i32
  }
}

module attributes {stable_mosaic.version = 11 : i64} {
  func.func @_concat_conv_kernel(%arg0: i32, %arg1: memref<1x16x16x4xf32, #tpu.memory_space<vmem>>, %arg2: memref<1x16x16x4xf32, #tpu.memory_space<vmem>>, %arg3: memref<1x4xf32, #tpu.memory_space<vmem>>, %arg4: memref<1x4xf32, #tpu.memory_space<vmem>>, %arg5: memref<1x4xf32, #tpu.memory_space<vmem>>, %arg6: memref<1x4xf32, #tpu.memory_space<vmem>>, %arg7: memref<3x12x4xbf16, #tpu.memory_space<vmem>>, %arg8: memref<3x12x4xbf16, #tpu.memory_space<vmem>>, %arg9: memref<1x16x16x4xf32, #tpu.memory_space<vmem>>, %arg10: memref<1x4xf32, #tpu.memory_space<vmem>>, %arg11: memref<1x4xf32, #tpu.memory_space<vmem>>) attributes {dimension_semantics = [#tpu.dimension_semantics<arbitrary>], iteration_bounds = array<i64: 2>, scalar_prefetch = 0 : i64, scratch_operands = 0 : i64, tpu.core_type = #tpu.core_type<tc>, window_params = [{transform_indices = @transform_0, window_bounds = array<i64: 1, 16, 16, 4>}, {transform_indices = @transform_1, window_bounds = array<i64: 1, 16, 16, 4>}, {pipeline_mode = #tpu.pipeline_mode<synchronous>, transform_indices = @transform_2, window_bounds = array<i64: 1, 4>}, {pipeline_mode = #tpu.pipeline_mode<synchronous>, transform_indices = @transform_3, window_bounds = array<i64: 1, 4>}, {pipeline_mode = #tpu.pipeline_mode<synchronous>, transform_indices = @transform_4, window_bounds = array<i64: 1, 4>}, {pipeline_mode = #tpu.pipeline_mode<synchronous>, transform_indices = @transform_5, window_bounds = array<i64: 1, 4>}, {pipeline_mode = #tpu.pipeline_mode<synchronous>, transform_indices = @transform_6, window_bounds = array<i64: 3, 12, 4>}, {pipeline_mode = #tpu.pipeline_mode<synchronous>, transform_indices = @transform_7, window_bounds = array<i64: 3, 12, 4>}, {transform_indices = @transform_8, window_bounds = array<i64: 1, 16, 16, 4>}, {pipeline_mode = #tpu.pipeline_mode<synchronous>, transform_indices = @transform_9, window_bounds = array<i64: 1, 4>}, {pipeline_mode = #tpu.pipeline_mode<synchronous>, transform_indices = @transform_10, window_bounds = array<i64: 1, 4>}]} {
    %c0_i32 = arith.constant 0 : i32
    %0 = arith.cmpi eq, %arg0, %c0_i32 : i32
    %1 = arith.extui %0 : i1 to i32
    %c0_i32_0 = arith.constant 0 : i32
    %2 = arith.cmpi ne, %1, %c0_i32_0 : i32
    scf.if %2 {
      %cst_62 = arith.constant 0.000000e+00 : f32
      %125 = vector.broadcast %cst_62 : f32 to vector<1x4xf32>
      %c0_63 = arith.constant 0 : index
      %c0_64 = arith.constant 0 : index
      %126 = vector.load %arg10[%c0_63, %c0_64] : memref<1x4xf32, #tpu.memory_space<vmem>>, vector<1x4xf32>
      tpu.vector_store %arg10[%c0_63, %c0_64], %125 {strides = array<i32>} : memref<1x4xf32, #tpu.memory_space<vmem>>, vector<1x4xf32>,
      %cst_65 = arith.constant 0.000000e+00 : f32
      %127 = vector.broadcast %cst_65 : f32 to vector<1x4xf32>
      %c0_66 = arith.constant 0 : index
      %c0_67 = arith.constant 0 : index
      %128 = vector.load %arg11[%c0_66, %c0_67] : memref<1x4xf32, #tpu.memory_space<vmem>>, vector<1x4xf32>
      tpu.vector_store %arg11[%c0_66, %c0_67], %127 {strides = array<i32>} : memref<1x4xf32, #tpu.memory_space<vmem>>, vector<1x4xf32>,
    } else {
    }
    %c0 = arith.constant 0 : index
    %c0_1 = arith.constant 0 : index
    %c0_2 = arith.constant 0 : index
    %c0_3 = arith.constant 0 : index
    %3 = vector.load %arg2[%c0, %c0_1, %c0_2, %c0_3] : memref<1x16x16x4xf32, #tpu.memory_space<vmem>>, vector<1x16x16x4xf32>
    %4 = vector.shape_cast %3 : vector<1x16x16x4xf32> to vector<16x16x4xf32>
    %c0_4 = arith.constant 0 : index
    %c0_5 = arith.constant 0 : index
    %5 = vector.load %arg3[%c0_4, %c0_5] : memref<1x4xf32, #tpu.memory_space<vmem>>, vector<1x4xf32>
    %c0_6 = arith.constant 0 : index
    %c0_7 = arith.constant 0 : index
    %6 = vector.load %arg4[%c0_6, %c0_7] : memref<1x4xf32, #tpu.memory_space<vmem>>, vector<1x4xf32>
    %c0_8 = arith.constant 0 : index
    %c0_9 = arith.constant 0 : index
    %7 = vector.load %arg5[%c0_8, %c0_9] : memref<1x4xf32, #tpu.memory_space<vmem>>, vector<1x4xf32>
    %c0_10 = arith.constant 0 : index
    %c0_11 = arith.constant 0 : index
    %8 = vector.load %arg6[%c0_10, %c0_11] : memref<1x4xf32, #tpu.memory_space<vmem>>, vector<1x4xf32>
    %cst = arith.constant 5.120000e+02 : f32
    %9 = vector.broadcast %cst : f32 to vector<1x4xf32>
    %10 = arith.divf %5, %9 : vector<1x4xf32>
    %cst_12 = arith.constant 5.120000e+02 : f32
    %11 = vector.broadcast %cst_12 : f32 to vector<1x4xf32>
    %12 = arith.divf %6, %11 : vector<1x4xf32>
    %13 = arith.mulf %10, %10 : vector<1x4xf32>
    %14 = arith.subf %12, %13 : vector<1x4xf32>
    %cst_13 = arith.constant 0.000000e+00 : f32
    %15 = vector.broadcast %cst_13 : f32 to vector<1x4xf32>
    %16 = arith.maximumf %14, %15 : vector<1x4xf32>
    %cst_14 = arith.constant 9.99999974E-6 : f32
    %17 = vector.broadcast %cst_14 : f32 to vector<1x4xf32>
    %18 = arith.addf %16, %17 : vector<1x4xf32>
    %19 = math.rsqrt %18 : vector<1x4xf32>
    %20 = arith.mulf %7, %19 : vector<1x4xf32>
    %21 = arith.mulf %10, %20 : vector<1x4xf32>
    %22 = arith.subf %8, %21 : vector<1x4xf32>
    %23 = vector.shape_cast %20 : vector<1x4xf32> to vector<1x1x4xf32>
    %24 = vector.broadcast %23 : vector<1x1x4xf32> to vector<16x16x4xf32>
    %25 = arith.mulf %4, %24 : vector<16x16x4xf32>
    %26 = vector.shape_cast %22 : vector<1x4xf32> to vector<1x1x4xf32>
    %27 = vector.broadcast %26 : vector<1x1x4xf32> to vector<16x16x4xf32>
    %28 = arith.addf %25, %27 : vector<16x16x4xf32>
    %cst_15 = arith.constant 0.000000e+00 : f32
    %29 = vector.broadcast %cst_15 : f32 to vector<16x16x4xf32>
    %30 = arith.maximumf %28, %29 : vector<16x16x4xf32>
    %c0_16 = arith.constant 0 : index
    %c0_17 = arith.constant 0 : index
    %c0_18 = arith.constant 0 : index
    %c0_19 = arith.constant 0 : index
    %31 = vector.load %arg1[%c0_16, %c0_17, %c0_18, %c0_19] : memref<1x16x16x4xf32, #tpu.memory_space<vmem>>, vector<1x16x16x4xf32>
    %32 = vector.shape_cast %31 : vector<1x16x16x4xf32> to vector<16x16x4xf32>
    %cst_20 = arith.constant 0.000000e+00 : f32
    %33 = vector.broadcast %cst_20 : f32 to vector<1x16x4xf32>
    %34 = tpu.concatenate %33, %32, %33 in 0 : vector<1x16x4xf32>, vector<16x16x4xf32>, vector<1x16x4xf32> -> vector<18x16x4xf32>
    %cst_21 = arith.constant 0.000000e+00 : f32
    %35 = vector.broadcast %cst_21 : f32 to vector<18x1x4xf32>
    %36 = tpu.concatenate %35, %34, %35 in 1 : vector<18x1x4xf32>, vector<18x16x4xf32>, vector<18x1x4xf32> -> vector<18x18x4xf32>
    %cst_22 = arith.constant 0.000000e+00 : f32
    %37 = vector.broadcast %cst_22 : f32 to vector<256x4xf32>
    %38 = vector.extract_strided_slice %36 {offsets = [0, 0, 0], sizes = [16, 18, 4], strides = [1, 1, 1]} : vector<18x18x4xf32> to vector<16x18x4xf32>
    %39 = vector.extract_strided_slice %38 {offsets = [0, 0, 0], sizes = [16, 16, 4], strides = [1, 1, 1]} : vector<16x18x4xf32> to vector<16x16x4xf32>
    %40 = vector.extract_strided_slice %38 {offsets = [0, 1, 0], sizes = [16, 16, 4], strides = [1, 1, 1]} : vector<16x18x4xf32> to vector<16x16x4xf32>
    %41 = vector.extract_strided_slice %38 {offsets = [0, 2, 0], sizes = [16, 16, 4], strides = [1, 1, 1]} : vector<16x18x4xf32> to vector<16x16x4xf32>
    %42 = tpu.concatenate %39, %40, %41 in 2 : vector<16x16x4xf32>, vector<16x16x4xf32>, vector<16x16x4xf32> -> vector<16x16x12xf32>
    %43 = vector.shape_cast %42 : vector<16x16x12xf32> to vector<256x12xf32>
    %44 = arith.truncf %43 : vector<256x12xf32> to vector<256x12xbf16>
    %c0_23 = arith.constant 0 : index
    %c0_24 = arith.constant 0 : index
    %c0_25 = arith.constant 0 : index
    %45 = vector.load %arg7[%c0_23, %c0_24, %c0_25] : memref<3x12x4xbf16, #tpu.memory_space<vmem>>, vector<1x12x4xbf16>
    %46 = vector.shape_cast %45 : vector<1x12x4xbf16> to vector<12x4xbf16>
    %cst_26 = arith.constant dense<0.000000e+00> : vector<256x4xf32>
    %47 = tpu.matmul %44, %46, %cst_26 {dimension_numbers = #tpu.dot_dimension_numbers<[1], [0], [0], [1], [0, 0, 1, 1], [], []>} : vector<256x12xbf16>, vector<12x4xbf16>, vector<256x4xf32> -> vector<256x4xf32>
    %48 = arith.addf %37, %47 : vector<256x4xf32>
    %49 = vector.extract_strided_slice %36 {offsets = [1, 0, 0], sizes = [16, 18, 4], strides = [1, 1, 1]} : vector<18x18x4xf32> to vector<16x18x4xf32>
    %50 = vector.extract_strided_slice %49 {offsets = [0, 0, 0], sizes = [16, 16, 4], strides = [1, 1, 1]} : vector<16x18x4xf32> to vector<16x16x4xf32>
    %51 = vector.extract_strided_slice %49 {offsets = [0, 1, 0], sizes = [16, 16, 4], strides = [1, 1, 1]} : vector<16x18x4xf32> to vector<16x16x4xf32>
    %52 = vector.extract_strided_slice %49 {offsets = [0, 2, 0], sizes = [16, 16, 4], strides = [1, 1, 1]} : vector<16x18x4xf32> to vector<16x16x4xf32>
    %53 = tpu.concatenate %50, %51, %52 in 2 : vector<16x16x4xf32>, vector<16x16x4xf32>, vector<16x16x4xf32> -> vector<16x16x12xf32>
    %54 = vector.shape_cast %53 : vector<16x16x12xf32> to vector<256x12xf32>
    %55 = arith.truncf %54 : vector<256x12xf32> to vector<256x12xbf16>
    %c1 = arith.constant 1 : index
    %c0_27 = arith.constant 0 : index
    %c0_28 = arith.constant 0 : index
    %56 = vector.load %arg7[%c1, %c0_27, %c0_28] : memref<3x12x4xbf16, #tpu.memory_space<vmem>>, vector<1x12x4xbf16>
    %57 = vector.shape_cast %56 : vector<1x12x4xbf16> to vector<12x4xbf16>
    %cst_29 = arith.constant dense<0.000000e+00> : vector<256x4xf32>
    %58 = tpu.matmul %55, %57, %cst_29 {dimension_numbers = #tpu.dot_dimension_numbers<[1], [0], [0], [1], [0, 0, 1, 1], [], []>} : vector<256x12xbf16>, vector<12x4xbf16>, vector<256x4xf32> -> vector<256x4xf32>
    %59 = arith.addf %48, %58 : vector<256x4xf32>
    %60 = vector.extract_strided_slice %36 {offsets = [2, 0, 0], sizes = [16, 18, 4], strides = [1, 1, 1]} : vector<18x18x4xf32> to vector<16x18x4xf32>
    %61 = vector.extract_strided_slice %60 {offsets = [0, 0, 0], sizes = [16, 16, 4], strides = [1, 1, 1]} : vector<16x18x4xf32> to vector<16x16x4xf32>
    %62 = vector.extract_strided_slice %60 {offsets = [0, 1, 0], sizes = [16, 16, 4], strides = [1, 1, 1]} : vector<16x18x4xf32> to vector<16x16x4xf32>
    %63 = vector.extract_strided_slice %60 {offsets = [0, 2, 0], sizes = [16, 16, 4], strides = [1, 1, 1]} : vector<16x18x4xf32> to vector<16x16x4xf32>
    %64 = tpu.concatenate %61, %62, %63 in 2 : vector<16x16x4xf32>, vector<16x16x4xf32>, vector<16x16x4xf32> -> vector<16x16x12xf32>
    %65 = vector.shape_cast %64 : vector<16x16x12xf32> to vector<256x12xf32>
    %66 = arith.truncf %65 : vector<256x12xf32> to vector<256x12xbf16>
    %c2 = arith.constant 2 : index
    %c0_30 = arith.constant 0 : index
    %c0_31 = arith.constant 0 : index
    %67 = vector.load %arg7[%c2, %c0_30, %c0_31] : memref<3x12x4xbf16, #tpu.memory_space<vmem>>, vector<1x12x4xbf16>
    %68 = vector.shape_cast %67 : vector<1x12x4xbf16> to vector<12x4xbf16>
    %cst_32 = arith.constant dense<0.000000e+00> : vector<256x4xf32>
    %69 = tpu.matmul %66, %68, %cst_32 {dimension_numbers = #tpu.dot_dimension_numbers<[1], [0], [0], [1], [0, 0, 1, 1], [], []>} : vector<256x12xbf16>, vector<12x4xbf16>, vector<256x4xf32> -> vector<256x4xf32>
    %70 = arith.addf %59, %69 : vector<256x4xf32>
    %cst_33 = arith.constant 0.000000e+00 : f32
    %71 = vector.broadcast %cst_33 : f32 to vector<1x16x4xf32>
    %72 = tpu.concatenate %71, %30, %71 in 0 : vector<1x16x4xf32>, vector<16x16x4xf32>, vector<1x16x4xf32> -> vector<18x16x4xf32>
    %cst_34 = arith.constant 0.000000e+00 : f32
    %73 = vector.broadcast %cst_34 : f32 to vector<18x1x4xf32>
    %74 = tpu.concatenate %73, %72, %73 in 1 : vector<18x1x4xf32>, vector<18x16x4xf32>, vector<18x1x4xf32> -> vector<18x18x4xf32>
    %cst_35 = arith.constant 0.000000e+00 : f32
    %75 = vector.broadcast %cst_35 : f32 to vector<256x4xf32>
    %76 = vector.extract_strided_slice %74 {offsets = [0, 0, 0], sizes = [16, 18, 4], strides = [1, 1, 1]} : vector<18x18x4xf32> to vector<16x18x4xf32>
    %77 = vector.extract_strided_slice %76 {offsets = [0, 0, 0], sizes = [16, 16, 4], strides = [1, 1, 1]} : vector<16x18x4xf32> to vector<16x16x4xf32>
    %78 = vector.extract_strided_slice %76 {offsets = [0, 1, 0], sizes = [16, 16, 4], strides = [1, 1, 1]} : vector<16x18x4xf32> to vector<16x16x4xf32>
    %79 = vector.extract_strided_slice %76 {offsets = [0, 2, 0], sizes = [16, 16, 4], strides = [1, 1, 1]} : vector<16x18x4xf32> to vector<16x16x4xf32>
    %80 = tpu.concatenate %77, %78, %79 in 2 : vector<16x16x4xf32>, vector<16x16x4xf32>, vector<16x16x4xf32> -> vector<16x16x12xf32>
    %81 = vector.shape_cast %80 : vector<16x16x12xf32> to vector<256x12xf32>
    %82 = arith.truncf %81 : vector<256x12xf32> to vector<256x12xbf16>
    %c0_36 = arith.constant 0 : index
    %c0_37 = arith.constant 0 : index
    %c0_38 = arith.constant 0 : index
    %83 = vector.load %arg8[%c0_36, %c0_37, %c0_38] : memref<3x12x4xbf16, #tpu.memory_space<vmem>>, vector<1x12x4xbf16>
    %84 = vector.shape_cast %83 : vector<1x12x4xbf16> to vector<12x4xbf16>
    %cst_39 = arith.constant dense<0.000000e+00> : vector<256x4xf32>
    %85 = tpu.matmul %82, %84, %cst_39 {dimension_numbers = #tpu.dot_dimension_numbers<[1], [0], [0], [1], [0, 0, 1, 1], [], []>} : vector<256x12xbf16>, vector<12x4xbf16>, vector<256x4xf32> -> vector<256x4xf32>
    %86 = arith.addf %75, %85 : vector<256x4xf32>
    %87 = vector.extract_strided_slice %74 {offsets = [1, 0, 0], sizes = [16, 18, 4], strides = [1, 1, 1]} : vector<18x18x4xf32> to vector<16x18x4xf32>
    %88 = vector.extract_strided_slice %87 {offsets = [0, 0, 0], sizes = [16, 16, 4], strides = [1, 1, 1]} : vector<16x18x4xf32> to vector<16x16x4xf32>
    %89 = vector.extract_strided_slice %87 {offsets = [0, 1, 0], sizes = [16, 16, 4], strides = [1, 1, 1]} : vector<16x18x4xf32> to vector<16x16x4xf32>
    %90 = vector.extract_strided_slice %87 {offsets = [0, 2, 0], sizes = [16, 16, 4], strides = [1, 1, 1]} : vector<16x18x4xf32> to vector<16x16x4xf32>
    %91 = tpu.concatenate %88, %89, %90 in 2 : vector<16x16x4xf32>, vector<16x16x4xf32>, vector<16x16x4xf32> -> vector<16x16x12xf32>
    %92 = vector.shape_cast %91 : vector<16x16x12xf32> to vector<256x12xf32>
    %93 = arith.truncf %92 : vector<256x12xf32> to vector<256x12xbf16>
    %c1_40 = arith.constant 1 : index
    %c0_41 = arith.constant 0 : index
    %c0_42 = arith.constant 0 : index
    %94 = vector.load %arg8[%c1_40, %c0_41, %c0_42] : memref<3x12x4xbf16, #tpu.memory_space<vmem>>, vector<1x12x4xbf16>
    %95 = vector.shape_cast %94 : vector<1x12x4xbf16> to vector<12x4xbf16>
    %cst_43 = arith.constant dense<0.000000e+00> : vector<256x4xf32>
    %96 = tpu.matmul %93, %95, %cst_43 {dimension_numbers = #tpu.dot_dimension_numbers<[1], [0], [0], [1], [0, 0, 1, 1], [], []>} : vector<256x12xbf16>, vector<12x4xbf16>, vector<256x4xf32> -> vector<256x4xf32>
    %97 = arith.addf %86, %96 : vector<256x4xf32>
    %98 = vector.extract_strided_slice %74 {offsets = [2, 0, 0], sizes = [16, 18, 4], strides = [1, 1, 1]} : vector<18x18x4xf32> to vector<16x18x4xf32>
    %99 = vector.extract_strided_slice %98 {offsets = [0, 0, 0], sizes = [16, 16, 4], strides = [1, 1, 1]} : vector<16x18x4xf32> to vector<16x16x4xf32>
    %100 = vector.extract_strided_slice %98 {offsets = [0, 1, 0], sizes = [16, 16, 4], strides = [1, 1, 1]} : vector<16x18x4xf32> to vector<16x16x4xf32>
    %101 = vector.extract_strided_slice %98 {offsets = [0, 2, 0], sizes = [16, 16, 4], strides = [1, 1, 1]} : vector<16x18x4xf32> to vector<16x16x4xf32>
    %102 = tpu.concatenate %99, %100, %101 in 2 : vector<16x16x4xf32>, vector<16x16x4xf32>, vector<16x16x4xf32> -> vector<16x16x12xf32>
    %103 = vector.shape_cast %102 : vector<16x16x12xf32> to vector<256x12xf32>
    %104 = arith.truncf %103 : vector<256x12xf32> to vector<256x12xbf16>
    %c2_44 = arith.constant 2 : index
    %c0_45 = arith.constant 0 : index
    %c0_46 = arith.constant 0 : index
    %105 = vector.load %arg8[%c2_44, %c0_45, %c0_46] : memref<3x12x4xbf16, #tpu.memory_space<vmem>>, vector<1x12x4xbf16>
    %106 = vector.shape_cast %105 : vector<1x12x4xbf16> to vector<12x4xbf16>
    %cst_47 = arith.constant dense<0.000000e+00> : vector<256x4xf32>
    %107 = tpu.matmul %104, %106, %cst_47 {dimension_numbers = #tpu.dot_dimension_numbers<[1], [0], [0], [1], [0, 0, 1, 1], [], []>} : vector<256x12xbf16>, vector<12x4xbf16>, vector<256x4xf32> -> vector<256x4xf32>
    %108 = arith.addf %97, %107 : vector<256x4xf32>
    %109 = arith.addf %70, %108 : vector<256x4xf32>
    %110 = vector.shape_cast %109 : vector<256x4xf32> to vector<16x16x4xf32>
    %c0_48 = arith.constant 0 : index
    %c0_49 = arith.constant 0 : index
    %c0_50 = arith.constant 0 : index
    %c0_51 = arith.constant 0 : index
    %111 = vector.load %arg9[%c0_48, %c0_49, %c0_50, %c0_51] : memref<1x16x16x4xf32, #tpu.memory_space<vmem>>, vector<1x16x16x4xf32>
    %112 = vector.shape_cast %111 : vector<1x16x16x4xf32> to vector<16x16x4xf32>
    %113 = vector.shape_cast %110 : vector<16x16x4xf32> to vector<1x16x16x4xf32>
    tpu.vector_store %arg9[%c0_48, %c0_49, %c0_50, %c0_51], %113 {strides = array<i32>} : memref<1x16x16x4xf32, #tpu.memory_space<vmem>>, vector<1x16x16x4xf32>,
    %c0_52 = arith.constant 0 : index
    %c0_53 = arith.constant 0 : index
    %114 = vector.load %arg10[%c0_52, %c0_53] : memref<1x4xf32, #tpu.memory_space<vmem>>, vector<1x4xf32>
    %cst_54 = arith.constant dense<0.000000e+00> : vector<4xf32>
    %115 = vector.multi_reduction <add>, %109, %cst_54 [0] : vector<256x4xf32> to vector<4xf32>
    %116 = vector.shape_cast %115 : vector<4xf32> to vector<1x4xf32>
    %117 = arith.addf %114, %116 : vector<1x4xf32>
    %c0_55 = arith.constant 0 : index
    %c0_56 = arith.constant 0 : index
    %118 = vector.load %arg10[%c0_55, %c0_56] : memref<1x4xf32, #tpu.memory_space<vmem>>, vector<1x4xf32>
    tpu.vector_store %arg10[%c0_55, %c0_56], %117 {strides = array<i32>} : memref<1x4xf32, #tpu.memory_space<vmem>>, vector<1x4xf32>,
    %c0_57 = arith.constant 0 : index
    %c0_58 = arith.constant 0 : index
    %119 = vector.load %arg11[%c0_57, %c0_58] : memref<1x4xf32, #tpu.memory_space<vmem>>, vector<1x4xf32>
    %120 = arith.mulf %109, %109 : vector<256x4xf32>
    %cst_59 = arith.constant dense<0.000000e+00> : vector<4xf32>
    %121 = vector.multi_reduction <add>, %120, %cst_59 [0] : vector<256x4xf32> to vector<4xf32>
    %122 = vector.shape_cast %121 : vector<4xf32> to vector<1x4xf32>
    %123 = arith.addf %119, %122 : vector<1x4xf32>
    %c0_60 = arith.constant 0 : index
    %c0_61 = arith.constant 0 : index
    %124 = vector.load %arg11[%c0_60, %c0_61] : memref<1x4xf32, #tpu.memory_space<vmem>>, vector<1x4xf32>
    tpu.vector_store %arg11[%c0_60, %c0_61], %123 {strides = array<i32>} : memref<1x4xf32, #tpu.memory_space<vmem>>, vector<1x4xf32>,
    return
  }
  func.func @transform_0(%arg0: i32) -> (i32, i32, i32, i32) {
    %c0_i32 = arith.constant 0 : i32
    %c0_i32_0 = arith.constant 0 : i32
    %c0_i32_1 = arith.constant 0 : i32
    %c0_i32_2 = arith.constant 0 : i32
    return %arg0, %c0_i32, %c0_i32_0, %c0_i32_1 : i32, i32, i32, i32
  }
  func.func @transform_1(%arg0: i32) -> (i32, i32, i32, i32) {
    %c0_i32 = arith.constant 0 : i32
    %c0_i32_0 = arith.constant 0 : i32
    %c0_i32_1 = arith.constant 0 : i32
    %c0_i32_2 = arith.constant 0 : i32
    return %arg0, %c0_i32, %c0_i32_0, %c0_i32_1 : i32, i32, i32, i32
  }
  func.func @transform_2(%arg0: i32) -> (i32, i32) {
    %c0_i32 = arith.constant 0 : i32
    %c0_i32_0 = arith.constant 0 : i32
    %c0_i32_1 = arith.constant 0 : i32
    return %c0_i32, %c0_i32_0 : i32, i32
  }
  func.func @transform_3(%arg0: i32) -> (i32, i32) {
    %c0_i32 = arith.constant 0 : i32
    %c0_i32_0 = arith.constant 0 : i32
    %c0_i32_1 = arith.constant 0 : i32
    return %c0_i32, %c0_i32_0 : i32, i32
  }
  func.func @transform_4(%arg0: i32) -> (i32, i32) {
    %c0_i32 = arith.constant 0 : i32
    %c0_i32_0 = arith.constant 0 : i32
    %c0_i32_1 = arith.constant 0 : i32
    return %c0_i32, %c0_i32_0 : i32, i32
  }
  func.func @transform_5(%arg0: i32) -> (i32, i32) {
    %c0_i32 = arith.constant 0 : i32
    %c0_i32_0 = arith.constant 0 : i32
    %c0_i32_1 = arith.constant 0 : i32
    return %c0_i32, %c0_i32_0 : i32, i32
  }
  func.func @transform_6(%arg0: i32) -> (i32, i32, i32) {
    %c0_i32 = arith.constant 0 : i32
    %c0_i32_0 = arith.constant 0 : i32
    %c0_i32_1 = arith.constant 0 : i32
    %c0_i32_2 = arith.constant 0 : i32
    return %c0_i32, %c0_i32_0, %c0_i32_1 : i32, i32, i32
  }
  func.func @transform_7(%arg0: i32) -> (i32, i32, i32) {
    %c0_i32 = arith.constant 0 : i32
    %c0_i32_0 = arith.constant 0 : i32
    %c0_i32_1 = arith.constant 0 : i32
    %c0_i32_2 = arith.constant 0 : i32
    return %c0_i32, %c0_i32_0, %c0_i32_1 : i32, i32, i32
  }
  func.func @transform_8(%arg0: i32) -> (i32, i32, i32, i32) {
    %c0_i32 = arith.constant 0 : i32
    %c0_i32_0 = arith.constant 0 : i32
    %c0_i32_1 = arith.constant 0 : i32
    %c0_i32_2 = arith.constant 0 : i32
    return %arg0, %c0_i32, %c0_i32_0, %c0_i32_1 : i32, i32, i32, i32
  }
  func.func @transform_9(%arg0: i32) -> (i32, i32) {
    %c0_i32 = arith.constant 0 : i32
    %c0_i32_0 = arith.constant 0 : i32
    %c0_i32_1 = arith.constant 0 : i32
    return %c0_i32, %c0_i32_0 : i32, i32
  }
  func.func @transform_10(%arg0: i32) -> (i32, i32) {
    %c0_i32 = arith.constant 0 : i32
    %c0_i32_0 = arith.constant 0 : i32
    %c0_i32_1 = arith.constant 0 : i32
    return %c0_i32, %c0_i32_0 : i32, i32
  }
}

module attributes {stable_mosaic.version = 11 : i64} {
  func.func @_bn_relu_kernel(%arg0: i32, %arg1: memref<1x16x16x4xf32, #tpu.memory_space<vmem>>, %arg2: memref<1x4xf32, #tpu.memory_space<vmem>>, %arg3: memref<1x4xf32, #tpu.memory_space<vmem>>, %arg4: memref<1x4xf32, #tpu.memory_space<vmem>>, %arg5: memref<1x4xf32, #tpu.memory_space<vmem>>, %arg6: memref<1x16x16x4xf32, #tpu.memory_space<vmem>>) attributes {dimension_semantics = [#tpu.dimension_semantics<parallel>], iteration_bounds = array<i64: 2>, scalar_prefetch = 0 : i64, scratch_operands = 0 : i64, tpu.core_type = #tpu.core_type<tc>, window_params = [{transform_indices = @transform_0, window_bounds = array<i64: 1, 16, 16, 4>}, {pipeline_mode = #tpu.pipeline_mode<synchronous>, transform_indices = @transform_1, window_bounds = array<i64: 1, 4>}, {pipeline_mode = #tpu.pipeline_mode<synchronous>, transform_indices = @transform_2, window_bounds = array<i64: 1, 4>}, {pipeline_mode = #tpu.pipeline_mode<synchronous>, transform_indices = @transform_3, window_bounds = array<i64: 1, 4>}, {pipeline_mode = #tpu.pipeline_mode<synchronous>, transform_indices = @transform_4, window_bounds = array<i64: 1, 4>}, {transform_indices = @transform_5, window_bounds = array<i64: 1, 16, 16, 4>}]} {
    %c0 = arith.constant 0 : index
    %c0_0 = arith.constant 0 : index
    %c0_1 = arith.constant 0 : index
    %c0_2 = arith.constant 0 : index
    %0 = vector.load %arg1[%c0, %c0_0, %c0_1, %c0_2] : memref<1x16x16x4xf32, #tpu.memory_space<vmem>>, vector<1x16x16x4xf32>
    %1 = vector.shape_cast %0 : vector<1x16x16x4xf32> to vector<16x16x4xf32>
    %c0_3 = arith.constant 0 : index
    %c0_4 = arith.constant 0 : index
    %2 = vector.load %arg2[%c0_3, %c0_4] : memref<1x4xf32, #tpu.memory_space<vmem>>, vector<1x4xf32>
    %c0_5 = arith.constant 0 : index
    %c0_6 = arith.constant 0 : index
    %3 = vector.load %arg3[%c0_5, %c0_6] : memref<1x4xf32, #tpu.memory_space<vmem>>, vector<1x4xf32>
    %c0_7 = arith.constant 0 : index
    %c0_8 = arith.constant 0 : index
    %4 = vector.load %arg4[%c0_7, %c0_8] : memref<1x4xf32, #tpu.memory_space<vmem>>, vector<1x4xf32>
    %c0_9 = arith.constant 0 : index
    %c0_10 = arith.constant 0 : index
    %5 = vector.load %arg5[%c0_9, %c0_10] : memref<1x4xf32, #tpu.memory_space<vmem>>, vector<1x4xf32>
    %cst = arith.constant 5.120000e+02 : f32
    %6 = vector.broadcast %cst : f32 to vector<1x4xf32>
    %7 = arith.divf %2, %6 : vector<1x4xf32>
    %cst_11 = arith.constant 5.120000e+02 : f32
    %8 = vector.broadcast %cst_11 : f32 to vector<1x4xf32>
    %9 = arith.divf %3, %8 : vector<1x4xf32>
    %10 = arith.mulf %7, %7 : vector<1x4xf32>
    %11 = arith.subf %9, %10 : vector<1x4xf32>
    %cst_12 = arith.constant 0.000000e+00 : f32
    %12 = vector.broadcast %cst_12 : f32 to vector<1x4xf32>
    %13 = arith.maximumf %11, %12 : vector<1x4xf32>
    %cst_13 = arith.constant 9.99999974E-6 : f32
    %14 = vector.broadcast %cst_13 : f32 to vector<1x4xf32>
    %15 = arith.addf %13, %14 : vector<1x4xf32>
    %16 = math.rsqrt %15 : vector<1x4xf32>
    %17 = arith.mulf %4, %16 : vector<1x4xf32>
    %18 = arith.mulf %7, %17 : vector<1x4xf32>
    %19 = arith.subf %5, %18 : vector<1x4xf32>
    %20 = vector.shape_cast %17 : vector<1x4xf32> to vector<1x1x4xf32>
    %21 = vector.broadcast %20 : vector<1x1x4xf32> to vector<16x16x4xf32>
    %22 = arith.mulf %1, %21 : vector<16x16x4xf32>
    %23 = vector.shape_cast %19 : vector<1x4xf32> to vector<1x1x4xf32>
    %24 = vector.broadcast %23 : vector<1x1x4xf32> to vector<16x16x4xf32>
    %25 = arith.addf %22, %24 : vector<16x16x4xf32>
    %cst_14 = arith.constant 0.000000e+00 : f32
    %26 = vector.broadcast %cst_14 : f32 to vector<16x16x4xf32>
    %27 = arith.maximumf %25, %26 : vector<16x16x4xf32>
    %c0_15 = arith.constant 0 : index
    %c0_16 = arith.constant 0 : index
    %c0_17 = arith.constant 0 : index
    %c0_18 = arith.constant 0 : index
    %28 = vector.load %arg6[%c0_15, %c0_16, %c0_17, %c0_18] : memref<1x16x16x4xf32, #tpu.memory_space<vmem>>, vector<1x16x16x4xf32>
    %29 = vector.shape_cast %28 : vector<1x16x16x4xf32> to vector<16x16x4xf32>
    %30 = vector.shape_cast %27 : vector<16x16x4xf32> to vector<1x16x16x4xf32>
    tpu.vector_store %arg6[%c0_15, %c0_16, %c0_17, %c0_18], %30 {strides = array<i32>} : memref<1x16x16x4xf32, #tpu.memory_space<vmem>>, vector<1x16x16x4xf32>,
    return
  }
  func.func @transform_0(%arg0: i32) -> (i32, i32, i32, i32) {
    %c0_i32 = arith.constant 0 : i32
    %c0_i32_0 = arith.constant 0 : i32
    %c0_i32_1 = arith.constant 0 : i32
    %c0_i32_2 = arith.constant 0 : i32
    return %arg0, %c0_i32, %c0_i32_0, %c0_i32_1 : i32, i32, i32, i32
  }
  func.func @transform_1(%arg0: i32) -> (i32, i32) {
    %c0_i32 = arith.constant 0 : i32
    %c0_i32_0 = arith.constant 0 : i32
    %c0_i32_1 = arith.constant 0 : i32
    return %c0_i32, %c0_i32_0 : i32, i32
  }
  func.func @transform_2(%arg0: i32) -> (i32, i32) {
    %c0_i32 = arith.constant 0 : i32
    %c0_i32_0 = arith.constant 0 : i32
    %c0_i32_1 = arith.constant 0 : i32
    return %c0_i32, %c0_i32_0 : i32, i32
  }
  func.func @transform_3(%arg0: i32) -> (i32, i32) {
    %c0_i32 = arith.constant 0 : i32
    %c0_i32_0 = arith.constant 0 : i32
    %c0_i32_1 = arith.constant 0 : i32
    return %c0_i32, %c0_i32_0 : i32, i32
  }
  func.func @transform_4(%arg0: i32) -> (i32, i32) {
    %c0_i32 = arith.constant 0 : i32
    %c0_i32_0 = arith.constant 0 : i32
    %c0_i32_1 = arith.constant 0 : i32
    return %c0_i32, %c0_i32_0 : i32, i32
  }
  func.func @transform_5(%arg0: i32) -> (i32, i32, i32, i32) {
    %c0_i32 = arith.constant 0 : i32
    %c0_i32_0 = arith.constant 0 : i32
    %c0_i32_1 = arith.constant 0 : i32
    %c0_i32_2 = arith.constant 0 : i32
    return %arg0, %c0_i32, %c0_i32_0, %c0_i32_1 : i32, i32, i32, i32
  }
}

</mosaic_0001>

<llo_original>
// kernel: feature_up_forward.7
$region0: #{feature_up_forward.7}
  #allocation0 [shape = 'u32[]', space=smem, size = 0x4, offset = 0x4, fixed_abs, tag = 'smem constant byte address 0x4 - core index']
  #allocation1 [shape = 'u32[144,128]{1,0:T(1,128)}', space=vmem, size = 0x12000, scoped, tag = 'internal scratch']
  %s0 = inlined_call_operand.vmem [shape: f32[2,16,16,4], index: 0, kind: input, shape index: {}]
  %s1 = inlined_call_operand.vmem [shape: f32[1,4], index: 1, kind: input, shape index: {}]
  %s2 = inlined_call_operand.vmem [shape: f32[1,4], index: 2, kind: input, shape index: {}]
  %s3 = inlined_call_operand.vmem [shape: f32[1,4], index: 3, kind: input, shape index: {}]
  %s4 = inlined_call_operand.vmem [shape: f32[1,4], index: 4, kind: input, shape index: {}]
  %s5 = inlined_call_operand.vmem [shape: f32[2,16,16,4], index: 5, kind: output, shape index: {}]
  %s6 = sld [smem:[#allocation0]]
  $region53: #{feature_up_forward.7} parent=0
    _
  %s8 = ssub.s32 1, %s6
  %s9 = scalar_select 0, %s8, %s6
  loop: start=0, step=1, limit=4
  $region2: #{feature_up_forward.7} parent=0 // loop_pre_header
    _
  $region3: #{feature_up_forward.7} parent=0 // loop_header
    %s11 = sphi 0, %s15
    %p12 = scmp.ge.s32.totalorder %s11, 4
    %s21 = sphi 0, %s23
    %s24 = sphi 0, %s21
    %s25 = sphi 0, %s24
    %s41 = sphi 0, %s25
    %s45 = sphi 0, %s45
    %s47 = sphi 0, %s45
    %s48 = sphi 0, %s47
    %s62 = sphi 0, %s48
    %s66 = sphi 0, %s66
    %s68 = sphi 0, %s66
    %s69 = sphi 0, %s68
    %s83 = sphi 0, %s69
    %s87 = sphi 0, %s87
    %s89 = sphi 0, %s87
    %s90 = sphi 0, %s89
    %s104 = sphi 0, %s90
    %s108 = sphi 0, %s108
    %s110 = sphi 0, %s108
    %s111 = sphi 0, %s110
    %s125 = sphi 0, %s111
    %s131 = sphi 0, %s133
    %s134 = sphi 0, %s131
    %s135 = sphi 0, %s134
    %s151 = sphi 0, %s135
  $region4: #{feature_up_forward.7} parent=0 // loop_header_branch
    %14 = sbr.rel (%p12) target = $region8
  $region5: #{feature_up_forward.7} parent=0 // loop_body
    %s16 = ssub.s32 %s11, 1
    %s17 = ssub.s32 %s11, 2
    %s18 = sadd.s32 %s11, 1
    %s19 = ssub.s32 %s11, %s18
    %p20 = scmp.eq.s32.totalorder %s19, 0
    %s22 = sadd.s32 %s21, 1
    %s23 = scalar_select %p20, %s21, %s22
    %p26 = pneg %p20
    %p27 = scmp.eq.s32.totalorder %s11, 1
    %p28 = por %p26, %p27
    %p29 = scmp.ne.s32.totalorder %s21, %s24
    %p30 = scmp.eq.s32.totalorder %s11, 0
    %p31 = por %p29, %p30
    %p32 = scmp.ne.s32.totalorder %s21, %s24
    %p33 = scmp.eq.s32.totalorder %s16, 1
    %p34 = por %p32, %p33
    %p35 = scmp.ne.s32.totalorder %s24, %s25
    %p36 = scmp.eq.s32.totalorder %s16, 0
    %p37 = por %p35, %p36
    %p38 = scmp.ne.s32.totalorder %s24, %s25
    %p39 = scmp.eq.s32.totalorder %s17, 1
    %p40 = por %p38, %p39
    %p42 = scmp.ne.s32.totalorder %s25, %s41
    %p43 = scmp.eq.s32.totalorder %s17, 0
    %p44 = por %p42, %p43
    %s46 = sadd.s32 %s45, 1
    %p49 = scmp.eq.s32.totalorder %s11, 1
    %p50 = scmp.ne.s32.totalorder %s45, %s47
    %p51 = scmp.eq.s32.totalorder %s11, 0
    %p52 = por %p50, %p51
    %p53 = scmp.ne.s32.totalorder %s45, %s47
    %p54 = scmp.eq.s32.totalorder %s16, 1
    %p55 = por %p53, %p54
    %p56 = scmp.ne.s32.totalorder %s47, %s48
    %p57 = scmp.eq.s32.totalorder %s16, 0
    %p58 = por %p56, %p57
    %p59 = scmp.ne.s32.totalorder %s47, %s48
    %p60 = scmp.eq.s32.totalorder %s17, 1
    %p61 = por %p59, %p60
    %p63 = scmp.ne.s32.totalorder %s48, %s62
    %p64 = scmp.eq.s32.totalorder %s17, 0
    %p65 = por %p63, %p64
    %s67 = sadd.s32 %s66, 1
    %p70 = scmp.eq.s32.totalorder %s11, 1
    %p71 = scmp.ne.s32.totalorder %s66, %s68
    %p72 = scmp.eq.s32.totalorder %s11, 0
    %p73 = por %p71, %p72
    %p74 = scmp.ne.s32.totalorder %s66, %s68
    %p75 = scmp.eq.s32.totalorder %s16, 1
    %p76 = por %p74, %p75
    %p77 = scmp.ne.s32.totalorder %s68, %s69
    %p78 = scmp.eq.s32.totalorder %s16, 0
    %p79 = por %p77, %p78
    %p80 = scmp.ne.s32.totalorder %s68, %s69
    %p81 = scmp.eq.s32.totalorder %s17, 1
    %p82 = por %p80, %p81
    %p84 = scmp.ne.s32.totalorder %s69, %s83
    %p85 = scmp.eq.s32.totalorder %s17, 0
    %p86 = por %p84, %p85
    %s88 = sadd.s32 %s87, 1
    %p91 = scmp.eq.s32.totalorder %s11, 1
    %p92 = scmp.ne.s32.totalorder %s87, %s89
    %p93 = scmp.eq.s32.totalorder %s11, 0
    %p94 = por %p92, %p93
    %p95 = scmp.ne.s32.totalorder %s87, %s89
    %p96 = scmp.eq.s32.totalorder %s16, 1
    %p97 = por %p95, %p96
    %p98 = scmp.ne.s32.totalorder %s89, %s90
    %p99 = scmp.eq.s32.totalorder %s16, 0
    %p100 = por %p98, %p99
    %p101 = scmp.ne.s32.totalorder %s89, %s90
    %p102 = scmp.eq.s32.totalorder %s17, 1
    %p103 = por %p101, %p102
    %p105 = scmp.ne.s32.totalorder %s90, %s104
    %p106 = scmp.eq.s32.totalorder %s17, 0
    %p107 = por %p105, %p106
    %s109 = sadd.s32 %s108, 1
    %p112 = scmp.eq.s32.totalorder %s11, 1
    %p113 = scmp.ne.s32.totalorder %s108, %s110
    %p114 = scmp.eq.s32.totalorder %s11, 0
    %p115 = por %p113, %p114
    %p116 = scmp.ne.s32.totalorder %s108, %s110
    %p117 = scmp.eq.s32.totalorder %s16, 1
    %p118 = por %p116, %p117
    %p119 = scmp.ne.s32.totalorder %s110, %s111
    %p120 = scmp.eq.s32.totalorder %s16, 0
    %p121 = por %p119, %p120
    %p122 = scmp.ne.s32.totalorder %s110, %s111
    %p123 = scmp.eq.s32.totalorder %s17, 1
    %p124 = por %p122, %p123
    %p126 = scmp.ne.s32.totalorder %s111, %s125
    %p127 = scmp.eq.s32.totalorder %s17, 0
    %p128 = por %p126, %p127
    %s129 = ssub.s32 %s11, %s18
    %p130 = scmp.eq.s32.totalorder %s129, 0
    %s132 = sadd.s32 %s131, 1
    %s133 = scalar_select %p130, %s131, %s132
    %p136 = pneg %p130
    %p137 = scmp.eq.s32.totalorder %s11, 1
    %p138 = por %p136, %p137
    %p139 = scmp.ne.s32.totalorder %s131, %s134
    %p140 = scmp.eq.s32.totalorder %s11, 0
    %p141 = por %p139, %p140
    %p142 = scmp.ne.s32.totalorder %s131, %s134
    %p143 = scmp.eq.s32.totalorder %s16, 1
    %p144 = por %p142, %p143
    %p145 = scmp.ne.s32.totalorder %s134, %s135
    %p146 = scmp.eq.s32.totalorder %s16, 0
    %p147 = por %p145, %p146
    %p148 = scmp.ne.s32.totalorder %s134, %s135
    %p149 = scmp.eq.s32.totalorder %s17, 1
    %p150 = por %p148, %p149
    %p152 = scmp.ne.s32.totalorder %s135, %s151
    %p153 = scmp.eq.s32.totalorder %s17, 0
    %p154 = por %p152, %p153
    %p155 = scmp.le.s32.totalorder 1, %s11
    %p156 = scmp.lt.s32.totalorder %s11, 3
    %p157 = pnand %p155, %p156
    %p158 = pneg %p157
    // Predicated region
    $region9: #{feature_up_forward.7} parent=5 // pred_check
      _
    $region10: #{feature_up_forward.7} parent=5 // pred_check_branch
      %160 = sbr.rel (%p157) target = $region12
    $region11: #{feature_up_forward.7} parent=5 // pred_region
      %s161 = ssub.s32 %s11, 1
      // Predicated region
      $region13: #{feature_up_forward.7} parent=11 // pred_check
        %p162 = pneg %p58
      $region14: #{feature_up_forward.7} parent=11 // pred_check_branch
        %164 = sbr.rel (%p162) target = $region16
      $region15: #{feature_up_forward.7} parent=11 // pred_region
        _
      $region16: #{feature_up_forward.7} parent=11 // pred_fallthru
        _
      // Predicated region
      $region17: #{feature_up_forward.7} parent=11 // pred_check
        %p165 = pneg %p79
      $region18: #{feature_up_forward.7} parent=11 // pred_check_branch
        %167 = sbr.rel (%p165) target = $region20
      $region19: #{feature_up_forward.7} parent=11 // pred_region
        _
      $region20: #{feature_up_forward.7} parent=11 // pred_fallthru
        _
      // Predicated region
      $region21: #{feature_up_forward.7} parent=11 // pred_check
        %p168 = pneg %p100
      $region22: #{feature_up_forward.7} parent=11 // pred_check_branch
        %170 = sbr.rel (%p168) target = $region24
      $region23: #{feature_up_forward.7} parent=11 // pred_region
        _
      $region24: #{feature_up_forward.7} parent=11 // pred_fallthru
        _
      // Predicated region
      $region25: #{feature_up_forward.7} parent=11 // pred_check
        %p171 = pneg %p121
      $region26: #{feature_up_forward.7} parent=11 // pred_check_branch
        %173 = sbr.rel (%p171) target = $region28
      $region27: #{feature_up_forward.7} parent=11 // pred_region
        _
      $region28: #{feature_up_forward.7} parent=11 // pred_fallthru
        _
    $region12: #{feature_up_forward.7} parent=5 // pred_fallthru
      _
    %p174 = scmp.lt.s32.totalorder %s11, 2
    // Predicated region
    $region29: #{feature_up_forward.7} parent=5 // pred_check
      %p175 = pneg %p174
    $region30: #{feature_up_forward.7} parent=5 // pred_check_branch
      %177 = sbr.rel (%p175) target = $region32
    $region31: #{feature_up_forward.7} parent=5 // pred_region
      // Predicated region
      $region33: #{feature_up_forward.7} parent=31 // pred_check
        %p178 = pneg %p31
      $region34: #{feature_up_forward.7} parent=31 // pred_check_branch
        %180 = sbr.rel (%p178) target = $region36
      $region35: #{feature_up_forward.7} parent=31 // pred_region
        %p181 = scmp.lt.s32.totalorder %s11, 1
        %s182 = scalar_select %p181, %s11, 1
        %s183 = smul.addr %s182, 32
        %s184 = smul.addr %s183, 8
        %s185 = scalar_lea.vmem %s0, %s184
      $region36: #{feature_up_forward.7} parent=31 // pred_fallthru
        _
    $region32: #{feature_up_forward.7} parent=5 // pred_fallthru
      _
    %p186 = scmp.le.s32.totalorder 1, %s11
    %p187 = scmp.lt.s32.totalorder %s11, 3
    %p188 = pnand %p186, %p187
    %p189 = pneg %p188
    // Predicated region
    $region37: #{feature_up_forward.7} parent=5 // pred_check
      _
    $region38: #{feature_up_forward.7} parent=5 // pred_check_branch
      %191 = sbr.rel (%p188) target = $region40
    $region39: #{feature_up_forward.7} parent=5 // pred_region
      %s192 = ssub.s32 %s11, 1
      %p193 = scmp.lt.s32.totalorder %s16, 1
      %s194 = scalar_select %p193, %s16, 1
      %s195 = smul.addr %s194, 32
      %s196 = smul.addr %s195, 8
      %s197 = scalar_lea.vmem %s0, %s196
      %p198 = pneg %p37
      %p199 = pneg %p34
      %p200 = pneg %p58
      %p201 = pneg %p55
      %p202 = pneg %p79
      %p203 = pneg %p76
      %p204 = pneg %p100
      %p205 = pneg %p97
      %p206 = pneg %p121
      %p207 = pneg %p118
      %p208 = pneg %p147
      %p209 = pneg %p144
      %p210 = scmp.lt.s32.totalorder %s16, 1
      %s211 = scalar_select %p210, %s16, 1
      %s212 = smul.addr %s211, 32
      %s213 = smul.addr %s212, 8
      %s214 = scalar_lea.vmem %s5, %s213
      %p215 = scmp.lt.s32.totalorder %s16, 1
      %s216 = scalar_select %p215, %s16, 1
      %s217 = smul.addr %s216, 32
      %s218 = smul.addr %s217, 8
      %s219 = scalar_lea.vmem %s0, %s218
      %p220 = scmp.lt.s32.totalorder %s16, 1
      %s221 = scalar_select %p220, %s16, 1
      %s222 = smul.addr %s221, 32
      %s223 = smul.addr %s222, 8
      %s224 = scalar_lea.vmem %s5, %s223
      %v225 = vld [vmem:[%s219] sm:$0xff]
      %v226 = vld [vmem:[%s219 + $0x8] sm:$0xff]
      %v227 = vld [vmem:[%s219 + $0x10] sm:$0xff]
      %v228 = vld [vmem:[%s219 + $0x18] sm:$0xff]
      %v229 = vld [vmem:[%s219 + $0x20] sm:$0xff]
      %v230 = vld [vmem:[%s219 + $0x28] sm:$0xff]
      %v231 = vld [vmem:[%s219 + $0x30] sm:$0xff]
      %v232 = vld [vmem:[%s219 + $0x38] sm:$0xff]
      %v233 = vld [vmem:[%s219 + $0x40] sm:$0xff]
      %v234 = vld [vmem:[%s219 + $0x48] sm:$0xff]
      %v235 = vld [vmem:[%s219 + $0x50] sm:$0xff]
      %v236 = vld [vmem:[%s219 + $0x58] sm:$0xff]
      %v237 = vld [vmem:[%s219 + $0x60] sm:$0xff]
      %v238 = vld [vmem:[%s219 + $0x68] sm:$0xff]
      %v239 = vld [vmem:[%s219 + $0x70] sm:$0xff]
      %v240 = vld [vmem:[%s219 + $0x78] sm:$0xff]
      %v241 = vld [vmem:[%s219 + $0x80] sm:$0xff]
      %v242 = vld [vmem:[%s219 + $0x88] sm:$0xff]
      %v243 = vld [vmem:[%s219 + $0x90] sm:$0xff]
      %v244 = vld [vmem:[%s219 + $0x98] sm:$0xff]
      %v245 = vld [vmem:[%s219 + $0xa0] sm:$0xff]
      %v246 = vld [vmem:[%s219 + $0xa8] sm:$0xff]
      %v247 = vld [vmem:[%s219 + $0xb0] sm:$0xff]
      %v248 = vld [vmem:[%s219 + $0xb8] sm:$0xff]
      %v249 = vld [vmem:[%s219 + $0xc0] sm:$0xff]
      %v250 = vld [vmem:[%s219 + $0xc8] sm:$0xff]
      %v251 = vld [vmem:[%s219 + $0xd0] sm:$0xff]
      %v252 = vld [vmem:[%s219 + $0xd8] sm:$0xff]
      %v253 = vld [vmem:[%s219 + $0xe0] sm:$0xff]
      %v254 = vld [vmem:[%s219 + $0xe8] sm:$0xff]
      %v255 = vld [vmem:[%s219 + $0xf0] sm:$0xff]
      %v256 = vld [vmem:[%s219 + $0xf8] sm:$0xff]
      %v257 = vld [vmem:[%s1] sm:$0x1]
      %v258 = vld [vmem:[%s2] sm:$0x1]
      %v259 = vld [vmem:[%s3] sm:$0x1]
      %v260 = vld [vmem:[%s4] sm:$0x1]
      %v261 = vrcp.pop 512.0
      %v262 = vmul.f32 %v257, %v261
      %v263 = vmul.f32 %v258, %v261
      %v264 = vmul.f32 %v262, %v262
      %v265 = vsub.f32 %v263, %v264
      %v266 = vmax.f32 %v265, 0.0
      %v267 = vadd.f32 %v266, 1e-05
      %v268 = vrsqrt.pop %v267
      %v269 = vmul.f32 %v259, %v268
      %v270 = vmul.f32 %v262, %v269
      %v271 = vsub.f32 %v260, %v270
      %v273 = vlaneseq
      %v274 = vshrl.u32 %v273, 7
      %v275 = vsub.s32 0, %v274
      %v276 = vrot.slane %v269, %v275
      %v278 = vmul.f32 %v225, %v276
      %v279 = vmul.f32 %v226, %v276
      %v280 = vmul.f32 %v227, %v276
      %v281 = vmul.f32 %v228, %v276
      %v282 = vmul.f32 %v229, %v276
      %v283 = vmul.f32 %v230, %v276
      %v284 = vmul.f32 %v231, %v276
      %v285 = vmul.f32 %v232, %v276
      %v286 = vmul.f32 %v233, %v276
      %v287 = vmul.f32 %v234, %v276
      %v288 = vmul.f32 %v235, %v276
      %v289 = vmul.f32 %v236, %v276
      %v290 = vmul.f32 %v237, %v276
      %v291 = vmul.f32 %v238, %v276
      %v292 = vmul.f32 %v239, %v276
      %v293 = vmul.f32 %v240, %v276
      %v294 = vmul.f32 %v241, %v276
      %v295 = vmul.f32 %v242, %v276
      %v296 = vmul.f32 %v243, %v276
      %v297 = vmul.f32 %v244, %v276
      %v298 = vmul.f32 %v245, %v276
      %v299 = vmul.f32 %v246, %v276
      %v300 = vmul.f32 %v247, %v276
      %v301 = vmul.f32 %v248, %v276
      %v302 = vmul.f32 %v249, %v276
      %v303 = vmul.f32 %v250, %v276
      %v304 = vmul.f32 %v251, %v276
      %v305 = vmul.f32 %v252, %v276
      %v306 = vmul.f32 %v253, %v276
      %v307 = vmul.f32 %v254, %v276
      %v308 = vmul.f32 %v255, %v276
      %v309 = vmul.f32 %v256, %v276
      %v311 = vlaneseq
      %v312 = vshrl.u32 %v311, 7
      %v313 = vsub.s32 0, %v312
      %v314 = vrot.slane %v271, %v313
      %v316 = vadd.f32 %v278, %v314
      %v317 = vadd.f32 %v279, %v314
      %v318 = vadd.f32 %v280, %v314
      %v319 = vadd.f32 %v281, %v314
      %v320 = vadd.f32 %v282, %v314
      %v321 = vadd.f32 %v283, %v314
      %v322 = vadd.f32 %v284, %v314
      %v323 = vadd.f32 %v285, %v314
      %v324 = vadd.f32 %v286, %v314
      %v325 = vadd.f32 %v287, %v314
      %v326 = vadd.f32 %v288, %v314
      %v327 = vadd.f32 %v289, %v314
      %v328 = vadd.f32 %v290, %v314
      %v329 = vadd.f32 %v291, %v314
      %v330 = vadd.f32 %v292, %v314
      %v331 = vadd.f32 %v293, %v314
      %v332 = vadd.f32 %v294, %v314
      %v333 = vadd.f32 %v295, %v314
      %v334 = vadd.f32 %v296, %v314
      %v335 = vadd.f32 %v297, %v314
      %v336 = vadd.f32 %v298, %v314
      %v337 = vadd.f32 %v299, %v314
      %v338 = vadd.f32 %v300, %v314
      %v339 = vadd.f32 %v301, %v314
      %v340 = vadd.f32 %v302, %v314
      %v341 = vadd.f32 %v303, %v314
      %v342 = vadd.f32 %v304, %v314
      %v343 = vadd.f32 %v305, %v314
      %v344 = vadd.f32 %v306, %v314
      %v345 = vadd.f32 %v307, %v314
      %v346 = vadd.f32 %v308, %v314
      %v347 = vadd.f32 %v309, %v314
      %v348 = vmax.f32 %v316, 0.0
      %v349 = vmax.f32 %v317, 0.0
      %v350 = vmax.f32 %v318, 0.0
      %v351 = vmax.f32 %v319, 0.0
      %v352 = vmax.f32 %v320, 0.0
      %v353 = vmax.f32 %v321, 0.0
      %v354 = vmax.f32 %v322, 0.0
      %v355 = vmax.f32 %v323, 0.0
      %v356 = vmax.f32 %v324, 0.0
      %v357 = vmax.f32 %v325, 0.0
      %v358 = vmax.f32 %v326, 0.0
      %v359 = vmax.f32 %v327, 0.0
      %v360 = vmax.f32 %v328, 0.0
      %v361 = vmax.f32 %v329, 0.0
      %v362 = vmax.f32 %v330, 0.0
      %v363 = vmax.f32 %v331, 0.0
      %v364 = vmax.f32 %v332, 0.0
      %v365 = vmax.f32 %v333, 0.0
      %v366 = vmax.f32 %v334, 0.0
      %v367 = vmax.f32 %v335, 0.0
      %v368 = vmax.f32 %v336, 0.0
      %v369 = vmax.f32 %v337, 0.0
      %v370 = vmax.f32 %v338, 0.0
      %v371 = vmax.f32 %v339, 0.0
      %v372 = vmax.f32 %v340, 0.0
      %v373 = vmax.f32 %v341, 0.0
      %v374 = vmax.f32 %v342, 0.0
      %v375 = vmax.f32 %v343, 0.0
      %v376 = vmax.f32 %v344, 0.0
      %v377 = vmax.f32 %v345, 0.0
      %v378 = vmax.f32 %v346, 0.0
      %v379 = vmax.f32 %v347, 0.0
      %vm380 = vcmask 31744
      %381 = vst.msk [vmem:[%s224] sm:$0xff] %vm380, %v348
      %382 = vst.msk [vmem:[%s224 + $0x8] sm:$0xff] %vm380, %v349
      %383 = vst.msk [vmem:[%s224 + $0x10] sm:$0xff] %vm380, %v350
      %384 = vst.msk [vmem:[%s224 + $0x18] sm:$0xff] %vm380, %v351
      %385 = vst.msk [vmem:[%s224 + $0x20] sm:$0xff] %vm380, %v352
      %386 = vst.msk [vmem:[%s224 + $0x28] sm:$0xff] %vm380, %v353
      %387 = vst.msk [vmem:[%s224 + $0x30] sm:$0xff] %vm380, %v354
      %388 = vst.msk [vmem:[%s224 + $0x38] sm:$0xff] %vm380, %v355
      %389 = vst.msk [vmem:[%s224 + $0x40] sm:$0xff] %vm380, %v356
      %390 = vst.msk [vmem:[%s224 + $0x48] sm:$0xff] %vm380, %v357
      %391 = vst.msk [vmem:[%s224 + $0x50] sm:$0xff] %vm380, %v358
      %392 = vst.msk [vmem:[%s224 + $0x58] sm:$0xff] %vm380, %v359
      %393 = vst.msk [vmem:[%s224 + $0x60] sm:$0xff] %vm380, %v360
      %394 = vst.msk [vmem:[%s224 + $0x68] sm:$0xff] %vm380, %v361
      %395 = vst.msk [vmem:[%s224 + $0x70] sm:$0xff] %vm380, %v362
      %396 = vst.msk [vmem:[%s224 + $0x78] sm:$0xff] %vm380, %v363
      %397 = vst.msk [vmem:[%s224 + $0x80] sm:$0xff] %vm380, %v364
      %398 = vst.msk [vmem:[%s224 + $0x88] sm:$0xff] %vm380, %v365
      %399 = vst.msk [vmem:[%s224 + $0x90] sm:$0xff] %vm380, %v366
      %400 = vst.msk [vmem:[%s224 + $0x98] sm:$0xff] %vm380, %v367
      %401 = vst.msk [vmem:[%s224 + $0xa0] sm:$0xff] %vm380, %v368
      %402 = vst.msk [vmem:[%s224 + $0xa8] sm:$0xff] %vm380, %v369
      %403 = vst.msk [vmem:[%s224 + $0xb0] sm:$0xff] %vm380, %v370
      %404 = vst.msk [vmem:[%s224 + $0xb8] sm:$0xff] %vm380, %v371
      %405 = vst.msk [vmem:[%s224 + $0xc0] sm:$0xff] %vm380, %v372
      %406 = vst.msk [vmem:[%s224 + $0xc8] sm:$0xff] %vm380, %v373
      %407 = vst.msk [vmem:[%s224 + $0xd0] sm:$0xff] %vm380, %v374
      %408 = vst.msk [vmem:[%s224 + $0xd8] sm:$0xff] %vm380, %v375
      %409 = vst.msk [vmem:[%s224 + $0xe0] sm:$0xff] %vm380, %v376
      %410 = vst.msk [vmem:[%s224 + $0xe8] sm:$0xff] %vm380, %v377
      %411 = vst.msk [vmem:[%s224 + $0xf0] sm:$0xff] %vm380, %v378
      %412 = vst.msk [vmem:[%s224 + $0xf8] sm:$0xff] %vm380, %v379
      %p413 = scmp.lt.s32.totalorder %s16, 1
      %s414 = scalar_select %p413, %s16, 1
      %s415 = smul.addr %s414, 32
      %s416 = smul.addr %s415, 8
      %s417 = scalar_lea.vmem %s5, %s416
      // Predicated region
      $region41: #{feature_up_forward.7} parent=39 // pred_check
        %p418 = pneg %p144
      $region42: #{feature_up_forward.7} parent=39 // pred_check_branch
        %420 = sbr.rel (%p418) target = $region44
      $region43: #{feature_up_forward.7} parent=39 // pred_region
        _
      $region44: #{feature_up_forward.7} parent=39 // pred_fallthru
        _
    $region40: #{feature_up_forward.7} parent=5 // pred_fallthru
      _
    %p421 = scmp.le.s32.totalorder 2, %s11
    // Predicated region
    $region45: #{feature_up_forward.7} parent=5 // pred_check
      %p422 = pneg %p421
    $region46: #{feature_up_forward.7} parent=5 // pred_check_branch
      %424 = sbr.rel (%p422) target = $region48
    $region47: #{feature_up_forward.7} parent=5 // pred_region
      %s425 = ssub.s32 %s11, 2
      // Predicated region
      $region49: #{feature_up_forward.7} parent=47 // pred_check
        %p426 = pneg %p150
      $region50: #{feature_up_forward.7} parent=47 // pred_check_branch
        %428 = sbr.rel (%p426) target = $region52
      $region51: #{feature_up_forward.7} parent=47 // pred_region
        %p429 = scmp.lt.s32.totalorder %s17, 1
        %s430 = scalar_select %p429, %s17, 1
        %s431 = smul.addr %s430, 32
        %s432 = smul.addr %s431, 8
        %s433 = scalar_lea.vmem %s5, %s432
      $region52: #{feature_up_forward.7} parent=47 // pred_fallthru
        _
    $region48: #{feature_up_forward.7} parent=5 // pred_fallthru
      _
  $region6: #{feature_up_forward.7} parent=0 // loop_footer
    %s15 = sadd.s32 1, %s11
  $region7: #{feature_up_forward.7} parent=0 // loop_footer_branch
    %10 = sbr.rel target = $region3
  $region8: #{feature_up_forward.7} parent=0 // loop_exit
    _

// kernel: feature_up_forward.6
$region0: #{feature_up_forward.6}
  #allocation0 [shape = 'u32[]', space=smem, size = 0x4, offset = 0x4, fixed_abs, tag = 'smem constant byte address 0x4 - core index']
  #allocation1 [shape = 'u32[144,128]{1,0:T(1,128)}', space=vmem, size = 0x12000, scoped, tag = 'internal scratch']
  %s0 = inlined_call_operand.vmem [shape: f32[2,16,16,4], index: 0, kind: input, shape index: {}]
  %s1 = inlined_call_operand.vmem [shape: f32[1,4], index: 1, kind: input, shape index: {}]
  %s2 = inlined_call_operand.vmem [shape: f32[1,4], index: 2, kind: input, shape index: {}]
  %s3 = inlined_call_operand.vmem [shape: f32[1,4], index: 3, kind: input, shape index: {}]
  %s4 = inlined_call_operand.vmem [shape: f32[1,4], index: 4, kind: input, shape index: {}]
  %s5 = inlined_call_operand.vmem [shape: bf16[3,12,4], index: 5, kind: input, shape index: {}]
  %s6 = inlined_call_operand.vmem [shape: f32[2,16,16,4], index: 6, kind: output, shape index: {0}]
  %s7 = inlined_call_operand.vmem [shape: f32[1,4], index: 7, kind: output, shape index: {1}]
  %s8 = inlined_call_operand.vmem [shape: f32[1,4], index: 8, kind: output, shape index: {2}]
  %9 = xla_tuple %s6, %s7, %s8
  %s10 = sld [smem:[#allocation0]]
  $region77: #{feature_up_forward.6} parent=0
    _
  %s12 = ssub.s32 1, %s10
  %s13 = scalar_select 0, %s12, %s10
  loop: start=0, step=1, limit=4
  $region2: #{feature_up_forward.6} parent=0 // loop_pre_header
    _
  $region3: #{feature_up_forward.6} parent=0 // loop_header
    %s15 = sphi 0, %s19
    %p16 = scmp.ge.s32.totalorder %s15, 4
    %s25 = sphi 0, %s27
    %s28 = sphi 0, %s25
    %s29 = sphi 0, %s28
    %s45 = sphi 0, %s29
    %s49 = sphi 0, %s49
    %s51 = sphi 0, %s49
    %s52 = sphi 0, %s51
    %s66 = sphi 0, %s52
    %s70 = sphi 0, %s70
    %s72 = sphi 0, %s70
    %s73 = sphi 0, %s72
    %s87 = sphi 0, %s73
    %s91 = sphi 0, %s91
    %s93 = sphi 0, %s91
    %s94 = sphi 0, %s93
    %s108 = sphi 0, %s94
    %s112 = sphi 0, %s112
    %s114 = sphi 0, %s112
    %s115 = sphi 0, %s114
    %s129 = sphi 0, %s115
    %s133 = sphi 0, %s133
    %s135 = sphi 0, %s133
    %s136 = sphi 0, %s135
    %s150 = sphi 0, %s136
    %s156 = sphi 0, %s158
    %s159 = sphi 0, %s156
    %s160 = sphi 0, %s159
    %s176 = sphi 0, %s160
    %s180 = sphi 0, %s180
    %s182 = sphi 0, %s180
    %s183 = sphi 0, %s182
    %s197 = sphi 0, %s183
    %s201 = sphi 0, %s201
    %s203 = sphi 0, %s201
    %s204 = sphi 0, %s203
    %s218 = sphi 0, %s204
  $region4: #{feature_up_forward.6} parent=0 // loop_header_branch
    %18 = sbr.rel (%p16) target = $region8
  $region5: #{feature_up_forward.6} parent=0 // loop_body
    %s20 = ssub.s32 %s15, 1
    %s21 = ssub.s32 %s15, 2
    %s22 = sadd.s32 %s15, 1
    %s23 = ssub.s32 %s15, %s22
    %p24 = scmp.eq.s32.totalorder %s23, 0
    %s26 = sadd.s32 %s25, 1
    %s27 = scalar_select %p24, %s25, %s26
    %p30 = pneg %p24
    %p31 = scmp.eq.s32.totalorder %s15, 1
    %p32 = por %p30, %p31
    %p33 = scmp.ne.s32.totalorder %s25, %s28
    %p34 = scmp.eq.s32.totalorder %s15, 0
    %p35 = por %p33, %p34
    %p36 = scmp.ne.s32.totalorder %s25, %s28
    %p37 = scmp.eq.s32.totalorder %s20, 1
    %p38 = por %p36, %p37
    %p39 = scmp.ne.s32.totalorder %s28, %s29
    %p40 = scmp.eq.s32.totalorder %s20, 0
    %p41 = por %p39, %p40
    %p42 = scmp.ne.s32.totalorder %s28, %s29
    %p43 = scmp.eq.s32.totalorder %s21, 1
    %p44 = por %p42, %p43
    %p46 = scmp.ne.s32.totalorder %s29, %s45
    %p47 = scmp.eq.s32.totalorder %s21, 0
    %p48 = por %p46, %p47
    %s50 = sadd.s32 %s49, 1
    %p53 = scmp.eq.s32.totalorder %s15, 1
    %p54 = scmp.ne.s32.totalorder %s49, %s51
    %p55 = scmp.eq.s32.totalorder %s15, 0
    %p56 = por %p54, %p55
    %p57 = scmp.ne.s32.totalorder %s49, %s51
    %p58 = scmp.eq.s32.totalorder %s20, 1
    %p59 = por %p57, %p58
    %p60 = scmp.ne.s32.totalorder %s51, %s52
    %p61 = scmp.eq.s32.totalorder %s20, 0
    %p62 = por %p60, %p61
    %p63 = scmp.ne.s32.totalorder %s51, %s52
    %p64 = scmp.eq.s32.totalorder %s21, 1
    %p65 = por %p63, %p64
    %p67 = scmp.ne.s32.totalorder %s52, %s66
    %p68 = scmp.eq.s32.totalorder %s21, 0
    %p69 = por %p67, %p68
    %s71 = sadd.s32 %s70, 1
    %p74 = scmp.eq.s32.totalorder %s15, 1
    %p75 = scmp.ne.s32.totalorder %s70, %s72
    %p76 = scmp.eq.s32.totalorder %s15, 0
    %p77 = por %p75, %p76
    %p78 = scmp.ne.s32.totalorder %s70, %s72
    %p79 = scmp.eq.s32.totalorder %s20, 1
    %p80 = por %p78, %p79
    %p81 = scmp.ne.s32.totalorder %s72, %s73
    %p82 = scmp.eq.s32.totalorder %s20, 0
    %p83 = por %p81, %p82
    %p84 = scmp.ne.s32.totalorder %s72, %s73
    %p85 = scmp.eq.s32.totalorder %s21, 1
    %p86 = por %p84, %p85
    %p88 = scmp.ne.s32.totalorder %s73, %s87
    %p89 = scmp.eq.s32.totalorder %s21, 0
    %p90 = por %p88, %p89
    %s92 = sadd.s32 %s91, 1
    %p95 = scmp.eq.s32.totalorder %s15, 1
    %p96 = scmp.ne.s32.totalorder %s91, %s93
    %p97 = scmp.eq.s32.totalorder %s15, 0
    %p98 = por %p96, %p97
    %p99 = scmp.ne.s32.totalorder %s91, %s93
    %p100 = scmp.eq.s32.totalorder %s20, 1
    %p101 = por %p99, %p100
    %p102 = scmp.ne.s32.totalorder %s93, %s94
    %p103 = scmp.eq.s32.totalorder %s20, 0
    %p104 = por %p102, %p103
    %p105 = scmp.ne.s32.totalorder %s93, %s94
    %p106 = scmp.eq.s32.totalorder %s21, 1
    %p107 = por %p105, %p106
    %p109 = scmp.ne.s32.totalorder %s94, %s108
    %p110 = scmp.eq.s32.totalorder %s21, 0
    %p111 = por %p109, %p110
    %s113 = sadd.s32 %s112, 1
    %p116 = scmp.eq.s32.totalorder %s15, 1
    %p117 = scmp.ne.s32.totalorder %s112, %s114
    %p118 = scmp.eq.s32.totalorder %s15, 0
    %p119 = por %p117, %p118
    %p120 = scmp.ne.s32.totalorder %s112, %s114
    %p121 = scmp.eq.s32.totalorder %s20, 1
    %p122 = por %p120, %p121
    %p123 = scmp.ne.s32.totalorder %s114, %s115
    %p124 = scmp.eq.s32.totalorder %s20, 0
    %p125 = por %p123, %p124
    %p126 = scmp.ne.s32.totalorder %s114, %s115
    %p127 = scmp.eq.s32.totalorder %s21, 1
    %p128 = por %p126, %p127
    %p130 = scmp.ne.s32.totalorder %s115, %s129
    %p131 = scmp.eq.s32.totalorder %s21, 0
    %p132 = por %p130, %p131
    %s134 = sadd.s32 %s133, 1
    %p137 = scmp.eq.s32.totalorder %s15, 1
    %p138 = scmp.ne.s32.totalorder %s133, %s135
    %p139 = scmp.eq.s32.totalorder %s15, 0
    %p140 = por %p138, %p139
    %p141 = scmp.ne.s32.totalorder %s133, %s135
    %p142 = scmp.eq.s32.totalorder %s20, 1
    %p143 = por %p141, %p142
    %p144 = scmp.ne.s32.totalorder %s135, %s136
    %p145 = scmp.eq.s32.totalorder %s20, 0
    %p146 = por %p144, %p145
    %p147 = scmp.ne.s32.totalorder %s135, %s136
    %p148 = scmp.eq.s32.totalorder %s21, 1
    %p149 = por %p147, %p148
    %p151 = scmp.ne.s32.totalorder %s136, %s150
    %p152 = scmp.eq.s32.totalorder %s21, 0
    %p153 = por %p151, %p152
    %s154 = ssub.s32 %s15, %s22
    %p155 = scmp.eq.s32.totalorder %s154, 0
    %s157 = sadd.s32 %s156, 1
    %s158 = scalar_select %p155, %s156, %s157
    %p161 = pneg %p155
    %p162 = scmp.eq.s32.totalorder %s15, 1
    %p163 = por %p161, %p162
    %p164 = scmp.ne.s32.totalorder %s156, %s159
    %p165 = scmp.eq.s32.totalorder %s15, 0
    %p166 = por %p164, %p165
    %p167 = scmp.ne.s32.totalorder %s156, %s159
    %p168 = scmp.eq.s32.totalorder %s20, 1
    %p169 = por %p167, %p168
    %p170 = scmp.ne.s32.totalorder %s159, %s160
    %p171 = scmp.eq.s32.totalorder %s20, 0
    %p172 = por %p170, %p171
    %p173 = scmp.ne.s32.totalorder %s159, %s160
    %p174 = scmp.eq.s32.totalorder %s21, 1
    %p175 = por %p173, %p174
    %p177 = scmp.ne.s32.totalorder %s160, %s176
    %p178 = scmp.eq.s32.totalorder %s21, 0
    %p179 = por %p177, %p178
    %s181 = sadd.s32 %s180, 1
    %p184 = scmp.eq.s32.totalorder %s15, 1
    %p185 = scmp.ne.s32.totalorder %s180, %s182
    %p186 = scmp.eq.s32.totalorder %s15, 0
    %p187 = por %p185, %p186
    %p188 = scmp.ne.s32.totalorder %s180, %s182
    %p189 = scmp.eq.s32.totalorder %s20, 1
    %p190 = por %p188, %p189
    %p191 = scmp.ne.s32.totalorder %s182, %s183
    %p192 = scmp.eq.s32.totalorder %s20, 0
    %p193 = por %p191, %p192
    %p194 = scmp.ne.s32.totalorder %s182, %s183
    %p195 = scmp.eq.s32.totalorder %s21, 1
    %p196 = por %p194, %p195
    %p198 = scmp.ne.s32.totalorder %s183, %s197
    %p199 = scmp.eq.s32.totalorder %s21, 0
    %p200 = por %p198, %p199
    %s202 = sadd.s32 %s201, 1
    %p205 = scmp.eq.s32.totalorder %s15, 1
    %p206 = scmp.ne.s32.totalorder %s201, %s203
    %p207 = scmp.eq.s32.totalorder %s15, 0
    %p208 = por %p206, %p207
    %p209 = scmp.ne.s32.totalorder %s201, %s203
    %p210 = scmp.eq.s32.totalorder %s20, 1
    %p211 = por %p209, %p210
    %p212 = scmp.ne.s32.totalorder %s203, %s204
    %p213 = scmp.eq.s32.totalorder %s20, 0
    %p214 = por %p212, %p213
    %p215 = scmp.ne.s32.totalorder %s203, %s204
    %p216 = scmp.eq.s32.totalorder %s21, 1
    %p217 = por %p215, %p216
    %p219 = scmp.ne.s32.totalorder %s204, %s218
    %p220 = scmp.eq.s32.totalorder %s21, 0
    %p221 = por %p219, %p220
    %p222 = scmp.le.s32.totalorder 1, %s15
    %p223 = scmp.lt.s32.totalorder %s15, 3
    %p224 = pnand %p222, %p223
    %p225 = pneg %p224
    // Predicated region
    $region9: #{feature_up_forward.6} parent=5 // pred_check
      _
    $region10: #{feature_up_forward.6} parent=5 // pred_check_branch
      %227 = sbr.rel (%p224) target = $region12
    $region11: #{feature_up_forward.6} parent=5 // pred_region
      %s228 = ssub.s32 %s15, 1
      // Predicated region
      $region13: #{feature_up_forward.6} parent=11 // pred_check
        %p229 = pneg %p62
      $region14: #{feature_up_forward.6} parent=11 // pred_check_branch
        %231 = sbr.rel (%p229) target = $region16
      $region15: #{feature_up_forward.6} parent=11 // pred_region
        _
      $region16: #{feature_up_forward.6} parent=11 // pred_fallthru
        _
      // Predicated region
      $region17: #{feature_up_forward.6} parent=11 // pred_check
        %p232 = pneg %p83
      $region18: #{feature_up_forward.6} parent=11 // pred_check_branch
        %234 = sbr.rel (%p232) target = $region20
      $region19: #{feature_up_forward.6} parent=11 // pred_region
        _
      $region20: #{feature_up_forward.6} parent=11 // pred_fallthru
        _
      // Predicated region
      $region21: #{feature_up_forward.6} parent=11 // pred_check
        %p235 = pneg %p104
      $region22: #{feature_up_forward.6} parent=11 // pred_check_branch
        %237 = sbr.rel (%p235) target = $region24
      $region23: #{feature_up_forward.6} parent=11 // pred_region
        _
      $region24: #{feature_up_forward.6} parent=11 // pred_fallthru
        _
      // Predicated region
      $region25: #{feature_up_forward.6} parent=11 // pred_check
        %p238 = pneg %p125
      $region26: #{feature_up_forward.6} parent=11 // pred_check_branch
        %240 = sbr.rel (%p238) target = $region28
      $region27: #{feature_up_forward.6} parent=11 // pred_region
        _
      $region28: #{feature_up_forward.6} parent=11 // pred_fallthru
        _
      // Predicated region
      $region29: #{feature_up_forward.6} parent=11 // pred_check
        %p241 = pneg %p146
      $region30: #{feature_up_forward.6} parent=11 // pred_check_branch
        %243 = sbr.rel (%p241) target = $region32
      $region31: #{feature_up_forward.6} parent=11 // pred_region
        _
      $region32: #{feature_up_forward.6} parent=11 // pred_fallthru
        _
    $region12: #{feature_up_forward.6} parent=5 // pred_fallthru
      _
    %p244 = scmp.lt.s32.totalorder %s15, 2
    // Predicated region
    $region33: #{feature_up_forward.6} parent=5 // pred_check
      %p245 = pneg %p244
    $region34: #{feature_up_forward.6} parent=5 // pred_check_branch
      %247 = sbr.rel (%p245) target = $region36
    $region35: #{feature_up_forward.6} parent=5 // pred_region
      // Predicated region
      $region37: #{feature_up_forward.6} parent=35 // pred_check
        %p248 = pneg %p35
      $region38: #{feature_up_forward.6} parent=35 // pred_check_branch
        %250 = sbr.rel (%p248) target = $region40
      $region39: #{feature_up_forward.6} parent=35 // pred_region
        %p251 = scmp.lt.s32.totalorder %s15, 1
        %s252 = scalar_select %p251, %s15, 1
        %s253 = smul.addr %s252, 32
        %s254 = smul.addr %s253, 8
        %s255 = scalar_lea.vmem %s0, %s254
      $region40: #{feature_up_forward.6} parent=35 // pred_fallthru
        _
    $region36: #{feature_up_forward.6} parent=5 // pred_fallthru
      _
    %p256 = scmp.le.s32.totalorder 1, %s15
    %p257 = scmp.lt.s32.totalorder %s15, 3
    %p258 = pnand %p256, %p257
    %p259 = pneg %p258
    // Predicated region
    $region41: #{feature_up_forward.6} parent=5 // pred_check
      _
    $region42: #{feature_up_forward.6} parent=5 // pred_check_branch
      %261 = sbr.rel (%p258) target = $region44
    $region43: #{feature_up_forward.6} parent=5 // pred_region
      %s262 = ssub.s32 %s15, 1
      %p263 = scmp.lt.s32.totalorder %s20, 1
      %s264 = scalar_select %p263, %s20, 1
      %s265 = smul.addr %s264, 32
      %s266 = smul.addr %s265, 8
      %s267 = scalar_lea.vmem %s0, %s266
      %p268 = pneg %p41
      %p269 = pneg %p38
      %p270 = pneg %p62
      %p271 = pneg %p59
      %p272 = pneg %p83
      %p273 = pneg %p80
      %p274 = pneg %p104
      %p275 = pneg %p101
      %p276 = pneg %p125
      %p277 = pneg %p122
      %p278 = pneg %p146
      %p279 = pneg %p143
      %p280 = pneg %p172
      %p281 = pneg %p169
      %p282 = scmp.lt.s32.totalorder %s20, 1
      %s283 = scalar_select %p282, %s20, 1
      %s284 = smul.addr %s283, 32
      %s285 = smul.addr %s284, 8
      %s286 = scalar_lea.vmem %s6, %s285
      %p287 = pneg %p193
      %p288 = pneg %p190
      %p289 = pneg %p214
      %p290 = pneg %p211
      %p291 = scmp.lt.s32.totalorder %s20, 1
      %s292 = scalar_select %p291, %s20, 1
      %s293 = smul.addr %s292, 32
      %s294 = smul.addr %s293, 8
      %s295 = scalar_lea.vmem %s0, %s294
      %p296 = scmp.lt.s32.totalorder %s20, 1
      %s297 = scalar_select %p296, %s20, 1
      %s298 = smul.addr %s297, 32
      %s299 = smul.addr %s298, 8
      %s300 = scalar_lea.vmem %s6, %s299
      %p302 = scmp.eq.s32.totalorder %s20, 0
      // Predicated region
      $region45: #{feature_up_forward.6} parent=43 // pred_check
        %p303 = pneg %p302
      $region46: #{feature_up_forward.6} parent=43 // pred_check_branch
        %305 = sbr.rel (%p303) target = $region48
      $region47: #{feature_up_forward.6} parent=43 // pred_region
        %vm306 = vcmask 24576
        %307 = vst.msk [vmem:[%s7] sm:$0x1] %vm306, 0.0
        %308 = vst.msk [vmem:[%s8] sm:$0x1] %vm306, 0.0
      $region48: #{feature_up_forward.6} parent=43 // pred_fallthru
        _
      %v309 = vld [vmem:[%s295] sm:$0xff]
      %v310 = vld [vmem:[%s295 + $0x8] sm:$0xff]
      %v311 = vld [vmem:[%s295 + $0x10] sm:$0xff]
      %v312 = vld [vmem:[%s295 + $0x18] sm:$0xff]
      %v313 = vld [vmem:[%s295 + $0x20] sm:$0xff]
      %v314 = vld [vmem:[%s295 + $0x28] sm:$0xff]
      %v315 = vld [vmem:[%s295 + $0x30] sm:$0xff]
      %v316 = vld [vmem:[%s295 + $0x38] sm:$0xff]
      %v317 = vld [vmem:[%s295 + $0x40] sm:$0xff]
      %v318 = vld [vmem:[%s295 + $0x48] sm:$0xff]
      %v319 = vld [vmem:[%s295 + $0x50] sm:$0xff]
      %v320 = vld [vmem:[%s295 + $0x58] sm:$0xff]
      %v321 = vld [vmem:[%s295 + $0x60] sm:$0xff]
      %v322 = vld [vmem:[%s295 + $0x68] sm:$0xff]
      %v323 = vld [vmem:[%s295 + $0x70] sm:$0xff]
      %v324 = vld [vmem:[%s295 + $0x78] sm:$0xff]
      %v325 = vld [vmem:[%s295 + $0x80] sm:$0xff]
      %v326 = vld [vmem:[%s295 + $0x88] sm:$0xff]
      %v327 = vld [vmem:[%s295 + $0x90] sm:$0xff]
      %v328 = vld [vmem:[%s295 + $0x98] sm:$0xff]
      %v329 = vld [vmem:[%s295 + $0xa0] sm:$0xff]
      %v330 = vld [vmem:[%s295 + $0xa8] sm:$0xff]
      %v331 = vld [vmem:[%s295 + $0xb0] sm:$0xff]
      %v332 = vld [vmem:[%s295 + $0xb8] sm:$0xff]
      %v333 = vld [vmem:[%s295 + $0xc0] sm:$0xff]
      %v334 = vld [vmem:[%s295 + $0xc8] sm:$0xff]
      %v335 = vld [vmem:[%s295 + $0xd0] sm:$0xff]
      %v336 = vld [vmem:[%s295 + $0xd8] sm:$0xff]
      %v337 = vld [vmem:[%s295 + $0xe0] sm:$0xff]
      %v338 = vld [vmem:[%s295 + $0xe8] sm:$0xff]
      %v339 = vld [vmem:[%s295 + $0xf0] sm:$0xff]
      %v340 = vld [vmem:[%s295 + $0xf8] sm:$0xff]
      %v341 = vld [vmem:[%s1] sm:$0x1]
      %v342 = vld [vmem:[%s2] sm:$0x1]
      %v343 = vld [vmem:[%s3] sm:$0x1]
      %v344 = vld [vmem:[%s4] sm:$0x1]
      %v345 = vrcp.pop 512.0
      %v346 = vmul.f32 %v341, %v345
      %v347 = vmul.f32 %v342, %v345
      %v348 = vmul.f32 %v346, %v346
      %v349 = vsub.f32 %v347, %v348
      %v350 = vmax.f32 %v349, 0.0
      %v351 = vadd.f32 %v350, 1e-05
      %v352 = vrsqrt.pop %v351
      %v353 = vmul.f32 %v343, %v352
      %v354 = vmul.f32 %v346, %v353
      %v355 = vsub.f32 %v344, %v354
      %v357 = vlaneseq
      %v358 = vshrl.u32 %v357, 7
      %v359 = vsub.s32 0, %v358
      %v360 = vrot.slane %v353, %v359
      %v362 = vmul.f32 %v309, %v360
      %v363 = vmul.f32 %v310, %v360
      %v364 = vmul.f32 %v311, %v360
      %v365 = vmul.f32 %v312, %v360
      %v366 = vmul.f32 %v313, %v360
      %v367 = vmul.f32 %v314, %v360
      %v368 = vmul.f32 %v315, %v360
      %v369 = vmul.f32 %v316, %v360
      %v370 = vmul.f32 %v317, %v360
      %v371 = vmul.f32 %v318, %v360
      %v372 = vmul.f32 %v319, %v360
      %v373 = vmul.f32 %v320, %v360
      %v374 = vmul.f32 %v321, %v360
      %v375 = vmul.f32 %v322, %v360
      %v376 = vmul.f32 %v323, %v360
      %v377 = vmul.f32 %v324, %v360
      %v378 = vmul.f32 %v325, %v360
      %v379 = vmul.f32 %v326, %v360
      %v380 = vmul.f32 %v327, %v360
      %v381 = vmul.f32 %v328, %v360
      %v382 = vmul.f32 %v329, %v360
      %v383 = vmul.f32 %v330, %v360
      %v384 = vmul.f32 %v331, %v360
      %v385 = vmul.f32 %v332, %v360
      %v386 = vmul.f32 %v333, %v360
      %v387 = vmul.f32 %v334, %v360
      %v388 = vmul.f32 %v335, %v360
      %v389 = vmul.f32 %v336, %v360
      %v390 = vmul.f32 %v337, %v360
      %v391 = vmul.f32 %v338, %v360
      %v392 = vmul.f32 %v339, %v360
      %v393 = vmul.f32 %v340, %v360
      %v395 = vlaneseq
      %v396 = vshrl.u32 %v395, 7
      %v397 = vsub.s32 0, %v396
      %v398 = vrot.slane %v355, %v397
      %v400 = vadd.f32 %v362, %v398
      %v401 = vadd.f32 %v363, %v398
      %v402 = vadd.f32 %v364, %v398
      %v403 = vadd.f32 %v365, %v398
      %v404 = vadd.f32 %v366, %v398
      %v405 = vadd.f32 %v367, %v398
      %v406 = vadd.f32 %v368, %v398
      %v407 = vadd.f32 %v369, %v398
      %v408 = vadd.f32 %v370, %v398
      %v409 = vadd.f32 %v371, %v398
      %v410 = vadd.f32 %v372, %v398
      %v411 = vadd.f32 %v373, %v398
      %v412 = vadd.f32 %v374, %v398
      %v413 = vadd.f32 %v375, %v398
      %v414 = vadd.f32 %v376, %v398
      %v415 = vadd.f32 %v377, %v398
      %v416 = vadd.f32 %v378, %v398
      %v417 = vadd.f32 %v379, %v398
      %v418 = vadd.f32 %v380, %v398
      %v419 = vadd.f32 %v381, %v398
      %v420 = vadd.f32 %v382, %v398
      %v421 = vadd.f32 %v383, %v398
      %v422 = vadd.f32 %v384, %v398
      %v423 = vadd.f32 %v385, %v398
      %v424 = vadd.f32 %v386, %v398
      %v425 = vadd.f32 %v387, %v398
      %v426 = vadd.f32 %v388, %v398
      %v427 = vadd.f32 %v389, %v398
      %v428 = vadd.f32 %v390, %v398
      %v429 = vadd.f32 %v391, %v398
      %v430 = vadd.f32 %v392, %v398
      %v431 = vadd.f32 %v393, %v398
      %v432 = vmax.f32 %v400, 0.0
      %v433 = vmax.f32 %v401, 0.0
      %v434 = vmax.f32 %v402, 0.0
      %v435 = vmax.f32 %v403, 0.0
      %v436 = vmax.f32 %v404, 0.0
      %v437 = vmax.f32 %v405, 0.0
      %v438 = vmax.f32 %v406, 0.0
      %v439 = vmax.f32 %v407, 0.0
      %v440 = vmax.f32 %v408, 0.0
      %v441 = vmax.f32 %v409, 0.0
      %v442 = vmax.f32 %v410, 0.0
      %v443 = vmax.f32 %v411, 0.0
      %v444 = vmax.f32 %v412, 0.0
      %v445 = vmax.f32 %v413, 0.0
      %v446 = vmax.f32 %v414, 0.0
      %v447 = vmax.f32 %v415, 0.0
      %v448 = vmax.f32 %v416, 0.0
      %v449 = vmax.f32 %v417, 0.0
      %v450 = vmax.f32 %v418, 0.0
      %v451 = vmax.f32 %v419, 0.0
      %v452 = vmax.f32 %v420, 0.0
      %v453 = vmax.f32 %v421, 0.0
      %v454 = vmax.f32 %v422, 0.0
      %v455 = vmax.f32 %v423, 0.0
      %v456 = vmax.f32 %v424, 0.0
      %v457 = vmax.f32 %v425, 0.0
      %v458 = vmax.f32 %v426, 0.0
      %v459 = vmax.f32 %v427, 0.0
      %v460 = vmax.f32 %v428, 0.0
      %v461 = vmax.f32 %v429, 0.0
      %v462 = vmax.f32 %v430, 0.0
      %v463 = vmax.f32 %v431, 0.0
      %vm497 = vcmask 1040384
      %v498 = vrot.slane 0.0, 7
      %v499 = vsel %vm497, %v498, %v498
      %v500 = vrot.slane %v432, 7
      %v501 = vrot.slane %v433, 7
      %v502 = vsel %vm497, %v500, %v501
      %v503 = vrot.slane %v434, 7
      %v504 = vrot.slane %v435, 7
      %v505 = vsel %vm497, %v503, %v504
      %v506 = vrot.slane %v436, 7
      %v507 = vrot.slane %v437, 7
      %v508 = vsel %vm497, %v506, %v507
      %v509 = vrot.slane %v438, 7
      %v510 = vrot.slane %v439, 7
      %v511 = vsel %vm497, %v509, %v510
      %v512 = vrot.slane %v440, 7
      %v513 = vrot.slane %v441, 7
      %v514 = vsel %vm497, %v512, %v513
      %v515 = vrot.slane %v442, 7
      %v516 = vrot.slane %v443, 7
      %v517 = vsel %vm497, %v515, %v516
      %v518 = vrot.slane %v444, 7
      %v519 = vrot.slane %v445, 7
      %v520 = vsel %vm497, %v518, %v519
      %v521 = vrot.slane %v446, 7
      %v522 = vrot.slane %v447, 7
      %v523 = vsel %vm497, %v521, %v522
      %v524 = vrot.slane %v448, 7
      %v525 = vrot.slane %v449, 7
      %v526 = vsel %vm497, %v524, %v525
      %v527 = vrot.slane %v450, 7
      %v528 = vrot.slane %v451, 7
      %v529 = vsel %vm497, %v527, %v528
      %v530 = vrot.slane %v452, 7
      %v531 = vrot.slane %v453, 7
      %v532 = vsel %vm497, %v530, %v531
      %v533 = vrot.slane %v454, 7
      %v534 = vrot.slane %v455, 7
      %v535 = vsel %vm497, %v533, %v534
      %v536 = vrot.slane %v456, 7
      %v537 = vrot.slane %v457, 7
      %v538 = vsel %vm497, %v536, %v537
      %v539 = vrot.slane %v458, 7
      %v540 = vrot.slane %v459, 7
      %v541 = vsel %vm497, %v539, %v540
      %v542 = vrot.slane %v460, 7
      %v543 = vrot.slane %v461, 7
      %v544 = vsel %vm497, %v542, %v543
      %v545 = vrot.slane %v462, 7
      %v546 = vrot.slane %v463, 7
      %v547 = vsel %vm497, %v545, %v546
      %v598 = vsel %vm497, 0.0, %v498
      %v599 = vsel %vm497, 0.0, %v500
      %v600 = vsel %vm497, 0.0, %v503
      %v601 = vsel %vm497, 0.0, %v506
      %v602 = vsel %vm497, 0.0, %v509
      %v603 = vsel %vm497, 0.0, %v512
      %v604 = vsel %vm497, 0.0, %v515
      %v605 = vsel %vm497, 0.0, %v518
      %v606 = vsel %vm497, 0.0, %v521
      %v607 = vsel %vm497, 0.0, %v524
      %v608 = vsel %vm497, 0.0, %v527
      %v609 = vsel %vm497, 0.0, %v530
      %v610 = vsel %vm497, 0.0, %v533
      %v611 = vsel %vm497, 0.0, %v536
      %v612 = vsel %vm497, 0.0, %v539
      %v613 = vsel %vm497, 0.0, %v542
      %v614 = vsel %vm497, 0.0, %v545
      %v615 = vsel %vm497, %v498, 0.0
      %v616 = vsel %vm497, %v501, 0.0
      %v617 = vsel %vm497, %v504, 0.0
      %v618 = vsel %vm497, %v507, 0.0
      %v619 = vsel %vm497, %v510, 0.0
      %v620 = vsel %vm497, %v513, 0.0
      %v621 = vsel %vm497, %v516, 0.0
      %v622 = vsel %vm497, %v519, 0.0
      %v623 = vsel %vm497, %v522, 0.0
      %v624 = vsel %vm497, %v525, 0.0
      %v625 = vsel %vm497, %v528, 0.0
      %v626 = vsel %vm497, %v531, 0.0
      %v627 = vsel %vm497, %v534, 0.0
      %v628 = vsel %vm497, %v537, 0.0
      %v629 = vsel %vm497, %v540, 0.0
      %v630 = vsel %vm497, %v543, 0.0
      %v631 = vsel %vm497, %v546, 0.0
      %vm664 = vcmask 1046528
      %v665 = vrot.slane %v598, 1
      %v666 = vrot.slane %v499, 1
      %v667 = vsel %vm664, %v665, %v666
      %v668 = vrot.slane %v615, 1
      %v669 = vsel %vm664, %v666, %v668
      %v670 = vrot.slane %v599, 1
      %v671 = vrot.slane %v502, 1
      %v672 = vsel %vm664, %v670, %v671
      %v673 = vrot.slane %v616, 1
      %v674 = vsel %vm664, %v671, %v673
      %v675 = vrot.slane %v600, 1
      %v676 = vrot.slane %v505, 1
      %v677 = vsel %vm664, %v675, %v676
      %v678 = vrot.slane %v617, 1
      %v679 = vsel %vm664, %v676, %v678
      %v680 = vrot.slane %v601, 1
      %v681 = vrot.slane %v508, 1
      %v682 = vsel %vm664, %v680, %v681
      %v683 = vrot.slane %v618, 1
      %v684 = vsel %vm664, %v681, %v683
      %v685 = vrot.slane %v602, 1
      %v686 = vrot.slane %v511, 1
      %v687 = vsel %vm664, %v685, %v686
      %v688 = vrot.slane %v619, 1
      %v689 = vsel %vm664, %v686, %v688
      %v690 = vrot.slane %v603, 1
      %v691 = vrot.slane %v514, 1
      %v692 = vsel %vm664, %v690, %v691
      %v693 = vrot.slane %v620, 1
      %v694 = vsel %vm664, %v691, %v693
      %v695 = vrot.slane %v604, 1
      %v696 = vrot.slane %v517, 1
      %v697 = vsel %vm664, %v695, %v696
      %v698 = vrot.slane %v621, 1
      %v699 = vsel %vm664, %v696, %v698
      %v700 = vrot.slane %v605, 1
      %v701 = vrot.slane %v520, 1
      %v702 = vsel %vm664, %v700, %v701
      %v703 = vrot.slane %v622, 1
      %v704 = vsel %vm664, %v701, %v703
      %v705 = vrot.slane %v606, 1
      %v706 = vrot.slane %v523, 1
      %v707 = vsel %vm664, %v705, %v706
      %v708 = vrot.slane %v623, 1
      %v709 = vsel %vm664, %v706, %v708
      %v710 = vrot.slane %v607, 1
      %v711 = vrot.slane %v526, 1
      %v712 = vsel %vm664, %v710, %v711
      %v713 = vrot.slane %v624, 1
      %v714 = vsel %vm664, %v711, %v713
      %v715 = vrot.slane %v608, 1
      %v716 = vrot.slane %v529, 1
      %v717 = vsel %vm664, %v715, %v716
      %v718 = vrot.slane %v625, 1
      %v719 = vsel %vm664, %v716, %v718
      %v720 = vrot.slane %v609, 1
      %v721 = vrot.slane %v532, 1
      %v722 = vsel %vm664, %v720, %v721
      %v723 = vrot.slane %v626, 1
      %v724 = vsel %vm664, %v721, %v723
      %v725 = vrot.slane %v610, 1
      %v726 = vrot.slane %v535, 1
      %v727 = vsel %vm664, %v725, %v726
      %v728 = vrot.slane %v627, 1
      %v729 = vsel %vm664, %v726, %v728
      %v730 = vrot.slane %v611, 1
      %v731 = vrot.slane %v538, 1
      %v732 = vsel %vm664, %v730, %v731
      %v733 = vrot.slane %v628, 1
      %v734 = vsel %vm664, %v731, %v733
      %v735 = vrot.slane %v612, 1
      %v736 = vrot.slane %v541, 1
      %v737 = vsel %vm664, %v735, %v736
      %v738 = vrot.slane %v629, 1
      %v739 = vsel %vm664, %v736, %v738
      %v740 = vrot.slane %v613, 1
      %v741 = vrot.slane %v544, 1
      %v742 = vsel %vm664, %v740, %v741
      %v743 = vrot.slane %v630, 1
      %v744 = vsel %vm664, %v741, %v743
      %745 = vrot.lane.b32.xlu0 %v667, 4
      %v746 = vpop.permute.xlu0 %745
      %747 = vrot.lane.b32.xlu0 %v669, 4
      %v748 = vpop.permute.xlu0 %747
      %749 = vrot.lane.b32.xlu0 %v672, 4
      %v750 = vpop.permute.xlu0 %749
      %751 = vrot.lane.b32.xlu0 %v674, 4
      %v752 = vpop.permute.xlu0 %751
      %753 = vrot.lane.b32.xlu0 %v677, 4
      %v754 = vpop.permute.xlu0 %753
      %755 = vrot.lane.b32.xlu0 %v679, 4
      %v756 = vpop.permute.xlu0 %755
      %757 = vrot.lane.b32.xlu0 %v682, 4
      %v758 = vpop.permute.xlu0 %757
      %759 = vrot.lane.b32.xlu0 %v684, 4
      %v760 = vpop.permute.xlu0 %759
      %761 = vrot.lane.b32.xlu0 %v687, 4
      %v762 = vpop.permute.xlu0 %761
      %763 = vrot.lane.b32.xlu0 %v689, 4
      %v764 = vpop.permute.xlu0 %763
      %765 = vrot.lane.b32.xlu0 %v692, 4
      %v766 = vpop.permute.xlu0 %765
      %767 = vrot.lane.b32.xlu0 %v694, 4
      %v768 = vpop.permute.xlu0 %767
      %769 = vrot.lane.b32.xlu0 %v697, 4
      %v770 = vpop.permute.xlu0 %769
      %771 = vrot.lane.b32.xlu0 %v699, 4
      %v772 = vpop.permute.xlu0 %771
      %773 = vrot.lane.b32.xlu0 %v702, 4
      %v774 = vpop.permute.xlu0 %773
      %775 = vrot.lane.b32.xlu0 %v704, 4
      %v776 = vpop.permute.xlu0 %775
      %777 = vrot.lane.b32.xlu0 %v707, 4
      %v778 = vpop.permute.xlu0 %777
      %779 = vrot.lane.b32.xlu0 %v709, 4
      %v780 = vpop.permute.xlu0 %779
      %781 = vrot.lane.b32.xlu0 %v712, 4
      %v782 = vpop.permute.xlu0 %781
      %783 = vrot.lane.b32.xlu0 %v714, 4
      %v784 = vpop.permute.xlu0 %783
      %785 = vrot.lane.b32.xlu0 %v717, 4
      %v786 = vpop.permute.xlu0 %785
      %787 = vrot.lane.b32.xlu0 %v719, 4
      %v788 = vpop.permute.xlu0 %787
      %789 = vrot.lane.b32.xlu0 %v722, 4
      %v790 = vpop.permute.xlu0 %789
      %791 = vrot.lane.b32.xlu0 %v724, 4
      %v792 = vpop.permute.xlu0 %791
      %793 = vrot.lane.b32.xlu0 %v727, 4
      %v794 = vpop.permute.xlu0 %793
      %795 = vrot.lane.b32.xlu0 %v729, 4
      %v796 = vpop.permute.xlu0 %795
      %797 = vrot.lane.b32.xlu0 %v732, 4
      %v798 = vpop.permute.xlu0 %797
      %799 = vrot.lane.b32.xlu0 %v734, 4
      %v800 = vpop.permute.xlu0 %799
      %801 = vrot.lane.b32.xlu0 %v737, 4
      %v802 = vpop.permute.xlu0 %801
      %803 = vrot.lane.b32.xlu0 %v739, 4
      %v804 = vpop.permute.xlu0 %803
      %805 = vrot.lane.b32.xlu0 %v742, 4
      %v806 = vpop.permute.xlu0 %805
      %807 = vrot.lane.b32.xlu0 %v744, 4
      %v808 = vpop.permute.xlu0 %807
      %vm841 = vcmask 1045504
      %v842 = vrot.slane %v598, 2
      %v843 = vrot.slane %v499, 2
      %v844 = vsel %vm841, %v842, %v843
      %v845 = vrot.slane %v615, 2
      %v846 = vsel %vm841, %v843, %v845
      %v847 = vrot.slane %v599, 2
      %v848 = vrot.slane %v502, 2
      %v849 = vsel %vm841, %v847, %v848
      %v850 = vrot.slane %v616, 2
      %v851 = vsel %vm841, %v848, %v850
      %v852 = vrot.slane %v600, 2
      %v853 = vrot.slane %v505, 2
      %v854 = vsel %vm841, %v852, %v853
      %v855 = vrot.slane %v617, 2
      %v856 = vsel %vm841, %v853, %v855
      %v857 = vrot.slane %v601, 2
      %v858 = vrot.slane %v508, 2
      %v859 = vsel %vm841, %v857, %v858
      %v860 = vrot.slane %v618, 2
      %v861 = vsel %vm841, %v858, %v860
      %v862 = vrot.slane %v602, 2
      %v863 = vrot.slane %v511, 2
      %v864 = vsel %vm841, %v862, %v863
      %v865 = vrot.slane %v619, 2
      %v866 = vsel %vm841, %v863, %v865
      %v867 = vrot.slane %v603, 2
      %v868 = vrot.slane %v514, 2
      %v869 = vsel %vm841, %v867, %v868
      %v870 = vrot.slane %v620, 2
      %v871 = vsel %vm841, %v868, %v870
      %v872 = vrot.slane %v604, 2
      %v873 = vrot.slane %v517, 2
      %v874 = vsel %vm841, %v872, %v873
      %v875 = vrot.slane %v621, 2
      %v876 = vsel %vm841, %v873, %v875
      %v877 = vrot.slane %v605, 2
      %v878 = vrot.slane %v520, 2
      %v879 = vsel %vm841, %v877, %v878
      %v880 = vrot.slane %v622, 2
      %v881 = vsel %vm841, %v878, %v880
      %v882 = vrot.slane %v606, 2
      %v883 = vrot.slane %v523, 2
      %v884 = vsel %vm841, %v882, %v883
      %v885 = vrot.slane %v623, 2
      %v886 = vsel %vm841, %v883, %v885
      %v887 = vrot.slane %v607, 2
      %v888 = vrot.slane %v526, 2
      %v889 = vsel %vm841, %v887, %v888
      %v890 = vrot.slane %v624, 2
      %v891 = vsel %vm841, %v888, %v890
      %v892 = vrot.slane %v608, 2
      %v893 = vrot.slane %v529, 2
      %v894 = vsel %vm841, %v892, %v893
      %v895 = vrot.slane %v625, 2
      %v896 = vsel %vm841, %v893, %v895
      %v897 = vrot.slane %v609, 2
      %v898 = vrot.slane %v532, 2
      %v899 = vsel %vm841, %v897, %v898
      %v900 = vrot.slane %v626, 2
      %v901 = vsel %vm841, %v898, %v900
      %v902 = vrot.slane %v610, 2
      %v903 = vrot.slane %v535, 2
      %v904 = vsel %vm841, %v902, %v903
      %v905 = vrot.slane %v627, 2
      %v906 = vsel %vm841, %v903, %v905
      %v907 = vrot.slane %v611, 2
      %v908 = vrot.slane %v538, 2
      %v909 = vsel %vm841, %v907, %v908
      %v910 = vrot.slane %v628, 2
      %v911 = vsel %vm841, %v908, %v910
      %v912 = vrot.slane %v612, 2
      %v913 = vrot.slane %v541, 2
      %v914 = vsel %vm841, %v912, %v913
      %v915 = vrot.slane %v629, 2
      %v916 = vsel %vm841, %v913, %v915
      %v917 = vrot.slane %v613, 2
      %v918 = vrot.slane %v544, 2
      %v919 = vsel %vm841, %v917, %v918
      %v920 = vrot.slane %v630, 2
      %v921 = vsel %vm841, %v918, %v920
      %922 = vrot.lane.b32.xlu0 %v844, 8
      %v923 = vpop.permute.xlu0 %922
      %924 = vrot.lane.b32.xlu0 %v846, 8
      %v925 = vpop.permute.xlu0 %924
      %926 = vrot.lane.b32.xlu0 %v849, 8
      %v927 = vpop.permute.xlu0 %926
      %928 = vrot.lane.b32.xlu0 %v851, 8
      %v929 = vpop.permute.xlu0 %928
      %930 = vrot.lane.b32.xlu0 %v854, 8
      %v931 = vpop.permute.xlu0 %930
      %932 = vrot.lane.b32.xlu0 %v856, 8
      %v933 = vpop.permute.xlu0 %932
      %934 = vrot.lane.b32.xlu0 %v859, 8
      %v935 = vpop.permute.xlu0 %934
      %936 = vrot.lane.b32.xlu0 %v861, 8
      %v937 = vpop.permute.xlu0 %936
      %938 = vrot.lane.b32.xlu0 %v864, 8
      %v939 = vpop.permute.xlu0 %938
      %940 = vrot.lane.b32.xlu0 %v866, 8
      %v941 = vpop.permute.xlu0 %940
      %942 = vrot.lane.b32.xlu0 %v869, 8
      %v943 = vpop.permute.xlu0 %942
      %944 = vrot.lane.b32.xlu0 %v871, 8
      %v945 = vpop.permute.xlu0 %944
      %946 = vrot.lane.b32.xlu0 %v874, 8
      %v947 = vpop.permute.xlu0 %946
      %948 = vrot.lane.b32.xlu0 %v876, 8
      %v949 = vpop.permute.xlu0 %948
      %950 = vrot.lane.b32.xlu0 %v879, 8
      %v951 = vpop.permute.xlu0 %950
      %952 = vrot.lane.b32.xlu0 %v881, 8
      %v953 = vpop.permute.xlu0 %952
      %954 = vrot.lane.b32.xlu0 %v884, 8
      %v955 = vpop.permute.xlu0 %954
      %956 = vrot.lane.b32.xlu0 %v886, 8
      %v957 = vpop.permute.xlu0 %956
      %958 = vrot.lane.b32.xlu0 %v889, 8
      %v959 = vpop.permute.xlu0 %958
      %960 = vrot.lane.b32.xlu0 %v891, 8
      %v961 = vpop.permute.xlu0 %960
      %962 = vrot.lane.b32.xlu0 %v894, 8
      %v963 = vpop.permute.xlu0 %962
      %964 = vrot.lane.b32.xlu0 %v896, 8
      %v965 = vpop.permute.xlu0 %964
      %966 = vrot.lane.b32.xlu0 %v899, 8
      %v967 = vpop.permute.xlu0 %966
      %968 = vrot.lane.b32.xlu0 %v901, 8
      %v969 = vpop.permute.xlu0 %968
      %970 = vrot.lane.b32.xlu0 %v904, 8
      %v971 = vpop.permute.xlu0 %970
      %972 = vrot.lane.b32.xlu0 %v906, 8
      %v973 = vpop.permute.xlu0 %972
      %974 = vrot.lane.b32.xlu0 %v909, 8
      %v975 = vpop.permute.xlu0 %974
      %976 = vrot.lane.b32.xlu0 %v911, 8
      %v977 = vpop.permute.xlu0 %976
      %978 = vrot.lane.b32.xlu0 %v914, 8
      %v979 = vpop.permute.xlu0 %978
      %980 = vrot.lane.b32.xlu0 %v916, 8
      %v981 = vpop.permute.xlu0 %980
      %982 = vrot.lane.b32.xlu0 %v919, 8
      %v983 = vpop.permute.xlu0 %982
      %984 = vrot.lane.b32.xlu0 %v921, 8
      %v985 = vpop.permute.xlu0 %984
      %vm1018 = vcmask 31744
      %v1019 = vsel %vm1018, %v598, %v746
      %v1020 = vsel %vm1018, %v499, %v748
      %v1021 = vsel %vm1018, %v599, %v750
      %v1022 = vsel %vm1018, %v502, %v752
      %v1023 = vsel %vm1018, %v600, %v754
      %v1024 = vsel %vm1018, %v505, %v756
      %v1025 = vsel %vm1018, %v601, %v758
      %v1026 = vsel %vm1018, %v508, %v760
      %v1027 = vsel %vm1018, %v602, %v762
      %v1028 = vsel %vm1018, %v511, %v764
      %v1029 = vsel %vm1018, %v603, %v766
      %v1030 = vsel %vm1018, %v514, %v768
      %v1031 = vsel %vm1018, %v604, %v770
      %v1032 = vsel %vm1018, %v517, %v772
      %v1033 = vsel %vm1018, %v605, %v774
      %v1034 = vsel %vm1018, %v520, %v776
      %v1035 = vsel %vm1018, %v606, %v778
      %v1036 = vsel %vm1018, %v523, %v780
      %v1037 = vsel %vm1018, %v607, %v782
      %v1038 = vsel %vm1018, %v526, %v784
      %v1039 = vsel %vm1018, %v608, %v786
      %v1040 = vsel %vm1018, %v529, %v788
      %v1041 = vsel %vm1018, %v609, %v790
      %v1042 = vsel %vm1018, %v532, %v792
      %v1043 = vsel %vm1018, %v610, %v794
      %v1044 = vsel %vm1018, %v535, %v796
      %v1045 = vsel %vm1018, %v611, %v798
      %v1046 = vsel %vm1018, %v538, %v800
      %v1047 = vsel %vm1018, %v612, %v802
      %v1048 = vsel %vm1018, %v541, %v804
      %v1049 = vsel %vm1018, %v613, %v806
      %v1050 = vsel %vm1018, %v544, %v808
      %vm1051 = vcmask 64512
      %v1052 = vsel %vm1051, %v1019, %v923
      %v1053 = vsel %vm1051, %v1020, %v925
      %v1054 = vsel %vm1051, %v1021, %v927
      %v1055 = vsel %vm1051, %v1022, %v929
      %v1056 = vsel %vm1051, %v1023, %v931
      %v1057 = vsel %vm1051, %v1024, %v933
      %v1058 = vsel %vm1051, %v1025, %v935
      %v1059 = vsel %vm1051, %v1026, %v937
      %v1060 = vsel %vm1051, %v1027, %v939
      %v1061 = vsel %vm1051, %v1028, %v941
      %v1062 = vsel %vm1051, %v1029, %v943
      %v1063 = vsel %vm1051, %v1030, %v945
      %v1064 = vsel %vm1051, %v1031, %v947
      %v1065 = vsel %vm1051, %v1032, %v949
      %v1066 = vsel %vm1051, %v1033, %v951
      %v1067 = vsel %vm1051, %v1034, %v953
      %v1068 = vsel %vm1051, %v1035, %v955
      %v1069 = vsel %vm1051, %v1036, %v957
      %v1070 = vsel %vm1051, %v1037, %v959
      %v1071 = vsel %vm1051, %v1038, %v961
      %v1072 = vsel %vm1051, %v1039, %v963
      %v1073 = vsel %vm1051, %v1040, %v965
      %v1074 = vsel %vm1051, %v1041, %v967
      %v1075 = vsel %vm1051, %v1042, %v969
      %v1076 = vsel %vm1051, %v1043, %v971
      %v1077 = vsel %vm1051, %v1044, %v973
      %v1078 = vsel %vm1051, %v1045, %v975
      %v1079 = vsel %vm1051, %v1046, %v977
      %v1080 = vsel %vm1051, %v1047, %v979
      %v1081 = vsel %vm1051, %v1048, %v981
      %v1082 = vsel %vm1051, %v1049, %v983
      %v1083 = vsel %vm1051, %v1050, %v985
      %v1084 = vpack.c.bf16 %v1053, %v1052
      %v1085 = vpack.c.bf16 %v1055, %v1054
      %v1086 = vpack.c.bf16 %v1057, %v1056
      %v1087 = vpack.c.bf16 %v1059, %v1058
      %v1088 = vpack.c.bf16 %v1061, %v1060
      %v1089 = vpack.c.bf16 %v1063, %v1062
      %v1090 = vpack.c.bf16 %v1065, %v1064
      %v1091 = vpack.c.bf16 %v1067, %v1066
      %v1092 = vpack.c.bf16 %v1069, %v1068
      %v1093 = vpack.c.bf16 %v1071, %v1070
      %v1094 = vpack.c.bf16 %v1073, %v1072
      %v1095 = vpack.c.bf16 %v1075, %v1074
      %v1096 = vpack.c.bf16 %v1077, %v1076
      %v1097 = vpack.c.bf16 %v1079, %v1078
      %v1098 = vpack.c.bf16 %v1081, %v1080
      %v1099 = vpack.c.bf16 %v1083, %v1082
      %v1100 = vld [vmem:[%s5] sm:$0xf]
      %v1101 = vld [vmem:[%s5 + $0x4] sm:$0x3]
      %v1104 = vrot.slane %v614, 1
      %v1105 = vrot.slane %v547, 1
      %v1106 = vsel %vm664, %v1104, %v1105
      %v1107 = vrot.slane %v631, 1
      %v1108 = vsel %vm664, %v1105, %v1107
      %1109 = vrot.lane.b32.xlu0 %v1106, 4
      %v1110 = vpop.permute.xlu0 %1109
      %1111 = vrot.lane.b32.xlu0 %v1108, 4
      %v1112 = vpop.permute.xlu0 %1111
      %v1115 = vrot.slane %v614, 2
      %v1116 = vrot.slane %v547, 2
      %v1117 = vsel %vm841, %v1115, %v1116
      %v1118 = vrot.slane %v631, 2
      %v1119 = vsel %vm841, %v1116, %v1118
      %1120 = vrot.lane.b32.xlu0 %v1117, 8
      %v1121 = vpop.permute.xlu0 %1120
      %1122 = vrot.lane.b32.xlu0 %v1119, 8
      %v1123 = vpop.permute.xlu0 %1122
      %v1126 = vsel %vm1018, %v614, %v1110
      %v1127 = vsel %vm1018, %v547, %v1112
      %v1128 = vsel %vm1051, %v1126, %v1121
      %v1129 = vsel %vm1051, %v1127, %v1123
      %v1130 = vpack.c.bf16 %v1129, %v1128
      %s1131 = scalar_lea.vmem %s5, 8
      %v1132 = vld [vmem:[%s1131] sm:$0xf]
      %v1133 = vld [vmem:[%s1131 + $0x4] sm:$0x3]
      %v1136 = vunpack.c.l.b16 %v1132
      %v1137 = vunpack.c.l.b16 %v1133
      %v1138 = vpack.c.b16 %v1137, %v1136
      %vm1139 = vcmask 97280
      %v1141 = vsel %vm1139, %v1085, 0
      %v1144 = vsel %vm1139, %v1086, 0
      %v1147 = vsel %vm1139, %v1087, 0
      %v1150 = vsel %vm1139, %v1088, 0
      %v1153 = vsel %vm1139, %v1089, 0
      %v1156 = vsel %vm1139, %v1090, 0
      %v1159 = vsel %vm1139, %v1091, 0
      %v1162 = vsel %vm1139, %v1092, 0
      %v1165 = vsel %vm1139, %v1093, 0
      %v1168 = vsel %vm1139, %v1094, 0
      %v1171 = vsel %vm1139, %v1095, 0
      %v1174 = vsel %vm1139, %v1096, 0
      %v1177 = vsel %vm1139, %v1097, 0
      %v1180 = vsel %vm1139, %v1098, 0
      %v1183 = vsel %vm1139, %v1099, 0
      %v1186 = vsel %vm1139, %v1130, 0
      %v1189 = vsel %vm841, %v1138, 0
      %1191 = vmatprep.subr.bf16.mxu0 0
      %1192 = vmatpush1.bf16.msra.mxu0 %v1189
      %1193 = vmatprep.subr.bf16.mxu0 0
      %1194 = vmatpush1.bf16.msra.mxu0 0
      %1195 = vmatprep.subr.bf16.mxu0 0
      %1196 = vmatpush1.bf16.msra.mxu0 0
      %1197 = vmatprep.subr.bf16.mxu0 0
      %1198 = vmatpush1.bf16.msra.mxu0 0
      %1199 = vmatprep.subr.bf16.mxu0 0
      %1200 = vmatpush1.bf16.msra.mxu0 0
      %1201 = vmatprep.subr.bf16.mxu0 0
      %1202 = vmatpush1.bf16.msra.mxu0 0
      %1203 = vmatprep.subr.bf16.mxu0 0
      %1204 = vmatpush1.bf16.msra.mxu0 0
      %1205 = vmatprep.subr.bf16.mxu0 0
      %1206 = vmatpush1.bf16.msra.mxu0 0
      %1207 = vmatprep.subr.bf16.mxu0 0
      %1208 = vmatpush1.bf16.msra.mxu0 0
      %1209 = vmatprep.subr.bf16.mxu0 0
      %1210 = vmatpush1.bf16.msra.mxu0 0
      %1211 = vmatprep.subr.bf16.mxu0 0
      %1212 = vmatpush1.bf16.msra.mxu0 0
      %1213 = vmatprep.subr.bf16.mxu0 0
      %1214 = vmatpush1.bf16.msra.mxu0 0
      %1215 = vmatprep.subr.bf16.mxu0 0
      %1216 = vmatpush1.bf16.msra.mxu0 0
      %1217 = vmatprep.subr.bf16.mxu0 0
      %1218 = vmatpush1.bf16.msra.mxu0 0
      %1219 = vmatprep.subr.bf16.mxu0 0
      %1220 = vmatpush1.bf16.msra.mxu0 0
      %1221 = vmatprep.subr.bf16.mxu0 0
      %1222 = vmatpush1.bf16.msra.mxu0 0
      %1223 = vmatprep.mubr.bf16.mxu0 0
      %1224 = vmatmul.mubr.bf16.gmra.mrb[0].mxu0 %v1141
      %v1225 = vpop.f32.mrb[0].mxu0
      %v1226 = vadd.f32 0.0, %v1225
      %v1227 = vpop.f32.mrb[0].mxu0
      %v1228 = vpop.f32.mrb[0].mxu0
      %v1229 = vadd.f32 0.0, %v1228
      %v1230 = vpop.f32.mrb[0].mxu0
      %1231 = vmatprep.mubr.bf16.mxu0 0
      %1232 = vmatmul.mubr.bf16.gmra.mrb[0].mxu0 %v1144
      %v1233 = vpop.f32.mrb[0].mxu0
      %v1234 = vadd.f32 0.0, %v1233
      %v1235 = vpop.f32.mrb[0].mxu0
      %v1236 = vpop.f32.mrb[0].mxu0
      %v1237 = vadd.f32 0.0, %v1236
      %v1238 = vpop.f32.mrb[0].mxu0
      %1239 = vmatprep.mubr.bf16.mxu0 0
      %1240 = vmatmul.mubr.bf16.gmra.mrb[0].mxu0 %v1147
      %v1241 = vpop.f32.mrb[0].mxu0
      %v1242 = vadd.f32 0.0, %v1241
      %v1243 = vpop.f32.mrb[0].mxu0
      %v1244 = vpop.f32.mrb[0].mxu0
      %v1245 = vadd.f32 0.0, %v1244
      %v1246 = vpop.f32.mrb[0].mxu0
      %1247 = vmatprep.mubr.bf16.mxu0 0
      %1248 = vmatmul.mubr.bf16.gmra.mrb[0].mxu0 %v1150
      %v1249 = vpop.f32.mrb[0].mxu0
      %v1250 = vadd.f32 0.0, %v1249
      %v1251 = vpop.f32.mrb[0].mxu0
      %v1252 = vpop.f32.mrb[0].mxu0
      %v1253 = vadd.f32 0.0, %v1252
      %v1254 = vpop.f32.mrb[0].mxu0
      %1255 = vmatprep.mubr.bf16.mxu0 0
      %1256 = vmatmul.mubr.bf16.gmra.mrb[0].mxu0 %v1153
      %v1257 = vpop.f32.mrb[0].mxu0
      %v1258 = vadd.f32 0.0, %v1257
      %v1259 = vpop.f32.mrb[0].mxu0
      %v1260 = vpop.f32.mrb[0].mxu0
      %v1261 = vadd.f32 0.0, %v1260
      %v1262 = vpop.f32.mrb[0].mxu0
      %1263 = vmatprep.mubr.bf16.mxu0 0
      %1264 = vmatmul.mubr.bf16.gmra.mrb[0].mxu0 %v1156
      %v1265 = vpop.f32.mrb[0].mxu0
      %v1266 = vadd.f32 0.0, %v1265
      %v1267 = vpop.f32.mrb[0].mxu0
      %v1268 = vpop.f32.mrb[0].mxu0
      %v1269 = vadd.f32 0.0, %v1268
      %v1270 = vpop.f32.mrb[0].mxu0
      %1271 = vmatprep.mubr.bf16.mxu0 0
      %1272 = vmatmul.mubr.bf16.gmra.mrb[0].mxu0 %v1159
      %v1273 = vpop.f32.mrb[0].mxu0
      %v1274 = vadd.f32 0.0, %v1273
      %v1275 = vpop.f32.mrb[0].mxu0
      %v1276 = vpop.f32.mrb[0].mxu0
      %v1277 = vadd.f32 0.0, %v1276
      %v1278 = vpop.f32.mrb[0].mxu0
      %1279 = vmatprep.mubr.bf16.mxu0 0
      %1280 = vmatmul.mubr.bf16.gmra.mrb[0].mxu0 %v1162
      %v1281 = vpop.f32.mrb[0].mxu0
      %v1282 = vadd.f32 0.0, %v1281
      %v1283 = vpop.f32.mrb[0].mxu0
      %v1284 = vpop.f32.mrb[0].mxu0
      %v1285 = vadd.f32 0.0, %v1284
      %v1286 = vpop.f32.mrb[0].mxu0
      %1287 = vmatprep.mubr.bf16.mxu0 0
      %1288 = vmatmul.mubr.bf16.gmra.mrb[0].mxu0 %v1165
      %v1289 = vpop.f32.mrb[0].mxu0
      %v1290 = vadd.f32 0.0, %v1289
      %v1291 = vpop.f32.mrb[0].mxu0
      %v1292 = vpop.f32.mrb[0].mxu0
      %v1293 = vadd.f32 0.0, %v1292
      %v1294 = vpop.f32.mrb[0].mxu0
      %1295 = vmatprep.mubr.bf16.mxu0 0
      %1296 = vmatmul.mubr.bf16.gmra.mrb[0].mxu0 %v1168
      %v1297 = vpop.f32.mrb[0].mxu0
      %v1298 = vadd.f32 0.0, %v1297
      %v1299 = vpop.f32.mrb[0].mxu0
      %v1300 = vpop.f32.mrb[0].mxu0
      %v1301 = vadd.f32 0.0, %v1300
      %v1302 = vpop.f32.mrb[0].mxu0
      %1303 = vmatprep.mubr.bf16.mxu0 0
      %1304 = vmatmul.mubr.bf16.gmra.mrb[0].mxu0 %v1171
      %v1305 = vpop.f32.mrb[0].mxu0
      %v1306 = vadd.f32 0.0, %v1305
      %v1307 = vpop.f32.mrb[0].mxu0
      %v1308 = vpop.f32.mrb[0].mxu0
      %v1309 = vadd.f32 0.0, %v1308
      %v1310 = vpop.f32.mrb[0].mxu0
      %1311 = vmatprep.mubr.bf16.mxu0 0
      %1312 = vmatmul.mubr.bf16.gmra.mrb[0].mxu0 %v1174
      %v1313 = vpop.f32.mrb[0].mxu0
      %v1314 = vadd.f32 0.0, %v1313
      %v1315 = vpop.f32.mrb[0].mxu0
      %v1316 = vpop.f32.mrb[0].mxu0
      %v1317 = vadd.f32 0.0, %v1316
      %v1318 = vpop.f32.mrb[0].mxu0
      %1319 = vmatprep.mubr.bf16.mxu0 0
      %1320 = vmatmul.mubr.bf16.gmra.mrb[0].mxu0 %v1177
      %v1321 = vpop.f32.mrb[0].mxu0
      %v1322 = vadd.f32 0.0, %v1321
      %v1323 = vpop.f32.mrb[0].mxu0
      %v1324 = vpop.f32.mrb[0].mxu0
      %v1325 = vadd.f32 0.0, %v1324
      %v1326 = vpop.f32.mrb[0].mxu0
      %1327 = vmatprep.mubr.bf16.mxu0 0
      %1328 = vmatmul.mubr.bf16.gmra.mrb[0].mxu0 %v1180
      %v1329 = vpop.f32.mrb[0].mxu0
      %v1330 = vadd.f32 0.0, %v1329
      %v1331 = vpop.f32.mrb[0].mxu0
      %v1332 = vpop.f32.mrb[0].mxu0
      %v1333 = vadd.f32 0.0, %v1332
      %v1334 = vpop.f32.mrb[0].mxu0
      %1335 = vmatprep.mubr.bf16.mxu0 0
      %1336 = vmatmul.mubr.bf16.gmra.mrb[0].mxu0 %v1183
      %v1337 = vpop.f32.mrb[0].mxu0
      %v1338 = vadd.f32 0.0, %v1337
      %v1339 = vpop.f32.mrb[0].mxu0
      %v1340 = vpop.f32.mrb[0].mxu0
      %v1341 = vadd.f32 0.0, %v1340
      %v1342 = vpop.f32.mrb[0].mxu0
      %1343 = vmatprep.mubr.bf16.mxu0 0
      %1344 = vmatmul.mubr.bf16.gmra.mrb[0].mxu0 %v1186
      %v1345 = vpop.f32.mrb[0].mxu0
      %v1346 = vadd.f32 0.0, %v1345
      %v1347 = vpop.f32.mrb[0].mxu0
      %v1348 = vpop.f32.mrb[0].mxu0
      %v1349 = vadd.f32 0.0, %v1348
      %v1350 = vpop.f32.mrb[0].mxu0
      %1351 = vdwg.mxu0
      %v1354 = vunpack.c.l.b16 %v1100
      %v1355 = vunpack.c.l.b16 %v1101
      %v1356 = vpack.c.b16 %v1355, %v1354
      %v1358 = vsel %vm1139, %v1084, 0
      %v1361 = vsel %vm841, %v1356, 0
      %1363 = vmatprep.subr.bf16.mxu0 0
      %1364 = vmatpush1.bf16.msra.mxu0 %v1361
      %1365 = vmatprep.subr.bf16.mxu0 0
      %1366 = vmatpush1.bf16.msra.mxu0 0
      %1367 = vmatprep.subr.bf16.mxu0 0
      %1368 = vmatpush1.bf16.msra.mxu0 0
      %1369 = vmatprep.subr.bf16.mxu0 0
      %1370 = vmatpush1.bf16.msra.mxu0 0
      %1371 = vmatprep.subr.bf16.mxu0 0
      %1372 = vmatpush1.bf16.msra.mxu0 0
      %1373 = vmatprep.subr.bf16.mxu0 0
      %1374 = vmatpush1.bf16.msra.mxu0 0
      %1375 = vmatprep.subr.bf16.mxu0 0
      %1376 = vmatpush1.bf16.msra.mxu0 0
      %1377 = vmatprep.subr.bf16.mxu0 0
      %1378 = vmatpush1.bf16.msra.mxu0 0
      %1379 = vmatprep.subr.bf16.mxu0 0
      %1380 = vmatpush1.bf16.msra.mxu0 0
      %1381 = vmatprep.subr.bf16.mxu0 0
      %1382 = vmatpush1.bf16.msra.mxu0 0
      %1383 = vmatprep.subr.bf16.mxu0 0
      %1384 = vmatpush1.bf16.msra.mxu0 0
      %1385 = vmatprep.subr.bf16.mxu0 0
      %1386 = vmatpush1.bf16.msra.mxu0 0
      %1387 = vmatprep.subr.bf16.mxu0 0
      %1388 = vmatpush1.bf16.msra.mxu0 0
      %1389 = vmatprep.subr.bf16.mxu0 0
      %1390 = vmatpush1.bf16.msra.mxu0 0
      %1391 = vmatprep.subr.bf16.mxu0 0
      %1392 = vmatpush1.bf16.msra.mxu0 0
      %1393 = vmatprep.subr.bf16.mxu0 0
      %1394 = vmatpush1.bf16.msra.mxu0 0
      %1395 = vmatprep.mubr.bf16.mxu0 0
      %1396 = vmatmul.mubr.bf16.gmra.mrb[0].mxu0 %v1358
      %v1397 = vpop.f32.mrb[0].mxu0
      %v1398 = vadd.f32 %v1226, %v1397
      %v1399 = vpop.f32.mrb[0].mxu0
      %v1400 = vpop.f32.mrb[0].mxu0
      %v1401 = vadd.f32 %v1229, %v1400
      %v1402 = vpop.f32.mrb[0].mxu0
      %1403 = vmatprep.mubr.bf16.mxu0 0
      %1404 = vmatmul.mubr.bf16.gmra.mrb[0].mxu0 %v1141
      %v1405 = vpop.f32.mrb[0].mxu0
      %v1406 = vadd.f32 %v1234, %v1405
      %v1407 = vpop.f32.mrb[0].mxu0
      %v1408 = vpop.f32.mrb[0].mxu0
      %v1409 = vadd.f32 %v1237, %v1408
      %v1410 = vpop.f32.mrb[0].mxu0
      %1411 = vmatprep.mubr.bf16.mxu0 0
      %1412 = vmatmul.mubr.bf16.gmra.mrb[0].mxu0 %v1144
      %v1413 = vpop.f32.mrb[0].mxu0
      %v1414 = vadd.f32 %v1242, %v1413
      %v1415 = vpop.f32.mrb[0].mxu0
      %v1416 = vpop.f32.mrb[0].mxu0
      %v1417 = vadd.f32 %v1245, %v1416
      %v1418 = vpop.f32.mrb[0].mxu0
      %1419 = vmatprep.mubr.bf16.mxu0 0
      %1420 = vmatmul.mubr.bf16.gmra.mrb[0].mxu0 %v1147
      %v1421 = vpop.f32.mrb[0].mxu0
      %v1422 = vadd.f32 %v1250, %v1421
      %v1423 = vpop.f32.mrb[0].mxu0
      %v1424 = vpop.f32.mrb[0].mxu0
      %v1425 = vadd.f32 %v1253, %v1424
      %v1426 = vpop.f32.mrb[0].mxu0
      %1427 = vmatprep.mubr.bf16.mxu0 0
      %1428 = vmatmul.mubr.bf16.gmra.mrb[0].mxu0 %v1150
      %v1429 = vpop.f32.mrb[0].mxu0
      %v1430 = vadd.f32 %v1258, %v1429
      %v1431 = vpop.f32.mrb[0].mxu0
      %v1432 = vpop.f32.mrb[0].mxu0
      %v1433 = vadd.f32 %v1261, %v1432
      %v1434 = vpop.f32.mrb[0].mxu0
      %1435 = vmatprep.mubr.bf16.mxu0 0
      %1436 = vmatmul.mubr.bf16.gmra.mrb[0].mxu0 %v1153
      %v1437 = vpop.f32.mrb[0].mxu0
      %v1438 = vadd.f32 %v1266, %v1437
      %v1439 = vpop.f32.mrb[0].mxu0
      %v1440 = vpop.f32.mrb[0].mxu0
      %v1441 = vadd.f32 %v1269, %v1440
      %v1442 = vpop.f32.mrb[0].mxu0
      %1443 = vmatprep.mubr.bf16.mxu0 0
      %1444 = vmatmul.mubr.bf16.gmra.mrb[0].mxu0 %v1156
      %v1445 = vpop.f32.mrb[0].mxu0
      %v1446 = vadd.f32 %v1274, %v1445
      %v1447 = vpop.f32.mrb[0].mxu0
      %v1448 = vpop.f32.mrb[0].mxu0
      %v1449 = vadd.f32 %v1277, %v1448
      %v1450 = vpop.f32.mrb[0].mxu0
      %1451 = vmatprep.mubr.bf16.mxu0 0
      %1452 = vmatmul.mubr.bf16.gmra.mrb[0].mxu0 %v1159
      %v1453 = vpop.f32.mrb[0].mxu0
      %v1454 = vadd.f32 %v1282, %v1453
      %v1455 = vpop.f32.mrb[0].mxu0
      %v1456 = vpop.f32.mrb[0].mxu0
      %v1457 = vadd.f32 %v1285, %v1456
      %v1458 = vpop.f32.mrb[0].mxu0
      %1459 = vmatprep.mubr.bf16.mxu0 0
      %1460 = vmatmul.mubr.bf16.gmra.mrb[0].mxu0 %v1162
      %v1461 = vpop.f32.mrb[0].mxu0
      %v1462 = vadd.f32 %v1290, %v1461
      %v1463 = vpop.f32.mrb[0].mxu0
      %v1464 = vpop.f32.mrb[0].mxu0
      %v1465 = vadd.f32 %v1293, %v1464
      %v1466 = vpop.f32.mrb[0].mxu0
      %1467 = vmatprep.mubr.bf16.mxu0 0
      %1468 = vmatmul.mubr.bf16.gmra.mrb[0].mxu0 %v1165
      %v1469 = vpop.f32.mrb[0].mxu0
      %v1470 = vadd.f32 %v1298, %v1469
      %v1471 = vpop.f32.mrb[0].mxu0
      %v1472 = vpop.f32.mrb[0].mxu0
      %v1473 = vadd.f32 %v1301, %v1472
      %v1474 = vpop.f32.mrb[0].mxu0
      %1475 = vmatprep.mubr.bf16.mxu0 0
      %1476 = vmatmul.mubr.bf16.gmra.mrb[0].mxu0 %v1168
      %v1477 = vpop.f32.mrb[0].mxu0
      %v1478 = vadd.f32 %v1306, %v1477
      %v1479 = vpop.f32.mrb[0].mxu0
      %v1480 = vpop.f32.mrb[0].mxu0
      %v1481 = vadd.f32 %v1309, %v1480
      %v1482 = vpop.f32.mrb[0].mxu0
      %1483 = vmatprep.mubr.bf16.mxu0 0
      %1484 = vmatmul.mubr.bf16.gmra.mrb[0].mxu0 %v1171
      %v1485 = vpop.f32.mrb[0].mxu0
      %v1486 = vadd.f32 %v1314, %v1485
      %v1487 = vpop.f32.mrb[0].mxu0
      %v1488 = vpop.f32.mrb[0].mxu0
      %v1489 = vadd.f32 %v1317, %v1488
      %v1490 = vpop.f32.mrb[0].mxu0
      %1491 = vmatprep.mubr.bf16.mxu0 0
      %1492 = vmatmul.mubr.bf16.gmra.mrb[0].mxu0 %v1174
      %v1493 = vpop.f32.mrb[0].mxu0
      %v1494 = vadd.f32 %v1322, %v1493
      %v1495 = vpop.f32.mrb[0].mxu0
      %v1496 = vpop.f32.mrb[0].mxu0
      %v1497 = vadd.f32 %v1325, %v1496
      %v1498 = vpop.f32.mrb[0].mxu0
      %1499 = vmatprep.mubr.bf16.mxu0 0
      %1500 = vmatmul.mubr.bf16.gmra.mrb[0].mxu0 %v1177
      %v1501 = vpop.f32.mrb[0].mxu0
      %v1502 = vadd.f32 %v1330, %v1501
      %v1503 = vpop.f32.mrb[0].mxu0
      %v1504 = vpop.f32.mrb[0].mxu0
      %v1505 = vadd.f32 %v1333, %v1504
      %v1506 = vpop.f32.mrb[0].mxu0
      %1507 = vmatprep.mubr.bf16.mxu0 0
      %1508 = vmatmul.mubr.bf16.gmra.mrb[0].mxu0 %v1180
      %v1509 = vpop.f32.mrb[0].mxu0
      %v1510 = vadd.f32 %v1338, %v1509
      %v1511 = vpop.f32.mrb[0].mxu0
      %v1512 = vpop.f32.mrb[0].mxu0
      %v1513 = vadd.f32 %v1341, %v1512
      %v1514 = vpop.f32.mrb[0].mxu0
      %1515 = vmatprep.mubr.bf16.mxu0 0
      %1516 = vmatmul.mubr.bf16.gmra.mrb[0].mxu0 %v1183
      %v1517 = vpop.f32.mrb[0].mxu0
      %v1518 = vadd.f32 %v1346, %v1517
      %v1519 = vpop.f32.mrb[0].mxu0
      %v1520 = vpop.f32.mrb[0].mxu0
      %v1521 = vadd.f32 %v1349, %v1520
      %v1522 = vpop.f32.mrb[0].mxu0
      %1523 = vdwg.mxu0
      %s1524 = scalar_lea.vmem %s5, 16
      %v1525 = vld [vmem:[%s1524] sm:$0xf]
      %v1526 = vld [vmem:[%s1524 + $0x4] sm:$0x3]
      %v1529 = vunpack.c.l.b16 %v1525
      %v1530 = vunpack.c.l.b16 %v1526
      %v1531 = vpack.c.b16 %v1530, %v1529
      %v1533 = vsel %vm841, %v1531, 0
      %1535 = vmatprep.subr.bf16.mxu0 0
      %1536 = vmatpush1.bf16.msra.mxu0 %v1533
      %1537 = vmatprep.subr.bf16.mxu0 0
      %1538 = vmatpush1.bf16.msra.mxu0 0
      %1539 = vmatprep.subr.bf16.mxu0 0
      %1540 = vmatpush1.bf16.msra.mxu0 0
      %1541 = vmatprep.subr.bf16.mxu0 0
      %1542 = vmatpush1.bf16.msra.mxu0 0
      %1543 = vmatprep.subr.bf16.mxu0 0
      %1544 = vmatpush1.bf16.msra.mxu0 0
      %1545 = vmatprep.subr.bf16.mxu0 0
      %1546 = vmatpush1.bf16.msra.mxu0 0
      %1547 = vmatprep.subr.bf16.mxu0 0
      %1548 = vmatpush1.bf16.msra.mxu0 0
      %1549 = vmatprep.subr.bf16.mxu0 0
      %1550 = vmatpush1.bf16.msra.mxu0 0
      %1551 = vmatprep.subr.bf16.mxu0 0
      %1552 = vmatpush1.bf16.msra.mxu0 0
      %1553 = vmatprep.subr.bf16.mxu0 0
      %1554 = vmatpush1.bf16.msra.mxu0 0
      %1555 = vmatprep.subr.bf16.mxu0 0
      %1556 = vmatpush1.bf16.msra.mxu0 0
      %1557 = vmatprep.subr.bf16.mxu0 0
      %1558 = vmatpush1.bf16.msra.mxu0 0
      %1559 = vmatprep.subr.bf16.mxu0 0
      %1560 = vmatpush1.bf16.msra.mxu0 0
      %1561 = vmatprep.subr.bf16.mxu0 0
      %1562 = vmatpush1.bf16.msra.mxu0 0
      %1563 = vmatprep.subr.bf16.mxu0 0
      %1564 = vmatpush1.bf16.msra.mxu0 0
      %1565 = vmatprep.subr.bf16.mxu0 0
      %1566 = vmatpush1.bf16.msra.mxu0 0
      %1567 = vmatprep.mubr.bf16.mxu0 0
      %1568 = vmatmul.mubr.bf16.gmra.mrb[0].mxu0 %v1144
      %v1569 = vpop.f32.mrb[0].mxu0
      %v1570 = vadd.f32 0.0, %v1569
      %v1571 = vpop.f32.mrb[0].mxu0
      %v1572 = vpop.f32.mrb[0].mxu0
      %v1573 = vadd.f32 0.0, %v1572
      %v1574 = vpop.f32.mrb[0].mxu0
      %1575 = vmatprep.mubr.bf16.mxu0 0
      %1576 = vmatmul.mubr.bf16.gmra.mrb[0].mxu0 %v1147
      %v1577 = vpop.f32.mrb[0].mxu0
      %v1578 = vadd.f32 0.0, %v1577
      %v1579 = vpop.f32.mrb[0].mxu0
      %v1580 = vpop.f32.mrb[0].mxu0
      %v1581 = vadd.f32 0.0, %v1580
      %v1582 = vpop.f32.mrb[0].mxu0
      %1583 = vmatprep.mubr.bf16.mxu0 0
      %1584 = vmatmul.mubr.bf16.gmra.mrb[0].mxu0 %v1150
      %v1585 = vpop.f32.mrb[0].mxu0
      %v1586 = vadd.f32 0.0, %v1585
      %v1587 = vpop.f32.mrb[0].mxu0
      %v1588 = vpop.f32.mrb[0].mxu0
      %v1589 = vadd.f32 0.0, %v1588
      %v1590 = vpop.f32.mrb[0].mxu0
      %1591 = vmatprep.mubr.bf16.mxu0 0
      %1592 = vmatmul.mubr.bf16.gmra.mrb[0].mxu0 %v1153
      %v1593 = vpop.f32.mrb[0].mxu0
      %v1594 = vadd.f32 0.0, %v1593
      %v1595 = vpop.f32.mrb[0].mxu0
      %v1596 = vpop.f32.mrb[0].mxu0
      %v1597 = vadd.f32 0.0, %v1596
      %v1598 = vpop.f32.mrb[0].mxu0
      %1599 = vmatprep.mubr.bf16.mxu0 0
      %1600 = vmatmul.mubr.bf16.gmra.mrb[0].mxu0 %v1156
      %v1601 = vpop.f32.mrb[0].mxu0
      %v1602 = vadd.f32 0.0, %v1601
      %v1603 = vpop.f32.mrb[0].mxu0
      %v1604 = vpop.f32.mrb[0].mxu0
      %v1605 = vadd.f32 0.0, %v1604
      %v1606 = vpop.f32.mrb[0].mxu0
      %1607 = vmatprep.mubr.bf16.mxu0 0
      %1608 = vmatmul.mubr.bf16.gmra.mrb[0].mxu0 %v1159
      %v1609 = vpop.f32.mrb[0].mxu0
      %v1610 = vadd.f32 0.0, %v1609
      %v1611 = vpop.f32.mrb[0].mxu0
      %v1612 = vpop.f32.mrb[0].mxu0
      %v1613 = vadd.f32 0.0, %v1612
      %v1614 = vpop.f32.mrb[0].mxu0
      %1615 = vmatprep.mubr.bf16.mxu0 0
      %1616 = vmatmul.mubr.bf16.gmra.mrb[0].mxu0 %v1162
      %v1617 = vpop.f32.mrb[0].mxu0
      %v1618 = vadd.f32 0.0, %v1617
      %v1619 = vpop.f32.mrb[0].mxu0
      %v1620 = vpop.f32.mrb[0].mxu0
      %v1621 = vadd.f32 0.0, %v1620
      %v1622 = vpop.f32.mrb[0].mxu0
      %1623 = vmatprep.mubr.bf16.mxu0 0
      %1624 = vmatmul.mubr.bf16.gmra.mrb[0].mxu0 %v1165
      %v1625 = vpop.f32.mrb[0].mxu0
      %v1626 = vadd.f32 0.0, %v1625
      %v1627 = vpop.f32.mrb[0].mxu0
      %v1628 = vpop.f32.mrb[0].mxu0
      %v1629 = vadd.f32 0.0, %v1628
      %v1630 = vpop.f32.mrb[0].mxu0
      %1631 = vmatprep.mubr.bf16.mxu0 0
      %1632 = vmatmul.mubr.bf16.gmra.mrb[0].mxu0 %v1168
      %v1633 = vpop.f32.mrb[0].mxu0
      %v1634 = vadd.f32 0.0, %v1633
      %v1635 = vpop.f32.mrb[0].mxu0
      %v1636 = vpop.f32.mrb[0].mxu0
      %v1637 = vadd.f32 0.0, %v1636
      %v1638 = vpop.f32.mrb[0].mxu0
      %1639 = vmatprep.mubr.bf16.mxu0 0
      %1640 = vmatmul.mubr.bf16.gmra.mrb[0].mxu0 %v1171
      %v1641 = vpop.f32.mrb[0].mxu0
      %v1642 = vadd.f32 0.0, %v1641
      %v1643 = vpop.f32.mrb[0].mxu0
      %v1644 = vpop.f32.mrb[0].mxu0
      %v1645 = vadd.f32 0.0, %v1644
      %v1646 = vpop.f32.mrb[0].mxu0
      %1647 = vmatprep.mubr.bf16.mxu0 0
      %1648 = vmatmul.mubr.bf16.gmra.mrb[0].mxu0 %v1174
      %v1649 = vpop.f32.mrb[0].mxu0
      %v1650 = vadd.f32 0.0, %v1649
      %v1651 = vpop.f32.mrb[0].mxu0
      %v1652 = vpop.f32.mrb[0].mxu0
      %v1653 = vadd.f32 0.0, %v1652
      %v1654 = vpop.f32.mrb[0].mxu0
      %1655 = vmatprep.mubr.bf16.mxu0 0
      %1656 = vmatmul.mubr.bf16.gmra.mrb[0].mxu0 %v1177
      %v1657 = vpop.f32.mrb[0].mxu0
      %v1658 = vadd.f32 0.0, %v1657
      %v1659 = vpop.f32.mrb[0].mxu0
      %v1660 = vpop.f32.mrb[0].mxu0
      %v1661 = vadd.f32 0.0, %v1660
      %v1662 = vpop.f32.mrb[0].mxu0
      %1663 = vmatprep.mubr.bf16.mxu0 0
      %1664 = vmatmul.mubr.bf16.gmra.mrb[0].mxu0 %v1180
      %v1665 = vpop.f32.mrb[0].mxu0
      %v1666 = vadd.f32 0.0, %v1665
      %v1667 = vpop.f32.mrb[0].mxu0
      %v1668 = vpop.f32.mrb[0].mxu0
      %v1669 = vadd.f32 0.0, %v1668
      %v1670 = vpop.f32.mrb[0].mxu0
      %1671 = vmatprep.mubr.bf16.mxu0 0
      %1672 = vmatmul.mubr.bf16.gmra.mrb[0].mxu0 %v1183
      %v1673 = vpop.f32.mrb[0].mxu0
      %v1674 = vadd.f32 0.0, %v1673
      %v1675 = vpop.f32.mrb[0].mxu0
      %v1676 = vpop.f32.mrb[0].mxu0
      %v1677 = vadd.f32 0.0, %v1676
      %v1678 = vpop.f32.mrb[0].mxu0
      %1679 = vmatprep.mubr.bf16.mxu0 0
      %1680 = vmatmul.mubr.bf16.gmra.mrb[0].mxu0 %v1186
      %v1681 = vpop.f32.mrb[0].mxu0
      %v1682 = vadd.f32 0.0, %v1681
      %v1683 = vpop.f32.mrb[0].mxu0
      %v1684 = vpop.f32.mrb[0].mxu0
      %v1685 = vadd.f32 0.0, %v1684
      %v1686 = vpop.f32.mrb[0].mxu0
      %1687 = vmatprep.mubr.bf16.mxu0 0
      %1688 = vmatmul.mubr.bf16.gmra.mrb[0].mxu0 %v1358
      %v1689 = vpop.f32.mrb[0].mxu0
      %v1690 = vadd.f32 0.0, %v1689
      %v1691 = vpop.f32.mrb[0].mxu0
      %v1692 = vpop.f32.mrb[0].mxu0
      %v1693 = vadd.f32 0.0, %v1692
      %v1694 = vpop.f32.mrb[0].mxu0
      %1695 = vdwg.mxu0
      %v1696 = vadd.f32 %v1398, %v1570
      %v1697 = vadd.f32 %v1401, %v1573
      %v1698 = vadd.f32 %v1406, %v1578
      %v1699 = vadd.f32 %v1409, %v1581
      %v1700 = vadd.f32 %v1414, %v1586
      %v1701 = vadd.f32 %v1417, %v1589
      %v1702 = vadd.f32 %v1422, %v1594
      %v1703 = vadd.f32 %v1425, %v1597
      %v1704 = vadd.f32 %v1430, %v1602
      %v1705 = vadd.f32 %v1433, %v1605
      %v1706 = vadd.f32 %v1438, %v1610
      %v1707 = vadd.f32 %v1441, %v1613
      %v1708 = vadd.f32 %v1446, %v1618
      %v1709 = vadd.f32 %v1449, %v1621
      %v1710 = vadd.f32 %v1454, %v1626
      %v1711 = vadd.f32 %v1457, %v1629
      %v1712 = vadd.f32 %v1462, %v1634
      %v1713 = vadd.f32 %v1465, %v1637
      %v1714 = vadd.f32 %v1470, %v1642
      %v1715 = vadd.f32 %v1473, %v1645
      %v1716 = vadd.f32 %v1478, %v1650
      %v1717 = vadd.f32 %v1481, %v1653
      %v1718 = vadd.f32 %v1486, %v1658
      %v1719 = vadd.f32 %v1489, %v1661
      %v1720 = vadd.f32 %v1494, %v1666
      %v1721 = vadd.f32 %v1497, %v1669
      %v1722 = vadd.f32 %v1502, %v1674
      %v1723 = vadd.f32 %v1505, %v1677
      %v1724 = vadd.f32 %v1510, %v1682
      %v1725 = vadd.f32 %v1513, %v1685
      %v1726 = vadd.f32 %v1518, %v1690
      %v1727 = vadd.f32 %v1521, %v1693
      %1728 = vst.msk [vmem:[%s300] sm:$0xff] %vm1018, %v1696
      %1729 = vst.msk [vmem:[%s300 + $0x8] sm:$0xff] %vm1018, %v1697
      %1730 = vst.msk [vmem:[%s300 + $0x10] sm:$0xff] %vm1018, %v1698
      %1731 = vst.msk [vmem:[%s300 + $0x18] sm:$0xff] %vm1018, %v1699
      %1732 = vst.msk [vmem:[%s300 + $0x20] sm:$0xff] %vm1018, %v1700
      %1733 = vst.msk [vmem:[%s300 + $0x28] sm:$0xff] %vm1018, %v1701
      %1734 = vst.msk [vmem:[%s300 + $0x30] sm:$0xff] %vm1018, %v1702
      %1735 = vst.msk [vmem:[%s300 + $0x38] sm:$0xff] %vm1018, %v1703
      %1736 = vst.msk [vmem:[%s300 + $0x40] sm:$0xff] %vm1018, %v1704
      %1737 = vst.msk [vmem:[%s300 + $0x48] sm:$0xff] %vm1018, %v1705
      %1738 = vst.msk [vmem:[%s300 + $0x50] sm:$0xff] %vm1018, %v1706
      %1739 = vst.msk [vmem:[%s300 + $0x58] sm:$0xff] %vm1018, %v1707
      %1740 = vst.msk [vmem:[%s300 + $0x60] sm:$0xff] %vm1018, %v1708
      %1741 = vst.msk [vmem:[%s300 + $0x68] sm:$0xff] %vm1018, %v1709
      %1742 = vst.msk [vmem:[%s300 + $0x70] sm:$0xff] %vm1018, %v1710
      %1743 = vst.msk [vmem:[%s300 + $0x78] sm:$0xff] %vm1018, %v1711
      %1744 = vst.msk [vmem:[%s300 + $0x80] sm:$0xff] %vm1018, %v1712
      %1745 = vst.msk [vmem:[%s300 + $0x88] sm:$0xff] %vm1018, %v1713
      %1746 = vst.msk [vmem:[%s300 + $0x90] sm:$0xff] %vm1018, %v1714
      %1747 = vst.msk [vmem:[%s300 + $0x98] sm:$0xff] %vm1018, %v1715
      %1748 = vst.msk [vmem:[%s300 + $0xa0] sm:$0xff] %vm1018, %v1716
      %1749 = vst.msk [vmem:[%s300 + $0xa8] sm:$0xff] %vm1018, %v1717
      %1750 = vst.msk [vmem:[%s300 + $0xb0] sm:$0xff] %vm1018, %v1718
      %1751 = vst.msk [vmem:[%s300 + $0xb8] sm:$0xff] %vm1018, %v1719
      %1752 = vst.msk [vmem:[%s300 + $0xc0] sm:$0xff] %vm1018, %v1720
      %1753 = vst.msk [vmem:[%s300 + $0xc8] sm:$0xff] %vm1018, %v1721
      %1754 = vst.msk [vmem:[%s300 + $0xd0] sm:$0xff] %vm1018, %v1722
      %1755 = vst.msk [vmem:[%s300 + $0xd8] sm:$0xff] %vm1018, %v1723
      %1756 = vst.msk [vmem:[%s300 + $0xe0] sm:$0xff] %vm1018, %v1724
      %1757 = vst.msk [vmem:[%s300 + $0xe8] sm:$0xff] %vm1018, %v1725
      %1758 = vst.msk [vmem:[%s300 + $0xf0] sm:$0xff] %vm1018, %v1726
      %1759 = vst.msk [vmem:[%s300 + $0xf8] sm:$0xff] %vm1018, %v1727
      %v1760 = vld [vmem:[%s7] sm:$0x1]
      %v1761 = vsel %vm1018, %v1696, 0.0
      %v1762 = vsel %vm1018, %v1697, 0.0
      %v1763 = vadd.f32 %v1761, %v1762
      %v1764 = vsel %vm1018, %v1698, 0.0
      %v1765 = vadd.f32 %v1763, %v1764
      %v1766 = vsel %vm1018, %v1699, 0.0
      %v1767 = vadd.f32 %v1765, %v1766
      %v1768 = vsel %vm1018, %v1700, 0.0
      %v1769 = vadd.f32 %v1767, %v1768
      %v1770 = vsel %vm1018, %v1701, 0.0
      %v1771 = vadd.f32 %v1769, %v1770
      %v1772 = vsel %vm1018, %v1702, 0.0
      %v1773 = vadd.f32 %v1771, %v1772
      %v1774 = vsel %vm1018, %v1703, 0.0
      %v1775 = vadd.f32 %v1773, %v1774
      %v1776 = vsel %vm1018, %v1704, 0.0
      %v1777 = vadd.f32 %v1775, %v1776
      %v1778 = vsel %vm1018, %v1705, 0.0
      %v1779 = vadd.f32 %v1777, %v1778
      %v1780 = vsel %vm1018, %v1706, 0.0
      %v1781 = vadd.f32 %v1779, %v1780
      %v1782 = vsel %vm1018, %v1707, 0.0
      %v1783 = vadd.f32 %v1781, %v1782
      %v1784 = vsel %vm1018, %v1708, 0.0
      %v1785 = vadd.f32 %v1783, %v1784
      %v1786 = vsel %vm1018, %v1709, 0.0
      %v1787 = vadd.f32 %v1785, %v1786
      %v1788 = vsel %vm1018, %v1710, 0.0
      %v1789 = vadd.f32 %v1787, %v1788
      %v1790 = vsel %vm1018, %v1711, 0.0
      %v1791 = vadd.f32 %v1789, %v1790
      %v1792 = vsel %vm1018, %v1712, 0.0
      %v1793 = vadd.f32 %v1791, %v1792
      %v1794 = vsel %vm1018, %v1713, 0.0
      %v1795 = vadd.f32 %v1793, %v1794
      %v1796 = vsel %vm1018, %v1714, 0.0
      %v1797 = vadd.f32 %v1795, %v1796
      %v1798 = vsel %vm1018, %v1715, 0.0
      %v1799 = vadd.f32 %v1797, %v1798
      %v1800 = vsel %vm1018, %v1716, 0.0
      %v1801 = vadd.f32 %v1799, %v1800
      %v1802 = vsel %vm1018, %v1717, 0.0
      %v1803 = vadd.f32 %v1801, %v1802
      %v1804 = vsel %vm1018, %v1718, 0.0
      %v1805 = vadd.f32 %v1803, %v1804
      %v1806 = vsel %vm1018, %v1719, 0.0
      %v1807 = vadd.f32 %v1805, %v1806
      %v1808 = vsel %vm1018, %v1720, 0.0
      %v1809 = vadd.f32 %v1807, %v1808
      %v1810 = vsel %vm1018, %v1721, 0.0
      %v1811 = vadd.f32 %v1809, %v1810
      %v1812 = vsel %vm1018, %v1722, 0.0
      %v1813 = vadd.f32 %v1811, %v1812
      %v1814 = vsel %vm1018, %v1723, 0.0
      %v1815 = vadd.f32 %v1813, %v1814
      %v1816 = vsel %vm1018, %v1724, 0.0
      %v1817 = vadd.f32 %v1815, %v1816
      %v1818 = vsel %vm1018, %v1725, 0.0
      %v1819 = vadd.f32 %v1817, %v1818
      %v1820 = vsel %vm1018, %v1726, 0.0
      %v1821 = vadd.f32 %v1819, %v1820
      %v1822 = vsel %vm1018, %v1727, 0.0
      %v1823 = vadd.f32 %v1821, %v1822
      %v1824 = vrot.slane %v1823, 4
      %v1825 = vadd.f32 %v1823, %v1824
      %v1826 = vrot.slane %v1825, 2
      %v1827 = vadd.f32 %v1825, %v1826
      %v1828 = vrot.slane %v1827, 1
      %v1829 = vadd.f32 %v1827, %v1828
      %v1830 = vadd.f32 %v1760, %v1829
      %vm1831 = vcmask 24576
      %1832 = vst.msk [vmem:[%s7] sm:$0x1] %vm1831, %v1830
      %v1833 = vld [vmem:[%s8] sm:$0x1]
      %v1834 = vmul.f32 %v1696, %v1696
      %v1835 = vmul.f32 %v1697, %v1697
      %v1836 = vmul.f32 %v1698, %v1698
      %v1837 = vmul.f32 %v1699, %v1699
      %v1838 = vmul.f32 %v1700, %v1700
      %v1839 = vmul.f32 %v1701, %v1701
      %v1840 = vmul.f32 %v1702, %v1702
      %v1841 = vmul.f32 %v1703, %v1703
      %v1842 = vmul.f32 %v1704, %v1704
      %v1843 = vmul.f32 %v1705, %v1705
      %v1844 = vmul.f32 %v1706, %v1706
      %v1845 = vmul.f32 %v1707, %v1707
      %v1846 = vmul.f32 %v1708, %v1708
      %v1847 = vmul.f32 %v1709, %v1709
      %v1848 = vmul.f32 %v1710, %v1710
      %v1849 = vmul.f32 %v1711, %v1711
      %v1850 = vmul.f32 %v1712, %v1712
      %v1851 = vmul.f32 %v1713, %v1713
      %v1852 = vmul.f32 %v1714, %v1714
      %v1853 = vmul.f32 %v1715, %v1715
      %v1854 = vmul.f32 %v1716, %v1716
      %v1855 = vmul.f32 %v1717, %v1717
      %v1856 = vmul.f32 %v1718, %v1718
      %v1857 = vmul.f32 %v1719, %v1719
      %v1858 = vmul.f32 %v1720, %v1720
      %v1859 = vmul.f32 %v1721, %v1721
      %v1860 = vmul.f32 %v1722, %v1722
      %v1861 = vmul.f32 %v1723, %v1723
      %v1862 = vmul.f32 %v1724, %v1724
      %v1863 = vmul.f32 %v1725, %v1725
      %v1864 = vmul.f32 %v1726, %v1726
      %v1865 = vmul.f32 %v1727, %v1727
      %v1866 = vsel %vm1018, %v1834, 0.0
      %v1867 = vsel %vm1018, %v1835, 0.0
      %v1868 = vadd.f32 %v1866, %v1867
      %v1869 = vsel %vm1018, %v1836, 0.0
      %v1870 = vadd.f32 %v1868, %v1869
      %v1871 = vsel %vm1018, %v1837, 0.0
      %v1872 = vadd.f32 %v1870, %v1871
      %v1873 = vsel %vm1018, %v1838, 0.0
      %v1874 = vadd.f32 %v1872, %v1873
      %v1875 = vsel %vm1018, %v1839, 0.0
      %v1876 = vadd.f32 %v1874, %v1875
      %v1877 = vsel %vm1018, %v1840, 0.0
      %v1878 = vadd.f32 %v1876, %v1877
      %v1879 = vsel %vm1018, %v1841, 0.0
      %v1880 = vadd.f32 %v1878, %v1879
      %v1881 = vsel %vm1018, %v1842, 0.0
      %v1882 = vadd.f32 %v1880, %v1881
      %v1883 = vsel %vm1018, %v1843, 0.0
      %v1884 = vadd.f32 %v1882, %v1883
      %v1885 = vsel %vm1018, %v1844, 0.0
      %v1886 = vadd.f32 %v1884, %v1885
      %v1887 = vsel %vm1018, %v1845, 0.0
      %v1888 = vadd.f32 %v1886, %v1887
      %v1889 = vsel %vm1018, %v1846, 0.0
      %v1890 = vadd.f32 %v1888, %v1889
      %v1891 = vsel %vm1018, %v1847, 0.0
      %v1892 = vadd.f32 %v1890, %v1891
      %v1893 = vsel %vm1018, %v1848, 0.0
      %v1894 = vadd.f32 %v1892, %v1893
      %v1895 = vsel %vm1018, %v1849, 0.0
      %v1896 = vadd.f32 %v1894, %v1895
      %v1897 = vsel %vm1018, %v1850, 0.0
      %v1898 = vadd.f32 %v1896, %v1897
      %v1899 = vsel %vm1018, %v1851, 0.0
      %v1900 = vadd.f32 %v1898, %v1899
      %v1901 = vsel %vm1018, %v1852, 0.0
      %v1902 = vadd.f32 %v1900, %v1901
      %v1903 = vsel %vm1018, %v1853, 0.0
      %v1904 = vadd.f32 %v1902, %v1903
      %v1905 = vsel %vm1018, %v1854, 0.0
      %v1906 = vadd.f32 %v1904, %v1905
      %v1907 = vsel %vm1018, %v1855, 0.0
      %v1908 = vadd.f32 %v1906, %v1907
      %v1909 = vsel %vm1018, %v1856, 0.0
      %v1910 = vadd.f32 %v1908, %v1909
      %v1911 = vsel %vm1018, %v1857, 0.0
      %v1912 = vadd.f32 %v1910, %v1911
      %v1913 = vsel %vm1018, %v1858, 0.0
      %v1914 = vadd.f32 %v1912, %v1913
      %v1915 = vsel %vm1018, %v1859, 0.0
      %v1916 = vadd.f32 %v1914, %v1915
      %v1917 = vsel %vm1018, %v1860, 0.0
      %v1918 = vadd.f32 %v1916, %v1917
      %v1919 = vsel %vm1018, %v1861, 0.0
      %v1920 = vadd.f32 %v1918, %v1919
      %v1921 = vsel %vm1018, %v1862, 0.0
      %v1922 = vadd.f32 %v1920, %v1921
      %v1923 = vsel %vm1018, %v1863, 0.0
      %v1924 = vadd.f32 %v1922, %v1923
      %v1925 = vsel %vm1018, %v1864, 0.0
      %v1926 = vadd.f32 %v1924, %v1925
      %v1927 = vsel %vm1018, %v1865, 0.0
      %v1928 = vadd.f32 %v1926, %v1927
      %v1929 = vrot.slane %v1928, 4
      %v1930 = vadd.f32 %v1928, %v1929
      %v1931 = vrot.slane %v1930, 2
      %v1932 = vadd.f32 %v1930, %v1931
      %v1933 = vrot.slane %v1932, 1
      %v1934 = vadd.f32 %v1932, %v1933
      %v1935 = vadd.f32 %v1833, %v1934
      %1936 = vst.msk [vmem:[%s8] sm:$0x1] %vm1831, %v1935
      %p1937 = scmp.lt.s32.totalorder %s20, 1
      %s1938 = scalar_select %p1937, %s20, 1
      %s1939 = smul.addr %s1938, 32
      %s1940 = smul.addr %s1939, 8
      %s1941 = scalar_lea.vmem %s6, %s1940
      // Predicated region
      $region49: #{feature_up_forward.6} parent=43 // pred_check
        %p1942 = pneg %p169
      $region50: #{feature_up_forward.6} parent=43 // pred_check_branch
        %1944 = sbr.rel (%p1942) target = $region52
      $region51: #{feature_up_forward.6} parent=43 // pred_region
        _
      $region52: #{feature_up_forward.6} parent=43 // pred_fallthru
        _
      // Predicated region
      $region53: #{feature_up_forward.6} parent=43 // pred_check
        %p1945 = pneg %p190
      $region54: #{feature_up_forward.6} parent=43 // pred_check_branch
        %1947 = sbr.rel (%p1945) target = $region56
      $region55: #{feature_up_forward.6} parent=43 // pred_region
        _
      $region56: #{feature_up_forward.6} parent=43 // pred_fallthru
        _
      // Predicated region
      $region57: #{feature_up_forward.6} parent=43 // pred_check
        %p1948 = pneg %p211
      $region58: #{feature_up_forward.6} parent=43 // pred_check_branch
        %1950 = sbr.rel (%p1948) target = $region60
      $region59: #{feature_up_forward.6} parent=43 // pred_region
        _
      $region60: #{feature_up_forward.6} parent=43 // pred_fallthru
        _
      // Predicated region
      $region61: #{feature_up_forward.6} parent=43 // pred_check
        %p1951 = pneg %p190
      $region62: #{feature_up_forward.6} parent=43 // pred_check_branch
        %1953 = sbr.rel (%p1951) target = $region64
      $region63: #{feature_up_forward.6} parent=43 // pred_region
        _
      $region64: #{feature_up_forward.6} parent=43 // pred_fallthru
        _
      // Predicated region
      $region65: #{feature_up_forward.6} parent=43 // pred_check
        %p1954 = pneg %p211
      $region66: #{feature_up_forward.6} parent=43 // pred_check_branch
        %1956 = sbr.rel (%p1954) target = $region68
      $region67: #{feature_up_forward.6} parent=43 // pred_region
        _
      $region68: #{feature_up_forward.6} parent=43 // pred_fallthru
        _
    $region44: #{feature_up_forward.6} parent=5 // pred_fallthru
      _
    %p1957 = scmp.le.s32.totalorder 2, %s15
    // Predicated region
    $region69: #{feature_up_forward.6} parent=5 // pred_check
      %p1958 = pneg %p1957
    $region70: #{feature_up_forward.6} parent=5 // pred_check_branch
      %1960 = sbr.rel (%p1958) target = $region72
    $region71: #{feature_up_forward.6} parent=5 // pred_region
      %s1961 = ssub.s32 %s15, 2
      // Predicated region
      $region73: #{feature_up_forward.6} parent=71 // pred_check
        %p1962 = pneg %p175
      $region74: #{feature_up_forward.6} parent=71 // pred_check_branch
        %1964 = sbr.rel (%p1962) target = $region76
      $region75: #{feature_up_forward.6} parent=71 // pred_region
        %p1965 = scmp.lt.s32.totalorder %s21, 1
        %s1966 = scalar_select %p1965, %s21, 1
        %s1967 = smul.addr %s1966, 32
        %s1968 = smul.addr %s1967, 8
        %s1969 = scalar_lea.vmem %s6, %s1968
      $region76: #{feature_up_forward.6} parent=71 // pred_fallthru
        _
    $region72: #{feature_up_forward.6} parent=5 // pred_fallthru
      _
  $region6: #{feature_up_forward.6} parent=0 // loop_footer
    %s19 = sadd.s32 1, %s15
  $region7: #{feature_up_forward.6} parent=0 // loop_footer_branch
    %14 = sbr.rel target = $region3
  $region8: #{feature_up_forward.6} parent=0 // loop_exit
    _

// kernel: feature_up_forward.4
$region0: #{feature_up_forward.4}
  #allocation0 [shape = 'u32[]', space=smem, size = 0x4, offset = 0x4, fixed_abs, tag = 'smem constant byte address 0x4 - core index']
  #allocation1 [shape = 'u32[144,128]{1,0:T(1,128)}', space=vmem, size = 0x12000, scoped, tag = 'internal scratch']
  %s0 = inlined_call_operand.vmem [shape: f32[256,64], index: 0, kind: input, shape index: {}]
  %s1 = inlined_call_operand.vmem [shape: f32[2,8,8,8], index: 1, kind: input, shape index: {}]
  %s2 = inlined_call_operand.vmem [shape: bf16[3,24,4], index: 2, kind: input, shape index: {}]
  %s3 = inlined_call_operand.vmem [shape: f32[2,16,16,4], index: 3, kind: output, shape index: {0}]
  %s4 = inlined_call_operand.vmem [shape: f32[1,4], index: 4, kind: output, shape index: {1}]
  %s5 = inlined_call_operand.vmem [shape: f32[1,4], index: 5, kind: output, shape index: {2}]
  %6 = xla_tuple %s3, %s4, %s5
  %s7 = sld [smem:[#allocation0]]
  $region65: #{feature_up_forward.4} parent=0
    _
  %s9 = ssub.s32 1, %s7
  %s10 = scalar_select 0, %s9, %s7
  loop: start=0, step=1, limit=4
  $region2: #{feature_up_forward.4} parent=0 // loop_pre_header
    _
  $region3: #{feature_up_forward.4} parent=0 // loop_header
    %s12 = sphi 0, %s16
    %p13 = scmp.ge.s32.totalorder %s12, 4
    %s20 = sphi 0, %s20
    %s22 = sphi 0, %s20
    %s23 = sphi 0, %s22
    %s37 = sphi 0, %s23
    %s43 = sphi 0, %s45
    %s46 = sphi 0, %s43
    %s47 = sphi 0, %s46
    %s63 = sphi 0, %s47
    %s67 = sphi 0, %s67
    %s69 = sphi 0, %s67
    %s70 = sphi 0, %s69
    %s84 = sphi 0, %s70
    %s90 = sphi 0, %s92
    %s93 = sphi 0, %s90
    %s94 = sphi 0, %s93
    %s110 = sphi 0, %s94
    %s114 = sphi 0, %s114
    %s116 = sphi 0, %s114
    %s117 = sphi 0, %s116
    %s131 = sphi 0, %s117
    %s135 = sphi 0, %s135
    %s137 = sphi 0, %s135
    %s138 = sphi 0, %s137
    %s152 = sphi 0, %s138
  $region4: #{feature_up_forward.4} parent=0 // loop_header_branch
    %15 = sbr.rel (%p13) target = $region8
  $region5: #{feature_up_forward.4} parent=0 // loop_body
    %s17 = ssub.s32 %s12, 1
    %s18 = ssub.s32 %s12, 2
    %s19 = sadd.s32 %s12, 1
    %s21 = sadd.s32 %s20, 1
    %p24 = scmp.eq.s32.totalorder %s12, 1
    %p25 = scmp.ne.s32.totalorder %s20, %s22
    %p26 = scmp.eq.s32.totalorder %s12, 0
    %p27 = por %p25, %p26
    %p28 = scmp.ne.s32.totalorder %s20, %s22
    %p29 = scmp.eq.s32.totalorder %s17, 1
    %p30 = por %p28, %p29
    %p31 = scmp.ne.s32.totalorder %s22, %s23
    %p32 = scmp.eq.s32.totalorder %s17, 0
    %p33 = por %p31, %p32
    %p34 = scmp.ne.s32.totalorder %s22, %s23
    %p35 = scmp.eq.s32.totalorder %s18, 1
    %p36 = por %p34, %p35
    %p38 = scmp.ne.s32.totalorder %s23, %s37
    %p39 = scmp.eq.s32.totalorder %s18, 0
    %p40 = por %p38, %p39
    %s41 = ssub.s32 %s12, %s19
    %p42 = scmp.eq.s32.totalorder %s41, 0
    %s44 = sadd.s32 %s43, 1
    %s45 = scalar_select %p42, %s43, %s44
    %p48 = pneg %p42
    %p49 = scmp.eq.s32.totalorder %s12, 1
    %p50 = por %p48, %p49
    %p51 = scmp.ne.s32.totalorder %s43, %s46
    %p52 = scmp.eq.s32.totalorder %s12, 0
    %p53 = por %p51, %p52
    %p54 = scmp.ne.s32.totalorder %s43, %s46
    %p55 = scmp.eq.s32.totalorder %s17, 1
    %p56 = por %p54, %p55
    %p57 = scmp.ne.s32.totalorder %s46, %s47
    %p58 = scmp.eq.s32.totalorder %s17, 0
    %p59 = por %p57, %p58
    %p60 = scmp.ne.s32.totalorder %s46, %s47
    %p61 = scmp.eq.s32.totalorder %s18, 1
    %p62 = por %p60, %p61
    %p64 = scmp.ne.s32.totalorder %s47, %s63
    %p65 = scmp.eq.s32.totalorder %s18, 0
    %p66 = por %p64, %p65
    %s68 = sadd.s32 %s67, 1
    %p71 = scmp.eq.s32.totalorder %s12, 1
    %p72 = scmp.ne.s32.totalorder %s67, %s69
    %p73 = scmp.eq.s32.totalorder %s12, 0
    %p74 = por %p72, %p73
    %p75 = scmp.ne.s32.totalorder %s67, %s69
    %p76 = scmp.eq.s32.totalorder %s17, 1
    %p77 = por %p75, %p76
    %p78 = scmp.ne.s32.totalorder %s69, %s70
    %p79 = scmp.eq.s32.totalorder %s17, 0
    %p80 = por %p78, %p79
    %p81 = scmp.ne.s32.totalorder %s69, %s70
    %p82 = scmp.eq.s32.totalorder %s18, 1
    %p83 = por %p81, %p82
    %p85 = scmp.ne.s32.totalorder %s70, %s84
    %p86 = scmp.eq.s32.totalorder %s18, 0
    %p87 = por %p85, %p86
    %s88 = ssub.s32 %s12, %s19
    %p89 = scmp.eq.s32.totalorder %s88, 0
    %s91 = sadd.s32 %s90, 1
    %s92 = scalar_select %p89, %s90, %s91
    %p95 = pneg %p89
    %p96 = scmp.eq.s32.totalorder %s12, 1
    %p97 = por %p95, %p96
    %p98 = scmp.ne.s32.totalorder %s90, %s93
    %p99 = scmp.eq.s32.totalorder %s12, 0
    %p100 = por %p98, %p99
    %p101 = scmp.ne.s32.totalorder %s90, %s93
    %p102 = scmp.eq.s32.totalorder %s17, 1
    %p103 = por %p101, %p102
    %p104 = scmp.ne.s32.totalorder %s93, %s94
    %p105 = scmp.eq.s32.totalorder %s17, 0
    %p106 = por %p104, %p105
    %p107 = scmp.ne.s32.totalorder %s93, %s94
    %p108 = scmp.eq.s32.totalorder %s18, 1
    %p109 = por %p107, %p108
    %p111 = scmp.ne.s32.totalorder %s94, %s110
    %p112 = scmp.eq.s32.totalorder %s18, 0
    %p113 = por %p111, %p112
    %s115 = sadd.s32 %s114, 1
    %p118 = scmp.eq.s32.totalorder %s12, 1
    %p119 = scmp.ne.s32.totalorder %s114, %s116
    %p120 = scmp.eq.s32.totalorder %s12, 0
    %p121 = por %p119, %p120
    %p122 = scmp.ne.s32.totalorder %s114, %s116
    %p123 = scmp.eq.s32.totalorder %s17, 1
    %p124 = por %p122, %p123
    %p125 = scmp.ne.s32.totalorder %s116, %s117
    %p126 = scmp.eq.s32.totalorder %s17, 0
    %p127 = por %p125, %p126
    %p128 = scmp.ne.s32.totalorder %s116, %s117
    %p129 = scmp.eq.s32.totalorder %s18, 1
    %p130 = por %p128, %p129
    %p132 = scmp.ne.s32.totalorder %s117, %s131
    %p133 = scmp.eq.s32.totalorder %s18, 0
    %p134 = por %p132, %p133
    %s136 = sadd.s32 %s135, 1
    %p139 = scmp.eq.s32.totalorder %s12, 1
    %p140 = scmp.ne.s32.totalorder %s135, %s137
    %p141 = scmp.eq.s32.totalorder %s12, 0
    %p142 = por %p140, %p141
    %p143 = scmp.ne.s32.totalorder %s135, %s137
    %p144 = scmp.eq.s32.totalorder %s17, 1
    %p145 = por %p143, %p144
    %p146 = scmp.ne.s32.totalorder %s137, %s138
    %p147 = scmp.eq.s32.totalorder %s17, 0
    %p148 = por %p146, %p147
    %p149 = scmp.ne.s32.totalorder %s137, %s138
    %p150 = scmp.eq.s32.totalorder %s18, 1
    %p151 = por %p149, %p150
    %p153 = scmp.ne.s32.totalorder %s138, %s152
    %p154 = scmp.eq.s32.totalorder %s18, 0
    %p155 = por %p153, %p154
    %p156 = scmp.le.s32.totalorder 1, %s12
    %p157 = scmp.lt.s32.totalorder %s12, 3
    %p158 = pnand %p156, %p157
    %p159 = pneg %p158
    // Predicated region
    $region9: #{feature_up_forward.4} parent=5 // pred_check
      _
    $region10: #{feature_up_forward.4} parent=5 // pred_check_branch
      %161 = sbr.rel (%p158) target = $region12
    $region11: #{feature_up_forward.4} parent=5 // pred_region
      %s162 = ssub.s32 %s12, 1
      // Predicated region
      $region13: #{feature_up_forward.4} parent=11 // pred_check
        %p163 = pneg %p33
      $region14: #{feature_up_forward.4} parent=11 // pred_check_branch
        %165 = sbr.rel (%p163) target = $region16
      $region15: #{feature_up_forward.4} parent=11 // pred_region
        _
      $region16: #{feature_up_forward.4} parent=11 // pred_fallthru
        _
      // Predicated region
      $region17: #{feature_up_forward.4} parent=11 // pred_check
        %p166 = pneg %p80
      $region18: #{feature_up_forward.4} parent=11 // pred_check_branch
        %168 = sbr.rel (%p166) target = $region20
      $region19: #{feature_up_forward.4} parent=11 // pred_region
        _
      $region20: #{feature_up_forward.4} parent=11 // pred_fallthru
        _
    $region12: #{feature_up_forward.4} parent=5 // pred_fallthru
      _
    %p169 = scmp.lt.s32.totalorder %s12, 2
    // Predicated region
    $region21: #{feature_up_forward.4} parent=5 // pred_check
      %p170 = pneg %p169
    $region22: #{feature_up_forward.4} parent=5 // pred_check_branch
      %172 = sbr.rel (%p170) target = $region24
    $region23: #{feature_up_forward.4} parent=5 // pred_region
      // Predicated region
      $region25: #{feature_up_forward.4} parent=23 // pred_check
        %p173 = pneg %p53
      $region26: #{feature_up_forward.4} parent=23 // pred_check_branch
        %175 = sbr.rel (%p173) target = $region28
      $region27: #{feature_up_forward.4} parent=23 // pred_region
        %p176 = scmp.lt.s32.totalorder %s12, 1
        %s177 = scalar_select %p176, %s12, 1
        %s178 = smul.addr %s177, 8
        %s179 = smul.addr %s178, 8
        %s180 = scalar_lea.vmem %s1, %s179
      $region28: #{feature_up_forward.4} parent=23 // pred_fallthru
        _
    $region24: #{feature_up_forward.4} parent=5 // pred_fallthru
      _
    %p181 = scmp.le.s32.totalorder 1, %s12
    %p182 = scmp.lt.s32.totalorder %s12, 3
    %p183 = pnand %p181, %p182
    %p184 = pneg %p183
    // Predicated region
    $region29: #{feature_up_forward.4} parent=5 // pred_check
      _
    $region30: #{feature_up_forward.4} parent=5 // pred_check_branch
      %186 = sbr.rel (%p183) target = $region32
    $region31: #{feature_up_forward.4} parent=5 // pred_region
      %s187 = ssub.s32 %s12, 1
      %p188 = pneg %p33
      %p189 = pneg %p30
      %p190 = scmp.lt.s32.totalorder %s17, 1
      %s191 = scalar_select %p190, %s17, 1
      %s192 = smul.addr %s191, 8
      %s193 = smul.addr %s192, 8
      %s194 = scalar_lea.vmem %s1, %s193
      %p195 = pneg %p59
      %p196 = pneg %p56
      %p197 = pneg %p80
      %p198 = pneg %p77
      %p199 = pneg %p106
      %p200 = pneg %p103
      %p201 = scmp.lt.s32.totalorder %s17, 1
      %s202 = scalar_select %p201, %s17, 1
      %s203 = smul.addr %s202, 32
      %s204 = smul.addr %s203, 8
      %s205 = scalar_lea.vmem %s3, %s204
      %p206 = pneg %p127
      %p207 = pneg %p124
      %p208 = pneg %p148
      %p209 = pneg %p145
      %p210 = scmp.lt.s32.totalorder %s17, 1
      %s211 = scalar_select %p210, %s17, 1
      %s212 = smul.addr %s211, 8
      %s213 = smul.addr %s212, 8
      %s214 = scalar_lea.vmem %s1, %s213
      %p215 = scmp.lt.s32.totalorder %s17, 1
      %s216 = scalar_select %p215, %s17, 1
      %s217 = smul.addr %s216, 32
      %s218 = smul.addr %s217, 8
      %s219 = scalar_lea.vmem %s3, %s218
      %p221 = scmp.eq.s32.totalorder %s17, 0
      // Predicated region
      $region33: #{feature_up_forward.4} parent=31 // pred_check
        %p222 = pneg %p221
      $region34: #{feature_up_forward.4} parent=31 // pred_check_branch
        %224 = sbr.rel (%p222) target = $region36
      $region35: #{feature_up_forward.4} parent=31 // pred_region
        %vm225 = vcmask 24576
        %226 = vst.msk [vmem:[%s4] sm:$0x1] %vm225, 0.0
        %227 = vst.msk [vmem:[%s5] sm:$0x1] %vm225, 0.0
      $region36: #{feature_up_forward.4} parent=31 // pred_fallthru
        _
      %v228 = vld [vmem:[%s214] sm:$0xff]
      %v229 = vld [vmem:[%s214 + $0x8] sm:$0xff]
      %v230 = vld [vmem:[%s214 + $0x10] sm:$0xff]
      %v231 = vld [vmem:[%s214 + $0x18] sm:$0xff]
      %v232 = vld [vmem:[%s214 + $0x20] sm:$0xff]
      %v233 = vld [vmem:[%s214 + $0x28] sm:$0xff]
      %v234 = vld [vmem:[%s214 + $0x30] sm:$0xff]
      %v235 = vld [vmem:[%s214 + $0x38] sm:$0xff]
      %v236 = vld [vmem:[%s0] sm:$0xff]
      %v237 = vld [vmem:[%s0 + $0x8] sm:$0xff]
      %v238 = vld [vmem:[%s0 + $0x10] sm:$0xff]
      %v239 = vld [vmem:[%s0 + $0x18] sm:$0xff]
      %v240 = vld [vmem:[%s0 + $0x20] sm:$0xff]
      %v241 = vld [vmem:[%s0 + $0x28] sm:$0xff]
      %v242 = vld [vmem:[%s0 + $0x30] sm:$0xff]
      %v243 = vld [vmem:[%s0 + $0x38] sm:$0xff]
      %v244 = vld [vmem:[%s0 + $0x40] sm:$0xff]
      %v245 = vld [vmem:[%s0 + $0x48] sm:$0xff]
      %v246 = vld [vmem:[%s0 + $0x50] sm:$0xff]
      %v247 = vld [vmem:[%s0 + $0x58] sm:$0xff]
      %v248 = vld [vmem:[%s0 + $0x60] sm:$0xff]
      %v249 = vld [vmem:[%s0 + $0x68] sm:$0xff]
      %v250 = vld [vmem:[%s0 + $0x70] sm:$0xff]
      %v251 = vld [vmem:[%s0 + $0x78] sm:$0xff]
      %v252 = vld [vmem:[%s0 + $0x80] sm:$0xff]
      %v253 = vld [vmem:[%s0 + $0x88] sm:$0xff]
      %v254 = vld [vmem:[%s0 + $0x90] sm:$0xff]
      %v255 = vld [vmem:[%s0 + $0x98] sm:$0xff]
      %v256 = vld [vmem:[%s0 + $0xa0] sm:$0xff]
      %v257 = vld [vmem:[%s0 + $0xa8] sm:$0xff]
      %v258 = vld [vmem:[%s0 + $0xb0] sm:$0xff]
      %v259 = vld [vmem:[%s0 + $0xb8] sm:$0xff]
      %v260 = vld [vmem:[%s0 + $0xc0] sm:$0xff]
      %v261 = vld [vmem:[%s0 + $0xc8] sm:$0xff]
      %v262 = vld [vmem:[%s0 + $0xd0] sm:$0xff]
      %v263 = vld [vmem:[%s0 + $0xd8] sm:$0xff]
      %v264 = vld [vmem:[%s0 + $0xe0] sm:$0xff]
      %v265 = vld [vmem:[%s0 + $0xe8] sm:$0xff]
      %v266 = vld [vmem:[%s0 + $0xf0] sm:$0xff]
      %v267 = vld [vmem:[%s0 + $0xf8] sm:$0xff]
      %vm268 = vcmask 523264
      %v270 = vsel %vm268, %v236, 0
      %v273 = vsel %vm268, %v237, 0
      %v276 = vsel %vm268, %v238, 0
      %v279 = vsel %vm268, %v239, 0
      %v282 = vsel %vm268, %v240, 0
      %v285 = vsel %vm268, %v241, 0
      %v288 = vsel %vm268, %v242, 0
      %v291 = vsel %vm268, %v243, 0
      %v294 = vsel %vm268, %v244, 0
      %v297 = vsel %vm268, %v245, 0
      %v300 = vsel %vm268, %v246, 0
      %v303 = vsel %vm268, %v247, 0
      %v306 = vsel %vm268, %v248, 0
      %v309 = vsel %vm268, %v249, 0
      %v312 = vsel %vm268, %v250, 0
      %v315 = vsel %vm268, %v251, 0
      %v318 = vsel %vm268, %v252, 0
      %v321 = vsel %vm268, %v253, 0
      %v324 = vsel %vm268, %v254, 0
      %v327 = vsel %vm268, %v255, 0
      %v330 = vsel %vm268, %v256, 0
      %v333 = vsel %vm268, %v257, 0
      %v336 = vsel %vm268, %v258, 0
      %v339 = vsel %vm268, %v259, 0
      %v342 = vsel %vm268, %v260, 0
      %v345 = vsel %vm268, %v261, 0
      %v348 = vsel %vm268, %v262, 0
      %v351 = vsel %vm268, %v263, 0
      %v354 = vsel %vm268, %v264, 0
      %v357 = vsel %vm268, %v265, 0
      %v360 = vsel %vm268, %v266, 0
      %v363 = vsel %vm268, %v267, 0
      %365 = vmatprep.subr.mxu0 0.0
      %366 = vmatpush1.msra.mxu0 %v228
      %367 = vmatprep.subr.mxu0 0.0
      %368 = vmatpush1.msra.mxu0 %v229
      %369 = vmatprep.subr.mxu0 0.0
      %370 = vmatpush1.msra.mxu0 %v230
      %371 = vmatprep.subr.mxu0 0.0
      %372 = vmatpush1.msra.mxu0 %v231
      %373 = vmatprep.subr.mxu0 0.0
      %374 = vmatpush1.msra.mxu0 %v232
      %375 = vmatprep.subr.mxu0 0.0
      %376 = vmatpush1.msra.mxu0 %v233
      %377 = vmatprep.subr.mxu0 0.0
      %378 = vmatpush1.msra.mxu0 %v234
      %379 = vmatprep.subr.mxu0 0.0
      %380 = vmatpush1.msra.mxu0 %v235
      %381 = vmatprep.subr.mxu0 0.0
      %382 = vmatpush1.msra.mxu0 0.0
      %383 = vmatprep.subr.mxu0 0.0
      %384 = vmatpush1.msra.mxu0 0.0
      %385 = vmatprep.subr.mxu0 0.0
      %386 = vmatpush1.msra.mxu0 0.0
      %387 = vmatprep.subr.mxu0 0.0
      %388 = vmatpush1.msra.mxu0 0.0
      %389 = vmatprep.subr.mxu0 0.0
      %390 = vmatpush1.msra.mxu0 0.0
      %391 = vmatprep.subr.mxu0 0.0
      %392 = vmatpush1.msra.mxu0 0.0
      %393 = vmatprep.subr.mxu0 0.0
      %394 = vmatpush1.msra.mxu0 0.0
      %395 = vmatprep.subr.mxu0 0.0
      %396 = vmatpush1.msra.mxu0 0.0
      %397 = vmatprep.subr.mxu0 0.0
      %398 = vmatpush1.msra.mxu0 0.0
      %399 = vmatprep.subr.mxu0 0.0
      %400 = vmatpush1.msra.mxu0 0.0
      %401 = vmatprep.subr.mxu0 0.0
      %402 = vmatpush1.msra.mxu0 0.0
      %403 = vmatprep.subr.mxu0 0.0
      %404 = vmatpush1.msra.mxu0 0.0
      %405 = vmatprep.subr.mxu0 0.0
      %406 = vmatpush1.msra.mxu0 0.0
      %407 = vmatprep.subr.mxu0 0.0
      %408 = vmatpush1.msra.mxu0 0.0
      %409 = vmatprep.subr.mxu0 0.0
      %410 = vmatpush1.msra.mxu0 0.0
      %411 = vmatprep.subr.mxu0 0.0
      %412 = vmatpush1.msra.mxu0 0.0
      %413 = vmatprep.subr.mxu0 0.0
      %414 = vmatpush1.msra.mxu0 0.0
      %415 = vmatprep.subr.mxu0 0.0
      %416 = vmatpush1.msra.mxu0 0.0
      %417 = vmatprep.subr.mxu0 0.0
      %418 = vmatpush1.msra.mxu0 0.0
      %419 = vmatprep.subr.mxu0 0.0
      %420 = vmatpush1.msra.mxu0 0.0
      %421 = vmatprep.subr.mxu0 0.0
      %422 = vmatpush1.msra.mxu0 0.0
      %423 = vmatprep.subr.mxu0 0.0
      %424 = vmatpush1.msra.mxu0 0.0
      %425 = vmatprep.subr.mxu0 0.0
      %426 = vmatpush1.msra.mxu0 0.0
      %427 = vmatprep.subr.mxu0 0.0
      %428 = vmatpush1.msra.mxu0 0.0
      %429 = vmatprep.mubr.f32.mxu0 0.0
      %430 = vmatmul.mubr.f32.gmra.mrb[0].mxu0 %v270
      %v431 = vpop.f32.mrb[0].mxu0
      %v432 = vadd.f32 0.0, %v431
      %v433 = vpop.f32.mrb[0].mxu0
      %434 = vmatprep.mubr.f32.mxu0 0.0
      %435 = vmatmul.mubr.f32.gmra.mrb[0].mxu0 %v273
      %v436 = vpop.f32.mrb[0].mxu0
      %v437 = vadd.f32 0.0, %v436
      %v438 = vpop.f32.mrb[0].mxu0
      %439 = vmatprep.mubr.f32.mxu0 0.0
      %440 = vmatmul.mubr.f32.gmra.mrb[0].mxu0 %v276
      %v441 = vpop.f32.mrb[0].mxu0
      %v442 = vadd.f32 0.0, %v441
      %v443 = vpop.f32.mrb[0].mxu0
      %444 = vmatprep.mubr.f32.mxu0 0.0
      %445 = vmatmul.mubr.f32.gmra.mrb[0].mxu0 %v279
      %v446 = vpop.f32.mrb[0].mxu0
      %v447 = vadd.f32 0.0, %v446
      %v448 = vpop.f32.mrb[0].mxu0
      %449 = vmatprep.mubr.f32.mxu0 0.0
      %450 = vmatmul.mubr.f32.gmra.mrb[0].mxu0 %v282
      %v451 = vpop.f32.mrb[0].mxu0
      %v452 = vadd.f32 0.0, %v451
      %v453 = vpop.f32.mrb[0].mxu0
      %454 = vmatprep.mubr.f32.mxu0 0.0
      %455 = vmatmul.mubr.f32.gmra.mrb[0].mxu0 %v285
      %v456 = vpop.f32.mrb[0].mxu0
      %v457 = vadd.f32 0.0, %v456
      %v458 = vpop.f32.mrb[0].mxu0
      %459 = vmatprep.mubr.f32.mxu0 0.0
      %460 = vmatmul.mubr.f32.gmra.mrb[0].mxu0 %v288
      %v461 = vpop.f32.mrb[0].mxu0
      %v462 = vadd.f32 0.0, %v461
      %v463 = vpop.f32.mrb[0].mxu0
      %464 = vmatprep.mubr.f32.mxu0 0.0
      %465 = vmatmul.mubr.f32.gmra.mrb[0].mxu0 %v291
      %v466 = vpop.f32.mrb[0].mxu0
      %v467 = vadd.f32 0.0, %v466
      %v468 = vpop.f32.mrb[0].mxu0
      %469 = vmatprep.mubr.f32.mxu0 0.0
      %470 = vmatmul.mubr.f32.gmra.mrb[0].mxu0 %v294
      %v471 = vpop.f32.mrb[0].mxu0
      %v472 = vadd.f32 0.0, %v471
      %v473 = vpop.f32.mrb[0].mxu0
      %474 = vmatprep.mubr.f32.mxu0 0.0
      %475 = vmatmul.mubr.f32.gmra.mrb[0].mxu0 %v297
      %v476 = vpop.f32.mrb[0].mxu0
      %v477 = vadd.f32 0.0, %v476
      %v478 = vpop.f32.mrb[0].mxu0
      %479 = vmatprep.mubr.f32.mxu0 0.0
      %480 = vmatmul.mubr.f32.gmra.mrb[0].mxu0 %v300
      %v481 = vpop.f32.mrb[0].mxu0
      %v482 = vadd.f32 0.0, %v481
      %v483 = vpop.f32.mrb[0].mxu0
      %484 = vmatprep.mubr.f32.mxu0 0.0
      %485 = vmatmul.mubr.f32.gmra.mrb[0].mxu0 %v303
      %v486 = vpop.f32.mrb[0].mxu0
      %v487 = vadd.f32 0.0, %v486
      %v488 = vpop.f32.mrb[0].mxu0
      %489 = vmatprep.mubr.f32.mxu0 0.0
      %490 = vmatmul.mubr.f32.gmra.mrb[0].mxu0 %v306
      %v491 = vpop.f32.mrb[0].mxu0
      %v492 = vadd.f32 0.0, %v491
      %v493 = vpop.f32.mrb[0].mxu0
      %494 = vmatprep.mubr.f32.mxu0 0.0
      %495 = vmatmul.mubr.f32.gmra.mrb[0].mxu0 %v309
      %v496 = vpop.f32.mrb[0].mxu0
      %v497 = vadd.f32 0.0, %v496
      %v498 = vpop.f32.mrb[0].mxu0
      %499 = vmatprep.mubr.f32.mxu0 0.0
      %500 = vmatmul.mubr.f32.gmra.mrb[0].mxu0 %v312
      %v501 = vpop.f32.mrb[0].mxu0
      %v502 = vadd.f32 0.0, %v501
      %v503 = vpop.f32.mrb[0].mxu0
      %504 = vmatprep.mubr.f32.mxu0 0.0
      %505 = vmatmul.mubr.f32.gmra.mrb[0].mxu0 %v315
      %v506 = vpop.f32.mrb[0].mxu0
      %v507 = vadd.f32 0.0, %v506
      %v508 = vpop.f32.mrb[0].mxu0
      %509 = vmatprep.mubr.f32.mxu0 0.0
      %510 = vmatmul.mubr.f32.gmra.mrb[0].mxu0 %v318
      %v511 = vpop.f32.mrb[0].mxu0
      %v512 = vadd.f32 0.0, %v511
      %v513 = vpop.f32.mrb[0].mxu0
      %514 = vmatprep.mubr.f32.mxu0 0.0
      %515 = vmatmul.mubr.f32.gmra.mrb[0].mxu0 %v321
      %v516 = vpop.f32.mrb[0].mxu0
      %v517 = vadd.f32 0.0, %v516
      %v518 = vpop.f32.mrb[0].mxu0
      %519 = vmatprep.mubr.f32.mxu0 0.0
      %520 = vmatmul.mubr.f32.gmra.mrb[0].mxu0 %v324
      %v521 = vpop.f32.mrb[0].mxu0
      %v522 = vadd.f32 0.0, %v521
      %v523 = vpop.f32.mrb[0].mxu0
      %524 = vmatprep.mubr.f32.mxu0 0.0
      %525 = vmatmul.mubr.f32.gmra.mrb[0].mxu0 %v327
      %v526 = vpop.f32.mrb[0].mxu0
      %v527 = vadd.f32 0.0, %v526
      %v528 = vpop.f32.mrb[0].mxu0
      %529 = vmatprep.mubr.f32.mxu0 0.0
      %530 = vmatmul.mubr.f32.gmra.mrb[0].mxu0 %v330
      %v531 = vpop.f32.mrb[0].mxu0
      %v532 = vadd.f32 0.0, %v531
      %v533 = vpop.f32.mrb[0].mxu0
      %534 = vmatprep.mubr.f32.mxu0 0.0
      %535 = vmatmul.mubr.f32.gmra.mrb[0].mxu0 %v333
      %v536 = vpop.f32.mrb[0].mxu0
      %v537 = vadd.f32 0.0, %v536
      %v538 = vpop.f32.mrb[0].mxu0
      %539 = vmatprep.mubr.f32.mxu0 0.0
      %540 = vmatmul.mubr.f32.gmra.mrb[0].mxu0 %v336
      %v541 = vpop.f32.mrb[0].mxu0
      %v542 = vadd.f32 0.0, %v541
      %v543 = vpop.f32.mrb[0].mxu0
      %544 = vmatprep.mubr.f32.mxu0 0.0
      %545 = vmatmul.mubr.f32.gmra.mrb[0].mxu0 %v339
      %v546 = vpop.f32.mrb[0].mxu0
      %v547 = vadd.f32 0.0, %v546
      %v548 = vpop.f32.mrb[0].mxu0
      %549 = vmatprep.mubr.f32.mxu0 0.0
      %550 = vmatmul.mubr.f32.gmra.mrb[0].mxu0 %v342
      %v551 = vpop.f32.mrb[0].mxu0
      %v552 = vadd.f32 0.0, %v551
      %v553 = vpop.f32.mrb[0].mxu0
      %554 = vmatprep.mubr.f32.mxu0 0.0
      %555 = vmatmul.mubr.f32.gmra.mrb[0].mxu0 %v345
      %v556 = vpop.f32.mrb[0].mxu0
      %v557 = vadd.f32 0.0, %v556
      %v558 = vpop.f32.mrb[0].mxu0
      %559 = vmatprep.mubr.f32.mxu0 0.0
      %560 = vmatmul.mubr.f32.gmra.mrb[0].mxu0 %v348
      %v561 = vpop.f32.mrb[0].mxu0
      %v562 = vadd.f32 0.0, %v561
      %v563 = vpop.f32.mrb[0].mxu0
      %564 = vmatprep.mubr.f32.mxu0 0.0
      %565 = vmatmul.mubr.f32.gmra.mrb[0].mxu0 %v351
      %v566 = vpop.f32.mrb[0].mxu0
      %v567 = vadd.f32 0.0, %v566
      %v568 = vpop.f32.mrb[0].mxu0
      %569 = vmatprep.mubr.f32.mxu0 0.0
      %570 = vmatmul.mubr.f32.gmra.mrb[0].mxu0 %v354
      %v571 = vpop.f32.mrb[0].mxu0
      %v572 = vadd.f32 0.0, %v571
      %v573 = vpop.f32.mrb[0].mxu0
      %574 = vmatprep.mubr.f32.mxu0 0.0
      %575 = vmatmul.mubr.f32.gmra.mrb[0].mxu0 %v357
      %v576 = vpop.f32.mrb[0].mxu0
      %v577 = vadd.f32 0.0, %v576
      %v578 = vpop.f32.mrb[0].mxu0
      %579 = vmatprep.mubr.f32.mxu0 0.0
      %580 = vmatmul.mubr.f32.gmra.mrb[0].mxu0 %v360
      %v581 = vpop.f32.mrb[0].mxu0
      %v582 = vadd.f32 0.0, %v581
      %v583 = vpop.f32.mrb[0].mxu0
      %584 = vmatprep.mubr.f32.mxu0 0.0
      %585 = vmatmul.mubr.f32.gmra.mrb[0].mxu0 %v363
      %v586 = vpop.f32.mrb[0].mxu0
      %v587 = vadd.f32 0.0, %v586
      %v588 = vpop.f32.mrb[0].mxu0
      %589 = vdwg.mxu0
      %vm623 = vcmask 1040384
      %v624 = vrot.slane 0.0, 7
      %v625 = vsel %vm623, %v624, %v624
      %v626 = vrot.slane %v432, 7
      %v627 = vrot.slane %v437, 7
      %v628 = vsel %vm623, %v626, %v627
      %v629 = vrot.slane %v442, 7
      %v630 = vrot.slane %v447, 7
      %v631 = vsel %vm623, %v629, %v630
      %v632 = vrot.slane %v452, 7
      %v633 = vrot.slane %v457, 7
      %v634 = vsel %vm623, %v632, %v633
      %v635 = vrot.slane %v462, 7
      %v636 = vrot.slane %v467, 7
      %v637 = vsel %vm623, %v635, %v636
      %v638 = vrot.slane %v472, 7
      %v639 = vrot.slane %v477, 7
      %v640 = vsel %vm623, %v638, %v639
      %v641 = vrot.slane %v482, 7
      %v642 = vrot.slane %v487, 7
      %v643 = vsel %vm623, %v641, %v642
      %v644 = vrot.slane %v492, 7
      %v645 = vrot.slane %v497, 7
      %v646 = vsel %vm623, %v644, %v645
      %v647 = vrot.slane %v502, 7
      %v648 = vrot.slane %v507, 7
      %v649 = vsel %vm623, %v647, %v648
      %v650 = vrot.slane %v512, 7
      %v651 = vrot.slane %v517, 7
      %v652 = vsel %vm623, %v650, %v651
      %v653 = vrot.slane %v522, 7
      %v654 = vrot.slane %v527, 7
      %v655 = vsel %vm623, %v653, %v654
      %v656 = vrot.slane %v532, 7
      %v657 = vrot.slane %v537, 7
      %v658 = vsel %vm623, %v656, %v657
      %v659 = vrot.slane %v542, 7
      %v660 = vrot.slane %v547, 7
      %v661 = vsel %vm623, %v659, %v660
      %v662 = vrot.slane %v552, 7
      %v663 = vrot.slane %v557, 7
      %v664 = vsel %vm623, %v662, %v663
      %v665 = vrot.slane %v562, 7
      %v666 = vrot.slane %v567, 7
      %v667 = vsel %vm623, %v665, %v666
      %v668 = vrot.slane %v572, 7
      %v669 = vrot.slane %v577, 7
      %v670 = vsel %vm623, %v668, %v669
      %v671 = vrot.slane %v582, 7
      %v672 = vrot.slane %v587, 7
      %v673 = vsel %vm623, %v671, %v672
      %v724 = vsel %vm623, 0.0, %v624
      %v725 = vsel %vm623, 0.0, %v626
      %v726 = vsel %vm623, 0.0, %v629
      %v727 = vsel %vm623, 0.0, %v632
      %v728 = vsel %vm623, 0.0, %v635
      %v729 = vsel %vm623, 0.0, %v638
      %v730 = vsel %vm623, 0.0, %v641
      %v731 = vsel %vm623, 0.0, %v644
      %v732 = vsel %vm623, 0.0, %v647
      %v733 = vsel %vm623, 0.0, %v650
      %v734 = vsel %vm623, 0.0, %v653
      %v735 = vsel %vm623, 0.0, %v656
      %v736 = vsel %vm623, 0.0, %v659
      %v737 = vsel %vm623, 0.0, %v662
      %v738 = vsel %vm623, 0.0, %v665
      %v739 = vsel %vm623, 0.0, %v668
      %v740 = vsel %vm623, 0.0, %v671
      %v741 = vsel %vm623, %v624, 0.0
      %v742 = vsel %vm623, %v627, 0.0
      %v743 = vsel %vm623, %v630, 0.0
      %v744 = vsel %vm623, %v633, 0.0
      %v745 = vsel %vm623, %v636, 0.0
      %v746 = vsel %vm623, %v639, 0.0
      %v747 = vsel %vm623, %v642, 0.0
      %v748 = vsel %vm623, %v645, 0.0
      %v749 = vsel %vm623, %v648, 0.0
      %v750 = vsel %vm623, %v651, 0.0
      %v751 = vsel %vm623, %v654, 0.0
      %v752 = vsel %vm623, %v657, 0.0
      %v753 = vsel %vm623, %v660, 0.0
      %v754 = vsel %vm623, %v663, 0.0
      %v755 = vsel %vm623, %v666, 0.0
      %v756 = vsel %vm623, %v669, 0.0
      %v757 = vsel %vm623, %v672, 0.0
      %vm790 = vcmask 1046528
      %v791 = vrot.slane %v724, 1
      %v792 = vrot.slane %v625, 1
      %v793 = vsel %vm790, %v791, %v792
      %v794 = vrot.slane %v741, 1
      %v795 = vsel %vm790, %v792, %v794
      %v796 = vrot.slane %v725, 1
      %v797 = vrot.slane %v628, 1
      %v798 = vsel %vm790, %v796, %v797
      %v799 = vrot.slane %v742, 1
      %v800 = vsel %vm790, %v797, %v799
      %v801 = vrot.slane %v726, 1
      %v802 = vrot.slane %v631, 1
      %v803 = vsel %vm790, %v801, %v802
      %v804 = vrot.slane %v743, 1
      %v805 = vsel %vm790, %v802, %v804
      %v806 = vrot.slane %v727, 1
      %v807 = vrot.slane %v634, 1
      %v808 = vsel %vm790, %v806, %v807
      %v809 = vrot.slane %v744, 1
      %v810 = vsel %vm790, %v807, %v809
      %v811 = vrot.slane %v728, 1
      %v812 = vrot.slane %v637, 1
      %v813 = vsel %vm790, %v811, %v812
      %v814 = vrot.slane %v745, 1
      %v815 = vsel %vm790, %v812, %v814
      %v816 = vrot.slane %v729, 1
      %v817 = vrot.slane %v640, 1
      %v818 = vsel %vm790, %v816, %v817
      %v819 = vrot.slane %v746, 1
      %v820 = vsel %vm790, %v817, %v819
      %v821 = vrot.slane %v730, 1
      %v822 = vrot.slane %v643, 1
      %v823 = vsel %vm790, %v821, %v822
      %v824 = vrot.slane %v747, 1
      %v825 = vsel %vm790, %v822, %v824
      %v826 = vrot.slane %v731, 1
      %v827 = vrot.slane %v646, 1
      %v828 = vsel %vm790, %v826, %v827
      %v829 = vrot.slane %v748, 1
      %v830 = vsel %vm790, %v827, %v829
      %v831 = vrot.slane %v732, 1
      %v832 = vrot.slane %v649, 1
      %v833 = vsel %vm790, %v831, %v832
      %v834 = vrot.slane %v749, 1
      %v835 = vsel %vm790, %v832, %v834
      %v836 = vrot.slane %v733, 1
      %v837 = vrot.slane %v652, 1
      %v838 = vsel %vm790, %v836, %v837
      %v839 = vrot.slane %v750, 1
      %v840 = vsel %vm790, %v837, %v839
      %v841 = vrot.slane %v734, 1
      %v842 = vrot.slane %v655, 1
      %v843 = vsel %vm790, %v841, %v842
      %v844 = vrot.slane %v751, 1
      %v845 = vsel %vm790, %v842, %v844
      %v846 = vrot.slane %v735, 1
      %v847 = vrot.slane %v658, 1
      %v848 = vsel %vm790, %v846, %v847
      %v849 = vrot.slane %v752, 1
      %v850 = vsel %vm790, %v847, %v849
      %v851 = vrot.slane %v736, 1
      %v852 = vrot.slane %v661, 1
      %v853 = vsel %vm790, %v851, %v852
      %v854 = vrot.slane %v753, 1
      %v855 = vsel %vm790, %v852, %v854
      %v856 = vrot.slane %v737, 1
      %v857 = vrot.slane %v664, 1
      %v858 = vsel %vm790, %v856, %v857
      %v859 = vrot.slane %v754, 1
      %v860 = vsel %vm790, %v857, %v859
      %v861 = vrot.slane %v738, 1
      %v862 = vrot.slane %v667, 1
      %v863 = vsel %vm790, %v861, %v862
      %v864 = vrot.slane %v755, 1
      %v865 = vsel %vm790, %v862, %v864
      %v866 = vrot.slane %v739, 1
      %v867 = vrot.slane %v670, 1
      %v868 = vsel %vm790, %v866, %v867
      %v869 = vrot.slane %v756, 1
      %v870 = vsel %vm790, %v867, %v869
      %871 = vrot.lane.b32.xlu0 %v793, 8
      %v872 = vpop.permute.xlu0 %871
      %873 = vrot.lane.b32.xlu0 %v795, 8
      %v874 = vpop.permute.xlu0 %873
      %875 = vrot.lane.b32.xlu0 %v798, 8
      %v876 = vpop.permute.xlu0 %875
      %877 = vrot.lane.b32.xlu0 %v800, 8
      %v878 = vpop.permute.xlu0 %877
      %879 = vrot.lane.b32.xlu0 %v803, 8
      %v880 = vpop.permute.xlu0 %879
      %881 = vrot.lane.b32.xlu0 %v805, 8
      %v882 = vpop.permute.xlu0 %881
      %883 = vrot.lane.b32.xlu0 %v808, 8
      %v884 = vpop.permute.xlu0 %883
      %885 = vrot.lane.b32.xlu0 %v810, 8
      %v886 = vpop.permute.xlu0 %885
      %887 = vrot.lane.b32.xlu0 %v813, 8
      %v888 = vpop.permute.xlu0 %887
      %889 = vrot.lane.b32.xlu0 %v815, 8
      %v890 = vpop.permute.xlu0 %889
      %891 = vrot.lane.b32.xlu0 %v818, 8
      %v892 = vpop.permute.xlu0 %891
      %893 = vrot.lane.b32.xlu0 %v820, 8
      %v894 = vpop.permute.xlu0 %893
      %895 = vrot.lane.b32.xlu0 %v823, 8
      %v896 = vpop.permute.xlu0 %895
      %897 = vrot.lane.b32.xlu0 %v825, 8
      %v898 = vpop.permute.xlu0 %897
      %899 = vrot.lane.b32.xlu0 %v828, 8
      %v900 = vpop.permute.xlu0 %899
      %901 = vrot.lane.b32.xlu0 %v830, 8
      %v902 = vpop.permute.xlu0 %901
      %903 = vrot.lane.b32.xlu0 %v833, 8
      %v904 = vpop.permute.xlu0 %903
      %905 = vrot.lane.b32.xlu0 %v835, 8
      %v906 = vpop.permute.xlu0 %905
      %907 = vrot.lane.b32.xlu0 %v838, 8
      %v908 = vpop.permute.xlu0 %907
      %909 = vrot.lane.b32.xlu0 %v840, 8
      %v910 = vpop.permute.xlu0 %909
      %911 = vrot.lane.b32.xlu0 %v843, 8
      %v912 = vpop.permute.xlu0 %911
      %913 = vrot.lane.b32.xlu0 %v845, 8
      %v914 = vpop.permute.xlu0 %913
      %915 = vrot.lane.b32.xlu0 %v848, 8
      %v916 = vpop.permute.xlu0 %915
      %917 = vrot.lane.b32.xlu0 %v850, 8
      %v918 = vpop.permute.xlu0 %917
      %919 = vrot.lane.b32.xlu0 %v853, 8
      %v920 = vpop.permute.xlu0 %919
      %921 = vrot.lane.b32.xlu0 %v855, 8
      %v922 = vpop.permute.xlu0 %921
      %923 = vrot.lane.b32.xlu0 %v858, 8
      %v924 = vpop.permute.xlu0 %923
      %925 = vrot.lane.b32.xlu0 %v860, 8
      %v926 = vpop.permute.xlu0 %925
      %927 = vrot.lane.b32.xlu0 %v863, 8
      %v928 = vpop.permute.xlu0 %927
      %929 = vrot.lane.b32.xlu0 %v865, 8
      %v930 = vpop.permute.xlu0 %929
      %931 = vrot.lane.b32.xlu0 %v868, 8
      %v932 = vpop.permute.xlu0 %931
      %933 = vrot.lane.b32.xlu0 %v870, 8
      %v934 = vpop.permute.xlu0 %933
      %vm967 = vcmask 1045504
      %v968 = vrot.slane %v724, 2
      %v969 = vrot.slane %v625, 2
      %v970 = vsel %vm967, %v968, %v969
      %v971 = vrot.slane %v741, 2
      %v972 = vsel %vm967, %v969, %v971
      %v973 = vrot.slane %v725, 2
      %v974 = vrot.slane %v628, 2
      %v975 = vsel %vm967, %v973, %v974
      %v976 = vrot.slane %v742, 2
      %v977 = vsel %vm967, %v974, %v976
      %v978 = vrot.slane %v726, 2
      %v979 = vrot.slane %v631, 2
      %v980 = vsel %vm967, %v978, %v979
      %v981 = vrot.slane %v743, 2
      %v982 = vsel %vm967, %v979, %v981
      %v983 = vrot.slane %v727, 2
      %v984 = vrot.slane %v634, 2
      %v985 = vsel %vm967, %v983, %v984
      %v986 = vrot.slane %v744, 2
      %v987 = vsel %vm967, %v984, %v986
      %v988 = vrot.slane %v728, 2
      %v989 = vrot.slane %v637, 2
      %v990 = vsel %vm967, %v988, %v989
      %v991 = vrot.slane %v745, 2
      %v992 = vsel %vm967, %v989, %v991
      %v993 = vrot.slane %v729, 2
      %v994 = vrot.slane %v640, 2
      %v995 = vsel %vm967, %v993, %v994
      %v996 = vrot.slane %v746, 2
      %v997 = vsel %vm967, %v994, %v996
      %v998 = vrot.slane %v730, 2
      %v999 = vrot.slane %v643, 2
      %v1000 = vsel %vm967, %v998, %v999
      %v1001 = vrot.slane %v747, 2
      %v1002 = vsel %vm967, %v999, %v1001
      %v1003 = vrot.slane %v731, 2
      %v1004 = vrot.slane %v646, 2
      %v1005 = vsel %vm967, %v1003, %v1004
      %v1006 = vrot.slane %v748, 2
      %v1007 = vsel %vm967, %v1004, %v1006
      %v1008 = vrot.slane %v732, 2
      %v1009 = vrot.slane %v649, 2
      %v1010 = vsel %vm967, %v1008, %v1009
      %v1011 = vrot.slane %v749, 2
      %v1012 = vsel %vm967, %v1009, %v1011
      %v1013 = vrot.slane %v733, 2
      %v1014 = vrot.slane %v652, 2
      %v1015 = vsel %vm967, %v1013, %v1014
      %v1016 = vrot.slane %v750, 2
      %v1017 = vsel %vm967, %v1014, %v1016
      %v1018 = vrot.slane %v734, 2
      %v1019 = vrot.slane %v655, 2
      %v1020 = vsel %vm967, %v1018, %v1019
      %v1021 = vrot.slane %v751, 2
      %v1022 = vsel %vm967, %v1019, %v1021
      %v1023 = vrot.slane %v735, 2
      %v1024 = vrot.slane %v658, 2
      %v1025 = vsel %vm967, %v1023, %v1024
      %v1026 = vrot.slane %v752, 2
      %v1027 = vsel %vm967, %v1024, %v1026
      %v1028 = vrot.slane %v736, 2
      %v1029 = vrot.slane %v661, 2
      %v1030 = vsel %vm967, %v1028, %v1029
      %v1031 = vrot.slane %v753, 2
      %v1032 = vsel %vm967, %v1029, %v1031
      %v1033 = vrot.slane %v737, 2
      %v1034 = vrot.slane %v664, 2
      %v1035 = vsel %vm967, %v1033, %v1034
      %v1036 = vrot.slane %v754, 2
      %v1037 = vsel %vm967, %v1034, %v1036
      %v1038 = vrot.slane %v738, 2
      %v1039 = vrot.slane %v667, 2
      %v1040 = vsel %vm967, %v1038, %v1039
      %v1041 = vrot.slane %v755, 2
      %v1042 = vsel %vm967, %v1039, %v1041
      %v1043 = vrot.slane %v739, 2
      %v1044 = vrot.slane %v670, 2
      %v1045 = vsel %vm967, %v1043, %v1044
      %v1046 = vrot.slane %v756, 2
      %v1047 = vsel %vm967, %v1044, %v1046
      %1048 = vrot.lane.b32.xlu0 %v970, 16
      %v1049 = vpop.permute.xlu0 %1048
      %1050 = vrot.lane.b32.xlu0 %v972, 16
      %v1051 = vpop.permute.xlu0 %1050
      %1052 = vrot.lane.b32.xlu0 %v975, 16
      %v1053 = vpop.permute.xlu0 %1052
      %1054 = vrot.lane.b32.xlu0 %v977, 16
      %v1055 = vpop.permute.xlu0 %1054
      %1056 = vrot.lane.b32.xlu0 %v980, 16
      %v1057 = vpop.permute.xlu0 %1056
      %1058 = vrot.lane.b32.xlu0 %v982, 16
      %v1059 = vpop.permute.xlu0 %1058
      %1060 = vrot.lane.b32.xlu0 %v985, 16
      %v1061 = vpop.permute.xlu0 %1060
      %1062 = vrot.lane.b32.xlu0 %v987, 16
      %v1063 = vpop.permute.xlu0 %1062
      %1064 = vrot.lane.b32.xlu0 %v990, 16
      %v1065 = vpop.permute.xlu0 %1064
      %1066 = vrot.lane.b32.xlu0 %v992, 16
      %v1067 = vpop.permute.xlu0 %1066
      %1068 = vrot.lane.b32.xlu0 %v995, 16
      %v1069 = vpop.permute.xlu0 %1068
      %1070 = vrot.lane.b32.xlu0 %v997, 16
      %v1071 = vpop.permute.xlu0 %1070
      %1072 = vrot.lane.b32.xlu0 %v1000, 16
      %v1073 = vpop.permute.xlu0 %1072
      %1074 = vrot.lane.b32.xlu0 %v1002, 16
      %v1075 = vpop.permute.xlu0 %1074
      %1076 = vrot.lane.b32.xlu0 %v1005, 16
      %v1077 = vpop.permute.xlu0 %1076
      %1078 = vrot.lane.b32.xlu0 %v1007, 16
      %v1079 = vpop.permute.xlu0 %1078
      %1080 = vrot.lane.b32.xlu0 %v1010, 16
      %v1081 = vpop.permute.xlu0 %1080
      %1082 = vrot.lane.b32.xlu0 %v1012, 16
      %v1083 = vpop.permute.xlu0 %1082
      %1084 = vrot.lane.b32.xlu0 %v1015, 16
      %v1085 = vpop.permute.xlu0 %1084
      %1086 = vrot.lane.b32.xlu0 %v1017, 16
      %v1087 = vpop.permute.xlu0 %1086
      %1088 = vrot.lane.b32.xlu0 %v1020, 16
      %v1089 = vpop.permute.xlu0 %1088
      %1090 = vrot.lane.b32.xlu0 %v1022, 16
      %v1091 = vpop.permute.xlu0 %1090
      %1092 = vrot.lane.b32.xlu0 %v1025, 16
      %v1093 = vpop.permute.xlu0 %1092
      %1094 = vrot.lane.b32.xlu0 %v1027, 16
      %v1095 = vpop.permute.xlu0 %1094
      %1096 = vrot.lane.b32.xlu0 %v1030, 16
      %v1097 = vpop.permute.xlu0 %1096
      %1098 = vrot.lane.b32.xlu0 %v1032, 16
      %v1099 = vpop.permute.xlu0 %1098
      %1100 = vrot.lane.b32.xlu0 %v1035, 16
      %v1101 = vpop.permute.xlu0 %1100
      %1102 = vrot.lane.b32.xlu0 %v1037, 16
      %v1103 = vpop.permute.xlu0 %1102
      %1104 = vrot.lane.b32.xlu0 %v1040, 16
      %v1105 = vpop.permute.xlu0 %1104
      %1106 = vrot.lane.b32.xlu0 %v1042, 16
      %v1107 = vpop.permute.xlu0 %1106
      %1108 = vrot.lane.b32.xlu0 %v1045, 16
      %v1109 = vpop.permute.xlu0 %1108
      %1110 = vrot.lane.b32.xlu0 %v1047, 16
      %v1111 = vpop.permute.xlu0 %1110
      %vm1144 = vcmask 64512
      %v1145 = vsel %vm1144, %v724, %v872
      %v1146 = vsel %vm1144, %v625, %v874
      %v1147 = vsel %vm1144, %v725, %v876
      %v1148 = vsel %vm1144, %v628, %v878
      %v1149 = vsel %vm1144, %v726, %v880
      %v1150 = vsel %vm1144, %v631, %v882
      %v1151 = vsel %vm1144, %v727, %v884
      %v1152 = vsel %vm1144, %v634, %v886
      %v1153 = vsel %vm1144, %v728, %v888
      %v1154 = vsel %vm1144, %v637, %v890
      %v1155 = vsel %vm1144, %v729, %v892
      %v1156 = vsel %vm1144, %v640, %v894
      %v1157 = vsel %vm1144, %v730, %v896
      %v1158 = vsel %vm1144, %v643, %v898
      %v1159 = vsel %vm1144, %v731, %v900
      %v1160 = vsel %vm1144, %v646, %v902
      %v1161 = vsel %vm1144, %v732, %v904
      %v1162 = vsel %vm1144, %v649, %v906
      %v1163 = vsel %vm1144, %v733, %v908
      %v1164 = vsel %vm1144, %v652, %v910
      %v1165 = vsel %vm1144, %v734, %v912
      %v1166 = vsel %vm1144, %v655, %v914
      %v1167 = vsel %vm1144, %v735, %v916
      %v1168 = vsel %vm1144, %v658, %v918
      %v1169 = vsel %vm1144, %v736, %v920
      %v1170 = vsel %vm1144, %v661, %v922
      %v1171 = vsel %vm1144, %v737, %v924
      %v1172 = vsel %vm1144, %v664, %v926
      %v1173 = vsel %vm1144, %v738, %v928
      %v1174 = vsel %vm1144, %v667, %v930
      %v1175 = vsel %vm1144, %v739, %v932
      %v1176 = vsel %vm1144, %v670, %v934
      %vm1177 = vcmask 130048
      %v1178 = vsel %vm1177, %v1145, %v1049
      %v1179 = vsel %vm1177, %v1146, %v1051
      %v1180 = vsel %vm1177, %v1147, %v1053
      %v1181 = vsel %vm1177, %v1148, %v1055
      %v1182 = vsel %vm1177, %v1149, %v1057
      %v1183 = vsel %vm1177, %v1150, %v1059
      %v1184 = vsel %vm1177, %v1151, %v1061
      %v1185 = vsel %vm1177, %v1152, %v1063
      %v1186 = vsel %vm1177, %v1153, %v1065
      %v1187 = vsel %vm1177, %v1154, %v1067
      %v1188 = vsel %vm1177, %v1155, %v1069
      %v1189 = vsel %vm1177, %v1156, %v1071
      %v1190 = vsel %vm1177, %v1157, %v1073
      %v1191 = vsel %vm1177, %v1158, %v1075
      %v1192 = vsel %vm1177, %v1159, %v1077
      %v1193 = vsel %vm1177, %v1160, %v1079
      %v1194 = vsel %vm1177, %v1161, %v1081
      %v1195 = vsel %vm1177, %v1162, %v1083
      %v1196 = vsel %vm1177, %v1163, %v1085
      %v1197 = vsel %vm1177, %v1164, %v1087
      %v1198 = vsel %vm1177, %v1165, %v1089
      %v1199 = vsel %vm1177, %v1166, %v1091
      %v1200 = vsel %vm1177, %v1167, %v1093
      %v1201 = vsel %vm1177, %v1168, %v1095
      %v1202 = vsel %vm1177, %v1169, %v1097
      %v1203 = vsel %vm1177, %v1170, %v1099
      %v1204 = vsel %vm1177, %v1171, %v1101
      %v1205 = vsel %vm1177, %v1172, %v1103
      %v1206 = vsel %vm1177, %v1173, %v1105
      %v1207 = vsel %vm1177, %v1174, %v1107
      %v1208 = vsel %vm1177, %v1175, %v1109
      %v1209 = vsel %vm1177, %v1176, %v1111
      %v1210 = vpack.c.bf16 %v1179, %v1178
      %v1211 = vpack.c.bf16 %v1181, %v1180
      %v1212 = vpack.c.bf16 %v1183, %v1182
      %v1213 = vpack.c.bf16 %v1185, %v1184
      %v1214 = vpack.c.bf16 %v1187, %v1186
      %v1215 = vpack.c.bf16 %v1189, %v1188
      %v1216 = vpack.c.bf16 %v1191, %v1190
      %v1217 = vpack.c.bf16 %v1193, %v1192
      %v1218 = vpack.c.bf16 %v1195, %v1194
      %v1219 = vpack.c.bf16 %v1197, %v1196
      %v1220 = vpack.c.bf16 %v1199, %v1198
      %v1221 = vpack.c.bf16 %v1201, %v1200
      %v1222 = vpack.c.bf16 %v1203, %v1202
      %v1223 = vpack.c.bf16 %v1205, %v1204
      %v1224 = vpack.c.bf16 %v1207, %v1206
      %v1225 = vpack.c.bf16 %v1209, %v1208
      %v1226 = vld [vmem:[%s2] sm:$0xf]
      %v1227 = vld [vmem:[%s2 + $0x4] sm:$0xf]
      %v1228 = vld [vmem:[%s2 + $0x8] sm:$0xf]
      %v1231 = vrot.slane %v740, 1
      %v1232 = vrot.slane %v673, 1
      %v1233 = vsel %vm790, %v1231, %v1232
      %v1234 = vrot.slane %v757, 1
      %v1235 = vsel %vm790, %v1232, %v1234
      %1236 = vrot.lane.b32.xlu0 %v1233, 8
      %v1237 = vpop.permute.xlu0 %1236
      %1238 = vrot.lane.b32.xlu0 %v1235, 8
      %v1239 = vpop.permute.xlu0 %1238
      %v1242 = vrot.slane %v740, 2
      %v1243 = vrot.slane %v673, 2
      %v1244 = vsel %vm967, %v1242, %v1243
      %v1245 = vrot.slane %v757, 2
      %v1246 = vsel %vm967, %v1243, %v1245
      %1247 = vrot.lane.b32.xlu0 %v1244, 16
      %v1248 = vpop.permute.xlu0 %1247
      %1249 = vrot.lane.b32.xlu0 %v1246, 16
      %v1250 = vpop.permute.xlu0 %1249
      %v1253 = vsel %vm1144, %v740, %v1237
      %v1254 = vsel %vm1144, %v673, %v1239
      %v1255 = vsel %vm1177, %v1253, %v1248
      %v1256 = vsel %vm1177, %v1254, %v1250
      %v1257 = vpack.c.bf16 %v1256, %v1255
      %s1258 = scalar_lea.vmem %s2, 12
      %v1259 = vld [vmem:[%s1258] sm:$0xf]
      %v1260 = vld [vmem:[%s1258 + $0x4] sm:$0xf]
      %v1261 = vld [vmem:[%s1258 + $0x8] sm:$0xf]
      %v1265 = vunpack.c.l.b16 %v1259
      %v1266 = vunpack.c.l.b16 %v1260
      %v1267 = vunpack.c.l.b16 %v1261
      %v1268 = vpack.c.b16 %v1266, %v1265
      %v1269 = vpack.c.b16 %v1267, %v1267
      %vm1271 = vcmask 195584
      %v1273 = vsel %vm1271, %v1211, 0
      %v1276 = vsel %vm1271, %v1212, 0
      %v1279 = vsel %vm1271, %v1213, 0
      %v1282 = vsel %vm1271, %v1214, 0
      %v1285 = vsel %vm1271, %v1215, 0
      %v1288 = vsel %vm1271, %v1216, 0
      %v1291 = vsel %vm1271, %v1217, 0
      %v1294 = vsel %vm1271, %v1218, 0
      %v1297 = vsel %vm1271, %v1219, 0
      %v1300 = vsel %vm1271, %v1220, 0
      %v1303 = vsel %vm1271, %v1221, 0
      %v1306 = vsel %vm1271, %v1222, 0
      %v1309 = vsel %vm1271, %v1223, 0
      %v1312 = vsel %vm1271, %v1224, 0
      %v1315 = vsel %vm1271, %v1225, 0
      %v1318 = vsel %vm1271, %v1257, 0
      %vm1320 = vcmask 1043456
      %v1322 = vsel %vm1320, %v1269, 0
      %1324 = vmatprep.subr.bf16.mxu0 0
      %1325 = vmatpush1.bf16.msra.mxu0 %v1268
      %1326 = vmatprep.subr.bf16.mxu0 0
      %1327 = vmatpush1.bf16.msra.mxu0 %v1322
      %1328 = vmatprep.subr.bf16.mxu0 0
      %1329 = vmatpush1.bf16.msra.mxu0 0
      %1330 = vmatprep.subr.bf16.mxu0 0
      %1331 = vmatpush1.bf16.msra.mxu0 0
      %1332 = vmatprep.subr.bf16.mxu0 0
      %1333 = vmatpush1.bf16.msra.mxu0 0
      %1334 = vmatprep.subr.bf16.mxu0 0
      %1335 = vmatpush1.bf16.msra.mxu0 0
      %1336 = vmatprep.subr.bf16.mxu0 0
      %1337 = vmatpush1.bf16.msra.mxu0 0
      %1338 = vmatprep.subr.bf16.mxu0 0
      %1339 = vmatpush1.bf16.msra.mxu0 0
      %1340 = vmatprep.subr.bf16.mxu0 0
      %1341 = vmatpush1.bf16.msra.mxu0 0
      %1342 = vmatprep.subr.bf16.mxu0 0
      %1343 = vmatpush1.bf16.msra.mxu0 0
      %1344 = vmatprep.subr.bf16.mxu0 0
      %1345 = vmatpush1.bf16.msra.mxu0 0
      %1346 = vmatprep.subr.bf16.mxu0 0
      %1347 = vmatpush1.bf16.msra.mxu0 0
      %1348 = vmatprep.subr.bf16.mxu0 0
      %1349 = vmatpush1.bf16.msra.mxu0 0
      %1350 = vmatprep.subr.bf16.mxu0 0
      %1351 = vmatpush1.bf16.msra.mxu0 0
      %1352 = vmatprep.subr.bf16.mxu0 0
      %1353 = vmatpush1.bf16.msra.mxu0 0
      %1354 = vmatprep.subr.bf16.mxu0 0
      %1355 = vmatpush1.bf16.msra.mxu0 0
      %1356 = vmatprep.mubr.bf16.mxu0 0
      %1357 = vmatmul.mubr.bf16.gmra.mrb[0].mxu0 %v1273
      %v1358 = vpop.f32.mrb[0].mxu0
      %v1359 = vadd.f32 0.0, %v1358
      %v1360 = vpop.f32.mrb[0].mxu0
      %v1361 = vpop.f32.mrb[0].mxu0
      %v1362 = vadd.f32 0.0, %v1361
      %v1363 = vpop.f32.mrb[0].mxu0
      %1364 = vmatprep.mubr.bf16.mxu0 0
      %1365 = vmatmul.mubr.bf16.gmra.mrb[0].mxu0 %v1276
      %v1366 = vpop.f32.mrb[0].mxu0
      %v1367 = vadd.f32 0.0, %v1366
      %v1368 = vpop.f32.mrb[0].mxu0
      %v1369 = vpop.f32.mrb[0].mxu0
      %v1370 = vadd.f32 0.0, %v1369
      %v1371 = vpop.f32.mrb[0].mxu0
      %1372 = vmatprep.mubr.bf16.mxu0 0
      %1373 = vmatmul.mubr.bf16.gmra.mrb[0].mxu0 %v1279
      %v1374 = vpop.f32.mrb[0].mxu0
      %v1375 = vadd.f32 0.0, %v1374
      %v1376 = vpop.f32.mrb[0].mxu0
      %v1377 = vpop.f32.mrb[0].mxu0
      %v1378 = vadd.f32 0.0, %v1377
      %v1379 = vpop.f32.mrb[0].mxu0
      %1380 = vmatprep.mubr.bf16.mxu0 0
      %1381 = vmatmul.mubr.bf16.gmra.mrb[0].mxu0 %v1282
      %v1382 = vpop.f32.mrb[0].mxu0
      %v1383 = vadd.f32 0.0, %v1382
      %v1384 = vpop.f32.mrb[0].mxu0
      %v1385 = vpop.f32.mrb[0].mxu0
      %v1386 = vadd.f32 0.0, %v1385
      %v1387 = vpop.f32.mrb[0].mxu0
      %1388 = vmatprep.mubr.bf16.mxu0 0
      %1389 = vmatmul.mubr.bf16.gmra.mrb[0].mxu0 %v1285
      %v1390 = vpop.f32.mrb[0].mxu0
      %v1391 = vadd.f32 0.0, %v1390
      %v1392 = vpop.f32.mrb[0].mxu0
      %v1393 = vpop.f32.mrb[0].mxu0
      %v1394 = vadd.f32 0.0, %v1393
      %v1395 = vpop.f32.mrb[0].mxu0
      %1396 = vmatprep.mubr.bf16.mxu0 0
      %1397 = vmatmul.mubr.bf16.gmra.mrb[0].mxu0 %v1288
      %v1398 = vpop.f32.mrb[0].mxu0
      %v1399 = vadd.f32 0.0, %v1398
      %v1400 = vpop.f32.mrb[0].mxu0
      %v1401 = vpop.f32.mrb[0].mxu0
      %v1402 = vadd.f32 0.0, %v1401
      %v1403 = vpop.f32.mrb[0].mxu0
      %1404 = vmatprep.mubr.bf16.mxu0 0
      %1405 = vmatmul.mubr.bf16.gmra.mrb[0].mxu0 %v1291
      %v1406 = vpop.f32.mrb[0].mxu0
      %v1407 = vadd.f32 0.0, %v1406
      %v1408 = vpop.f32.mrb[0].mxu0
      %v1409 = vpop.f32.mrb[0].mxu0
      %v1410 = vadd.f32 0.0, %v1409
      %v1411 = vpop.f32.mrb[0].mxu0
      %1412 = vmatprep.mubr.bf16.mxu0 0
      %1413 = vmatmul.mubr.bf16.gmra.mrb[0].mxu0 %v1294
      %v1414 = vpop.f32.mrb[0].mxu0
      %v1415 = vadd.f32 0.0, %v1414
      %v1416 = vpop.f32.mrb[0].mxu0
      %v1417 = vpop.f32.mrb[0].mxu0
      %v1418 = vadd.f32 0.0, %v1417
      %v1419 = vpop.f32.mrb[0].mxu0
      %1420 = vmatprep.mubr.bf16.mxu0 0
      %1421 = vmatmul.mubr.bf16.gmra.mrb[0].mxu0 %v1297
      %v1422 = vpop.f32.mrb[0].mxu0
      %v1423 = vadd.f32 0.0, %v1422
      %v1424 = vpop.f32.mrb[0].mxu0
      %v1425 = vpop.f32.mrb[0].mxu0
      %v1426 = vadd.f32 0.0, %v1425
      %v1427 = vpop.f32.mrb[0].mxu0
      %1428 = vmatprep.mubr.bf16.mxu0 0
      %1429 = vmatmul.mubr.bf16.gmra.mrb[0].mxu0 %v1300
      %v1430 = vpop.f32.mrb[0].mxu0
      %v1431 = vadd.f32 0.0, %v1430
      %v1432 = vpop.f32.mrb[0].mxu0
      %v1433 = vpop.f32.mrb[0].mxu0
      %v1434 = vadd.f32 0.0, %v1433
      %v1435 = vpop.f32.mrb[0].mxu0
      %1436 = vmatprep.mubr.bf16.mxu0 0
      %1437 = vmatmul.mubr.bf16.gmra.mrb[0].mxu0 %v1303
      %v1438 = vpop.f32.mrb[0].mxu0
      %v1439 = vadd.f32 0.0, %v1438
      %v1440 = vpop.f32.mrb[0].mxu0
      %v1441 = vpop.f32.mrb[0].mxu0
      %v1442 = vadd.f32 0.0, %v1441
      %v1443 = vpop.f32.mrb[0].mxu0
      %1444 = vmatprep.mubr.bf16.mxu0 0
      %1445 = vmatmul.mubr.bf16.gmra.mrb[0].mxu0 %v1306
      %v1446 = vpop.f32.mrb[0].mxu0
      %v1447 = vadd.f32 0.0, %v1446
      %v1448 = vpop.f32.mrb[0].mxu0
      %v1449 = vpop.f32.mrb[0].mxu0
      %v1450 = vadd.f32 0.0, %v1449
      %v1451 = vpop.f32.mrb[0].mxu0
      %1452 = vmatprep.mubr.bf16.mxu0 0
      %1453 = vmatmul.mubr.bf16.gmra.mrb[0].mxu0 %v1309
      %v1454 = vpop.f32.mrb[0].mxu0
      %v1455 = vadd.f32 0.0, %v1454
      %v1456 = vpop.f32.mrb[0].mxu0
      %v1457 = vpop.f32.mrb[0].mxu0
      %v1458 = vadd.f32 0.0, %v1457
      %v1459 = vpop.f32.mrb[0].mxu0
      %1460 = vmatprep.mubr.bf16.mxu0 0
      %1461 = vmatmul.mubr.bf16.gmra.mrb[0].mxu0 %v1312
      %v1462 = vpop.f32.mrb[0].mxu0
      %v1463 = vadd.f32 0.0, %v1462
      %v1464 = vpop.f32.mrb[0].mxu0
      %v1465 = vpop.f32.mrb[0].mxu0
      %v1466 = vadd.f32 0.0, %v1465
      %v1467 = vpop.f32.mrb[0].mxu0
      %1468 = vmatprep.mubr.bf16.mxu0 0
      %1469 = vmatmul.mubr.bf16.gmra.mrb[0].mxu0 %v1315
      %v1470 = vpop.f32.mrb[0].mxu0
      %v1471 = vadd.f32 0.0, %v1470
      %v1472 = vpop.f32.mrb[0].mxu0
      %v1473 = vpop.f32.mrb[0].mxu0
      %v1474 = vadd.f32 0.0, %v1473
      %v1475 = vpop.f32.mrb[0].mxu0
      %1476 = vmatprep.mubr.bf16.mxu0 0
      %1477 = vmatmul.mubr.bf16.gmra.mrb[0].mxu0 %v1318
      %v1478 = vpop.f32.mrb[0].mxu0
      %v1479 = vadd.f32 0.0, %v1478
      %v1480 = vpop.f32.mrb[0].mxu0
      %v1481 = vpop.f32.mrb[0].mxu0
      %v1482 = vadd.f32 0.0, %v1481
      %v1483 = vpop.f32.mrb[0].mxu0
      %1484 = vdwg.mxu0
      %v1488 = vunpack.c.l.b16 %v1226
      %v1489 = vunpack.c.l.b16 %v1227
      %v1490 = vunpack.c.l.b16 %v1228
      %v1491 = vpack.c.b16 %v1489, %v1488
      %v1492 = vpack.c.b16 %v1490, %v1490
      %v1495 = vsel %vm1271, %v1210, 0
      %v1498 = vsel %vm1320, %v1492, 0
      %1500 = vmatprep.subr.bf16.mxu0 0
      %1501 = vmatpush1.bf16.msra.mxu0 %v1491
      %1502 = vmatprep.subr.bf16.mxu0 0
      %1503 = vmatpush1.bf16.msra.mxu0 %v1498
      %1504 = vmatprep.subr.bf16.mxu0 0
      %1505 = vmatpush1.bf16.msra.mxu0 0
      %1506 = vmatprep.subr.bf16.mxu0 0
      %1507 = vmatpush1.bf16.msra.mxu0 0
      %1508 = vmatprep.subr.bf16.mxu0 0
      %1509 = vmatpush1.bf16.msra.mxu0 0
      %1510 = vmatprep.subr.bf16.mxu0 0
      %1511 = vmatpush1.bf16.msra.mxu0 0
      %1512 = vmatprep.subr.bf16.mxu0 0
      %1513 = vmatpush1.bf16.msra.mxu0 0
      %1514 = vmatprep.subr.bf16.mxu0 0
      %1515 = vmatpush1.bf16.msra.mxu0 0
      %1516 = vmatprep.subr.bf16.mxu0 0
      %1517 = vmatpush1.bf16.msra.mxu0 0
      %1518 = vmatprep.subr.bf16.mxu0 0
      %1519 = vmatpush1.bf16.msra.mxu0 0
      %1520 = vmatprep.subr.bf16.mxu0 0
      %1521 = vmatpush1.bf16.msra.mxu0 0
      %1522 = vmatprep.subr.bf16.mxu0 0
      %1523 = vmatpush1.bf16.msra.mxu0 0
      %1524 = vmatprep.subr.bf16.mxu0 0
      %1525 = vmatpush1.bf16.msra.mxu0 0
      %1526 = vmatprep.subr.bf16.mxu0 0
      %1527 = vmatpush1.bf16.msra.mxu0 0
      %1528 = vmatprep.subr.bf16.mxu0 0
      %1529 = vmatpush1.bf16.msra.mxu0 0
      %1530 = vmatprep.subr.bf16.mxu0 0
      %1531 = vmatpush1.bf16.msra.mxu0 0
      %1532 = vmatprep.mubr.bf16.mxu0 0
      %1533 = vmatmul.mubr.bf16.gmra.mrb[0].mxu0 %v1495
      %v1534 = vpop.f32.mrb[0].mxu0
      %v1535 = vadd.f32 %v1359, %v1534
      %v1536 = vpop.f32.mrb[0].mxu0
      %v1537 = vpop.f32.mrb[0].mxu0
      %v1538 = vadd.f32 %v1362, %v1537
      %v1539 = vpop.f32.mrb[0].mxu0
      %1540 = vmatprep.mubr.bf16.mxu0 0
      %1541 = vmatmul.mubr.bf16.gmra.mrb[0].mxu0 %v1273
      %v1542 = vpop.f32.mrb[0].mxu0
      %v1543 = vadd.f32 %v1367, %v1542
      %v1544 = vpop.f32.mrb[0].mxu0
      %v1545 = vpop.f32.mrb[0].mxu0
      %v1546 = vadd.f32 %v1370, %v1545
      %v1547 = vpop.f32.mrb[0].mxu0
      %1548 = vmatprep.mubr.bf16.mxu0 0
      %1549 = vmatmul.mubr.bf16.gmra.mrb[0].mxu0 %v1276
      %v1550 = vpop.f32.mrb[0].mxu0
      %v1551 = vadd.f32 %v1375, %v1550
      %v1552 = vpop.f32.mrb[0].mxu0
      %v1553 = vpop.f32.mrb[0].mxu0
      %v1554 = vadd.f32 %v1378, %v1553
      %v1555 = vpop.f32.mrb[0].mxu0
      %1556 = vmatprep.mubr.bf16.mxu0 0
      %1557 = vmatmul.mubr.bf16.gmra.mrb[0].mxu0 %v1279
      %v1558 = vpop.f32.mrb[0].mxu0
      %v1559 = vadd.f32 %v1383, %v1558
      %v1560 = vpop.f32.mrb[0].mxu0
      %v1561 = vpop.f32.mrb[0].mxu0
      %v1562 = vadd.f32 %v1386, %v1561
      %v1563 = vpop.f32.mrb[0].mxu0
      %1564 = vmatprep.mubr.bf16.mxu0 0
      %1565 = vmatmul.mubr.bf16.gmra.mrb[0].mxu0 %v1282
      %v1566 = vpop.f32.mrb[0].mxu0
      %v1567 = vadd.f32 %v1391, %v1566
      %v1568 = vpop.f32.mrb[0].mxu0
      %v1569 = vpop.f32.mrb[0].mxu0
      %v1570 = vadd.f32 %v1394, %v1569
      %v1571 = vpop.f32.mrb[0].mxu0
      %1572 = vmatprep.mubr.bf16.mxu0 0
      %1573 = vmatmul.mubr.bf16.gmra.mrb[0].mxu0 %v1285
      %v1574 = vpop.f32.mrb[0].mxu0
      %v1575 = vadd.f32 %v1399, %v1574
      %v1576 = vpop.f32.mrb[0].mxu0
      %v1577 = vpop.f32.mrb[0].mxu0
      %v1578 = vadd.f32 %v1402, %v1577
      %v1579 = vpop.f32.mrb[0].mxu0
      %1580 = vmatprep.mubr.bf16.mxu0 0
      %1581 = vmatmul.mubr.bf16.gmra.mrb[0].mxu0 %v1288
      %v1582 = vpop.f32.mrb[0].mxu0
      %v1583 = vadd.f32 %v1407, %v1582
      %v1584 = vpop.f32.mrb[0].mxu0
      %v1585 = vpop.f32.mrb[0].mxu0
      %v1586 = vadd.f32 %v1410, %v1585
      %v1587 = vpop.f32.mrb[0].mxu0
      %1588 = vmatprep.mubr.bf16.mxu0 0
      %1589 = vmatmul.mubr.bf16.gmra.mrb[0].mxu0 %v1291
      %v1590 = vpop.f32.mrb[0].mxu0
      %v1591 = vadd.f32 %v1415, %v1590
      %v1592 = vpop.f32.mrb[0].mxu0
      %v1593 = vpop.f32.mrb[0].mxu0
      %v1594 = vadd.f32 %v1418, %v1593
      %v1595 = vpop.f32.mrb[0].mxu0
      %1596 = vmatprep.mubr.bf16.mxu0 0
      %1597 = vmatmul.mubr.bf16.gmra.mrb[0].mxu0 %v1294
      %v1598 = vpop.f32.mrb[0].mxu0
      %v1599 = vadd.f32 %v1423, %v1598
      %v1600 = vpop.f32.mrb[0].mxu0
      %v1601 = vpop.f32.mrb[0].mxu0
      %v1602 = vadd.f32 %v1426, %v1601
      %v1603 = vpop.f32.mrb[0].mxu0
      %1604 = vmatprep.mubr.bf16.mxu0 0
      %1605 = vmatmul.mubr.bf16.gmra.mrb[0].mxu0 %v1297
      %v1606 = vpop.f32.mrb[0].mxu0
      %v1607 = vadd.f32 %v1431, %v1606
      %v1608 = vpop.f32.mrb[0].mxu0
      %v1609 = vpop.f32.mrb[0].mxu0
      %v1610 = vadd.f32 %v1434, %v1609
      %v1611 = vpop.f32.mrb[0].mxu0
      %1612 = vmatprep.mubr.bf16.mxu0 0
      %1613 = vmatmul.mubr.bf16.gmra.mrb[0].mxu0 %v1300
      %v1614 = vpop.f32.mrb[0].mxu0
      %v1615 = vadd.f32 %v1439, %v1614
      %v1616 = vpop.f32.mrb[0].mxu0
      %v1617 = vpop.f32.mrb[0].mxu0
      %v1618 = vadd.f32 %v1442, %v1617
      %v1619 = vpop.f32.mrb[0].mxu0
      %1620 = vmatprep.mubr.bf16.mxu0 0
      %1621 = vmatmul.mubr.bf16.gmra.mrb[0].mxu0 %v1303
      %v1622 = vpop.f32.mrb[0].mxu0
      %v1623 = vadd.f32 %v1447, %v1622
      %v1624 = vpop.f32.mrb[0].mxu0
      %v1625 = vpop.f32.mrb[0].mxu0
      %v1626 = vadd.f32 %v1450, %v1625
      %v1627 = vpop.f32.mrb[0].mxu0
      %1628 = vmatprep.mubr.bf16.mxu0 0
      %1629 = vmatmul.mubr.bf16.gmra.mrb[0].mxu0 %v1306
      %v1630 = vpop.f32.mrb[0].mxu0
      %v1631 = vadd.f32 %v1455, %v1630
      %v1632 = vpop.f32.mrb[0].mxu0
      %v1633 = vpop.f32.mrb[0].mxu0
      %v1634 = vadd.f32 %v1458, %v1633
      %v1635 = vpop.f32.mrb[0].mxu0
      %1636 = vmatprep.mubr.bf16.mxu0 0
      %1637 = vmatmul.mubr.bf16.gmra.mrb[0].mxu0 %v1309
      %v1638 = vpop.f32.mrb[0].mxu0
      %v1639 = vadd.f32 %v1463, %v1638
      %v1640 = vpop.f32.mrb[0].mxu0
      %v1641 = vpop.f32.mrb[0].mxu0
      %v1642 = vadd.f32 %v1466, %v1641
      %v1643 = vpop.f32.mrb[0].mxu0
      %1644 = vmatprep.mubr.bf16.mxu0 0
      %1645 = vmatmul.mubr.bf16.gmra.mrb[0].mxu0 %v1312
      %v1646 = vpop.f32.mrb[0].mxu0
      %v1647 = vadd.f32 %v1471, %v1646
      %v1648 = vpop.f32.mrb[0].mxu0
      %v1649 = vpop.f32.mrb[0].mxu0
      %v1650 = vadd.f32 %v1474, %v1649
      %v1651 = vpop.f32.mrb[0].mxu0
      %1652 = vmatprep.mubr.bf16.mxu0 0
      %1653 = vmatmul.mubr.bf16.gmra.mrb[0].mxu0 %v1315
      %v1654 = vpop.f32.mrb[0].mxu0
      %v1655 = vadd.f32 %v1479, %v1654
      %v1656 = vpop.f32.mrb[0].mxu0
      %v1657 = vpop.f32.mrb[0].mxu0
      %v1658 = vadd.f32 %v1482, %v1657
      %v1659 = vpop.f32.mrb[0].mxu0
      %1660 = vdwg.mxu0
      %s1661 = scalar_lea.vmem %s2, 24
      %v1662 = vld [vmem:[%s1661] sm:$0xf]
      %v1663 = vld [vmem:[%s1661 + $0x4] sm:$0xf]
      %v1664 = vld [vmem:[%s1661 + $0x8] sm:$0xf]
      %v1668 = vunpack.c.l.b16 %v1662
      %v1669 = vunpack.c.l.b16 %v1663
      %v1670 = vunpack.c.l.b16 %v1664
      %v1671 = vpack.c.b16 %v1669, %v1668
      %v1672 = vpack.c.b16 %v1670, %v1670
      %v1675 = vsel %vm1320, %v1672, 0
      %1677 = vmatprep.subr.bf16.mxu0 0
      %1678 = vmatpush1.bf16.msra.mxu0 %v1671
      %1679 = vmatprep.subr.bf16.mxu0 0
      %1680 = vmatpush1.bf16.msra.mxu0 %v1675
      %1681 = vmatprep.subr.bf16.mxu0 0
      %1682 = vmatpush1.bf16.msra.mxu0 0
      %1683 = vmatprep.subr.bf16.mxu0 0
      %1684 = vmatpush1.bf16.msra.mxu0 0
      %1685 = vmatprep.subr.bf16.mxu0 0
      %1686 = vmatpush1.bf16.msra.mxu0 0
      %1687 = vmatprep.subr.bf16.mxu0 0
      %1688 = vmatpush1.bf16.msra.mxu0 0
      %1689 = vmatprep.subr.bf16.mxu0 0
      %1690 = vmatpush1.bf16.msra.mxu0 0
      %1691 = vmatprep.subr.bf16.mxu0 0
      %1692 = vmatpush1.bf16.msra.mxu0 0
      %1693 = vmatprep.subr.bf16.mxu0 0
      %1694 = vmatpush1.bf16.msra.mxu0 0
      %1695 = vmatprep.subr.bf16.mxu0 0
      %1696 = vmatpush1.bf16.msra.mxu0 0
      %1697 = vmatprep.subr.bf16.mxu0 0
      %1698 = vmatpush1.bf16.msra.mxu0 0
      %1699 = vmatprep.subr.bf16.mxu0 0
      %1700 = vmatpush1.bf16.msra.mxu0 0
      %1701 = vmatprep.subr.bf16.mxu0 0
      %1702 = vmatpush1.bf16.msra.mxu0 0
      %1703 = vmatprep.subr.bf16.mxu0 0
      %1704 = vmatpush1.bf16.msra.mxu0 0
      %1705 = vmatprep.subr.bf16.mxu0 0
      %1706 = vmatpush1.bf16.msra.mxu0 0
      %1707 = vmatprep.subr.bf16.mxu0 0
      %1708 = vmatpush1.bf16.msra.mxu0 0
      %1709 = vmatprep.mubr.bf16.mxu0 0
      %1710 = vmatmul.mubr.bf16.gmra.mrb[0].mxu0 %v1276
      %v1711 = vpop.f32.mrb[0].mxu0
      %v1712 = vadd.f32 0.0, %v1711
      %v1713 = vpop.f32.mrb[0].mxu0
      %v1714 = vpop.f32.mrb[0].mxu0
      %v1715 = vadd.f32 0.0, %v1714
      %v1716 = vpop.f32.mrb[0].mxu0
      %1717 = vmatprep.mubr.bf16.mxu0 0
      %1718 = vmatmul.mubr.bf16.gmra.mrb[0].mxu0 %v1279
      %v1719 = vpop.f32.mrb[0].mxu0
      %v1720 = vadd.f32 0.0, %v1719
      %v1721 = vpop.f32.mrb[0].mxu0
      %v1722 = vpop.f32.mrb[0].mxu0
      %v1723 = vadd.f32 0.0, %v1722
      %v1724 = vpop.f32.mrb[0].mxu0
      %1725 = vmatprep.mubr.bf16.mxu0 0
      %1726 = vmatmul.mubr.bf16.gmra.mrb[0].mxu0 %v1282
      %v1727 = vpop.f32.mrb[0].mxu0
      %v1728 = vadd.f32 0.0, %v1727
      %v1729 = vpop.f32.mrb[0].mxu0
      %v1730 = vpop.f32.mrb[0].mxu0
      %v1731 = vadd.f32 0.0, %v1730
      %v1732 = vpop.f32.mrb[0].mxu0
      %1733 = vmatprep.mubr.bf16.mxu0 0
      %1734 = vmatmul.mubr.bf16.gmra.mrb[0].mxu0 %v1285
      %v1735 = vpop.f32.mrb[0].mxu0
      %v1736 = vadd.f32 0.0, %v1735
      %v1737 = vpop.f32.mrb[0].mxu0
      %v1738 = vpop.f32.mrb[0].mxu0
      %v1739 = vadd.f32 0.0, %v1738
      %v1740 = vpop.f32.mrb[0].mxu0
      %1741 = vmatprep.mubr.bf16.mxu0 0
      %1742 = vmatmul.mubr.bf16.gmra.mrb[0].mxu0 %v1288
      %v1743 = vpop.f32.mrb[0].mxu0
      %v1744 = vadd.f32 0.0, %v1743
      %v1745 = vpop.f32.mrb[0].mxu0
      %v1746 = vpop.f32.mrb[0].mxu0
      %v1747 = vadd.f32 0.0, %v1746
      %v1748 = vpop.f32.mrb[0].mxu0
      %1749 = vmatprep.mubr.bf16.mxu0 0
      %1750 = vmatmul.mubr.bf16.gmra.mrb[0].mxu0 %v1291
      %v1751 = vpop.f32.mrb[0].mxu0
      %v1752 = vadd.f32 0.0, %v1751
      %v1753 = vpop.f32.mrb[0].mxu0
      %v1754 = vpop.f32.mrb[0].mxu0
      %v1755 = vadd.f32 0.0, %v1754
      %v1756 = vpop.f32.mrb[0].mxu0
      %1757 = vmatprep.mubr.bf16.mxu0 0
      %1758 = vmatmul.mubr.bf16.gmra.mrb[0].mxu0 %v1294
      %v1759 = vpop.f32.mrb[0].mxu0
      %v1760 = vadd.f32 0.0, %v1759
      %v1761 = vpop.f32.mrb[0].mxu0
      %v1762 = vpop.f32.mrb[0].mxu0
      %v1763 = vadd.f32 0.0, %v1762
      %v1764 = vpop.f32.mrb[0].mxu0
      %1765 = vmatprep.mubr.bf16.mxu0 0
      %1766 = vmatmul.mubr.bf16.gmra.mrb[0].mxu0 %v1297
      %v1767 = vpop.f32.mrb[0].mxu0
      %v1768 = vadd.f32 0.0, %v1767
      %v1769 = vpop.f32.mrb[0].mxu0
      %v1770 = vpop.f32.mrb[0].mxu0
      %v1771 = vadd.f32 0.0, %v1770
      %v1772 = vpop.f32.mrb[0].mxu0
      %1773 = vmatprep.mubr.bf16.mxu0 0
      %1774 = vmatmul.mubr.bf16.gmra.mrb[0].mxu0 %v1300
      %v1775 = vpop.f32.mrb[0].mxu0
      %v1776 = vadd.f32 0.0, %v1775
      %v1777 = vpop.f32.mrb[0].mxu0
      %v1778 = vpop.f32.mrb[0].mxu0
      %v1779 = vadd.f32 0.0, %v1778
      %v1780 = vpop.f32.mrb[0].mxu0
      %1781 = vmatprep.mubr.bf16.mxu0 0
      %1782 = vmatmul.mubr.bf16.gmra.mrb[0].mxu0 %v1303
      %v1783 = vpop.f32.mrb[0].mxu0
      %v1784 = vadd.f32 0.0, %v1783
      %v1785 = vpop.f32.mrb[0].mxu0
      %v1786 = vpop.f32.mrb[0].mxu0
      %v1787 = vadd.f32 0.0, %v1786
      %v1788 = vpop.f32.mrb[0].mxu0
      %1789 = vmatprep.mubr.bf16.mxu0 0
      %1790 = vmatmul.mubr.bf16.gmra.mrb[0].mxu0 %v1306
      %v1791 = vpop.f32.mrb[0].mxu0
      %v1792 = vadd.f32 0.0, %v1791
      %v1793 = vpop.f32.mrb[0].mxu0
      %v1794 = vpop.f32.mrb[0].mxu0
      %v1795 = vadd.f32 0.0, %v1794
      %v1796 = vpop.f32.mrb[0].mxu0
      %1797 = vmatprep.mubr.bf16.mxu0 0
      %1798 = vmatmul.mubr.bf16.gmra.mrb[0].mxu0 %v1309
      %v1799 = vpop.f32.mrb[0].mxu0
      %v1800 = vadd.f32 0.0, %v1799
      %v1801 = vpop.f32.mrb[0].mxu0
      %v1802 = vpop.f32.mrb[0].mxu0
      %v1803 = vadd.f32 0.0, %v1802
      %v1804 = vpop.f32.mrb[0].mxu0
      %1805 = vmatprep.mubr.bf16.mxu0 0
      %1806 = vmatmul.mubr.bf16.gmra.mrb[0].mxu0 %v1312
      %v1807 = vpop.f32.mrb[0].mxu0
      %v1808 = vadd.f32 0.0, %v1807
      %v1809 = vpop.f32.mrb[0].mxu0
      %v1810 = vpop.f32.mrb[0].mxu0
      %v1811 = vadd.f32 0.0, %v1810
      %v1812 = vpop.f32.mrb[0].mxu0
      %1813 = vmatprep.mubr.bf16.mxu0 0
      %1814 = vmatmul.mubr.bf16.gmra.mrb[0].mxu0 %v1315
      %v1815 = vpop.f32.mrb[0].mxu0
      %v1816 = vadd.f32 0.0, %v1815
      %v1817 = vpop.f32.mrb[0].mxu0
      %v1818 = vpop.f32.mrb[0].mxu0
      %v1819 = vadd.f32 0.0, %v1818
      %v1820 = vpop.f32.mrb[0].mxu0
      %1821 = vmatprep.mubr.bf16.mxu0 0
      %1822 = vmatmul.mubr.bf16.gmra.mrb[0].mxu0 %v1318
      %v1823 = vpop.f32.mrb[0].mxu0
      %v1824 = vadd.f32 0.0, %v1823
      %v1825 = vpop.f32.mrb[0].mxu0
      %v1826 = vpop.f32.mrb[0].mxu0
      %v1827 = vadd.f32 0.0, %v1826
      %v1828 = vpop.f32.mrb[0].mxu0
      %1829 = vmatprep.mubr.bf16.mxu0 0
      %1830 = vmatmul.mubr.bf16.gmra.mrb[0].mxu0 %v1495
      %v1831 = vpop.f32.mrb[0].mxu0
      %v1832 = vadd.f32 0.0, %v1831
      %v1833 = vpop.f32.mrb[0].mxu0
      %v1834 = vpop.f32.mrb[0].mxu0
      %v1835 = vadd.f32 0.0, %v1834
      %v1836 = vpop.f32.mrb[0].mxu0
      %1837 = vdwg.mxu0
      %v1838 = vadd.f32 %v1535, %v1712
      %v1839 = vadd.f32 %v1538, %v1715
      %v1840 = vadd.f32 %v1543, %v1720
      %v1841 = vadd.f32 %v1546, %v1723
      %v1842 = vadd.f32 %v1551, %v1728
      %v1843 = vadd.f32 %v1554, %v1731
      %v1844 = vadd.f32 %v1559, %v1736
      %v1845 = vadd.f32 %v1562, %v1739
      %v1846 = vadd.f32 %v1567, %v1744
      %v1847 = vadd.f32 %v1570, %v1747
      %v1848 = vadd.f32 %v1575, %v1752
      %v1849 = vadd.f32 %v1578, %v1755
      %v1850 = vadd.f32 %v1583, %v1760
      %v1851 = vadd.f32 %v1586, %v1763
      %v1852 = vadd.f32 %v1591, %v1768
      %v1853 = vadd.f32 %v1594, %v1771
      %v1854 = vadd.f32 %v1599, %v1776
      %v1855 = vadd.f32 %v1602, %v1779
      %v1856 = vadd.f32 %v1607, %v1784
      %v1857 = vadd.f32 %v1610, %v1787
      %v1858 = vadd.f32 %v1615, %v1792
      %v1859 = vadd.f32 %v1618, %v1795
      %v1860 = vadd.f32 %v1623, %v1800
      %v1861 = vadd.f32 %v1626, %v1803
      %v1862 = vadd.f32 %v1631, %v1808
      %v1863 = vadd.f32 %v1634, %v1811
      %v1864 = vadd.f32 %v1639, %v1816
      %v1865 = vadd.f32 %v1642, %v1819
      %v1866 = vadd.f32 %v1647, %v1824
      %v1867 = vadd.f32 %v1650, %v1827
      %v1868 = vadd.f32 %v1655, %v1832
      %v1869 = vadd.f32 %v1658, %v1835
      %vm1870 = vcmask 31744
      %1871 = vst.msk [vmem:[%s219] sm:$0xff] %vm1870, %v1838
      %1872 = vst.msk [vmem:[%s219 + $0x8] sm:$0xff] %vm1870, %v1839
      %1873 = vst.msk [vmem:[%s219 + $0x10] sm:$0xff] %vm1870, %v1840
      %1874 = vst.msk [vmem:[%s219 + $0x18] sm:$0xff] %vm1870, %v1841
      %1875 = vst.msk [vmem:[%s219 + $0x20] sm:$0xff] %vm1870, %v1842
      %1876 = vst.msk [vmem:[%s219 + $0x28] sm:$0xff] %vm1870, %v1843
      %1877 = vst.msk [vmem:[%s219 + $0x30] sm:$0xff] %vm1870, %v1844
      %1878 = vst.msk [vmem:[%s219 + $0x38] sm:$0xff] %vm1870, %v1845
      %1879 = vst.msk [vmem:[%s219 + $0x40] sm:$0xff] %vm1870, %v1846
      %1880 = vst.msk [vmem:[%s219 + $0x48] sm:$0xff] %vm1870, %v1847
      %1881 = vst.msk [vmem:[%s219 + $0x50] sm:$0xff] %vm1870, %v1848
      %1882 = vst.msk [vmem:[%s219 + $0x58] sm:$0xff] %vm1870, %v1849
      %1883 = vst.msk [vmem:[%s219 + $0x60] sm:$0xff] %vm1870, %v1850
      %1884 = vst.msk [vmem:[%s219 + $0x68] sm:$0xff] %vm1870, %v1851
      %1885 = vst.msk [vmem:[%s219 + $0x70] sm:$0xff] %vm1870, %v1852
      %1886 = vst.msk [vmem:[%s219 + $0x78] sm:$0xff] %vm1870, %v1853
      %1887 = vst.msk [vmem:[%s219 + $0x80] sm:$0xff] %vm1870, %v1854
      %1888 = vst.msk [vmem:[%s219 + $0x88] sm:$0xff] %vm1870, %v1855
      %1889 = vst.msk [vmem:[%s219 + $0x90] sm:$0xff] %vm1870, %v1856
      %1890 = vst.msk [vmem:[%s219 + $0x98] sm:$0xff] %vm1870, %v1857
      %1891 = vst.msk [vmem:[%s219 + $0xa0] sm:$0xff] %vm1870, %v1858
      %1892 = vst.msk [vmem:[%s219 + $0xa8] sm:$0xff] %vm1870, %v1859
      %1893 = vst.msk [vmem:[%s219 + $0xb0] sm:$0xff] %vm1870, %v1860
      %1894 = vst.msk [vmem:[%s219 + $0xb8] sm:$0xff] %vm1870, %v1861
      %1895 = vst.msk [vmem:[%s219 + $0xc0] sm:$0xff] %vm1870, %v1862
      %1896 = vst.msk [vmem:[%s219 + $0xc8] sm:$0xff] %vm1870, %v1863
      %1897 = vst.msk [vmem:[%s219 + $0xd0] sm:$0xff] %vm1870, %v1864
      %1898 = vst.msk [vmem:[%s219 + $0xd8] sm:$0xff] %vm1870, %v1865
      %1899 = vst.msk [vmem:[%s219 + $0xe0] sm:$0xff] %vm1870, %v1866
      %1900 = vst.msk [vmem:[%s219 + $0xe8] sm:$0xff] %vm1870, %v1867
      %1901 = vst.msk [vmem:[%s219 + $0xf0] sm:$0xff] %vm1870, %v1868
      %1902 = vst.msk [vmem:[%s219 + $0xf8] sm:$0xff] %vm1870, %v1869
      %v1903 = vld [vmem:[%s4] sm:$0x1]
      %v1904 = vsel %vm1870, %v1838, 0.0
      %v1905 = vsel %vm1870, %v1839, 0.0
      %v1906 = vadd.f32 %v1904, %v1905
      %v1907 = vsel %vm1870, %v1840, 0.0
      %v1908 = vadd.f32 %v1906, %v1907
      %v1909 = vsel %vm1870, %v1841, 0.0
      %v1910 = vadd.f32 %v1908, %v1909
      %v1911 = vsel %vm1870, %v1842, 0.0
      %v1912 = vadd.f32 %v1910, %v1911
      %v1913 = vsel %vm1870, %v1843, 0.0
      %v1914 = vadd.f32 %v1912, %v1913
      %v1915 = vsel %vm1870, %v1844, 0.0
      %v1916 = vadd.f32 %v1914, %v1915
      %v1917 = vsel %vm1870, %v1845, 0.0
      %v1918 = vadd.f32 %v1916, %v1917
      %v1919 = vsel %vm1870, %v1846, 0.0
      %v1920 = vadd.f32 %v1918, %v1919
      %v1921 = vsel %vm1870, %v1847, 0.0
      %v1922 = vadd.f32 %v1920, %v1921
      %v1923 = vsel %vm1870, %v1848, 0.0
      %v1924 = vadd.f32 %v1922, %v1923
      %v1925 = vsel %vm1870, %v1849, 0.0
      %v1926 = vadd.f32 %v1924, %v1925
      %v1927 = vsel %vm1870, %v1850, 0.0
      %v1928 = vadd.f32 %v1926, %v1927
      %v1929 = vsel %vm1870, %v1851, 0.0
      %v1930 = vadd.f32 %v1928, %v1929
      %v1931 = vsel %vm1870, %v1852, 0.0
      %v1932 = vadd.f32 %v1930, %v1931
      %v1933 = vsel %vm1870, %v1853, 0.0
      %v1934 = vadd.f32 %v1932, %v1933
      %v1935 = vsel %vm1870, %v1854, 0.0
      %v1936 = vadd.f32 %v1934, %v1935
      %v1937 = vsel %vm1870, %v1855, 0.0
      %v1938 = vadd.f32 %v1936, %v1937
      %v1939 = vsel %vm1870, %v1856, 0.0
      %v1940 = vadd.f32 %v1938, %v1939
      %v1941 = vsel %vm1870, %v1857, 0.0
      %v1942 = vadd.f32 %v1940, %v1941
      %v1943 = vsel %vm1870, %v1858, 0.0
      %v1944 = vadd.f32 %v1942, %v1943
      %v1945 = vsel %vm1870, %v1859, 0.0
      %v1946 = vadd.f32 %v1944, %v1945
      %v1947 = vsel %vm1870, %v1860, 0.0
      %v1948 = vadd.f32 %v1946, %v1947
      %v1949 = vsel %vm1870, %v1861, 0.0
      %v1950 = vadd.f32 %v1948, %v1949
      %v1951 = vsel %vm1870, %v1862, 0.0
      %v1952 = vadd.f32 %v1950, %v1951
      %v1953 = vsel %vm1870, %v1863, 0.0
      %v1954 = vadd.f32 %v1952, %v1953
      %v1955 = vsel %vm1870, %v1864, 0.0
      %v1956 = vadd.f32 %v1954, %v1955
      %v1957 = vsel %vm1870, %v1865, 0.0
      %v1958 = vadd.f32 %v1956, %v1957
      %v1959 = vsel %vm1870, %v1866, 0.0
      %v1960 = vadd.f32 %v1958, %v1959
      %v1961 = vsel %vm1870, %v1867, 0.0
      %v1962 = vadd.f32 %v1960, %v1961
      %v1963 = vsel %vm1870, %v1868, 0.0
      %v1964 = vadd.f32 %v1962, %v1963
      %v1965 = vsel %vm1870, %v1869, 0.0
      %v1966 = vadd.f32 %v1964, %v1965
      %v1967 = vrot.slane %v1966, 4
      %v1968 = vadd.f32 %v1966, %v1967
      %v1969 = vrot.slane %v1968, 2
      %v1970 = vadd.f32 %v1968, %v1969
      %v1971 = vrot.slane %v1970, 1
      %v1972 = vadd.f32 %v1970, %v1971
      %v1973 = vadd.f32 %v1903, %v1972
      %vm1974 = vcmask 24576
      %1975 = vst.msk [vmem:[%s4] sm:$0x1] %vm1974, %v1973
      %v1976 = vld [vmem:[%s5] sm:$0x1]
      %v1977 = vmul.f32 %v1838, %v1838
      %v1978 = vmul.f32 %v1839, %v1839
      %v1979 = vmul.f32 %v1840, %v1840
      %v1980 = vmul.f32 %v1841, %v1841
      %v1981 = vmul.f32 %v1842, %v1842
      %v1982 = vmul.f32 %v1843, %v1843
      %v1983 = vmul.f32 %v1844, %v1844
      %v1984 = vmul.f32 %v1845, %v1845
      %v1985 = vmul.f32 %v1846, %v1846
      %v1986 = vmul.f32 %v1847, %v1847
      %v1987 = vmul.f32 %v1848, %v1848
      %v1988 = vmul.f32 %v1849, %v1849
      %v1989 = vmul.f32 %v1850, %v1850
      %v1990 = vmul.f32 %v1851, %v1851
      %v1991 = vmul.f32 %v1852, %v1852
      %v1992 = vmul.f32 %v1853, %v1853
      %v1993 = vmul.f32 %v1854, %v1854
      %v1994 = vmul.f32 %v1855, %v1855
      %v1995 = vmul.f32 %v1856, %v1856
      %v1996 = vmul.f32 %v1857, %v1857
      %v1997 = vmul.f32 %v1858, %v1858
      %v1998 = vmul.f32 %v1859, %v1859
      %v1999 = vmul.f32 %v1860, %v1860
      %v2000 = vmul.f32 %v1861, %v1861
      %v2001 = vmul.f32 %v1862, %v1862
      %v2002 = vmul.f32 %v1863, %v1863
      %v2003 = vmul.f32 %v1864, %v1864
      %v2004 = vmul.f32 %v1865, %v1865
      %v2005 = vmul.f32 %v1866, %v1866
      %v2006 = vmul.f32 %v1867, %v1867
      %v2007 = vmul.f32 %v1868, %v1868
      %v2008 = vmul.f32 %v1869, %v1869
      %v2009 = vsel %vm1870, %v1977, 0.0
      %v2010 = vsel %vm1870, %v1978, 0.0
      %v2011 = vadd.f32 %v2009, %v2010
      %v2012 = vsel %vm1870, %v1979, 0.0
      %v2013 = vadd.f32 %v2011, %v2012
      %v2014 = vsel %vm1870, %v1980, 0.0
      %v2015 = vadd.f32 %v2013, %v2014
      %v2016 = vsel %vm1870, %v1981, 0.0
      %v2017 = vadd.f32 %v2015, %v2016
      %v2018 = vsel %vm1870, %v1982, 0.0
      %v2019 = vadd.f32 %v2017, %v2018
      %v2020 = vsel %vm1870, %v1983, 0.0
      %v2021 = vadd.f32 %v2019, %v2020
      %v2022 = vsel %vm1870, %v1984, 0.0
      %v2023 = vadd.f32 %v2021, %v2022
      %v2024 = vsel %vm1870, %v1985, 0.0
      %v2025 = vadd.f32 %v2023, %v2024
      %v2026 = vsel %vm1870, %v1986, 0.0
      %v2027 = vadd.f32 %v2025, %v2026
      %v2028 = vsel %vm1870, %v1987, 0.0
      %v2029 = vadd.f32 %v2027, %v2028
      %v2030 = vsel %vm1870, %v1988, 0.0
      %v2031 = vadd.f32 %v2029, %v2030
      %v2032 = vsel %vm1870, %v1989, 0.0
      %v2033 = vadd.f32 %v2031, %v2032
      %v2034 = vsel %vm1870, %v1990, 0.0
      %v2035 = vadd.f32 %v2033, %v2034
      %v2036 = vsel %vm1870, %v1991, 0.0
      %v2037 = vadd.f32 %v2035, %v2036
      %v2038 = vsel %vm1870, %v1992, 0.0
      %v2039 = vadd.f32 %v2037, %v2038
      %v2040 = vsel %vm1870, %v1993, 0.0
      %v2041 = vadd.f32 %v2039, %v2040
      %v2042 = vsel %vm1870, %v1994, 0.0
      %v2043 = vadd.f32 %v2041, %v2042
      %v2044 = vsel %vm1870, %v1995, 0.0
      %v2045 = vadd.f32 %v2043, %v2044
      %v2046 = vsel %vm1870, %v1996, 0.0
      %v2047 = vadd.f32 %v2045, %v2046
      %v2048 = vsel %vm1870, %v1997, 0.0
      %v2049 = vadd.f32 %v2047, %v2048
      %v2050 = vsel %vm1870, %v1998, 0.0
      %v2051 = vadd.f32 %v2049, %v2050
      %v2052 = vsel %vm1870, %v1999, 0.0
      %v2053 = vadd.f32 %v2051, %v2052
      %v2054 = vsel %vm1870, %v2000, 0.0
      %v2055 = vadd.f32 %v2053, %v2054
      %v2056 = vsel %vm1870, %v2001, 0.0
      %v2057 = vadd.f32 %v2055, %v2056
      %v2058 = vsel %vm1870, %v2002, 0.0
      %v2059 = vadd.f32 %v2057, %v2058
      %v2060 = vsel %vm1870, %v2003, 0.0
      %v2061 = vadd.f32 %v2059, %v2060
      %v2062 = vsel %vm1870, %v2004, 0.0
      %v2063 = vadd.f32 %v2061, %v2062
      %v2064 = vsel %vm1870, %v2005, 0.0
      %v2065 = vadd.f32 %v2063, %v2064
      %v2066 = vsel %vm1870, %v2006, 0.0
      %v2067 = vadd.f32 %v2065, %v2066
      %v2068 = vsel %vm1870, %v2007, 0.0
      %v2069 = vadd.f32 %v2067, %v2068
      %v2070 = vsel %vm1870, %v2008, 0.0
      %v2071 = vadd.f32 %v2069, %v2070
      %v2072 = vrot.slane %v2071, 4
      %v2073 = vadd.f32 %v2071, %v2072
      %v2074 = vrot.slane %v2073, 2
      %v2075 = vadd.f32 %v2073, %v2074
      %v2076 = vrot.slane %v2075, 1
      %v2077 = vadd.f32 %v2075, %v2076
      %v2078 = vadd.f32 %v1976, %v2077
      %2079 = vst.msk [vmem:[%s5] sm:$0x1] %vm1974, %v2078
      %p2080 = scmp.lt.s32.totalorder %s17, 1
      %s2081 = scalar_select %p2080, %s17, 1
      %s2082 = smul.addr %s2081, 32
      %s2083 = smul.addr %s2082, 8
      %s2084 = scalar_lea.vmem %s3, %s2083
      // Predicated region
      $region37: #{feature_up_forward.4} parent=31 // pred_check
        %p2085 = pneg %p103
      $region38: #{feature_up_forward.4} parent=31 // pred_check_branch
        %2087 = sbr.rel (%p2085) target = $region40
      $region39: #{feature_up_forward.4} parent=31 // pred_region
        _
      $region40: #{feature_up_forward.4} parent=31 // pred_fallthru
        _
      // Predicated region
      $region41: #{feature_up_forward.4} parent=31 // pred_check
        %p2088 = pneg %p124
      $region42: #{feature_up_forward.4} parent=31 // pred_check_branch
        %2090 = sbr.rel (%p2088) target = $region44
      $region43: #{feature_up_forward.4} parent=31 // pred_region
        _
      $region44: #{feature_up_forward.4} parent=31 // pred_fallthru
        _
      // Predicated region
      $region45: #{feature_up_forward.4} parent=31 // pred_check
        %p2091 = pneg %p145
      $region46: #{feature_up_forward.4} parent=31 // pred_check_branch
        %2093 = sbr.rel (%p2091) target = $region48
      $region47: #{feature_up_forward.4} parent=31 // pred_region
        _
      $region48: #{feature_up_forward.4} parent=31 // pred_fallthru
        _
      // Predicated region
      $region49: #{feature_up_forward.4} parent=31 // pred_check
        %p2094 = pneg %p124
      $region50: #{feature_up_forward.4} parent=31 // pred_check_branch
        %2096 = sbr.rel (%p2094) target = $region52
      $region51: #{feature_up_forward.4} parent=31 // pred_region
        _
      $region52: #{feature_up_forward.4} parent=31 // pred_fallthru
        _
      // Predicated region
      $region53: #{feature_up_forward.4} parent=31 // pred_check
        %p2097 = pneg %p145
      $region54: #{feature_up_forward.4} parent=31 // pred_check_branch
        %2099 = sbr.rel (%p2097) target = $region56
      $region55: #{feature_up_forward.4} parent=31 // pred_region
        _
      $region56: #{feature_up_forward.4} parent=31 // pred_fallthru
        _
    $region32: #{feature_up_forward.4} parent=5 // pred_fallthru
      _
    %p2100 = scmp.le.s32.totalorder 2, %s12
    // Predicated region
    $region57: #{feature_up_forward.4} parent=5 // pred_check
      %p2101 = pneg %p2100
    $region58: #{feature_up_forward.4} parent=5 // pred_check_branch
      %2103 = sbr.rel (%p2101) target = $region60
    $region59: #{feature_up_forward.4} parent=5 // pred_region
      %s2104 = ssub.s32 %s12, 2
      // Predicated region
      $region61: #{feature_up_forward.4} parent=59 // pred_check
        %p2105 = pneg %p109
      $region62: #{feature_up_forward.4} parent=59 // pred_check_branch
        %2107 = sbr.rel (%p2105) target = $region64
      $region63: #{feature_up_forward.4} parent=59 // pred_region
        %p2108 = scmp.lt.s32.totalorder %s18, 1
        %s2109 = scalar_select %p2108, %s18, 1
        %s2110 = smul.addr %s2109, 32
        %s2111 = smul.addr %s2110, 8
        %s2112 = scalar_lea.vmem %s3, %s2111
      $region64: #{feature_up_forward.4} parent=59 // pred_fallthru
        _
    $region60: #{feature_up_forward.4} parent=5 // pred_fallthru
      _
  $region6: #{feature_up_forward.4} parent=0 // loop_footer
    %s16 = sadd.s32 1, %s12
  $region7: #{feature_up_forward.4} parent=0 // loop_footer_branch
    %11 = sbr.rel target = $region3
  $region8: #{feature_up_forward.4} parent=0 // loop_exit
    _

// kernel: feature_up_forward.5
$region0: #{feature_up_forward.5}
  #allocation0 [shape = 'u32[]', space=smem, size = 0x4, offset = 0x4, fixed_abs, tag = 'smem constant byte address 0x4 - core index']
  #allocation1 [shape = 'u32[144,128]{1,0:T(1,128)}', space=vmem, size = 0x12000, scoped, tag = 'internal scratch']
  %s0 = inlined_call_operand.vmem [shape: f32[2,16,16,4], index: 0, kind: input, shape index: {}]
  %s1 = inlined_call_operand.vmem [shape: f32[2,16,16,4], index: 1, kind: input, shape index: {}]
  %s2 = inlined_call_operand.vmem [shape: f32[1,4], index: 2, kind: input, shape index: {}]
  %s3 = inlined_call_operand.vmem [shape: f32[1,4], index: 3, kind: input, shape index: {}]
  %s4 = inlined_call_operand.vmem [shape: f32[1,4], index: 4, kind: input, shape index: {}]
  %s5 = inlined_call_operand.vmem [shape: f32[1,4], index: 5, kind: input, shape index: {}]
  %s6 = inlined_call_operand.vmem [shape: bf16[3,12,4], index: 6, kind: input, shape index: {}]
  %s7 = inlined_call_operand.vmem [shape: bf16[3,12,4], index: 7, kind: input, shape index: {}]
  %s8 = inlined_call_operand.vmem [shape: f32[2,16,16,4], index: 8, kind: output, shape index: {0}]
  %s9 = inlined_call_operand.vmem [shape: f32[1,4], index: 9, kind: output, shape index: {1}]
  %s10 = inlined_call_operand.vmem [shape: f32[1,4], index: 10, kind: output, shape index: {2}]
  %11 = xla_tuple %s8, %s9, %s10
  %s12 = sld [smem:[#allocation0]]
  $region85: #{feature_up_forward.5} parent=0
    _
  %s14 = ssub.s32 1, %s12
  %s15 = scalar_select 0, %s14, %s12
  loop: start=0, step=1, limit=4
  $region2: #{feature_up_forward.5} parent=0 // loop_pre_header
    _
  $region3: #{feature_up_forward.5} parent=0 // loop_header
    %s17 = sphi 0, %s21
    %p18 = scmp.ge.s32.totalorder %s17, 4
    %s27 = sphi 0, %s29
    %s30 = sphi 0, %s27
    %s31 = sphi 0, %s30
    %s47 = sphi 0, %s31
    %s53 = sphi 0, %s55
    %s56 = sphi 0, %s53
    %s57 = sphi 0, %s56
    %s73 = sphi 0, %s57
    %s77 = sphi 0, %s77
    %s79 = sphi 0, %s77
    %s80 = sphi 0, %s79
    %s94 = sphi 0, %s80
    %s98 = sphi 0, %s98
    %s100 = sphi 0, %s98
    %s101 = sphi 0, %s100
    %s115 = sphi 0, %s101
    %s119 = sphi 0, %s119
    %s121 = sphi 0, %s119
    %s122 = sphi 0, %s121
    %s136 = sphi 0, %s122
    %s140 = sphi 0, %s140
    %s142 = sphi 0, %s140
    %s143 = sphi 0, %s142
    %s157 = sphi 0, %s143
    %s161 = sphi 0, %s161
    %s163 = sphi 0, %s161
    %s164 = sphi 0, %s163
    %s178 = sphi 0, %s164
    %s182 = sphi 0, %s182
    %s184 = sphi 0, %s182
    %s185 = sphi 0, %s184
    %s199 = sphi 0, %s185
    %s205 = sphi 0, %s207
    %s208 = sphi 0, %s205
    %s209 = sphi 0, %s208
    %s225 = sphi 0, %s209
    %s229 = sphi 0, %s229
    %s231 = sphi 0, %s229
    %s232 = sphi 0, %s231
    %s246 = sphi 0, %s232
    %s250 = sphi 0, %s250
    %s252 = sphi 0, %s250
    %s253 = sphi 0, %s252
    %s267 = sphi 0, %s253
  $region4: #{feature_up_forward.5} parent=0 // loop_header_branch
    %20 = sbr.rel (%p18) target = $region8
  $region5: #{feature_up_forward.5} parent=0 // loop_body
    %s22 = ssub.s32 %s17, 1
    %s23 = ssub.s32 %s17, 2
    %s24 = sadd.s32 %s17, 1
    %s25 = ssub.s32 %s17, %s24
    %p26 = scmp.eq.s32.totalorder %s25, 0
    %s28 = sadd.s32 %s27, 1
    %s29 = scalar_select %p26, %s27, %s28
    %p32 = pneg %p26
    %p33 = scmp.eq.s32.totalorder %s17, 1
    %p34 = por %p32, %p33
    %p35 = scmp.ne.s32.totalorder %s27, %s30
    %p36 = scmp.eq.s32.totalorder %s17, 0
    %p37 = por %p35, %p36
    %p38 = scmp.ne.s32.totalorder %s27, %s30
    %p39 = scmp.eq.s32.totalorder %s22, 1
    %p40 = por %p38, %p39
    %p41 = scmp.ne.s32.totalorder %s30, %s31
    %p42 = scmp.eq.s32.totalorder %s22, 0
    %p43 = por %p41, %p42
    %p44 = scmp.ne.s32.totalorder %s30, %s31
    %p45 = scmp.eq.s32.totalorder %s23, 1
    %p46 = por %p44, %p45
    %p48 = scmp.ne.s32.totalorder %s31, %s47
    %p49 = scmp.eq.s32.totalorder %s23, 0
    %p50 = por %p48, %p49
    %s51 = ssub.s32 %s17, %s24
    %p52 = scmp.eq.s32.totalorder %s51, 0
    %s54 = sadd.s32 %s53, 1
    %s55 = scalar_select %p52, %s53, %s54
    %p58 = pneg %p52
    %p59 = scmp.eq.s32.totalorder %s17, 1
    %p60 = por %p58, %p59
    %p61 = scmp.ne.s32.totalorder %s53, %s56
    %p62 = scmp.eq.s32.totalorder %s17, 0
    %p63 = por %p61, %p62
    %p64 = scmp.ne.s32.totalorder %s53, %s56
    %p65 = scmp.eq.s32.totalorder %s22, 1
    %p66 = por %p64, %p65
    %p67 = scmp.ne.s32.totalorder %s56, %s57
    %p68 = scmp.eq.s32.totalorder %s22, 0
    %p69 = por %p67, %p68
    %p70 = scmp.ne.s32.totalorder %s56, %s57
    %p71 = scmp.eq.s32.totalorder %s23, 1
    %p72 = por %p70, %p71
    %p74 = scmp.ne.s32.totalorder %s57, %s73
    %p75 = scmp.eq.s32.totalorder %s23, 0
    %p76 = por %p74, %p75
    %s78 = sadd.s32 %s77, 1
    %p81 = scmp.eq.s32.totalorder %s17, 1
    %p82 = scmp.ne.s32.totalorder %s77, %s79
    %p83 = scmp.eq.s32.totalorder %s17, 0
    %p84 = por %p82, %p83
    %p85 = scmp.ne.s32.totalorder %s77, %s79
    %p86 = scmp.eq.s32.totalorder %s22, 1
    %p87 = por %p85, %p86
    %p88 = scmp.ne.s32.totalorder %s79, %s80
    %p89 = scmp.eq.s32.totalorder %s22, 0
    %p90 = por %p88, %p89
    %p91 = scmp.ne.s32.totalorder %s79, %s80
    %p92 = scmp.eq.s32.totalorder %s23, 1
    %p93 = por %p91, %p92
    %p95 = scmp.ne.s32.totalorder %s80, %s94
    %p96 = scmp.eq.s32.totalorder %s23, 0
    %p97 = por %p95, %p96
    %s99 = sadd.s32 %s98, 1
    %p102 = scmp.eq.s32.totalorder %s17, 1
    %p103 = scmp.ne.s32.totalorder %s98, %s100
    %p104 = scmp.eq.s32.totalorder %s17, 0
    %p105 = por %p103, %p104
    %p106 = scmp.ne.s32.totalorder %s98, %s100
    %p107 = scmp.eq.s32.totalorder %s22, 1
    %p108 = por %p106, %p107
    %p109 = scmp.ne.s32.totalorder %s100, %s101
    %p110 = scmp.eq.s32.totalorder %s22, 0
    %p111 = por %p109, %p110
    %p112 = scmp.ne.s32.totalorder %s100, %s101
    %p113 = scmp.eq.s32.totalorder %s23, 1
    %p114 = por %p112, %p113
    %p116 = scmp.ne.s32.totalorder %s101, %s115
    %p117 = scmp.eq.s32.totalorder %s23, 0
    %p118 = por %p116, %p117
    %s120 = sadd.s32 %s119, 1
    %p123 = scmp.eq.s32.totalorder %s17, 1
    %p124 = scmp.ne.s32.totalorder %s119, %s121
    %p125 = scmp.eq.s32.totalorder %s17, 0
    %p126 = por %p124, %p125
    %p127 = scmp.ne.s32.totalorder %s119, %s121
    %p128 = scmp.eq.s32.totalorder %s22, 1
    %p129 = por %p127, %p128
    %p130 = scmp.ne.s32.totalorder %s121, %s122
    %p131 = scmp.eq.s32.totalorder %s22, 0
    %p132 = por %p130, %p131
    %p133 = scmp.ne.s32.totalorder %s121, %s122
    %p134 = scmp.eq.s32.totalorder %s23, 1
    %p135 = por %p133, %p134
    %p137 = scmp.ne.s32.totalorder %s122, %s136
    %p138 = scmp.eq.s32.totalorder %s23, 0
    %p139 = por %p137, %p138
    %s141 = sadd.s32 %s140, 1
    %p144 = scmp.eq.s32.totalorder %s17, 1
    %p145 = scmp.ne.s32.totalorder %s140, %s142
    %p146 = scmp.eq.s32.totalorder %s17, 0
    %p147 = por %p145, %p146
    %p148 = scmp.ne.s32.totalorder %s140, %s142
    %p149 = scmp.eq.s32.totalorder %s22, 1
    %p150 = por %p148, %p149
    %p151 = scmp.ne.s32.totalorder %s142, %s143
    %p152 = scmp.eq.s32.totalorder %s22, 0
    %p153 = por %p151, %p152
    %p154 = scmp.ne.s32.totalorder %s142, %s143
    %p155 = scmp.eq.s32.totalorder %s23, 1
    %p156 = por %p154, %p155
    %p158 = scmp.ne.s32.totalorder %s143, %s157
    %p159 = scmp.eq.s32.totalorder %s23, 0
    %p160 = por %p158, %p159
    %s162 = sadd.s32 %s161, 1
    %p165 = scmp.eq.s32.totalorder %s17, 1
    %p166 = scmp.ne.s32.totalorder %s161, %s163
    %p167 = scmp.eq.s32.totalorder %s17, 0
    %p168 = por %p166, %p167
    %p169 = scmp.ne.s32.totalorder %s161, %s163
    %p170 = scmp.eq.s32.totalorder %s22, 1
    %p171 = por %p169, %p170
    %p172 = scmp.ne.s32.totalorder %s163, %s164
    %p173 = scmp.eq.s32.totalorder %s22, 0
    %p174 = por %p172, %p173
    %p175 = scmp.ne.s32.totalorder %s163, %s164
    %p176 = scmp.eq.s32.totalorder %s23, 1
    %p177 = por %p175, %p176
    %p179 = scmp.ne.s32.totalorder %s164, %s178
    %p180 = scmp.eq.s32.totalorder %s23, 0
    %p181 = por %p179, %p180
    %s183 = sadd.s32 %s182, 1
    %p186 = scmp.eq.s32.totalorder %s17, 1
    %p187 = scmp.ne.s32.totalorder %s182, %s184
    %p188 = scmp.eq.s32.totalorder %s17, 0
    %p189 = por %p187, %p188
    %p190 = scmp.ne.s32.totalorder %s182, %s184
    %p191 = scmp.eq.s32.totalorder %s22, 1
    %p192 = por %p190, %p191
    %p193 = scmp.ne.s32.totalorder %s184, %s185
    %p194 = scmp.eq.s32.totalorder %s22, 0
    %p195 = por %p193, %p194
    %p196 = scmp.ne.s32.totalorder %s184, %s185
    %p197 = scmp.eq.s32.totalorder %s23, 1
    %p198 = por %p196, %p197
    %p200 = scmp.ne.s32.totalorder %s185, %s199
    %p201 = scmp.eq.s32.totalorder %s23, 0
    %p202 = por %p200, %p201
    %s203 = ssub.s32 %s17, %s24
    %p204 = scmp.eq.s32.totalorder %s203, 0
    %s206 = sadd.s32 %s205, 1
    %s207 = scalar_select %p204, %s205, %s206
    %p210 = pneg %p204
    %p211 = scmp.eq.s32.totalorder %s17, 1
    %p212 = por %p210, %p211
    %p213 = scmp.ne.s32.totalorder %s205, %s208
    %p214 = scmp.eq.s32.totalorder %s17, 0
    %p215 = por %p213, %p214
    %p216 = scmp.ne.s32.totalorder %s205, %s208
    %p217 = scmp.eq.s32.totalorder %s22, 1
    %p218 = por %p216, %p217
    %p219 = scmp.ne.s32.totalorder %s208, %s209
    %p220 = scmp.eq.s32.totalorder %s22, 0
    %p221 = por %p219, %p220
    %p222 = scmp.ne.s32.totalorder %s208, %s209
    %p223 = scmp.eq.s32.totalorder %s23, 1
    %p224 = por %p222, %p223
    %p226 = scmp.ne.s32.totalorder %s209, %s225
    %p227 = scmp.eq.s32.totalorder %s23, 0
    %p228 = por %p226, %p227
    %s230 = sadd.s32 %s229, 1
    %p233 = scmp.eq.s32.totalorder %s17, 1
    %p234 = scmp.ne.s32.totalorder %s229, %s231
    %p235 = scmp.eq.s32.totalorder %s17, 0
    %p236 = por %p234, %p235
    %p237 = scmp.ne.s32.totalorder %s229, %s231
    %p238 = scmp.eq.s32.totalorder %s22, 1
    %p239 = por %p237, %p238
    %p240 = scmp.ne.s32.totalorder %s231, %s232
    %p241 = scmp.eq.s32.totalorder %s22, 0
    %p242 = por %p240, %p241
    %p243 = scmp.ne.s32.totalorder %s231, %s232
    %p244 = scmp.eq.s32.totalorder %s23, 1
    %p245 = por %p243, %p244
    %p247 = scmp.ne.s32.totalorder %s232, %s246
    %p248 = scmp.eq.s32.totalorder %s23, 0
    %p249 = por %p247, %p248
    %s251 = sadd.s32 %s250, 1
    %p254 = scmp.eq.s32.totalorder %s17, 1
    %p255 = scmp.ne.s32.totalorder %s250, %s252
    %p256 = scmp.eq.s32.totalorder %s17, 0
    %p257 = por %p255, %p256
    %p258 = scmp.ne.s32.totalorder %s250, %s252
    %p259 = scmp.eq.s32.totalorder %s22, 1
    %p260 = por %p258, %p259
    %p261 = scmp.ne.s32.totalorder %s252, %s253
    %p262 = scmp.eq.s32.totalorder %s22, 0
    %p263 = por %p261, %p262
    %p264 = scmp.ne.s32.totalorder %s252, %s253
    %p265 = scmp.eq.s32.totalorder %s23, 1
    %p266 = por %p264, %p265
    %p268 = scmp.ne.s32.totalorder %s253, %s267
    %p269 = scmp.eq.s32.totalorder %s23, 0
    %p270 = por %p268, %p269
    %p271 = scmp.le.s32.totalorder 1, %s17
    %p272 = scmp.lt.s32.totalorder %s17, 3
    %p273 = pnand %p271, %p272
    %p274 = pneg %p273
    // Predicated region
    $region9: #{feature_up_forward.5} parent=5 // pred_check
      _
    $region10: #{feature_up_forward.5} parent=5 // pred_check_branch
      %276 = sbr.rel (%p273) target = $region12
    $region11: #{feature_up_forward.5} parent=5 // pred_region
      %s277 = ssub.s32 %s17, 1
      // Predicated region
      $region13: #{feature_up_forward.5} parent=11 // pred_check
        %p278 = pneg %p90
      $region14: #{feature_up_forward.5} parent=11 // pred_check_branch
        %280 = sbr.rel (%p278) target = $region16
      $region15: #{feature_up_forward.5} parent=11 // pred_region
        _
      $region16: #{feature_up_forward.5} parent=11 // pred_fallthru
        _
      // Predicated region
      $region17: #{feature_up_forward.5} parent=11 // pred_check
        %p281 = pneg %p111
      $region18: #{feature_up_forward.5} parent=11 // pred_check_branch
        %283 = sbr.rel (%p281) target = $region20
      $region19: #{feature_up_forward.5} parent=11 // pred_region
        _
      $region20: #{feature_up_forward.5} parent=11 // pred_fallthru
        _
      // Predicated region
      $region21: #{feature_up_forward.5} parent=11 // pred_check
        %p284 = pneg %p132
      $region22: #{feature_up_forward.5} parent=11 // pred_check_branch
        %286 = sbr.rel (%p284) target = $region24
      $region23: #{feature_up_forward.5} parent=11 // pred_region
        _
      $region24: #{feature_up_forward.5} parent=11 // pred_fallthru
        _
      // Predicated region
      $region25: #{feature_up_forward.5} parent=11 // pred_check
        %p287 = pneg %p153
      $region26: #{feature_up_forward.5} parent=11 // pred_check_branch
        %289 = sbr.rel (%p287) target = $region28
      $region27: #{feature_up_forward.5} parent=11 // pred_region
        _
      $region28: #{feature_up_forward.5} parent=11 // pred_fallthru
        _
      // Predicated region
      $region29: #{feature_up_forward.5} parent=11 // pred_check
        %p290 = pneg %p174
      $region30: #{feature_up_forward.5} parent=11 // pred_check_branch
        %292 = sbr.rel (%p290) target = $region32
      $region31: #{feature_up_forward.5} parent=11 // pred_region
        _
      $region32: #{feature_up_forward.5} parent=11 // pred_fallthru
        _
      // Predicated region
      $region33: #{feature_up_forward.5} parent=11 // pred_check
        %p293 = pneg %p195
      $region34: #{feature_up_forward.5} parent=11 // pred_check_branch
        %295 = sbr.rel (%p293) target = $region36
      $region35: #{feature_up_forward.5} parent=11 // pred_region
        _
      $region36: #{feature_up_forward.5} parent=11 // pred_fallthru
        _
    $region12: #{feature_up_forward.5} parent=5 // pred_fallthru
      _
    %p296 = scmp.lt.s32.totalorder %s17, 2
    // Predicated region
    $region37: #{feature_up_forward.5} parent=5 // pred_check
      %p297 = pneg %p296
    $region38: #{feature_up_forward.5} parent=5 // pred_check_branch
      %299 = sbr.rel (%p297) target = $region40
    $region39: #{feature_up_forward.5} parent=5 // pred_region
      // Predicated region
      $region41: #{feature_up_forward.5} parent=39 // pred_check
        %p300 = pneg %p37
      $region42: #{feature_up_forward.5} parent=39 // pred_check_branch
        %302 = sbr.rel (%p300) target = $region44
      $region43: #{feature_up_forward.5} parent=39 // pred_region
        %p303 = scmp.lt.s32.totalorder %s17, 1
        %s304 = scalar_select %p303, %s17, 1
        %s305 = smul.addr %s304, 32
        %s306 = smul.addr %s305, 8
        %s307 = scalar_lea.vmem %s0, %s306
      $region44: #{feature_up_forward.5} parent=39 // pred_fallthru
        _
      // Predicated region
      $region45: #{feature_up_forward.5} parent=39 // pred_check
        %p308 = pneg %p63
      $region46: #{feature_up_forward.5} parent=39 // pred_check_branch
        %310 = sbr.rel (%p308) target = $region48
      $region47: #{feature_up_forward.5} parent=39 // pred_region
        %p311 = scmp.lt.s32.totalorder %s17, 1
        %s312 = scalar_select %p311, %s17, 1
        %s313 = smul.addr %s312, 32
        %s314 = smul.addr %s313, 8
        %s315 = scalar_lea.vmem %s1, %s314
      $region48: #{feature_up_forward.5} parent=39 // pred_fallthru
        _
    $region40: #{feature_up_forward.5} parent=5 // pred_fallthru
      _
    %p316 = scmp.le.s32.totalorder 1, %s17
    %p317 = scmp.lt.s32.totalorder %s17, 3
    %p318 = pnand %p316, %p317
    %p319 = pneg %p318
    // Predicated region
    $region49: #{feature_up_forward.5} parent=5 // pred_check
      _
    $region50: #{feature_up_forward.5} parent=5 // pred_check_branch
      %321 = sbr.rel (%p318) target = $region52
    $region51: #{feature_up_forward.5} parent=5 // pred_region
      %s322 = ssub.s32 %s17, 1
      %p323 = scmp.lt.s32.totalorder %s22, 1
      %s324 = scalar_select %p323, %s22, 1
      %s325 = smul.addr %s324, 32
      %s326 = smul.addr %s325, 8
      %s327 = scalar_lea.vmem %s0, %s326
      %p328 = pneg %p43
      %p329 = pneg %p40
      %p330 = scmp.lt.s32.totalorder %s22, 1
      %s331 = scalar_select %p330, %s22, 1
      %s332 = smul.addr %s331, 32
      %s333 = smul.addr %s332, 8
      %s334 = scalar_lea.vmem %s1, %s333
      %p335 = pneg %p69
      %p336 = pneg %p66
      %p337 = pneg %p90
      %p338 = pneg %p87
      %p339 = pneg %p111
      %p340 = pneg %p108
      %p341 = pneg %p132
      %p342 = pneg %p129
      %p343 = pneg %p153
      %p344 = pneg %p150
      %p345 = pneg %p174
      %p346 = pneg %p171
      %p347 = pneg %p195
      %p348 = pneg %p192
      %p349 = pneg %p221
      %p350 = pneg %p218
      %p351 = scmp.lt.s32.totalorder %s22, 1
      %s352 = scalar_select %p351, %s22, 1
      %s353 = smul.addr %s352, 32
      %s354 = smul.addr %s353, 8
      %s355 = scalar_lea.vmem %s8, %s354
      %p356 = pneg %p242
      %p357 = pneg %p239
      %p358 = pneg %p263
      %p359 = pneg %p260
      %p360 = scmp.lt.s32.totalorder %s22, 1
      %s361 = scalar_select %p360, %s22, 1
      %s362 = smul.addr %s361, 32
      %s363 = smul.addr %s362, 8
      %s364 = scalar_lea.vmem %s0, %s363
      %p365 = scmp.lt.s32.totalorder %s22, 1
      %s366 = scalar_select %p365, %s22, 1
      %s367 = smul.addr %s366, 32
      %s368 = smul.addr %s367, 8
      %s369 = scalar_lea.vmem %s1, %s368
      %p370 = scmp.lt.s32.totalorder %s22, 1
      %s371 = scalar_select %p370, %s22, 1
      %s372 = smul.addr %s371, 32
      %s373 = smul.addr %s372, 8
      %s374 = scalar_lea.vmem %s8, %s373
      %p376 = scmp.eq.s32.totalorder %s22, 0
      // Predicated region
      $region53: #{feature_up_forward.5} parent=51 // pred_check
        %p377 = pneg %p376
      $region54: #{feature_up_forward.5} parent=51 // pred_check_branch
        %379 = sbr.rel (%p377) target = $region56
      $region55: #{feature_up_forward.5} parent=51 // pred_region
        %vm380 = vcmask 24576
        %381 = vst.msk [vmem:[%s9] sm:$0x1] %vm380, 0.0
        %382 = vst.msk [vmem:[%s10] sm:$0x1] %vm380, 0.0
      $region56: #{feature_up_forward.5} parent=51 // pred_fallthru
        _
      %v383 = vld [vmem:[%s369] sm:$0xff]
      %v384 = vld [vmem:[%s369 + $0x8] sm:$0xff]
      %v385 = vld [vmem:[%s369 + $0x10] sm:$0xff]
      %v386 = vld [vmem:[%s369 + $0x18] sm:$0xff]
      %v387 = vld [vmem:[%s369 + $0x20] sm:$0xff]
      %v388 = vld [vmem:[%s369 + $0x28] sm:$0xff]
      %v389 = vld [vmem:[%s369 + $0x30] sm:$0xff]
      %v390 = vld [vmem:[%s369 + $0x38] sm:$0xff]
      %v391 = vld [vmem:[%s369 + $0x40] sm:$0xff]
      %v392 = vld [vmem:[%s369 + $0x48] sm:$0xff]
      %v393 = vld [vmem:[%s369 + $0x50] sm:$0xff]
      %v394 = vld [vmem:[%s369 + $0x58] sm:$0xff]
      %v395 = vld [vmem:[%s369 + $0x60] sm:$0xff]
      %v396 = vld [vmem:[%s369 + $0x68] sm:$0xff]
      %v397 = vld [vmem:[%s369 + $0x70] sm:$0xff]
      %v398 = vld [vmem:[%s369 + $0x78] sm:$0xff]
      %v399 = vld [vmem:[%s369 + $0x80] sm:$0xff]
      %v400 = vld [vmem:[%s369 + $0x88] sm:$0xff]
      %v401 = vld [vmem:[%s369 + $0x90] sm:$0xff]
      %v402 = vld [vmem:[%s369 + $0x98] sm:$0xff]
      %v403 = vld [vmem:[%s369 + $0xa0] sm:$0xff]
      %v404 = vld [vmem:[%s369 + $0xa8] sm:$0xff]
      %v405 = vld [vmem:[%s369 + $0xb0] sm:$0xff]
      %v406 = vld [vmem:[%s369 + $0xb8] sm:$0xff]
      %v407 = vld [vmem:[%s369 + $0xc0] sm:$0xff]
      %v408 = vld [vmem:[%s369 + $0xc8] sm:$0xff]
      %v409 = vld [vmem:[%s369 + $0xd0] sm:$0xff]
      %v410 = vld [vmem:[%s369 + $0xd8] sm:$0xff]
      %v411 = vld [vmem:[%s369 + $0xe0] sm:$0xff]
      %v412 = vld [vmem:[%s369 + $0xe8] sm:$0xff]
      %v413 = vld [vmem:[%s369 + $0xf0] sm:$0xff]
      %v414 = vld [vmem:[%s369 + $0xf8] sm:$0xff]
      %v415 = vld [vmem:[%s2] sm:$0x1]
      %v416 = vld [vmem:[%s3] sm:$0x1]
      %v417 = vld [vmem:[%s4] sm:$0x1]
      %v418 = vld [vmem:[%s5] sm:$0x1]
      %v419 = vrcp.pop 512.0
      %v420 = vmul.f32 %v415, %v419
      %v421 = vmul.f32 %v416, %v419
      %v422 = vmul.f32 %v420, %v420
      %v423 = vsub.f32 %v421, %v422
      %v424 = vmax.f32 %v423, 0.0
      %v425 = vadd.f32 %v424, 1e-05
      %v426 = vrsqrt.pop %v425
      %v427 = vmul.f32 %v417, %v426
      %v428 = vmul.f32 %v420, %v427
      %v429 = vsub.f32 %v418, %v428
      %v431 = vlaneseq
      %v432 = vshrl.u32 %v431, 7
      %v433 = vsub.s32 0, %v432
      %v434 = vrot.slane %v427, %v433
      %v436 = vmul.f32 %v383, %v434
      %v437 = vmul.f32 %v384, %v434
      %v438 = vmul.f32 %v385, %v434
      %v439 = vmul.f32 %v386, %v434
      %v440 = vmul.f32 %v387, %v434
      %v441 = vmul.f32 %v388, %v434
      %v442 = vmul.f32 %v389, %v434
      %v443 = vmul.f32 %v390, %v434
      %v444 = vmul.f32 %v391, %v434
      %v445 = vmul.f32 %v392, %v434
      %v446 = vmul.f32 %v393, %v434
      %v447 = vmul.f32 %v394, %v434
      %v448 = vmul.f32 %v395, %v434
      %v449 = vmul.f32 %v396, %v434
      %v450 = vmul.f32 %v397, %v434
      %v451 = vmul.f32 %v398, %v434
      %v452 = vmul.f32 %v399, %v434
      %v453 = vmul.f32 %v400, %v434
      %v454 = vmul.f32 %v401, %v434
      %v455 = vmul.f32 %v402, %v434
      %v456 = vmul.f32 %v403, %v434
      %v457 = vmul.f32 %v404, %v434
      %v458 = vmul.f32 %v405, %v434
      %v459 = vmul.f32 %v406, %v434
      %v460 = vmul.f32 %v407, %v434
      %v461 = vmul.f32 %v408, %v434
      %v462 = vmul.f32 %v409, %v434
      %v463 = vmul.f32 %v410, %v434
      %v464 = vmul.f32 %v411, %v434
      %v465 = vmul.f32 %v412, %v434
      %v466 = vmul.f32 %v413, %v434
      %v467 = vmul.f32 %v414, %v434
      %v469 = vlaneseq
      %v470 = vshrl.u32 %v469, 7
      %v471 = vsub.s32 0, %v470
      %v472 = vrot.slane %v429, %v471
      %v474 = vadd.f32 %v436, %v472
      %v475 = vadd.f32 %v437, %v472
      %v476 = vadd.f32 %v438, %v472
      %v477 = vadd.f32 %v439, %v472
      %v478 = vadd.f32 %v440, %v472
      %v479 = vadd.f32 %v441, %v472
      %v480 = vadd.f32 %v442, %v472
      %v481 = vadd.f32 %v443, %v472
      %v482 = vadd.f32 %v444, %v472
      %v483 = vadd.f32 %v445, %v472
      %v484 = vadd.f32 %v446, %v472
      %v485 = vadd.f32 %v447, %v472
      %v486 = vadd.f32 %v448, %v472
      %v487 = vadd.f32 %v449, %v472
      %v488 = vadd.f32 %v450, %v472
      %v489 = vadd.f32 %v451, %v472
      %v490 = vadd.f32 %v452, %v472
      %v491 = vadd.f32 %v453, %v472
      %v492 = vadd.f32 %v454, %v472
      %v493 = vadd.f32 %v455, %v472
      %v494 = vadd.f32 %v456, %v472
      %v495 = vadd.f32 %v457, %v472
      %v496 = vadd.f32 %v458, %v472
      %v497 = vadd.f32 %v459, %v472
      %v498 = vadd.f32 %v460, %v472
      %v499 = vadd.f32 %v461, %v472
      %v500 = vadd.f32 %v462, %v472
      %v501 = vadd.f32 %v463, %v472
      %v502 = vadd.f32 %v464, %v472
      %v503 = vadd.f32 %v465, %v472
      %v504 = vadd.f32 %v466, %v472
      %v505 = vadd.f32 %v467, %v472
      %v506 = vmax.f32 %v474, 0.0
      %v507 = vmax.f32 %v475, 0.0
      %v508 = vmax.f32 %v476, 0.0
      %v509 = vmax.f32 %v477, 0.0
      %v510 = vmax.f32 %v478, 0.0
      %v511 = vmax.f32 %v479, 0.0
      %v512 = vmax.f32 %v480, 0.0
      %v513 = vmax.f32 %v481, 0.0
      %v514 = vmax.f32 %v482, 0.0
      %v515 = vmax.f32 %v483, 0.0
      %v516 = vmax.f32 %v484, 0.0
      %v517 = vmax.f32 %v485, 0.0
      %v518 = vmax.f32 %v486, 0.0
      %v519 = vmax.f32 %v487, 0.0
      %v520 = vmax.f32 %v488, 0.0
      %v521 = vmax.f32 %v489, 0.0
      %v522 = vmax.f32 %v490, 0.0
      %v523 = vmax.f32 %v491, 0.0
      %v524 = vmax.f32 %v492, 0.0
      %v525 = vmax.f32 %v493, 0.0
      %v526 = vmax.f32 %v494, 0.0
      %v527 = vmax.f32 %v495, 0.0
      %v528 = vmax.f32 %v496, 0.0
      %v529 = vmax.f32 %v497, 0.0
      %v530 = vmax.f32 %v498, 0.0
      %v531 = vmax.f32 %v499, 0.0
      %v532 = vmax.f32 %v500, 0.0
      %v533 = vmax.f32 %v501, 0.0
      %v534 = vmax.f32 %v502, 0.0
      %v535 = vmax.f32 %v503, 0.0
      %v536 = vmax.f32 %v504, 0.0
      %v537 = vmax.f32 %v505, 0.0
      %v538 = vld [vmem:[%s364] sm:$0xff]
      %v539 = vld [vmem:[%s364 + $0x8] sm:$0xff]
      %v540 = vld [vmem:[%s364 + $0x10] sm:$0xff]
      %v541 = vld [vmem:[%s364 + $0x18] sm:$0xff]
      %v542 = vld [vmem:[%s364 + $0x20] sm:$0xff]
      %v543 = vld [vmem:[%s364 + $0x28] sm:$0xff]
      %v544 = vld [vmem:[%s364 + $0x30] sm:$0xff]
      %v545 = vld [vmem:[%s364 + $0x38] sm:$0xff]
      %v546 = vld [vmem:[%s364 + $0x40] sm:$0xff]
      %v547 = vld [vmem:[%s364 + $0x48] sm:$0xff]
      %v548 = vld [vmem:[%s364 + $0x50] sm:$0xff]
      %v549 = vld [vmem:[%s364 + $0x58] sm:$0xff]
      %v550 = vld [vmem:[%s364 + $0x60] sm:$0xff]
      %v551 = vld [vmem:[%s364 + $0x68] sm:$0xff]
      %v552 = vld [vmem:[%s364 + $0x70] sm:$0xff]
      %v553 = vld [vmem:[%s364 + $0x78] sm:$0xff]
      %v554 = vld [vmem:[%s364 + $0x80] sm:$0xff]
      %v555 = vld [vmem:[%s364 + $0x88] sm:$0xff]
      %v556 = vld [vmem:[%s364 + $0x90] sm:$0xff]
      %v557 = vld [vmem:[%s364 + $0x98] sm:$0xff]
      %v558 = vld [vmem:[%s364 + $0xa0] sm:$0xff]
      %v559 = vld [vmem:[%s364 + $0xa8] sm:$0xff]
      %v560 = vld [vmem:[%s364 + $0xb0] sm:$0xff]
      %v561 = vld [vmem:[%s364 + $0xb8] sm:$0xff]
      %v562 = vld [vmem:[%s364 + $0xc0] sm:$0xff]
      %v563 = vld [vmem:[%s364 + $0xc8] sm:$0xff]
      %v564 = vld [vmem:[%s364 + $0xd0] sm:$0xff]
      %v565 = vld [vmem:[%s364 + $0xd8] sm:$0xff]
      %v566 = vld [vmem:[%s364 + $0xe0] sm:$0xff]
      %v567 = vld [vmem:[%s364 + $0xe8] sm:$0xff]
      %v568 = vld [vmem:[%s364 + $0xf0] sm:$0xff]
      %v569 = vld [vmem:[%s364 + $0xf8] sm:$0xff]
      %vm603 = vcmask 1040384
      %v604 = vrot.slane 0.0, 7
      %v605 = vsel %vm603, %v604, %v604
      %v606 = vrot.slane %v538, 7
      %v607 = vrot.slane %v539, 7
      %v608 = vsel %vm603, %v606, %v607
      %v609 = vrot.slane %v540, 7
      %v610 = vrot.slane %v541, 7
      %v611 = vsel %vm603, %v609, %v610
      %v612 = vrot.slane %v542, 7
      %v613 = vrot.slane %v543, 7
      %v614 = vsel %vm603, %v612, %v613
      %v615 = vrot.slane %v544, 7
      %v616 = vrot.slane %v545, 7
      %v617 = vsel %vm603, %v615, %v616
      %v618 = vrot.slane %v546, 7
      %v619 = vrot.slane %v547, 7
      %v620 = vsel %vm603, %v618, %v619
      %v621 = vrot.slane %v548, 7
      %v622 = vrot.slane %v549, 7
      %v623 = vsel %vm603, %v621, %v622
      %v624 = vrot.slane %v550, 7
      %v625 = vrot.slane %v551, 7
      %v626 = vsel %vm603, %v624, %v625
      %v627 = vrot.slane %v552, 7
      %v628 = vrot.slane %v553, 7
      %v629 = vsel %vm603, %v627, %v628
      %v630 = vrot.slane %v554, 7
      %v631 = vrot.slane %v555, 7
      %v632 = vsel %vm603, %v630, %v631
      %v633 = vrot.slane %v556, 7
      %v634 = vrot.slane %v557, 7
      %v635 = vsel %vm603, %v633, %v634
      %v636 = vrot.slane %v558, 7
      %v637 = vrot.slane %v559, 7
      %v638 = vsel %vm603, %v636, %v637
      %v639 = vrot.slane %v560, 7
      %v640 = vrot.slane %v561, 7
      %v641 = vsel %vm603, %v639, %v640
      %v642 = vrot.slane %v562, 7
      %v643 = vrot.slane %v563, 7
      %v644 = vsel %vm603, %v642, %v643
      %v645 = vrot.slane %v564, 7
      %v646 = vrot.slane %v565, 7
      %v647 = vsel %vm603, %v645, %v646
      %v648 = vrot.slane %v566, 7
      %v649 = vrot.slane %v567, 7
      %v650 = vsel %vm603, %v648, %v649
      %v651 = vrot.slane %v568, 7
      %v652 = vrot.slane %v569, 7
      %v653 = vsel %vm603, %v651, %v652
      %v704 = vsel %vm603, 0.0, %v604
      %v705 = vsel %vm603, 0.0, %v606
      %v706 = vsel %vm603, 0.0, %v609
      %v707 = vsel %vm603, 0.0, %v612
      %v708 = vsel %vm603, 0.0, %v615
      %v709 = vsel %vm603, 0.0, %v618
      %v710 = vsel %vm603, 0.0, %v621
      %v711 = vsel %vm603, 0.0, %v624
      %v712 = vsel %vm603, 0.0, %v627
      %v713 = vsel %vm603, 0.0, %v630
      %v714 = vsel %vm603, 0.0, %v633
      %v715 = vsel %vm603, 0.0, %v636
      %v716 = vsel %vm603, 0.0, %v639
      %v717 = vsel %vm603, 0.0, %v642
      %v718 = vsel %vm603, 0.0, %v645
      %v719 = vsel %vm603, 0.0, %v648
      %v720 = vsel %vm603, 0.0, %v651
      %v721 = vsel %vm603, %v604, 0.0
      %v722 = vsel %vm603, %v607, 0.0
      %v723 = vsel %vm603, %v610, 0.0
      %v724 = vsel %vm603, %v613, 0.0
      %v725 = vsel %vm603, %v616, 0.0
      %v726 = vsel %vm603, %v619, 0.0
      %v727 = vsel %vm603, %v622, 0.0
      %v728 = vsel %vm603, %v625, 0.0
      %v729 = vsel %vm603, %v628, 0.0
      %v730 = vsel %vm603, %v631, 0.0
      %v731 = vsel %vm603, %v634, 0.0
      %v732 = vsel %vm603, %v637, 0.0
      %v733 = vsel %vm603, %v640, 0.0
      %v734 = vsel %vm603, %v643, 0.0
      %v735 = vsel %vm603, %v646, 0.0
      %v736 = vsel %vm603, %v649, 0.0
      %v737 = vsel %vm603, %v652, 0.0
      %vm770 = vcmask 1046528
      %v771 = vrot.slane %v704, 1
      %v772 = vrot.slane %v605, 1
      %v773 = vsel %vm770, %v771, %v772
      %v774 = vrot.slane %v721, 1
      %v775 = vsel %vm770, %v772, %v774
      %v776 = vrot.slane %v705, 1
      %v777 = vrot.slane %v608, 1
      %v778 = vsel %vm770, %v776, %v777
      %v779 = vrot.slane %v722, 1
      %v780 = vsel %vm770, %v777, %v779
      %v781 = vrot.slane %v706, 1
      %v782 = vrot.slane %v611, 1
      %v783 = vsel %vm770, %v781, %v782
      %v784 = vrot.slane %v723, 1
      %v785 = vsel %vm770, %v782, %v784
      %v786 = vrot.slane %v707, 1
      %v787 = vrot.slane %v614, 1
      %v788 = vsel %vm770, %v786, %v787
      %v789 = vrot.slane %v724, 1
      %v790 = vsel %vm770, %v787, %v789
      %v791 = vrot.slane %v708, 1
      %v792 = vrot.slane %v617, 1
      %v793 = vsel %vm770, %v791, %v792
      %v794 = vrot.slane %v725, 1
      %v795 = vsel %vm770, %v792, %v794
      %v796 = vrot.slane %v709, 1
      %v797 = vrot.slane %v620, 1
      %v798 = vsel %vm770, %v796, %v797
      %v799 = vrot.slane %v726, 1
      %v800 = vsel %vm770, %v797, %v799
      %v801 = vrot.slane %v710, 1
      %v802 = vrot.slane %v623, 1
      %v803 = vsel %vm770, %v801, %v802
      %v804 = vrot.slane %v727, 1
      %v805 = vsel %vm770, %v802, %v804
      %v806 = vrot.slane %v711, 1
      %v807 = vrot.slane %v626, 1
      %v808 = vsel %vm770, %v806, %v807
      %v809 = vrot.slane %v728, 1
      %v810 = vsel %vm770, %v807, %v809
      %v811 = vrot.slane %v712, 1
      %v812 = vrot.slane %v629, 1
      %v813 = vsel %vm770, %v811, %v812
      %v814 = vrot.slane %v729, 1
      %v815 = vsel %vm770, %v812, %v814
      %v816 = vrot.slane %v713, 1
      %v817 = vrot.slane %v632, 1
      %v818 = vsel %vm770, %v816, %v817
      %v819 = vrot.slane %v730, 1
      %v820 = vsel %vm770, %v817, %v819
      %v821 = vrot.slane %v714, 1
      %v822 = vrot.slane %v635, 1
      %v823 = vsel %vm770, %v821, %v822
      %v824 = vrot.slane %v731, 1
      %v825 = vsel %vm770, %v822, %v824
      %v826 = vrot.slane %v715, 1
      %v827 = vrot.slane %v638, 1
      %v828 = vsel %vm770, %v826, %v827
      %v829 = vrot.slane %v732, 1
      %v830 = vsel %vm770, %v827, %v829
      %v831 = vrot.slane %v716, 1
      %v832 = vrot.slane %v641, 1
      %v833 = vsel %vm770, %v831, %v832
      %v834 = vrot.slane %v733, 1
      %v835 = vsel %vm770, %v832, %v834
      %v836 = vrot.slane %v717, 1
      %v837 = vrot.slane %v644, 1
      %v838 = vsel %vm770, %v836, %v837
      %v839 = vrot.slane %v734, 1
      %v840 = vsel %vm770, %v837, %v839
      %v841 = vrot.slane %v718, 1
      %v842 = vrot.slane %v647, 1
      %v843 = vsel %vm770, %v841, %v842
      %v844 = vrot.slane %v735, 1
      %v845 = vsel %vm770, %v842, %v844
      %v846 = vrot.slane %v719, 1
      %v847 = vrot.slane %v650, 1
      %v848 = vsel %vm770, %v846, %v847
      %v849 = vrot.slane %v736, 1
      %v850 = vsel %vm770, %v847, %v849
      %851 = vrot.lane.b32.xlu0 %v773, 4
      %v852 = vpop.permute.xlu0 %851
      %853 = vrot.lane.b32.xlu0 %v775, 4
      %v854 = vpop.permute.xlu0 %853
      %855 = vrot.lane.b32.xlu0 %v778, 4
      %v856 = vpop.permute.xlu0 %855
      %857 = vrot.lane.b32.xlu0 %v780, 4
      %v858 = vpop.permute.xlu0 %857
      %859 = vrot.lane.b32.xlu0 %v783, 4
      %v860 = vpop.permute.xlu0 %859
      %861 = vrot.lane.b32.xlu0 %v785, 4
      %v862 = vpop.permute.xlu0 %861
      %863 = vrot.lane.b32.xlu0 %v788, 4
      %v864 = vpop.permute.xlu0 %863
      %865 = vrot.lane.b32.xlu0 %v790, 4
      %v866 = vpop.permute.xlu0 %865
      %867 = vrot.lane.b32.xlu0 %v793, 4
      %v868 = vpop.permute.xlu0 %867
      %869 = vrot.lane.b32.xlu0 %v795, 4
      %v870 = vpop.permute.xlu0 %869
      %871 = vrot.lane.b32.xlu0 %v798, 4
      %v872 = vpop.permute.xlu0 %871
      %873 = vrot.lane.b32.xlu0 %v800, 4
      %v874 = vpop.permute.xlu0 %873
      %875 = vrot.lane.b32.xlu0 %v803, 4
      %v876 = vpop.permute.xlu0 %875
      %877 = vrot.lane.b32.xlu0 %v805, 4
      %v878 = vpop.permute.xlu0 %877
      %879 = vrot.lane.b32.xlu0 %v808, 4
      %v880 = vpop.permute.xlu0 %879
      %881 = vrot.lane.b32.xlu0 %v810, 4
      %v882 = vpop.permute.xlu0 %881
      %883 = vrot.lane.b32.xlu0 %v813, 4
      %v884 = vpop.permute.xlu0 %883
      %885 = vrot.lane.b32.xlu0 %v815, 4
      %v886 = vpop.permute.xlu0 %885
      %887 = vrot.lane.b32.xlu0 %v818, 4
      %v888 = vpop.permute.xlu0 %887
      %889 = vrot.lane.b32.xlu0 %v820, 4
      %v890 = vpop.permute.xlu0 %889
      %891 = vrot.lane.b32.xlu0 %v823, 4
      %v892 = vpop.permute.xlu0 %891
      %893 = vrot.lane.b32.xlu0 %v825, 4
      %v894 = vpop.permute.xlu0 %893
      %895 = vrot.lane.b32.xlu0 %v828, 4
      %v896 = vpop.permute.xlu0 %895
      %897 = vrot.lane.b32.xlu0 %v830, 4
      %v898 = vpop.permute.xlu0 %897
      %899 = vrot.lane.b32.xlu0 %v833, 4
      %v900 = vpop.permute.xlu0 %899
      %901 = vrot.lane.b32.xlu0 %v835, 4
      %v902 = vpop.permute.xlu0 %901
      %903 = vrot.lane.b32.xlu0 %v838, 4
      %v904 = vpop.permute.xlu0 %903
      %905 = vrot.lane.b32.xlu0 %v840, 4
      %v906 = vpop.permute.xlu0 %905
      %907 = vrot.lane.b32.xlu0 %v843, 4
      %v908 = vpop.permute.xlu0 %907
      %909 = vrot.lane.b32.xlu0 %v845, 4
      %v910 = vpop.permute.xlu0 %909
      %911 = vrot.lane.b32.xlu0 %v848, 4
      %v912 = vpop.permute.xlu0 %911
      %913 = vrot.lane.b32.xlu0 %v850, 4
      %v914 = vpop.permute.xlu0 %913
      %vm947 = vcmask 1045504
      %v948 = vrot.slane %v704, 2
      %v949 = vrot.slane %v605, 2
      %v950 = vsel %vm947, %v948, %v949
      %v951 = vrot.slane %v721, 2
      %v952 = vsel %vm947, %v949, %v951
      %v953 = vrot.slane %v705, 2
      %v954 = vrot.slane %v608, 2
      %v955 = vsel %vm947, %v953, %v954
      %v956 = vrot.slane %v722, 2
      %v957 = vsel %vm947, %v954, %v956
      %v958 = vrot.slane %v706, 2
      %v959 = vrot.slane %v611, 2
      %v960 = vsel %vm947, %v958, %v959
      %v961 = vrot.slane %v723, 2
      %v962 = vsel %vm947, %v959, %v961
      %v963 = vrot.slane %v707, 2
      %v964 = vrot.slane %v614, 2
      %v965 = vsel %vm947, %v963, %v964
      %v966 = vrot.slane %v724, 2
      %v967 = vsel %vm947, %v964, %v966
      %v968 = vrot.slane %v708, 2
      %v969 = vrot.slane %v617, 2
      %v970 = vsel %vm947, %v968, %v969
      %v971 = vrot.slane %v725, 2
      %v972 = vsel %vm947, %v969, %v971
      %v973 = vrot.slane %v709, 2
      %v974 = vrot.slane %v620, 2
      %v975 = vsel %vm947, %v973, %v974
      %v976 = vrot.slane %v726, 2
      %v977 = vsel %vm947, %v974, %v976
      %v978 = vrot.slane %v710, 2
      %v979 = vrot.slane %v623, 2
      %v980 = vsel %vm947, %v978, %v979
      %v981 = vrot.slane %v727, 2
      %v982 = vsel %vm947, %v979, %v981
      %v983 = vrot.slane %v711, 2
      %v984 = vrot.slane %v626, 2
      %v985 = vsel %vm947, %v983, %v984
      %v986 = vrot.slane %v728, 2
      %v987 = vsel %vm947, %v984, %v986
      %v988 = vrot.slane %v712, 2
      %v989 = vrot.slane %v629, 2
      %v990 = vsel %vm947, %v988, %v989
      %v991 = vrot.slane %v729, 2
      %v992 = vsel %vm947, %v989, %v991
      %v993 = vrot.slane %v713, 2
      %v994 = vrot.slane %v632, 2
      %v995 = vsel %vm947, %v993, %v994
      %v996 = vrot.slane %v730, 2
      %v997 = vsel %vm947, %v994, %v996
      %v998 = vrot.slane %v714, 2
      %v999 = vrot.slane %v635, 2
      %v1000 = vsel %vm947, %v998, %v999
      %v1001 = vrot.slane %v731, 2
      %v1002 = vsel %vm947, %v999, %v1001
      %v1003 = vrot.slane %v715, 2
      %v1004 = vrot.slane %v638, 2
      %v1005 = vsel %vm947, %v1003, %v1004
      %v1006 = vrot.slane %v732, 2
      %v1007 = vsel %vm947, %v1004, %v1006
      %v1008 = vrot.slane %v716, 2
      %v1009 = vrot.slane %v641, 2
      %v1010 = vsel %vm947, %v1008, %v1009
      %v1011 = vrot.slane %v733, 2
      %v1012 = vsel %vm947, %v1009, %v1011
      %v1013 = vrot.slane %v717, 2
      %v1014 = vrot.slane %v644, 2
      %v1015 = vsel %vm947, %v1013, %v1014
      %v1016 = vrot.slane %v734, 2
      %v1017 = vsel %vm947, %v1014, %v1016
      %v1018 = vrot.slane %v718, 2
      %v1019 = vrot.slane %v647, 2
      %v1020 = vsel %vm947, %v1018, %v1019
      %v1021 = vrot.slane %v735, 2
      %v1022 = vsel %vm947, %v1019, %v1021
      %v1023 = vrot.slane %v719, 2
      %v1024 = vrot.slane %v650, 2
      %v1025 = vsel %vm947, %v1023, %v1024
      %v1026 = vrot.slane %v736, 2
      %v1027 = vsel %vm947, %v1024, %v1026
      %1028 = vrot.lane.b32.xlu0 %v950, 8
      %v1029 = vpop.permute.xlu0 %1028
      %1030 = vrot.lane.b32.xlu0 %v952, 8
      %v1031 = vpop.permute.xlu0 %1030
      %1032 = vrot.lane.b32.xlu0 %v955, 8
      %v1033 = vpop.permute.xlu0 %1032
      %1034 = vrot.lane.b32.xlu0 %v957, 8
      %v1035 = vpop.permute.xlu0 %1034
      %1036 = vrot.lane.b32.xlu0 %v960, 8
      %v1037 = vpop.permute.xlu0 %1036
      %1038 = vrot.lane.b32.xlu0 %v962, 8
      %v1039 = vpop.permute.xlu0 %1038
      %1040 = vrot.lane.b32.xlu0 %v965, 8
      %v1041 = vpop.permute.xlu0 %1040
      %1042 = vrot.lane.b32.xlu0 %v967, 8
      %v1043 = vpop.permute.xlu0 %1042
      %1044 = vrot.lane.b32.xlu0 %v970, 8
      %v1045 = vpop.permute.xlu0 %1044
      %1046 = vrot.lane.b32.xlu0 %v972, 8
      %v1047 = vpop.permute.xlu0 %1046
      %1048 = vrot.lane.b32.xlu0 %v975, 8
      %v1049 = vpop.permute.xlu0 %1048
      %1050 = vrot.lane.b32.xlu0 %v977, 8
      %v1051 = vpop.permute.xlu0 %1050
      %1052 = vrot.lane.b32.xlu0 %v980, 8
      %v1053 = vpop.permute.xlu0 %1052
      %1054 = vrot.lane.b32.xlu0 %v982, 8
      %v1055 = vpop.permute.xlu0 %1054
      %1056 = vrot.lane.b32.xlu0 %v985, 8
      %v1057 = vpop.permute.xlu0 %1056
      %1058 = vrot.lane.b32.xlu0 %v987, 8
      %v1059 = vpop.permute.xlu0 %1058
      %1060 = vrot.lane.b32.xlu0 %v990, 8
      %v1061 = vpop.permute.xlu0 %1060
      %1062 = vrot.lane.b32.xlu0 %v992, 8
      %v1063 = vpop.permute.xlu0 %1062
      %1064 = vrot.lane.b32.xlu0 %v995, 8
      %v1065 = vpop.permute.xlu0 %1064
      %1066 = vrot.lane.b32.xlu0 %v997, 8
      %v1067 = vpop.permute.xlu0 %1066
      %1068 = vrot.lane.b32.xlu0 %v1000, 8
      %v1069 = vpop.permute.xlu0 %1068
      %1070 = vrot.lane.b32.xlu0 %v1002, 8
      %v1071 = vpop.permute.xlu0 %1070
      %1072 = vrot.lane.b32.xlu0 %v1005, 8
      %v1073 = vpop.permute.xlu0 %1072
      %1074 = vrot.lane.b32.xlu0 %v1007, 8
      %v1075 = vpop.permute.xlu0 %1074
      %1076 = vrot.lane.b32.xlu0 %v1010, 8
      %v1077 = vpop.permute.xlu0 %1076
      %1078 = vrot.lane.b32.xlu0 %v1012, 8
      %v1079 = vpop.permute.xlu0 %1078
      %1080 = vrot.lane.b32.xlu0 %v1015, 8
      %v1081 = vpop.permute.xlu0 %1080
      %1082 = vrot.lane.b32.xlu0 %v1017, 8
      %v1083 = vpop.permute.xlu0 %1082
      %1084 = vrot.lane.b32.xlu0 %v1020, 8
      %v1085 = vpop.permute.xlu0 %1084
      %1086 = vrot.lane.b32.xlu0 %v1022, 8
      %v1087 = vpop.permute.xlu0 %1086
      %1088 = vrot.lane.b32.xlu0 %v1025, 8
      %v1089 = vpop.permute.xlu0 %1088
      %1090 = vrot.lane.b32.xlu0 %v1027, 8
      %v1091 = vpop.permute.xlu0 %1090
      %vm1124 = vcmask 31744
      %v1125 = vsel %vm1124, %v704, %v852
      %v1126 = vsel %vm1124, %v605, %v854
      %v1127 = vsel %vm1124, %v705, %v856
      %v1128 = vsel %vm1124, %v608, %v858
      %v1129 = vsel %vm1124, %v706, %v860
      %v1130 = vsel %vm1124, %v611, %v862
      %v1131 = vsel %vm1124, %v707, %v864
      %v1132 = vsel %vm1124, %v614, %v866
      %v1133 = vsel %vm1124, %v708, %v868
      %v1134 = vsel %vm1124, %v617, %v870
      %v1135 = vsel %vm1124, %v709, %v872
      %v1136 = vsel %vm1124, %v620, %v874
      %v1137 = vsel %vm1124, %v710, %v876
      %v1138 = vsel %vm1124, %v623, %v878
      %v1139 = vsel %vm1124, %v711, %v880
      %v1140 = vsel %vm1124, %v626, %v882
      %v1141 = vsel %vm1124, %v712, %v884
      %v1142 = vsel %vm1124, %v629, %v886
      %v1143 = vsel %vm1124, %v713, %v888
      %v1144 = vsel %vm1124, %v632, %v890
      %v1145 = vsel %vm1124, %v714, %v892
      %v1146 = vsel %vm1124, %v635, %v894
      %v1147 = vsel %vm1124, %v715, %v896
      %v1148 = vsel %vm1124, %v638, %v898
      %v1149 = vsel %vm1124, %v716, %v900
      %v1150 = vsel %vm1124, %v641, %v902
      %v1151 = vsel %vm1124, %v717, %v904
      %v1152 = vsel %vm1124, %v644, %v906
      %v1153 = vsel %vm1124, %v718, %v908
      %v1154 = vsel %vm1124, %v647, %v910
      %v1155 = vsel %vm1124, %v719, %v912
      %v1156 = vsel %vm1124, %v650, %v914
      %vm1157 = vcmask 64512
      %v1158 = vsel %vm1157, %v1125, %v1029
      %v1159 = vsel %vm1157, %v1126, %v1031
      %v1160 = vsel %vm1157, %v1127, %v1033
      %v1161 = vsel %vm1157, %v1128, %v1035
      %v1162 = vsel %vm1157, %v1129, %v1037
      %v1163 = vsel %vm1157, %v1130, %v1039
      %v1164 = vsel %vm1157, %v1131, %v1041
      %v1165 = vsel %vm1157, %v1132, %v1043
      %v1166 = vsel %vm1157, %v1133, %v1045
      %v1167 = vsel %vm1157, %v1134, %v1047
      %v1168 = vsel %vm1157, %v1135, %v1049
      %v1169 = vsel %vm1157, %v1136, %v1051
      %v1170 = vsel %vm1157, %v1137, %v1053
      %v1171 = vsel %vm1157, %v1138, %v1055
      %v1172 = vsel %vm1157, %v1139, %v1057
      %v1173 = vsel %vm1157, %v1140, %v1059
      %v1174 = vsel %vm1157, %v1141, %v1061
      %v1175 = vsel %vm1157, %v1142, %v1063
      %v1176 = vsel %vm1157, %v1143, %v1065
      %v1177 = vsel %vm1157, %v1144, %v1067
      %v1178 = vsel %vm1157, %v1145, %v1069
      %v1179 = vsel %vm1157, %v1146, %v1071
      %v1180 = vsel %vm1157, %v1147, %v1073
      %v1181 = vsel %vm1157, %v1148, %v1075
      %v1182 = vsel %vm1157, %v1149, %v1077
      %v1183 = vsel %vm1157, %v1150, %v1079
      %v1184 = vsel %vm1157, %v1151, %v1081
      %v1185 = vsel %vm1157, %v1152, %v1083
      %v1186 = vsel %vm1157, %v1153, %v1085
      %v1187 = vsel %vm1157, %v1154, %v1087
      %v1188 = vsel %vm1157, %v1155, %v1089
      %v1189 = vsel %vm1157, %v1156, %v1091
      %v1190 = vpack.c.bf16 %v1159, %v1158
      %v1191 = vpack.c.bf16 %v1161, %v1160
      %v1192 = vpack.c.bf16 %v1163, %v1162
      %v1193 = vpack.c.bf16 %v1165, %v1164
      %v1194 = vpack.c.bf16 %v1167, %v1166
      %v1195 = vpack.c.bf16 %v1169, %v1168
      %v1196 = vpack.c.bf16 %v1171, %v1170
      %v1197 = vpack.c.bf16 %v1173, %v1172
      %v1198 = vpack.c.bf16 %v1175, %v1174
      %v1199 = vpack.c.bf16 %v1177, %v1176
      %v1200 = vpack.c.bf16 %v1179, %v1178
      %v1201 = vpack.c.bf16 %v1181, %v1180
      %v1202 = vpack.c.bf16 %v1183, %v1182
      %v1203 = vpack.c.bf16 %v1185, %v1184
      %v1204 = vpack.c.bf16 %v1187, %v1186
      %v1205 = vpack.c.bf16 %v1189, %v1188
      %v1206 = vld [vmem:[%s6] sm:$0xf]
      %v1207 = vld [vmem:[%s6 + $0x4] sm:$0x3]
      %v1210 = vrot.slane %v720, 1
      %v1211 = vrot.slane %v653, 1
      %v1212 = vsel %vm770, %v1210, %v1211
      %v1213 = vrot.slane %v737, 1
      %v1214 = vsel %vm770, %v1211, %v1213
      %1215 = vrot.lane.b32.xlu0 %v1212, 4
      %v1216 = vpop.permute.xlu0 %1215
      %1217 = vrot.lane.b32.xlu0 %v1214, 4
      %v1218 = vpop.permute.xlu0 %1217
      %v1221 = vrot.slane %v720, 2
      %v1222 = vrot.slane %v653, 2
      %v1223 = vsel %vm947, %v1221, %v1222
      %v1224 = vrot.slane %v737, 2
      %v1225 = vsel %vm947, %v1222, %v1224
      %1226 = vrot.lane.b32.xlu0 %v1223, 8
      %v1227 = vpop.permute.xlu0 %1226
      %1228 = vrot.lane.b32.xlu0 %v1225, 8
      %v1229 = vpop.permute.xlu0 %1228
      %v1232 = vsel %vm1124, %v720, %v1216
      %v1233 = vsel %vm1124, %v653, %v1218
      %v1234 = vsel %vm1157, %v1232, %v1227
      %v1235 = vsel %vm1157, %v1233, %v1229
      %v1236 = vpack.c.bf16 %v1235, %v1234
      %s1237 = scalar_lea.vmem %s6, 8
      %v1238 = vld [vmem:[%s1237] sm:$0xf]
      %v1239 = vld [vmem:[%s1237 + $0x4] sm:$0x3]
      %v1242 = vunpack.c.l.b16 %v1238
      %v1243 = vunpack.c.l.b16 %v1239
      %v1244 = vpack.c.b16 %v1243, %v1242
      %vm1245 = vcmask 97280
      %v1247 = vsel %vm1245, %v1191, 0
      %v1250 = vsel %vm1245, %v1192, 0
      %v1253 = vsel %vm1245, %v1193, 0
      %v1256 = vsel %vm1245, %v1194, 0
      %v1259 = vsel %vm1245, %v1195, 0
      %v1262 = vsel %vm1245, %v1196, 0
      %v1265 = vsel %vm1245, %v1197, 0
      %v1268 = vsel %vm1245, %v1198, 0
      %v1271 = vsel %vm1245, %v1199, 0
      %v1274 = vsel %vm1245, %v1200, 0
      %v1277 = vsel %vm1245, %v1201, 0
      %v1280 = vsel %vm1245, %v1202, 0
      %v1283 = vsel %vm1245, %v1203, 0
      %v1286 = vsel %vm1245, %v1204, 0
      %v1289 = vsel %vm1245, %v1205, 0
      %v1292 = vsel %vm1245, %v1236, 0
      %v1295 = vsel %vm947, %v1244, 0
      %1297 = vmatprep.subr.bf16.mxu0 0
      %1298 = vmatpush1.bf16.msra.mxu0 %v1295
      %1299 = vmatprep.subr.bf16.mxu0 0
      %1300 = vmatpush1.bf16.msra.mxu0 0
      %1301 = vmatprep.subr.bf16.mxu0 0
      %1302 = vmatpush1.bf16.msra.mxu0 0
      %1303 = vmatprep.subr.bf16.mxu0 0
      %1304 = vmatpush1.bf16.msra.mxu0 0
      %1305 = vmatprep.subr.bf16.mxu0 0
      %1306 = vmatpush1.bf16.msra.mxu0 0
      %1307 = vmatprep.subr.bf16.mxu0 0
      %1308 = vmatpush1.bf16.msra.mxu0 0
      %1309 = vmatprep.subr.bf16.mxu0 0
      %1310 = vmatpush1.bf16.msra.mxu0 0
      %1311 = vmatprep.subr.bf16.mxu0 0
      %1312 = vmatpush1.bf16.msra.mxu0 0
      %1313 = vmatprep.subr.bf16.mxu0 0
      %1314 = vmatpush1.bf16.msra.mxu0 0
      %1315 = vmatprep.subr.bf16.mxu0 0
      %1316 = vmatpush1.bf16.msra.mxu0 0
      %1317 = vmatprep.subr.bf16.mxu0 0
      %1318 = vmatpush1.bf16.msra.mxu0 0
      %1319 = vmatprep.subr.bf16.mxu0 0
      %1320 = vmatpush1.bf16.msra.mxu0 0
      %1321 = vmatprep.subr.bf16.mxu0 0
      %1322 = vmatpush1.bf16.msra.mxu0 0
      %1323 = vmatprep.subr.bf16.mxu0 0
      %1324 = vmatpush1.bf16.msra.mxu0 0
      %1325 = vmatprep.subr.bf16.mxu0 0
      %1326 = vmatpush1.bf16.msra.mxu0 0
      %1327 = vmatprep.subr.bf16.mxu0 0
      %1328 = vmatpush1.bf16.msra.mxu0 0
      %1329 = vmatprep.mubr.bf16.mxu0 0
      %1330 = vmatmul.mubr.bf16.gmra.mrb[0].mxu0 %v1247
      %v1331 = vpop.f32.mrb[0].mxu0
      %v1332 = vadd.f32 0.0, %v1331
      %v1333 = vpop.f32.mrb[0].mxu0
      %v1334 = vpop.f32.mrb[0].mxu0
      %v1335 = vadd.f32 0.0, %v1334
      %v1336 = vpop.f32.mrb[0].mxu0
      %1337 = vmatprep.mubr.bf16.mxu0 0
      %1338 = vmatmul.mubr.bf16.gmra.mrb[0].mxu0 %v1250
      %v1339 = vpop.f32.mrb[0].mxu0
      %v1340 = vadd.f32 0.0, %v1339
      %v1341 = vpop.f32.mrb[0].mxu0
      %v1342 = vpop.f32.mrb[0].mxu0
      %v1343 = vadd.f32 0.0, %v1342
      %v1344 = vpop.f32.mrb[0].mxu0
      %1345 = vmatprep.mubr.bf16.mxu0 0
      %1346 = vmatmul.mubr.bf16.gmra.mrb[0].mxu0 %v1253
      %v1347 = vpop.f32.mrb[0].mxu0
      %v1348 = vadd.f32 0.0, %v1347
      %v1349 = vpop.f32.mrb[0].mxu0
      %v1350 = vpop.f32.mrb[0].mxu0
      %v1351 = vadd.f32 0.0, %v1350
      %v1352 = vpop.f32.mrb[0].mxu0
      %1353 = vmatprep.mubr.bf16.mxu0 0
      %1354 = vmatmul.mubr.bf16.gmra.mrb[0].mxu0 %v1256
      %v1355 = vpop.f32.mrb[0].mxu0
      %v1356 = vadd.f32 0.0, %v1355
      %v1357 = vpop.f32.mrb[0].mxu0
      %v1358 = vpop.f32.mrb[0].mxu0
      %v1359 = vadd.f32 0.0, %v1358
      %v1360 = vpop.f32.mrb[0].mxu0
      %1361 = vmatprep.mubr.bf16.mxu0 0
      %1362 = vmatmul.mubr.bf16.gmra.mrb[0].mxu0 %v1259
      %v1363 = vpop.f32.mrb[0].mxu0
      %v1364 = vadd.f32 0.0, %v1363
      %v1365 = vpop.f32.mrb[0].mxu0
      %v1366 = vpop.f32.mrb[0].mxu0
      %v1367 = vadd.f32 0.0, %v1366
      %v1368 = vpop.f32.mrb[0].mxu0
      %1369 = vmatprep.mubr.bf16.mxu0 0
      %1370 = vmatmul.mubr.bf16.gmra.mrb[0].mxu0 %v1262
      %v1371 = vpop.f32.mrb[0].mxu0
      %v1372 = vadd.f32 0.0, %v1371
      %v1373 = vpop.f32.mrb[0].mxu0
      %v1374 = vpop.f32.mrb[0].mxu0
      %v1375 = vadd.f32 0.0, %v1374
      %v1376 = vpop.f32.mrb[0].mxu0
      %1377 = vmatprep.mubr.bf16.mxu0 0
      %1378 = vmatmul.mubr.bf16.gmra.mrb[0].mxu0 %v1265
      %v1379 = vpop.f32.mrb[0].mxu0
      %v1380 = vadd.f32 0.0, %v1379
      %v1381 = vpop.f32.mrb[0].mxu0
      %v1382 = vpop.f32.mrb[0].mxu0
      %v1383 = vadd.f32 0.0, %v1382
      %v1384 = vpop.f32.mrb[0].mxu0
      %1385 = vmatprep.mubr.bf16.mxu0 0
      %1386 = vmatmul.mubr.bf16.gmra.mrb[0].mxu0 %v1268
      %v1387 = vpop.f32.mrb[0].mxu0
      %v1388 = vadd.f32 0.0, %v1387
      %v1389 = vpop.f32.mrb[0].mxu0
      %v1390 = vpop.f32.mrb[0].mxu0
      %v1391 = vadd.f32 0.0, %v1390
      %v1392 = vpop.f32.mrb[0].mxu0
      %1393 = vmatprep.mubr.bf16.mxu0 0
      %1394 = vmatmul.mubr.bf16.gmra.mrb[0].mxu0 %v1271
      %v1395 = vpop.f32.mrb[0].mxu0
      %v1396 = vadd.f32 0.0, %v1395
      %v1397 = vpop.f32.mrb[0].mxu0
      %v1398 = vpop.f32.mrb[0].mxu0
      %v1399 = vadd.f32 0.0, %v1398
      %v1400 = vpop.f32.mrb[0].mxu0
      %1401 = vmatprep.mubr.bf16.mxu0 0
      %1402 = vmatmul.mubr.bf16.gmra.mrb[0].mxu0 %v1274
      %v1403 = vpop.f32.mrb[0].mxu0
      %v1404 = vadd.f32 0.0, %v1403
      %v1405 = vpop.f32.mrb[0].mxu0
      %v1406 = vpop.f32.mrb[0].mxu0
      %v1407 = vadd.f32 0.0, %v1406
      %v1408 = vpop.f32.mrb[0].mxu0
      %1409 = vmatprep.mubr.bf16.mxu0 0
      %1410 = vmatmul.mubr.bf16.gmra.mrb[0].mxu0 %v1277
      %v1411 = vpop.f32.mrb[0].mxu0
      %v1412 = vadd.f32 0.0, %v1411
      %v1413 = vpop.f32.mrb[0].mxu0
      %v1414 = vpop.f32.mrb[0].mxu0
      %v1415 = vadd.f32 0.0, %v1414
      %v1416 = vpop.f32.mrb[0].mxu0
      %1417 = vmatprep.mubr.bf16.mxu0 0
      %1418 = vmatmul.mubr.bf16.gmra.mrb[0].mxu0 %v1280
      %v1419 = vpop.f32.mrb[0].mxu0
      %v1420 = vadd.f32 0.0, %v1419
      %v1421 = vpop.f32.mrb[0].mxu0
      %v1422 = vpop.f32.mrb[0].mxu0
      %v1423 = vadd.f32 0.0, %v1422
      %v1424 = vpop.f32.mrb[0].mxu0
      %1425 = vmatprep.mubr.bf16.mxu0 0
      %1426 = vmatmul.mubr.bf16.gmra.mrb[0].mxu0 %v1283
      %v1427 = vpop.f32.mrb[0].mxu0
      %v1428 = vadd.f32 0.0, %v1427
      %v1429 = vpop.f32.mrb[0].mxu0
      %v1430 = vpop.f32.mrb[0].mxu0
      %v1431 = vadd.f32 0.0, %v1430
      %v1432 = vpop.f32.mrb[0].mxu0
      %1433 = vmatprep.mubr.bf16.mxu0 0
      %1434 = vmatmul.mubr.bf16.gmra.mrb[0].mxu0 %v1286
      %v1435 = vpop.f32.mrb[0].mxu0
      %v1436 = vadd.f32 0.0, %v1435
      %v1437 = vpop.f32.mrb[0].mxu0
      %v1438 = vpop.f32.mrb[0].mxu0
      %v1439 = vadd.f32 0.0, %v1438
      %v1440 = vpop.f32.mrb[0].mxu0
      %1441 = vmatprep.mubr.bf16.mxu0 0
      %1442 = vmatmul.mubr.bf16.gmra.mrb[0].mxu0 %v1289
      %v1443 = vpop.f32.mrb[0].mxu0
      %v1444 = vadd.f32 0.0, %v1443
      %v1445 = vpop.f32.mrb[0].mxu0
      %v1446 = vpop.f32.mrb[0].mxu0
      %v1447 = vadd.f32 0.0, %v1446
      %v1448 = vpop.f32.mrb[0].mxu0
      %1449 = vmatprep.mubr.bf16.mxu0 0
      %1450 = vmatmul.mubr.bf16.gmra.mrb[0].mxu0 %v1292
      %v1451 = vpop.f32.mrb[0].mxu0
      %v1452 = vadd.f32 0.0, %v1451
      %v1453 = vpop.f32.mrb[0].mxu0
      %v1454 = vpop.f32.mrb[0].mxu0
      %v1455 = vadd.f32 0.0, %v1454
      %v1456 = vpop.f32.mrb[0].mxu0
      %1457 = vdwg.mxu0
      %v1460 = vunpack.c.l.b16 %v1206
      %v1461 = vunpack.c.l.b16 %v1207
      %v1462 = vpack.c.b16 %v1461, %v1460
      %v1464 = vsel %vm1245, %v1190, 0
      %v1467 = vsel %vm947, %v1462, 0
      %1469 = vmatprep.subr.bf16.mxu0 0
      %1470 = vmatpush1.bf16.msra.mxu0 %v1467
      %1471 = vmatprep.subr.bf16.mxu0 0
      %1472 = vmatpush1.bf16.msra.mxu0 0
      %1473 = vmatprep.subr.bf16.mxu0 0
      %1474 = vmatpush1.bf16.msra.mxu0 0
      %1475 = vmatprep.subr.bf16.mxu0 0
      %1476 = vmatpush1.bf16.msra.mxu0 0
      %1477 = vmatprep.subr.bf16.mxu0 0
      %1478 = vmatpush1.bf16.msra.mxu0 0
      %1479 = vmatprep.subr.bf16.mxu0 0
      %1480 = vmatpush1.bf16.msra.mxu0 0
      %1481 = vmatprep.subr.bf16.mxu0 0
      %1482 = vmatpush1.bf16.msra.mxu0 0
      %1483 = vmatprep.subr.bf16.mxu0 0
      %1484 = vmatpush1.bf16.msra.mxu0 0
      %1485 = vmatprep.subr.bf16.mxu0 0
      %1486 = vmatpush1.bf16.msra.mxu0 0
      %1487 = vmatprep.subr.bf16.mxu0 0
      %1488 = vmatpush1.bf16.msra.mxu0 0
      %1489 = vmatprep.subr.bf16.mxu0 0
      %1490 = vmatpush1.bf16.msra.mxu0 0
      %1491 = vmatprep.subr.bf16.mxu0 0
      %1492 = vmatpush1.bf16.msra.mxu0 0
      %1493 = vmatprep.subr.bf16.mxu0 0
      %1494 = vmatpush1.bf16.msra.mxu0 0
      %1495 = vmatprep.subr.bf16.mxu0 0
      %1496 = vmatpush1.bf16.msra.mxu0 0
      %1497 = vmatprep.subr.bf16.mxu0 0
      %1498 = vmatpush1.bf16.msra.mxu0 0
      %1499 = vmatprep.subr.bf16.mxu0 0
      %1500 = vmatpush1.bf16.msra.mxu0 0
      %1501 = vmatprep.mubr.bf16.mxu0 0
      %1502 = vmatmul.mubr.bf16.gmra.mrb[0].mxu0 %v1464
      %v1503 = vpop.f32.mrb[0].mxu0
      %v1504 = vadd.f32 %v1332, %v1503
      %v1505 = vpop.f32.mrb[0].mxu0
      %v1506 = vpop.f32.mrb[0].mxu0
      %v1507 = vadd.f32 %v1335, %v1506
      %v1508 = vpop.f32.mrb[0].mxu0
      %1509 = vmatprep.mubr.bf16.mxu0 0
      %1510 = vmatmul.mubr.bf16.gmra.mrb[0].mxu0 %v1247
      %v1511 = vpop.f32.mrb[0].mxu0
      %v1512 = vadd.f32 %v1340, %v1511
      %v1513 = vpop.f32.mrb[0].mxu0
      %v1514 = vpop.f32.mrb[0].mxu0
      %v1515 = vadd.f32 %v1343, %v1514
      %v1516 = vpop.f32.mrb[0].mxu0
      %1517 = vmatprep.mubr.bf16.mxu0 0
      %1518 = vmatmul.mubr.bf16.gmra.mrb[0].mxu0 %v1250
      %v1519 = vpop.f32.mrb[0].mxu0
      %v1520 = vadd.f32 %v1348, %v1519
      %v1521 = vpop.f32.mrb[0].mxu0
      %v1522 = vpop.f32.mrb[0].mxu0
      %v1523 = vadd.f32 %v1351, %v1522
      %v1524 = vpop.f32.mrb[0].mxu0
      %1525 = vmatprep.mubr.bf16.mxu0 0
      %1526 = vmatmul.mubr.bf16.gmra.mrb[0].mxu0 %v1253
      %v1527 = vpop.f32.mrb[0].mxu0
      %v1528 = vadd.f32 %v1356, %v1527
      %v1529 = vpop.f32.mrb[0].mxu0
      %v1530 = vpop.f32.mrb[0].mxu0
      %v1531 = vadd.f32 %v1359, %v1530
      %v1532 = vpop.f32.mrb[0].mxu0
      %1533 = vmatprep.mubr.bf16.mxu0 0
      %1534 = vmatmul.mubr.bf16.gmra.mrb[0].mxu0 %v1256
      %v1535 = vpop.f32.mrb[0].mxu0
      %v1536 = vadd.f32 %v1364, %v1535
      %v1537 = vpop.f32.mrb[0].mxu0
      %v1538 = vpop.f32.mrb[0].mxu0
      %v1539 = vadd.f32 %v1367, %v1538
      %v1540 = vpop.f32.mrb[0].mxu0
      %1541 = vmatprep.mubr.bf16.mxu0 0
      %1542 = vmatmul.mubr.bf16.gmra.mrb[0].mxu0 %v1259
      %v1543 = vpop.f32.mrb[0].mxu0
      %v1544 = vadd.f32 %v1372, %v1543
      %v1545 = vpop.f32.mrb[0].mxu0
      %v1546 = vpop.f32.mrb[0].mxu0
      %v1547 = vadd.f32 %v1375, %v1546
      %v1548 = vpop.f32.mrb[0].mxu0
      %1549 = vmatprep.mubr.bf16.mxu0 0
      %1550 = vmatmul.mubr.bf16.gmra.mrb[0].mxu0 %v1262
      %v1551 = vpop.f32.mrb[0].mxu0
      %v1552 = vadd.f32 %v1380, %v1551
      %v1553 = vpop.f32.mrb[0].mxu0
      %v1554 = vpop.f32.mrb[0].mxu0
      %v1555 = vadd.f32 %v1383, %v1554
      %v1556 = vpop.f32.mrb[0].mxu0
      %1557 = vmatprep.mubr.bf16.mxu0 0
      %1558 = vmatmul.mubr.bf16.gmra.mrb[0].mxu0 %v1265
      %v1559 = vpop.f32.mrb[0].mxu0
      %v1560 = vadd.f32 %v1388, %v1559
      %v1561 = vpop.f32.mrb[0].mxu0
      %v1562 = vpop.f32.mrb[0].mxu0
      %v1563 = vadd.f32 %v1391, %v1562
      %v1564 = vpop.f32.mrb[0].mxu0
      %1565 = vmatprep.mubr.bf16.mxu0 0
      %1566 = vmatmul.mubr.bf16.gmra.mrb[0].mxu0 %v1268
      %v1567 = vpop.f32.mrb[0].mxu0
      %v1568 = vadd.f32 %v1396, %v1567
      %v1569 = vpop.f32.mrb[0].mxu0
      %v1570 = vpop.f32.mrb[0].mxu0
      %v1571 = vadd.f32 %v1399, %v1570
      %v1572 = vpop.f32.mrb[0].mxu0
      %1573 = vmatprep.mubr.bf16.mxu0 0
      %1574 = vmatmul.mubr.bf16.gmra.mrb[0].mxu0 %v1271
      %v1575 = vpop.f32.mrb[0].mxu0
      %v1576 = vadd.f32 %v1404, %v1575
      %v1577 = vpop.f32.mrb[0].mxu0
      %v1578 = vpop.f32.mrb[0].mxu0
      %v1579 = vadd.f32 %v1407, %v1578
      %v1580 = vpop.f32.mrb[0].mxu0
      %1581 = vmatprep.mubr.bf16.mxu0 0
      %1582 = vmatmul.mubr.bf16.gmra.mrb[0].mxu0 %v1274
      %v1583 = vpop.f32.mrb[0].mxu0
      %v1584 = vadd.f32 %v1412, %v1583
      %v1585 = vpop.f32.mrb[0].mxu0
      %v1586 = vpop.f32.mrb[0].mxu0
      %v1587 = vadd.f32 %v1415, %v1586
      %v1588 = vpop.f32.mrb[0].mxu0
      %1589 = vmatprep.mubr.bf16.mxu0 0
      %1590 = vmatmul.mubr.bf16.gmra.mrb[0].mxu0 %v1277
      %v1591 = vpop.f32.mrb[0].mxu0
      %v1592 = vadd.f32 %v1420, %v1591
      %v1593 = vpop.f32.mrb[0].mxu0
      %v1594 = vpop.f32.mrb[0].mxu0
      %v1595 = vadd.f32 %v1423, %v1594
      %v1596 = vpop.f32.mrb[0].mxu0
      %1597 = vmatprep.mubr.bf16.mxu0 0
      %1598 = vmatmul.mubr.bf16.gmra.mrb[0].mxu0 %v1280
      %v1599 = vpop.f32.mrb[0].mxu0
      %v1600 = vadd.f32 %v1428, %v1599
      %v1601 = vpop.f32.mrb[0].mxu0
      %v1602 = vpop.f32.mrb[0].mxu0
      %v1603 = vadd.f32 %v1431, %v1602
      %v1604 = vpop.f32.mrb[0].mxu0
      %1605 = vmatprep.mubr.bf16.mxu0 0
      %1606 = vmatmul.mubr.bf16.gmra.mrb[0].mxu0 %v1283
      %v1607 = vpop.f32.mrb[0].mxu0
      %v1608 = vadd.f32 %v1436, %v1607
      %v1609 = vpop.f32.mrb[0].mxu0
      %v1610 = vpop.f32.mrb[0].mxu0
      %v1611 = vadd.f32 %v1439, %v1610
      %v1612 = vpop.f32.mrb[0].mxu0
      %1613 = vmatprep.mubr.bf16.mxu0 0
      %1614 = vmatmul.mubr.bf16.gmra.mrb[0].mxu0 %v1286
      %v1615 = vpop.f32.mrb[0].mxu0
      %v1616 = vadd.f32 %v1444, %v1615
      %v1617 = vpop.f32.mrb[0].mxu0
      %v1618 = vpop.f32.mrb[0].mxu0
      %v1619 = vadd.f32 %v1447, %v1618
      %v1620 = vpop.f32.mrb[0].mxu0
      %1621 = vmatprep.mubr.bf16.mxu0 0
      %1622 = vmatmul.mubr.bf16.gmra.mrb[0].mxu0 %v1289
      %v1623 = vpop.f32.mrb[0].mxu0
      %v1624 = vadd.f32 %v1452, %v1623
      %v1625 = vpop.f32.mrb[0].mxu0
      %v1626 = vpop.f32.mrb[0].mxu0
      %v1627 = vadd.f32 %v1455, %v1626
      %v1628 = vpop.f32.mrb[0].mxu0
      %1629 = vdwg.mxu0
      %s1630 = scalar_lea.vmem %s6, 16
      %v1631 = vld [vmem:[%s1630] sm:$0xf]
      %v1632 = vld [vmem:[%s1630 + $0x4] sm:$0x3]
      %v1635 = vunpack.c.l.b16 %v1631
      %v1636 = vunpack.c.l.b16 %v1632
      %v1637 = vpack.c.b16 %v1636, %v1635
      %v1639 = vsel %vm947, %v1637, 0
      %1641 = vmatprep.subr.bf16.mxu0 0
      %1642 = vmatpush1.bf16.msra.mxu0 %v1639
      %1643 = vmatprep.subr.bf16.mxu0 0
      %1644 = vmatpush1.bf16.msra.mxu0 0
      %1645 = vmatprep.subr.bf16.mxu0 0
      %1646 = vmatpush1.bf16.msra.mxu0 0
      %1647 = vmatprep.subr.bf16.mxu0 0
      %1648 = vmatpush1.bf16.msra.mxu0 0
      %1649 = vmatprep.subr.bf16.mxu0 0
      %1650 = vmatpush1.bf16.msra.mxu0 0
      %1651 = vmatprep.subr.bf16.mxu0 0
      %1652 = vmatpush1.bf16.msra.mxu0 0
      %1653 = vmatprep.subr.bf16.mxu0 0
      %1654 = vmatpush1.bf16.msra.mxu0 0
      %1655 = vmatprep.subr.bf16.mxu0 0
      %1656 = vmatpush1.bf16.msra.mxu0 0
      %1657 = vmatprep.subr.bf16.mxu0 0
      %1658 = vmatpush1.bf16.msra.mxu0 0
      %1659 = vmatprep.subr.bf16.mxu0 0
      %1660 = vmatpush1.bf16.msra.mxu0 0
      %1661 = vmatprep.subr.bf16.mxu0 0
      %1662 = vmatpush1.bf16.msra.mxu0 0
      %1663 = vmatprep.subr.bf16.mxu0 0
      %1664 = vmatpush1.bf16.msra.mxu0 0
      %1665 = vmatprep.subr.bf16.mxu0 0
      %1666 = vmatpush1.bf16.msra.mxu0 0
      %1667 = vmatprep.subr.bf16.mxu0 0
      %1668 = vmatpush1.bf16.msra.mxu0 0
      %1669 = vmatprep.subr.bf16.mxu0 0
      %1670 = vmatpush1.bf16.msra.mxu0 0
      %1671 = vmatprep.subr.bf16.mxu0 0
      %1672 = vmatpush1.bf16.msra.mxu0 0
      %1673 = vmatprep.mubr.bf16.mxu0 0
      %1674 = vmatmul.mubr.bf16.gmra.mrb[0].mxu0 %v1250
      %v1675 = vpop.f32.mrb[0].mxu0
      %v1676 = vadd.f32 0.0, %v1675
      %v1677 = vpop.f32.mrb[0].mxu0
      %v1678 = vpop.f32.mrb[0].mxu0
      %v1679 = vadd.f32 0.0, %v1678
      %v1680 = vpop.f32.mrb[0].mxu0
      %1681 = vmatprep.mubr.bf16.mxu0 0
      %1682 = vmatmul.mubr.bf16.gmra.mrb[0].mxu0 %v1253
      %v1683 = vpop.f32.mrb[0].mxu0
      %v1684 = vadd.f32 0.0, %v1683
      %v1685 = vpop.f32.mrb[0].mxu0
      %v1686 = vpop.f32.mrb[0].mxu0
      %v1687 = vadd.f32 0.0, %v1686
      %v1688 = vpop.f32.mrb[0].mxu0
      %1689 = vmatprep.mubr.bf16.mxu0 0
      %1690 = vmatmul.mubr.bf16.gmra.mrb[0].mxu0 %v1256
      %v1691 = vpop.f32.mrb[0].mxu0
      %v1692 = vadd.f32 0.0, %v1691
      %v1693 = vpop.f32.mrb[0].mxu0
      %v1694 = vpop.f32.mrb[0].mxu0
      %v1695 = vadd.f32 0.0, %v1694
      %v1696 = vpop.f32.mrb[0].mxu0
      %1697 = vmatprep.mubr.bf16.mxu0 0
      %1698 = vmatmul.mubr.bf16.gmra.mrb[0].mxu0 %v1259
      %v1699 = vpop.f32.mrb[0].mxu0
      %v1700 = vadd.f32 0.0, %v1699
      %v1701 = vpop.f32.mrb[0].mxu0
      %v1702 = vpop.f32.mrb[0].mxu0
      %v1703 = vadd.f32 0.0, %v1702
      %v1704 = vpop.f32.mrb[0].mxu0
      %1705 = vmatprep.mubr.bf16.mxu0 0
      %1706 = vmatmul.mubr.bf16.gmra.mrb[0].mxu0 %v1262
      %v1707 = vpop.f32.mrb[0].mxu0
      %v1708 = vadd.f32 0.0, %v1707
      %v1709 = vpop.f32.mrb[0].mxu0
      %v1710 = vpop.f32.mrb[0].mxu0
      %v1711 = vadd.f32 0.0, %v1710
      %v1712 = vpop.f32.mrb[0].mxu0
      %1713 = vmatprep.mubr.bf16.mxu0 0
      %1714 = vmatmul.mubr.bf16.gmra.mrb[0].mxu0 %v1265
      %v1715 = vpop.f32.mrb[0].mxu0
      %v1716 = vadd.f32 0.0, %v1715
      %v1717 = vpop.f32.mrb[0].mxu0
      %v1718 = vpop.f32.mrb[0].mxu0
      %v1719 = vadd.f32 0.0, %v1718
      %v1720 = vpop.f32.mrb[0].mxu0
      %1721 = vmatprep.mubr.bf16.mxu0 0
      %1722 = vmatmul.mubr.bf16.gmra.mrb[0].mxu0 %v1268
      %v1723 = vpop.f32.mrb[0].mxu0
      %v1724 = vadd.f32 0.0, %v1723
      %v1725 = vpop.f32.mrb[0].mxu0
      %v1726 = vpop.f32.mrb[0].mxu0
      %v1727 = vadd.f32 0.0, %v1726
      %v1728 = vpop.f32.mrb[0].mxu0
      %1729 = vmatprep.mubr.bf16.mxu0 0
      %1730 = vmatmul.mubr.bf16.gmra.mrb[0].mxu0 %v1271
      %v1731 = vpop.f32.mrb[0].mxu0
      %v1732 = vadd.f32 0.0, %v1731
      %v1733 = vpop.f32.mrb[0].mxu0
      %v1734 = vpop.f32.mrb[0].mxu0
      %v1735 = vadd.f32 0.0, %v1734
      %v1736 = vpop.f32.mrb[0].mxu0
      %1737 = vmatprep.mubr.bf16.mxu0 0
      %1738 = vmatmul.mubr.bf16.gmra.mrb[0].mxu0 %v1274
      %v1739 = vpop.f32.mrb[0].mxu0
      %v1740 = vadd.f32 0.0, %v1739
      %v1741 = vpop.f32.mrb[0].mxu0
      %v1742 = vpop.f32.mrb[0].mxu0
      %v1743 = vadd.f32 0.0, %v1742
      %v1744 = vpop.f32.mrb[0].mxu0
      %1745 = vmatprep.mubr.bf16.mxu0 0
      %1746 = vmatmul.mubr.bf16.gmra.mrb[0].mxu0 %v1277
      %v1747 = vpop.f32.mrb[0].mxu0
      %v1748 = vadd.f32 0.0, %v1747
      %v1749 = vpop.f32.mrb[0].mxu0
      %v1750 = vpop.f32.mrb[0].mxu0
      %v1751 = vadd.f32 0.0, %v1750
      %v1752 = vpop.f32.mrb[0].mxu0
      %1753 = vmatprep.mubr.bf16.mxu0 0
      %1754 = vmatmul.mubr.bf16.gmra.mrb[0].mxu0 %v1280
      %v1755 = vpop.f32.mrb[0].mxu0
      %v1756 = vadd.f32 0.0, %v1755
      %v1757 = vpop.f32.mrb[0].mxu0
      %v1758 = vpop.f32.mrb[0].mxu0
      %v1759 = vadd.f32 0.0, %v1758
      %v1760 = vpop.f32.mrb[0].mxu0
      %1761 = vmatprep.mubr.bf16.mxu0 0
      %1762 = vmatmul.mubr.bf16.gmra.mrb[0].mxu0 %v1283
      %v1763 = vpop.f32.mrb[0].mxu0
      %v1764 = vadd.f32 0.0, %v1763
      %v1765 = vpop.f32.mrb[0].mxu0
      %v1766 = vpop.f32.mrb[0].mxu0
      %v1767 = vadd.f32 0.0, %v1766
      %v1768 = vpop.f32.mrb[0].mxu0
      %1769 = vmatprep.mubr.bf16.mxu0 0
      %1770 = vmatmul.mubr.bf16.gmra.mrb[0].mxu0 %v1286
      %v1771 = vpop.f32.mrb[0].mxu0
      %v1772 = vadd.f32 0.0, %v1771
      %v1773 = vpop.f32.mrb[0].mxu0
      %v1774 = vpop.f32.mrb[0].mxu0
      %v1775 = vadd.f32 0.0, %v1774
      %v1776 = vpop.f32.mrb[0].mxu0
      %1777 = vmatprep.mubr.bf16.mxu0 0
      %1778 = vmatmul.mubr.bf16.gmra.mrb[0].mxu0 %v1289
      %v1779 = vpop.f32.mrb[0].mxu0
      %v1780 = vadd.f32 0.0, %v1779
      %v1781 = vpop.f32.mrb[0].mxu0
      %v1782 = vpop.f32.mrb[0].mxu0
      %v1783 = vadd.f32 0.0, %v1782
      %v1784 = vpop.f32.mrb[0].mxu0
      %1785 = vmatprep.mubr.bf16.mxu0 0
      %1786 = vmatmul.mubr.bf16.gmra.mrb[0].mxu0 %v1292
      %v1787 = vpop.f32.mrb[0].mxu0
      %v1788 = vadd.f32 0.0, %v1787
      %v1789 = vpop.f32.mrb[0].mxu0
      %v1790 = vpop.f32.mrb[0].mxu0
      %v1791 = vadd.f32 0.0, %v1790
      %v1792 = vpop.f32.mrb[0].mxu0
      %1793 = vmatprep.mubr.bf16.mxu0 0
      %1794 = vmatmul.mubr.bf16.gmra.mrb[0].mxu0 %v1464
      %v1795 = vpop.f32.mrb[0].mxu0
      %v1796 = vadd.f32 0.0, %v1795
      %v1797 = vpop.f32.mrb[0].mxu0
      %v1798 = vpop.f32.mrb[0].mxu0
      %v1799 = vadd.f32 0.0, %v1798
      %v1800 = vpop.f32.mrb[0].mxu0
      %1801 = vdwg.mxu0
      %v1802 = vadd.f32 %v1504, %v1676
      %v1803 = vadd.f32 %v1507, %v1679
      %v1804 = vadd.f32 %v1512, %v1684
      %v1805 = vadd.f32 %v1515, %v1687
      %v1806 = vadd.f32 %v1520, %v1692
      %v1807 = vadd.f32 %v1523, %v1695
      %v1808 = vadd.f32 %v1528, %v1700
      %v1809 = vadd.f32 %v1531, %v1703
      %v1810 = vadd.f32 %v1536, %v1708
      %v1811 = vadd.f32 %v1539, %v1711
      %v1812 = vadd.f32 %v1544, %v1716
      %v1813 = vadd.f32 %v1547, %v1719
      %v1814 = vadd.f32 %v1552, %v1724
      %v1815 = vadd.f32 %v1555, %v1727
      %v1816 = vadd.f32 %v1560, %v1732
      %v1817 = vadd.f32 %v1563, %v1735
      %v1818 = vadd.f32 %v1568, %v1740
      %v1819 = vadd.f32 %v1571, %v1743
      %v1820 = vadd.f32 %v1576, %v1748
      %v1821 = vadd.f32 %v1579, %v1751
      %v1822 = vadd.f32 %v1584, %v1756
      %v1823 = vadd.f32 %v1587, %v1759
      %v1824 = vadd.f32 %v1592, %v1764
      %v1825 = vadd.f32 %v1595, %v1767
      %v1826 = vadd.f32 %v1600, %v1772
      %v1827 = vadd.f32 %v1603, %v1775
      %v1828 = vadd.f32 %v1608, %v1780
      %v1829 = vadd.f32 %v1611, %v1783
      %v1830 = vadd.f32 %v1616, %v1788
      %v1831 = vadd.f32 %v1619, %v1791
      %v1832 = vadd.f32 %v1624, %v1796
      %v1833 = vadd.f32 %v1627, %v1799
      %v1866 = vrot.slane %v506, 7
      %v1867 = vrot.slane %v507, 7
      %v1868 = vsel %vm603, %v1866, %v1867
      %v1869 = vrot.slane %v508, 7
      %v1870 = vrot.slane %v509, 7
      %v1871 = vsel %vm603, %v1869, %v1870
      %v1872 = vrot.slane %v510, 7
      %v1873 = vrot.slane %v511, 7
      %v1874 = vsel %vm603, %v1872, %v1873
      %v1875 = vrot.slane %v512, 7
      %v1876 = vrot.slane %v513, 7
      %v1877 = vsel %vm603, %v1875, %v1876
      %v1878 = vrot.slane %v514, 7
      %v1879 = vrot.slane %v515, 7
      %v1880 = vsel %vm603, %v1878, %v1879
      %v1881 = vrot.slane %v516, 7
      %v1882 = vrot.slane %v517, 7
      %v1883 = vsel %vm603, %v1881, %v1882
      %v1884 = vrot.slane %v518, 7
      %v1885 = vrot.slane %v519, 7
      %v1886 = vsel %vm603, %v1884, %v1885
      %v1887 = vrot.slane %v520, 7
      %v1888 = vrot.slane %v521, 7
      %v1889 = vsel %vm603, %v1887, %v1888
      %v1890 = vrot.slane %v522, 7
      %v1891 = vrot.slane %v523, 7
      %v1892 = vsel %vm603, %v1890, %v1891
      %v1893 = vrot.slane %v524, 7
      %v1894 = vrot.slane %v525, 7
      %v1895 = vsel %vm603, %v1893, %v1894
      %v1896 = vrot.slane %v526, 7
      %v1897 = vrot.slane %v527, 7
      %v1898 = vsel %vm603, %v1896, %v1897
      %v1899 = vrot.slane %v528, 7
      %v1900 = vrot.slane %v529, 7
      %v1901 = vsel %vm603, %v1899, %v1900
      %v1902 = vrot.slane %v530, 7
      %v1903 = vrot.slane %v531, 7
      %v1904 = vsel %vm603, %v1902, %v1903
      %v1905 = vrot.slane %v532, 7
      %v1906 = vrot.slane %v533, 7
      %v1907 = vsel %vm603, %v1905, %v1906
      %v1908 = vrot.slane %v534, 7
      %v1909 = vrot.slane %v535, 7
      %v1910 = vsel %vm603, %v1908, %v1909
      %v1911 = vrot.slane %v536, 7
      %v1912 = vrot.slane %v537, 7
      %v1913 = vsel %vm603, %v1911, %v1912
      %v1962 = vsel %vm603, 0.0, %v1866
      %v1963 = vsel %vm603, 0.0, %v1869
      %v1964 = vsel %vm603, 0.0, %v1872
      %v1965 = vsel %vm603, 0.0, %v1875
      %v1966 = vsel %vm603, 0.0, %v1878
      %v1967 = vsel %vm603, 0.0, %v1881
      %v1968 = vsel %vm603, 0.0, %v1884
      %v1969 = vsel %vm603, 0.0, %v1887
      %v1970 = vsel %vm603, 0.0, %v1890
      %v1971 = vsel %vm603, 0.0, %v1893
      %v1972 = vsel %vm603, 0.0, %v1896
      %v1973 = vsel %vm603, 0.0, %v1899
      %v1974 = vsel %vm603, 0.0, %v1902
      %v1975 = vsel %vm603, 0.0, %v1905
      %v1976 = vsel %vm603, 0.0, %v1908
      %v1977 = vsel %vm603, 0.0, %v1911
      %v1978 = vsel %vm603, %v1867, 0.0
      %v1979 = vsel %vm603, %v1870, 0.0
      %v1980 = vsel %vm603, %v1873, 0.0
      %v1981 = vsel %vm603, %v1876, 0.0
      %v1982 = vsel %vm603, %v1879, 0.0
      %v1983 = vsel %vm603, %v1882, 0.0
      %v1984 = vsel %vm603, %v1885, 0.0
      %v1985 = vsel %vm603, %v1888, 0.0
      %v1986 = vsel %vm603, %v1891, 0.0
      %v1987 = vsel %vm603, %v1894, 0.0
      %v1988 = vsel %vm603, %v1897, 0.0
      %v1989 = vsel %vm603, %v1900, 0.0
      %v1990 = vsel %vm603, %v1903, 0.0
      %v1991 = vsel %vm603, %v1906, 0.0
      %v1992 = vsel %vm603, %v1909, 0.0
      %v1993 = vsel %vm603, %v1912, 0.0
      %v2024 = vrot.slane %v1962, 1
      %v2025 = vrot.slane %v1868, 1
      %v2026 = vsel %vm770, %v2024, %v2025
      %v2027 = vrot.slane %v1978, 1
      %v2028 = vsel %vm770, %v2025, %v2027
      %v2029 = vrot.slane %v1963, 1
      %v2030 = vrot.slane %v1871, 1
      %v2031 = vsel %vm770, %v2029, %v2030
      %v2032 = vrot.slane %v1979, 1
      %v2033 = vsel %vm770, %v2030, %v2032
      %v2034 = vrot.slane %v1964, 1
      %v2035 = vrot.slane %v1874, 1
      %v2036 = vsel %vm770, %v2034, %v2035
      %v2037 = vrot.slane %v1980, 1
      %v2038 = vsel %vm770, %v2035, %v2037
      %v2039 = vrot.slane %v1965, 1
      %v2040 = vrot.slane %v1877, 1
      %v2041 = vsel %vm770, %v2039, %v2040
      %v2042 = vrot.slane %v1981, 1
      %v2043 = vsel %vm770, %v2040, %v2042
      %v2044 = vrot.slane %v1966, 1
      %v2045 = vrot.slane %v1880, 1
      %v2046 = vsel %vm770, %v2044, %v2045
      %v2047 = vrot.slane %v1982, 1
      %v2048 = vsel %vm770, %v2045, %v2047
      %v2049 = vrot.slane %v1967, 1
      %v2050 = vrot.slane %v1883, 1
      %v2051 = vsel %vm770, %v2049, %v2050
      %v2052 = vrot.slane %v1983, 1
      %v2053 = vsel %vm770, %v2050, %v2052
      %v2054 = vrot.slane %v1968, 1
      %v2055 = vrot.slane %v1886, 1
      %v2056 = vsel %vm770, %v2054, %v2055
      %v2057 = vrot.slane %v1984, 1
      %v2058 = vsel %vm770, %v2055, %v2057
      %v2059 = vrot.slane %v1969, 1
      %v2060 = vrot.slane %v1889, 1
      %v2061 = vsel %vm770, %v2059, %v2060
      %v2062 = vrot.slane %v1985, 1
      %v2063 = vsel %vm770, %v2060, %v2062
      %v2064 = vrot.slane %v1970, 1
      %v2065 = vrot.slane %v1892, 1
      %v2066 = vsel %vm770, %v2064, %v2065
      %v2067 = vrot.slane %v1986, 1
      %v2068 = vsel %vm770, %v2065, %v2067
      %v2069 = vrot.slane %v1971, 1
      %v2070 = vrot.slane %v1895, 1
      %v2071 = vsel %vm770, %v2069, %v2070
      %v2072 = vrot.slane %v1987, 1
      %v2073 = vsel %vm770, %v2070, %v2072
      %v2074 = vrot.slane %v1972, 1
      %v2075 = vrot.slane %v1898, 1
      %v2076 = vsel %vm770, %v2074, %v2075
      %v2077 = vrot.slane %v1988, 1
      %v2078 = vsel %vm770, %v2075, %v2077
      %v2079 = vrot.slane %v1973, 1
      %v2080 = vrot.slane %v1901, 1
      %v2081 = vsel %vm770, %v2079, %v2080
      %v2082 = vrot.slane %v1989, 1
      %v2083 = vsel %vm770, %v2080, %v2082
      %v2084 = vrot.slane %v1974, 1
      %v2085 = vrot.slane %v1904, 1
      %v2086 = vsel %vm770, %v2084, %v2085
      %v2087 = vrot.slane %v1990, 1
      %v2088 = vsel %vm770, %v2085, %v2087
      %v2089 = vrot.slane %v1975, 1
      %v2090 = vrot.slane %v1907, 1
      %v2091 = vsel %vm770, %v2089, %v2090
      %v2092 = vrot.slane %v1991, 1
      %v2093 = vsel %vm770, %v2090, %v2092
      %v2094 = vrot.slane %v1976, 1
      %v2095 = vrot.slane %v1910, 1
      %v2096 = vsel %vm770, %v2094, %v2095
      %v2097 = vrot.slane %v1992, 1
      %v2098 = vsel %vm770, %v2095, %v2097
      %2099 = vrot.lane.b32.xlu0 %v2026, 4
      %v2100 = vpop.permute.xlu0 %2099
      %2101 = vrot.lane.b32.xlu0 %v2028, 4
      %v2102 = vpop.permute.xlu0 %2101
      %2103 = vrot.lane.b32.xlu0 %v2031, 4
      %v2104 = vpop.permute.xlu0 %2103
      %2105 = vrot.lane.b32.xlu0 %v2033, 4
      %v2106 = vpop.permute.xlu0 %2105
      %2107 = vrot.lane.b32.xlu0 %v2036, 4
      %v2108 = vpop.permute.xlu0 %2107
      %2109 = vrot.lane.b32.xlu0 %v2038, 4
      %v2110 = vpop.permute.xlu0 %2109
      %2111 = vrot.lane.b32.xlu0 %v2041, 4
      %v2112 = vpop.permute.xlu0 %2111
      %2113 = vrot.lane.b32.xlu0 %v2043, 4
      %v2114 = vpop.permute.xlu0 %2113
      %2115 = vrot.lane.b32.xlu0 %v2046, 4
      %v2116 = vpop.permute.xlu0 %2115
      %2117 = vrot.lane.b32.xlu0 %v2048, 4
      %v2118 = vpop.permute.xlu0 %2117
      %2119 = vrot.lane.b32.xlu0 %v2051, 4
      %v2120 = vpop.permute.xlu0 %2119
      %2121 = vrot.lane.b32.xlu0 %v2053, 4
      %v2122 = vpop.permute.xlu0 %2121
      %2123 = vrot.lane.b32.xlu0 %v2056, 4
      %v2124 = vpop.permute.xlu0 %2123
      %2125 = vrot.lane.b32.xlu0 %v2058, 4
      %v2126 = vpop.permute.xlu0 %2125
      %2127 = vrot.lane.b32.xlu0 %v2061, 4
      %v2128 = vpop.permute.xlu0 %2127
      %2129 = vrot.lane.b32.xlu0 %v2063, 4
      %v2130 = vpop.permute.xlu0 %2129
      %2131 = vrot.lane.b32.xlu0 %v2066, 4
      %v2132 = vpop.permute.xlu0 %2131
      %2133 = vrot.lane.b32.xlu0 %v2068, 4
      %v2134 = vpop.permute.xlu0 %2133
      %2135 = vrot.lane.b32.xlu0 %v2071, 4
      %v2136 = vpop.permute.xlu0 %2135
      %2137 = vrot.lane.b32.xlu0 %v2073, 4
      %v2138 = vpop.permute.xlu0 %2137
      %2139 = vrot.lane.b32.xlu0 %v2076, 4
      %v2140 = vpop.permute.xlu0 %2139
      %2141 = vrot.lane.b32.xlu0 %v2078, 4
      %v2142 = vpop.permute.xlu0 %2141
      %2143 = vrot.lane.b32.xlu0 %v2081, 4
      %v2144 = vpop.permute.xlu0 %2143
      %2145 = vrot.lane.b32.xlu0 %v2083, 4
      %v2146 = vpop.permute.xlu0 %2145
      %2147 = vrot.lane.b32.xlu0 %v2086, 4
      %v2148 = vpop.permute.xlu0 %2147
      %2149 = vrot.lane.b32.xlu0 %v2088, 4
      %v2150 = vpop.permute.xlu0 %2149
      %2151 = vrot.lane.b32.xlu0 %v2091, 4
      %v2152 = vpop.permute.xlu0 %2151
      %2153 = vrot.lane.b32.xlu0 %v2093, 4
      %v2154 = vpop.permute.xlu0 %2153
      %2155 = vrot.lane.b32.xlu0 %v2096, 4
      %v2156 = vpop.permute.xlu0 %2155
      %2157 = vrot.lane.b32.xlu0 %v2098, 4
      %v2158 = vpop.permute.xlu0 %2157
      %v2189 = vrot.slane %v1962, 2
      %v2190 = vrot.slane %v1868, 2
      %v2191 = vsel %vm947, %v2189, %v2190
      %v2192 = vrot.slane %v1978, 2
      %v2193 = vsel %vm947, %v2190, %v2192
      %v2194 = vrot.slane %v1963, 2
      %v2195 = vrot.slane %v1871, 2
      %v2196 = vsel %vm947, %v2194, %v2195
      %v2197 = vrot.slane %v1979, 2
      %v2198 = vsel %vm947, %v2195, %v2197
      %v2199 = vrot.slane %v1964, 2
      %v2200 = vrot.slane %v1874, 2
      %v2201 = vsel %vm947, %v2199, %v2200
      %v2202 = vrot.slane %v1980, 2
      %v2203 = vsel %vm947, %v2200, %v2202
      %v2204 = vrot.slane %v1965, 2
      %v2205 = vrot.slane %v1877, 2
      %v2206 = vsel %vm947, %v2204, %v2205
      %v2207 = vrot.slane %v1981, 2
      %v2208 = vsel %vm947, %v2205, %v2207
      %v2209 = vrot.slane %v1966, 2
      %v2210 = vrot.slane %v1880, 2
      %v2211 = vsel %vm947, %v2209, %v2210
      %v2212 = vrot.slane %v1982, 2
      %v2213 = vsel %vm947, %v2210, %v2212
      %v2214 = vrot.slane %v1967, 2
      %v2215 = vrot.slane %v1883, 2
      %v2216 = vsel %vm947, %v2214, %v2215
      %v2217 = vrot.slane %v1983, 2
      %v2218 = vsel %vm947, %v2215, %v2217
      %v2219 = vrot.slane %v1968, 2
      %v2220 = vrot.slane %v1886, 2
      %v2221 = vsel %vm947, %v2219, %v2220
      %v2222 = vrot.slane %v1984, 2
      %v2223 = vsel %vm947, %v2220, %v2222
      %v2224 = vrot.slane %v1969, 2
      %v2225 = vrot.slane %v1889, 2
      %v2226 = vsel %vm947, %v2224, %v2225
      %v2227 = vrot.slane %v1985, 2
      %v2228 = vsel %vm947, %v2225, %v2227
      %v2229 = vrot.slane %v1970, 2
      %v2230 = vrot.slane %v1892, 2
      %v2231 = vsel %vm947, %v2229, %v2230
      %v2232 = vrot.slane %v1986, 2
      %v2233 = vsel %vm947, %v2230, %v2232
      %v2234 = vrot.slane %v1971, 2
      %v2235 = vrot.slane %v1895, 2
      %v2236 = vsel %vm947, %v2234, %v2235
      %v2237 = vrot.slane %v1987, 2
      %v2238 = vsel %vm947, %v2235, %v2237
      %v2239 = vrot.slane %v1972, 2
      %v2240 = vrot.slane %v1898, 2
      %v2241 = vsel %vm947, %v2239, %v2240
      %v2242 = vrot.slane %v1988, 2
      %v2243 = vsel %vm947, %v2240, %v2242
      %v2244 = vrot.slane %v1973, 2
      %v2245 = vrot.slane %v1901, 2
      %v2246 = vsel %vm947, %v2244, %v2245
      %v2247 = vrot.slane %v1989, 2
      %v2248 = vsel %vm947, %v2245, %v2247
      %v2249 = vrot.slane %v1974, 2
      %v2250 = vrot.slane %v1904, 2
      %v2251 = vsel %vm947, %v2249, %v2250
      %v2252 = vrot.slane %v1990, 2
      %v2253 = vsel %vm947, %v2250, %v2252
      %v2254 = vrot.slane %v1975, 2
      %v2255 = vrot.slane %v1907, 2
      %v2256 = vsel %vm947, %v2254, %v2255
      %v2257 = vrot.slane %v1991, 2
      %v2258 = vsel %vm947, %v2255, %v2257
      %v2259 = vrot.slane %v1976, 2
      %v2260 = vrot.slane %v1910, 2
      %v2261 = vsel %vm947, %v2259, %v2260
      %v2262 = vrot.slane %v1992, 2
      %v2263 = vsel %vm947, %v2260, %v2262
      %2264 = vrot.lane.b32.xlu0 %v2191, 8
      %v2265 = vpop.permute.xlu0 %2264
      %2266 = vrot.lane.b32.xlu0 %v2193, 8
      %v2267 = vpop.permute.xlu0 %2266
      %2268 = vrot.lane.b32.xlu0 %v2196, 8
      %v2269 = vpop.permute.xlu0 %2268
      %2270 = vrot.lane.b32.xlu0 %v2198, 8
      %v2271 = vpop.permute.xlu0 %2270
      %2272 = vrot.lane.b32.xlu0 %v2201, 8
      %v2273 = vpop.permute.xlu0 %2272
      %2274 = vrot.lane.b32.xlu0 %v2203, 8
      %v2275 = vpop.permute.xlu0 %2274
      %2276 = vrot.lane.b32.xlu0 %v2206, 8
      %v2277 = vpop.permute.xlu0 %2276
      %2278 = vrot.lane.b32.xlu0 %v2208, 8
      %v2279 = vpop.permute.xlu0 %2278
      %2280 = vrot.lane.b32.xlu0 %v2211, 8
      %v2281 = vpop.permute.xlu0 %2280
      %2282 = vrot.lane.b32.xlu0 %v2213, 8
      %v2283 = vpop.permute.xlu0 %2282
      %2284 = vrot.lane.b32.xlu0 %v2216, 8
      %v2285 = vpop.permute.xlu0 %2284
      %2286 = vrot.lane.b32.xlu0 %v2218, 8
      %v2287 = vpop.permute.xlu0 %2286
      %2288 = vrot.lane.b32.xlu0 %v2221, 8
      %v2289 = vpop.permute.xlu0 %2288
      %2290 = vrot.lane.b32.xlu0 %v2223, 8
      %v2291 = vpop.permute.xlu0 %2290
      %2292 = vrot.lane.b32.xlu0 %v2226, 8
      %v2293 = vpop.permute.xlu0 %2292
      %2294 = vrot.lane.b32.xlu0 %v2228, 8
      %v2295 = vpop.permute.xlu0 %2294
      %2296 = vrot.lane.b32.xlu0 %v2231, 8
      %v2297 = vpop.permute.xlu0 %2296
      %2298 = vrot.lane.b32.xlu0 %v2233, 8
      %v2299 = vpop.permute.xlu0 %2298
      %2300 = vrot.lane.b32.xlu0 %v2236, 8
      %v2301 = vpop.permute.xlu0 %2300
      %2302 = vrot.lane.b32.xlu0 %v2238, 8
      %v2303 = vpop.permute.xlu0 %2302
      %2304 = vrot.lane.b32.xlu0 %v2241, 8
      %v2305 = vpop.permute.xlu0 %2304
      %2306 = vrot.lane.b32.xlu0 %v2243, 8
      %v2307 = vpop.permute.xlu0 %2306
      %2308 = vrot.lane.b32.xlu0 %v2246, 8
      %v2309 = vpop.permute.xlu0 %2308
      %2310 = vrot.lane.b32.xlu0 %v2248, 8
      %v2311 = vpop.permute.xlu0 %2310
      %2312 = vrot.lane.b32.xlu0 %v2251, 8
      %v2313 = vpop.permute.xlu0 %2312
      %2314 = vrot.lane.b32.xlu0 %v2253, 8
      %v2315 = vpop.permute.xlu0 %2314
      %2316 = vrot.lane.b32.xlu0 %v2256, 8
      %v2317 = vpop.permute.xlu0 %2316
      %2318 = vrot.lane.b32.xlu0 %v2258, 8
      %v2319 = vpop.permute.xlu0 %2318
      %2320 = vrot.lane.b32.xlu0 %v2261, 8
      %v2321 = vpop.permute.xlu0 %2320
      %2322 = vrot.lane.b32.xlu0 %v2263, 8
      %v2323 = vpop.permute.xlu0 %2322
      %v2354 = vsel %vm1124, %v1962, %v2100
      %v2355 = vsel %vm1124, %v1868, %v2102
      %v2356 = vsel %vm1124, %v1963, %v2104
      %v2357 = vsel %vm1124, %v1871, %v2106
      %v2358 = vsel %vm1124, %v1964, %v2108
      %v2359 = vsel %vm1124, %v1874, %v2110
      %v2360 = vsel %vm1124, %v1965, %v2112
      %v2361 = vsel %vm1124, %v1877, %v2114
      %v2362 = vsel %vm1124, %v1966, %v2116
      %v2363 = vsel %vm1124, %v1880, %v2118
      %v2364 = vsel %vm1124, %v1967, %v2120
      %v2365 = vsel %vm1124, %v1883, %v2122
      %v2366 = vsel %vm1124, %v1968, %v2124
      %v2367 = vsel %vm1124, %v1886, %v2126
      %v2368 = vsel %vm1124, %v1969, %v2128
      %v2369 = vsel %vm1124, %v1889, %v2130
      %v2370 = vsel %vm1124, %v1970, %v2132
      %v2371 = vsel %vm1124, %v1892, %v2134
      %v2372 = vsel %vm1124, %v1971, %v2136
      %v2373 = vsel %vm1124, %v1895, %v2138
      %v2374 = vsel %vm1124, %v1972, %v2140
      %v2375 = vsel %vm1124, %v1898, %v2142
      %v2376 = vsel %vm1124, %v1973, %v2144
      %v2377 = vsel %vm1124, %v1901, %v2146
      %v2378 = vsel %vm1124, %v1974, %v2148
      %v2379 = vsel %vm1124, %v1904, %v2150
      %v2380 = vsel %vm1124, %v1975, %v2152
      %v2381 = vsel %vm1124, %v1907, %v2154
      %v2382 = vsel %vm1124, %v1976, %v2156
      %v2383 = vsel %vm1124, %v1910, %v2158
      %v2384 = vsel %vm1157, %v2354, %v2265
      %v2385 = vsel %vm1157, %v2355, %v2267
      %v2386 = vsel %vm1157, %v2356, %v2269
      %v2387 = vsel %vm1157, %v2357, %v2271
      %v2388 = vsel %vm1157, %v2358, %v2273
      %v2389 = vsel %vm1157, %v2359, %v2275
      %v2390 = vsel %vm1157, %v2360, %v2277
      %v2391 = vsel %vm1157, %v2361, %v2279
      %v2392 = vsel %vm1157, %v2362, %v2281
      %v2393 = vsel %vm1157, %v2363, %v2283
      %v2394 = vsel %vm1157, %v2364, %v2285
      %v2395 = vsel %vm1157, %v2365, %v2287
      %v2396 = vsel %vm1157, %v2366, %v2289
      %v2397 = vsel %vm1157, %v2367, %v2291
      %v2398 = vsel %vm1157, %v2368, %v2293
      %v2399 = vsel %vm1157, %v2369, %v2295
      %v2400 = vsel %vm1157, %v2370, %v2297
      %v2401 = vsel %vm1157, %v2371, %v2299
      %v2402 = vsel %vm1157, %v2372, %v2301
      %v2403 = vsel %vm1157, %v2373, %v2303
      %v2404 = vsel %vm1157, %v2374, %v2305
      %v2405 = vsel %vm1157, %v2375, %v2307
      %v2406 = vsel %vm1157, %v2376, %v2309
      %v2407 = vsel %vm1157, %v2377, %v2311
      %v2408 = vsel %vm1157, %v2378, %v2313
      %v2409 = vsel %vm1157, %v2379, %v2315
      %v2410 = vsel %vm1157, %v2380, %v2317
      %v2411 = vsel %vm1157, %v2381, %v2319
      %v2412 = vsel %vm1157, %v2382, %v2321
      %v2413 = vsel %vm1157, %v2383, %v2323
      %v2414 = vpack.c.bf16 %v2385, %v2384
      %v2415 = vpack.c.bf16 %v2387, %v2386
      %v2416 = vpack.c.bf16 %v2389, %v2388
      %v2417 = vpack.c.bf16 %v2391, %v2390
      %v2418 = vpack.c.bf16 %v2393, %v2392
      %v2419 = vpack.c.bf16 %v2395, %v2394
      %v2420 = vpack.c.bf16 %v2397, %v2396
      %v2421 = vpack.c.bf16 %v2399, %v2398
      %v2422 = vpack.c.bf16 %v2401, %v2400
      %v2423 = vpack.c.bf16 %v2403, %v2402
      %v2424 = vpack.c.bf16 %v2405, %v2404
      %v2425 = vpack.c.bf16 %v2407, %v2406
      %v2426 = vpack.c.bf16 %v2409, %v2408
      %v2427 = vpack.c.bf16 %v2411, %v2410
      %v2428 = vpack.c.bf16 %v2413, %v2412
      %v2429 = vld [vmem:[%s7] sm:$0xf]
      %v2430 = vld [vmem:[%s7 + $0x4] sm:$0x3]
      %v2433 = vrot.slane %v1977, 1
      %v2434 = vrot.slane %v1913, 1
      %v2435 = vsel %vm770, %v2433, %v2434
      %v2436 = vrot.slane %v1993, 1
      %v2437 = vsel %vm770, %v2434, %v2436
      %2438 = vrot.lane.b32.xlu0 %v2435, 4
      %v2439 = vpop.permute.xlu0 %2438
      %2440 = vrot.lane.b32.xlu0 %v2437, 4
      %v2441 = vpop.permute.xlu0 %2440
      %v2444 = vrot.slane %v1977, 2
      %v2445 = vrot.slane %v1913, 2
      %v2446 = vsel %vm947, %v2444, %v2445
      %v2447 = vrot.slane %v1993, 2
      %v2448 = vsel %vm947, %v2445, %v2447
      %2449 = vrot.lane.b32.xlu0 %v2446, 8
      %v2450 = vpop.permute.xlu0 %2449
      %2451 = vrot.lane.b32.xlu0 %v2448, 8
      %v2452 = vpop.permute.xlu0 %2451
      %v2455 = vsel %vm1124, %v1977, %v2439
      %v2456 = vsel %vm1124, %v1913, %v2441
      %v2457 = vsel %vm1157, %v2455, %v2450
      %v2458 = vsel %vm1157, %v2456, %v2452
      %v2459 = vpack.c.bf16 %v2458, %v2457
      %s2460 = scalar_lea.vmem %s7, 8
      %v2461 = vld [vmem:[%s2460] sm:$0xf]
      %v2462 = vld [vmem:[%s2460 + $0x4] sm:$0x3]
      %v2465 = vunpack.c.l.b16 %v2461
      %v2466 = vunpack.c.l.b16 %v2462
      %v2467 = vpack.c.b16 %v2466, %v2465
      %v2469 = vsel %vm1245, %v2414, 0
      %v2472 = vsel %vm1245, %v2415, 0
      %v2475 = vsel %vm1245, %v2416, 0
      %v2478 = vsel %vm1245, %v2417, 0
      %v2481 = vsel %vm1245, %v2418, 0
      %v2484 = vsel %vm1245, %v2419, 0
      %v2487 = vsel %vm1245, %v2420, 0
      %v2490 = vsel %vm1245, %v2421, 0
      %v2493 = vsel %vm1245, %v2422, 0
      %v2496 = vsel %vm1245, %v2423, 0
      %v2499 = vsel %vm1245, %v2424, 0
      %v2502 = vsel %vm1245, %v2425, 0
      %v2505 = vsel %vm1245, %v2426, 0
      %v2508 = vsel %vm1245, %v2427, 0
      %v2511 = vsel %vm1245, %v2428, 0
      %v2514 = vsel %vm1245, %v2459, 0
      %v2517 = vsel %vm947, %v2467, 0
      %2519 = vmatprep.subr.bf16.mxu0 0
      %2520 = vmatpush1.bf16.msra.mxu0 %v2517
      %2521 = vmatprep.subr.bf16.mxu0 0
      %2522 = vmatpush1.bf16.msra.mxu0 0
      %2523 = vmatprep.subr.bf16.mxu0 0
      %2524 = vmatpush1.bf16.msra.mxu0 0
      %2525 = vmatprep.subr.bf16.mxu0 0
      %2526 = vmatpush1.bf16.msra.mxu0 0
      %2527 = vmatprep.subr.bf16.mxu0 0
      %2528 = vmatpush1.bf16.msra.mxu0 0
      %2529 = vmatprep.subr.bf16.mxu0 0
      %2530 = vmatpush1.bf16.msra.mxu0 0
      %2531 = vmatprep.subr.bf16.mxu0 0
      %2532 = vmatpush1.bf16.msra.mxu0 0
      %2533 = vmatprep.subr.bf16.mxu0 0
      %2534 = vmatpush1.bf16.msra.mxu0 0
      %2535 = vmatprep.subr.bf16.mxu0 0
      %2536 = vmatpush1.bf16.msra.mxu0 0
      %2537 = vmatprep.subr.bf16.mxu0 0
      %2538 = vmatpush1.bf16.msra.mxu0 0
      %2539 = vmatprep.subr.bf16.mxu0 0
      %2540 = vmatpush1.bf16.msra.mxu0 0
      %2541 = vmatprep.subr.bf16.mxu0 0
      %2542 = vmatpush1.bf16.msra.mxu0 0
      %2543 = vmatprep.subr.bf16.mxu0 0
      %2544 = vmatpush1.bf16.msra.mxu0 0
      %2545 = vmatprep.subr.bf16.mxu0 0
      %2546 = vmatpush1.bf16.msra.mxu0 0
      %2547 = vmatprep.subr.bf16.mxu0 0
      %2548 = vmatpush1.bf16.msra.mxu0 0
      %2549 = vmatprep.subr.bf16.mxu0 0
      %2550 = vmatpush1.bf16.msra.mxu0 0
      %2551 = vmatprep.mubr.bf16.mxu0 0
      %2552 = vmatmul.mubr.bf16.gmra.mrb[0].mxu0 %v2469
      %v2553 = vpop.f32.mrb[0].mxu0
      %v2554 = vadd.f32 0.0, %v2553
      %v2555 = vpop.f32.mrb[0].mxu0
      %v2556 = vpop.f32.mrb[0].mxu0
      %v2557 = vadd.f32 0.0, %v2556
      %v2558 = vpop.f32.mrb[0].mxu0
      %2559 = vmatprep.mubr.bf16.mxu0 0
      %2560 = vmatmul.mubr.bf16.gmra.mrb[0].mxu0 %v2472
      %v2561 = vpop.f32.mrb[0].mxu0
      %v2562 = vadd.f32 0.0, %v2561
      %v2563 = vpop.f32.mrb[0].mxu0
      %v2564 = vpop.f32.mrb[0].mxu0
      %v2565 = vadd.f32 0.0, %v2564
      %v2566 = vpop.f32.mrb[0].mxu0
      %2567 = vmatprep.mubr.bf16.mxu0 0
      %2568 = vmatmul.mubr.bf16.gmra.mrb[0].mxu0 %v2475
      %v2569 = vpop.f32.mrb[0].mxu0
      %v2570 = vadd.f32 0.0, %v2569
      %v2571 = vpop.f32.mrb[0].mxu0
      %v2572 = vpop.f32.mrb[0].mxu0
      %v2573 = vadd.f32 0.0, %v2572
      %v2574 = vpop.f32.mrb[0].mxu0
      %2575 = vmatprep.mubr.bf16.mxu0 0
      %2576 = vmatmul.mubr.bf16.gmra.mrb[0].mxu0 %v2478
      %v2577 = vpop.f32.mrb[0].mxu0
      %v2578 = vadd.f32 0.0, %v2577
      %v2579 = vpop.f32.mrb[0].mxu0
      %v2580 = vpop.f32.mrb[0].mxu0
      %v2581 = vadd.f32 0.0, %v2580
      %v2582 = vpop.f32.mrb[0].mxu0
      %2583 = vmatprep.mubr.bf16.mxu0 0
      %2584 = vmatmul.mubr.bf16.gmra.mrb[0].mxu0 %v2481
      %v2585 = vpop.f32.mrb[0].mxu0
      %v2586 = vadd.f32 0.0, %v2585
      %v2587 = vpop.f32.mrb[0].mxu0
      %v2588 = vpop.f32.mrb[0].mxu0
      %v2589 = vadd.f32 0.0, %v2588
      %v2590 = vpop.f32.mrb[0].mxu0
      %2591 = vmatprep.mubr.bf16.mxu0 0
      %2592 = vmatmul.mubr.bf16.gmra.mrb[0].mxu0 %v2484
      %v2593 = vpop.f32.mrb[0].mxu0
      %v2594 = vadd.f32 0.0, %v2593
      %v2595 = vpop.f32.mrb[0].mxu0
      %v2596 = vpop.f32.mrb[0].mxu0
      %v2597 = vadd.f32 0.0, %v2596
      %v2598 = vpop.f32.mrb[0].mxu0
      %2599 = vmatprep.mubr.bf16.mxu0 0
      %2600 = vmatmul.mubr.bf16.gmra.mrb[0].mxu0 %v2487
      %v2601 = vpop.f32.mrb[0].mxu0
      %v2602 = vadd.f32 0.0, %v2601
      %v2603 = vpop.f32.mrb[0].mxu0
      %v2604 = vpop.f32.mrb[0].mxu0
      %v2605 = vadd.f32 0.0, %v2604
      %v2606 = vpop.f32.mrb[0].mxu0
      %2607 = vmatprep.mubr.bf16.mxu0 0
      %2608 = vmatmul.mubr.bf16.gmra.mrb[0].mxu0 %v2490
      %v2609 = vpop.f32.mrb[0].mxu0
      %v2610 = vadd.f32 0.0, %v2609
      %v2611 = vpop.f32.mrb[0].mxu0
      %v2612 = vpop.f32.mrb[0].mxu0
      %v2613 = vadd.f32 0.0, %v2612
      %v2614 = vpop.f32.mrb[0].mxu0
      %2615 = vmatprep.mubr.bf16.mxu0 0
      %2616 = vmatmul.mubr.bf16.gmra.mrb[0].mxu0 %v2493
      %v2617 = vpop.f32.mrb[0].mxu0
      %v2618 = vadd.f32 0.0, %v2617
      %v2619 = vpop.f32.mrb[0].mxu0
      %v2620 = vpop.f32.mrb[0].mxu0
      %v2621 = vadd.f32 0.0, %v2620
      %v2622 = vpop.f32.mrb[0].mxu0
      %2623 = vmatprep.mubr.bf16.mxu0 0
      %2624 = vmatmul.mubr.bf16.gmra.mrb[0].mxu0 %v2496
      %v2625 = vpop.f32.mrb[0].mxu0
      %v2626 = vadd.f32 0.0, %v2625
      %v2627 = vpop.f32.mrb[0].mxu0
      %v2628 = vpop.f32.mrb[0].mxu0
      %v2629 = vadd.f32 0.0, %v2628
      %v2630 = vpop.f32.mrb[0].mxu0
      %2631 = vmatprep.mubr.bf16.mxu0 0
      %2632 = vmatmul.mubr.bf16.gmra.mrb[0].mxu0 %v2499
      %v2633 = vpop.f32.mrb[0].mxu0
      %v2634 = vadd.f32 0.0, %v2633
      %v2635 = vpop.f32.mrb[0].mxu0
      %v2636 = vpop.f32.mrb[0].mxu0
      %v2637 = vadd.f32 0.0, %v2636
      %v2638 = vpop.f32.mrb[0].mxu0
      %2639 = vmatprep.mubr.bf16.mxu0 0
      %2640 = vmatmul.mubr.bf16.gmra.mrb[0].mxu0 %v2502
      %v2641 = vpop.f32.mrb[0].mxu0
      %v2642 = vadd.f32 0.0, %v2641
      %v2643 = vpop.f32.mrb[0].mxu0
      %v2644 = vpop.f32.mrb[0].mxu0
      %v2645 = vadd.f32 0.0, %v2644
      %v2646 = vpop.f32.mrb[0].mxu0
      %2647 = vmatprep.mubr.bf16.mxu0 0
      %2648 = vmatmul.mubr.bf16.gmra.mrb[0].mxu0 %v2505
      %v2649 = vpop.f32.mrb[0].mxu0
      %v2650 = vadd.f32 0.0, %v2649
      %v2651 = vpop.f32.mrb[0].mxu0
      %v2652 = vpop.f32.mrb[0].mxu0
      %v2653 = vadd.f32 0.0, %v2652
      %v2654 = vpop.f32.mrb[0].mxu0
      %2655 = vmatprep.mubr.bf16.mxu0 0
      %2656 = vmatmul.mubr.bf16.gmra.mrb[0].mxu0 %v2508
      %v2657 = vpop.f32.mrb[0].mxu0
      %v2658 = vadd.f32 0.0, %v2657
      %v2659 = vpop.f32.mrb[0].mxu0
      %v2660 = vpop.f32.mrb[0].mxu0
      %v2661 = vadd.f32 0.0, %v2660
      %v2662 = vpop.f32.mrb[0].mxu0
      %2663 = vmatprep.mubr.bf16.mxu0 0
      %2664 = vmatmul.mubr.bf16.gmra.mrb[0].mxu0 %v2511
      %v2665 = vpop.f32.mrb[0].mxu0
      %v2666 = vadd.f32 0.0, %v2665
      %v2667 = vpop.f32.mrb[0].mxu0
      %v2668 = vpop.f32.mrb[0].mxu0
      %v2669 = vadd.f32 0.0, %v2668
      %v2670 = vpop.f32.mrb[0].mxu0
      %2671 = vmatprep.mubr.bf16.mxu0 0
      %2672 = vmatmul.mubr.bf16.gmra.mrb[0].mxu0 %v2514
      %v2673 = vpop.f32.mrb[0].mxu0
      %v2674 = vadd.f32 0.0, %v2673
      %v2675 = vpop.f32.mrb[0].mxu0
      %v2676 = vpop.f32.mrb[0].mxu0
      %v2677 = vadd.f32 0.0, %v2676
      %v2678 = vpop.f32.mrb[0].mxu0
      %2679 = vdwg.mxu0
      %v2682 = vunpack.c.l.b16 %v2429
      %v2683 = vunpack.c.l.b16 %v2430
      %v2684 = vpack.c.b16 %v2683, %v2682
      %v2686 = vsel %vm947, %v2684, 0
      %2688 = vmatprep.subr.bf16.mxu0 0
      %2689 = vmatpush1.bf16.msra.mxu0 %v2686
      %2690 = vmatprep.subr.bf16.mxu0 0
      %2691 = vmatpush1.bf16.msra.mxu0 0
      %2692 = vmatprep.subr.bf16.mxu0 0
      %2693 = vmatpush1.bf16.msra.mxu0 0
      %2694 = vmatprep.subr.bf16.mxu0 0
      %2695 = vmatpush1.bf16.msra.mxu0 0
      %2696 = vmatprep.subr.bf16.mxu0 0
      %2697 = vmatpush1.bf16.msra.mxu0 0
      %2698 = vmatprep.subr.bf16.mxu0 0
      %2699 = vmatpush1.bf16.msra.mxu0 0
      %2700 = vmatprep.subr.bf16.mxu0 0
      %2701 = vmatpush1.bf16.msra.mxu0 0
      %2702 = vmatprep.subr.bf16.mxu0 0
      %2703 = vmatpush1.bf16.msra.mxu0 0
      %2704 = vmatprep.subr.bf16.mxu0 0
      %2705 = vmatpush1.bf16.msra.mxu0 0
      %2706 = vmatprep.subr.bf16.mxu0 0
      %2707 = vmatpush1.bf16.msra.mxu0 0
      %2708 = vmatprep.subr.bf16.mxu0 0
      %2709 = vmatpush1.bf16.msra.mxu0 0
      %2710 = vmatprep.subr.bf16.mxu0 0
      %2711 = vmatpush1.bf16.msra.mxu0 0
      %2712 = vmatprep.subr.bf16.mxu0 0
      %2713 = vmatpush1.bf16.msra.mxu0 0
      %2714 = vmatprep.subr.bf16.mxu0 0
      %2715 = vmatpush1.bf16.msra.mxu0 0
      %2716 = vmatprep.subr.bf16.mxu0 0
      %2717 = vmatpush1.bf16.msra.mxu0 0
      %2718 = vmatprep.subr.bf16.mxu0 0
      %2719 = vmatpush1.bf16.msra.mxu0 0
      %2720 = vmatprep.mubr.bf16.mxu0 0
      %2721 = vmatmul.mubr.bf16.gmra.mrb[0].mxu0 %v1464
      %v2722 = vpop.f32.mrb[0].mxu0
      %v2723 = vadd.f32 %v2554, %v2722
      %v2724 = vpop.f32.mrb[0].mxu0
      %v2725 = vpop.f32.mrb[0].mxu0
      %v2726 = vadd.f32 %v2557, %v2725
      %v2727 = vpop.f32.mrb[0].mxu0
      %2728 = vmatprep.mubr.bf16.mxu0 0
      %2729 = vmatmul.mubr.bf16.gmra.mrb[0].mxu0 %v2469
      %v2730 = vpop.f32.mrb[0].mxu0
      %v2731 = vadd.f32 %v2562, %v2730
      %v2732 = vpop.f32.mrb[0].mxu0
      %v2733 = vpop.f32.mrb[0].mxu0
      %v2734 = vadd.f32 %v2565, %v2733
      %v2735 = vpop.f32.mrb[0].mxu0
      %2736 = vmatprep.mubr.bf16.mxu0 0
      %2737 = vmatmul.mubr.bf16.gmra.mrb[0].mxu0 %v2472
      %v2738 = vpop.f32.mrb[0].mxu0
      %v2739 = vadd.f32 %v2570, %v2738
      %v2740 = vpop.f32.mrb[0].mxu0
      %v2741 = vpop.f32.mrb[0].mxu0
      %v2742 = vadd.f32 %v2573, %v2741
      %v2743 = vpop.f32.mrb[0].mxu0
      %2744 = vmatprep.mubr.bf16.mxu0 0
      %2745 = vmatmul.mubr.bf16.gmra.mrb[0].mxu0 %v2475
      %v2746 = vpop.f32.mrb[0].mxu0
      %v2747 = vadd.f32 %v2578, %v2746
      %v2748 = vpop.f32.mrb[0].mxu0
      %v2749 = vpop.f32.mrb[0].mxu0
      %v2750 = vadd.f32 %v2581, %v2749
      %v2751 = vpop.f32.mrb[0].mxu0
      %2752 = vmatprep.mubr.bf16.mxu0 0
      %2753 = vmatmul.mubr.bf16.gmra.mrb[0].mxu0 %v2478
      %v2754 = vpop.f32.mrb[0].mxu0
      %v2755 = vadd.f32 %v2586, %v2754
      %v2756 = vpop.f32.mrb[0].mxu0
      %v2757 = vpop.f32.mrb[0].mxu0
      %v2758 = vadd.f32 %v2589, %v2757
      %v2759 = vpop.f32.mrb[0].mxu0
      %2760 = vmatprep.mubr.bf16.mxu0 0
      %2761 = vmatmul.mubr.bf16.gmra.mrb[0].mxu0 %v2481
      %v2762 = vpop.f32.mrb[0].mxu0
      %v2763 = vadd.f32 %v2594, %v2762
      %v2764 = vpop.f32.mrb[0].mxu0
      %v2765 = vpop.f32.mrb[0].mxu0
      %v2766 = vadd.f32 %v2597, %v2765
      %v2767 = vpop.f32.mrb[0].mxu0
      %2768 = vmatprep.mubr.bf16.mxu0 0
      %2769 = vmatmul.mubr.bf16.gmra.mrb[0].mxu0 %v2484
      %v2770 = vpop.f32.mrb[0].mxu0
      %v2771 = vadd.f32 %v2602, %v2770
      %v2772 = vpop.f32.mrb[0].mxu0
      %v2773 = vpop.f32.mrb[0].mxu0
      %v2774 = vadd.f32 %v2605, %v2773
      %v2775 = vpop.f32.mrb[0].mxu0
      %2776 = vmatprep.mubr.bf16.mxu0 0
      %2777 = vmatmul.mubr.bf16.gmra.mrb[0].mxu0 %v2487
      %v2778 = vpop.f32.mrb[0].mxu0
      %v2779 = vadd.f32 %v2610, %v2778
      %v2780 = vpop.f32.mrb[0].mxu0
      %v2781 = vpop.f32.mrb[0].mxu0
      %v2782 = vadd.f32 %v2613, %v2781
      %v2783 = vpop.f32.mrb[0].mxu0
      %2784 = vmatprep.mubr.bf16.mxu0 0
      %2785 = vmatmul.mubr.bf16.gmra.mrb[0].mxu0 %v2490
      %v2786 = vpop.f32.mrb[0].mxu0
      %v2787 = vadd.f32 %v2618, %v2786
      %v2788 = vpop.f32.mrb[0].mxu0
      %v2789 = vpop.f32.mrb[0].mxu0
      %v2790 = vadd.f32 %v2621, %v2789
      %v2791 = vpop.f32.mrb[0].mxu0
      %2792 = vmatprep.mubr.bf16.mxu0 0
      %2793 = vmatmul.mubr.bf16.gmra.mrb[0].mxu0 %v2493
      %v2794 = vpop.f32.mrb[0].mxu0
      %v2795 = vadd.f32 %v2626, %v2794
      %v2796 = vpop.f32.mrb[0].mxu0
      %v2797 = vpop.f32.mrb[0].mxu0
      %v2798 = vadd.f32 %v2629, %v2797
      %v2799 = vpop.f32.mrb[0].mxu0
      %2800 = vmatprep.mubr.bf16.mxu0 0
      %2801 = vmatmul.mubr.bf16.gmra.mrb[0].mxu0 %v2496
      %v2802 = vpop.f32.mrb[0].mxu0
      %v2803 = vadd.f32 %v2634, %v2802
      %v2804 = vpop.f32.mrb[0].mxu0
      %v2805 = vpop.f32.mrb[0].mxu0
      %v2806 = vadd.f32 %v2637, %v2805
      %v2807 = vpop.f32.mrb[0].mxu0
      %2808 = vmatprep.mubr.bf16.mxu0 0
      %2809 = vmatmul.mubr.bf16.gmra.mrb[0].mxu0 %v2499
      %v2810 = vpop.f32.mrb[0].mxu0
      %v2811 = vadd.f32 %v2642, %v2810
      %v2812 = vpop.f32.mrb[0].mxu0
      %v2813 = vpop.f32.mrb[0].mxu0
      %v2814 = vadd.f32 %v2645, %v2813
      %v2815 = vpop.f32.mrb[0].mxu0
      %2816 = vmatprep.mubr.bf16.mxu0 0
      %2817 = vmatmul.mubr.bf16.gmra.mrb[0].mxu0 %v2502
      %v2818 = vpop.f32.mrb[0].mxu0
      %v2819 = vadd.f32 %v2650, %v2818
      %v2820 = vpop.f32.mrb[0].mxu0
      %v2821 = vpop.f32.mrb[0].mxu0
      %v2822 = vadd.f32 %v2653, %v2821
      %v2823 = vpop.f32.mrb[0].mxu0
      %2824 = vmatprep.mubr.bf16.mxu0 0
      %2825 = vmatmul.mubr.bf16.gmra.mrb[0].mxu0 %v2505
      %v2826 = vpop.f32.mrb[0].mxu0
      %v2827 = vadd.f32 %v2658, %v2826
      %v2828 = vpop.f32.mrb[0].mxu0
      %v2829 = vpop.f32.mrb[0].mxu0
      %v2830 = vadd.f32 %v2661, %v2829
      %v2831 = vpop.f32.mrb[0].mxu0
      %2832 = vmatprep.mubr.bf16.mxu0 0
      %2833 = vmatmul.mubr.bf16.gmra.mrb[0].mxu0 %v2508
      %v2834 = vpop.f32.mrb[0].mxu0
      %v2835 = vadd.f32 %v2666, %v2834
      %v2836 = vpop.f32.mrb[0].mxu0
      %v2837 = vpop.f32.mrb[0].mxu0
      %v2838 = vadd.f32 %v2669, %v2837
      %v2839 = vpop.f32.mrb[0].mxu0
      %2840 = vmatprep.mubr.bf16.mxu0 0
      %2841 = vmatmul.mubr.bf16.gmra.mrb[0].mxu0 %v2511
      %v2842 = vpop.f32.mrb[0].mxu0
      %v2843 = vadd.f32 %v2674, %v2842
      %v2844 = vpop.f32.mrb[0].mxu0
      %v2845 = vpop.f32.mrb[0].mxu0
      %v2846 = vadd.f32 %v2677, %v2845
      %v2847 = vpop.f32.mrb[0].mxu0
      %2848 = vdwg.mxu0
      %s2849 = scalar_lea.vmem %s7, 16
      %v2850 = vld [vmem:[%s2849] sm:$0xf]
      %v2851 = vld [vmem:[%s2849 + $0x4] sm:$0x3]
      %v2854 = vunpack.c.l.b16 %v2850
      %v2855 = vunpack.c.l.b16 %v2851
      %v2856 = vpack.c.b16 %v2855, %v2854
      %v2858 = vsel %vm947, %v2856, 0
      %2860 = vmatprep.subr.bf16.mxu0 0
      %2861 = vmatpush1.bf16.msra.mxu0 %v2858
      %2862 = vmatprep.subr.bf16.mxu0 0
      %2863 = vmatpush1.bf16.msra.mxu0 0
      %2864 = vmatprep.subr.bf16.mxu0 0
      %2865 = vmatpush1.bf16.msra.mxu0 0
      %2866 = vmatprep.subr.bf16.mxu0 0
      %2867 = vmatpush1.bf16.msra.mxu0 0
      %2868 = vmatprep.subr.bf16.mxu0 0
      %2869 = vmatpush1.bf16.msra.mxu0 0
      %2870 = vmatprep.subr.bf16.mxu0 0
      %2871 = vmatpush1.bf16.msra.mxu0 0
      %2872 = vmatprep.subr.bf16.mxu0 0
      %2873 = vmatpush1.bf16.msra.mxu0 0
      %2874 = vmatprep.subr.bf16.mxu0 0
      %2875 = vmatpush1.bf16.msra.mxu0 0
      %2876 = vmatprep.subr.bf16.mxu0 0
      %2877 = vmatpush1.bf16.msra.mxu0 0
      %2878 = vmatprep.subr.bf16.mxu0 0
      %2879 = vmatpush1.bf16.msra.mxu0 0
      %2880 = vmatprep.subr.bf16.mxu0 0
      %2881 = vmatpush1.bf16.msra.mxu0 0
      %2882 = vmatprep.subr.bf16.mxu0 0
      %2883 = vmatpush1.bf16.msra.mxu0 0
      %2884 = vmatprep.subr.bf16.mxu0 0
      %2885 = vmatpush1.bf16.msra.mxu0 0
      %2886 = vmatprep.subr.bf16.mxu0 0
      %2887 = vmatpush1.bf16.msra.mxu0 0
      %2888 = vmatprep.subr.bf16.mxu0 0
      %2889 = vmatpush1.bf16.msra.mxu0 0
      %2890 = vmatprep.subr.bf16.mxu0 0
      %2891 = vmatpush1.bf16.msra.mxu0 0
      %2892 = vmatprep.mubr.bf16.mxu0 0
      %2893 = vmatmul.mubr.bf16.gmra.mrb[0].mxu0 %v2472
      %v2894 = vpop.f32.mrb[0].mxu0
      %v2895 = vadd.f32 0.0, %v2894
      %v2896 = vpop.f32.mrb[0].mxu0
      %v2897 = vpop.f32.mrb[0].mxu0
      %v2898 = vadd.f32 0.0, %v2897
      %v2899 = vpop.f32.mrb[0].mxu0
      %2900 = vmatprep.mubr.bf16.mxu0 0
      %2901 = vmatmul.mubr.bf16.gmra.mrb[0].mxu0 %v2475
      %v2902 = vpop.f32.mrb[0].mxu0
      %v2903 = vadd.f32 0.0, %v2902
      %v2904 = vpop.f32.mrb[0].mxu0
      %v2905 = vpop.f32.mrb[0].mxu0
      %v2906 = vadd.f32 0.0, %v2905
      %v2907 = vpop.f32.mrb[0].mxu0
      %2908 = vmatprep.mubr.bf16.mxu0 0
      %2909 = vmatmul.mubr.bf16.gmra.mrb[0].mxu0 %v2478
      %v2910 = vpop.f32.mrb[0].mxu0
      %v2911 = vadd.f32 0.0, %v2910
      %v2912 = vpop.f32.mrb[0].mxu0
      %v2913 = vpop.f32.mrb[0].mxu0
      %v2914 = vadd.f32 0.0, %v2913
      %v2915 = vpop.f32.mrb[0].mxu0
      %2916 = vmatprep.mubr.bf16.mxu0 0
      %2917 = vmatmul.mubr.bf16.gmra.mrb[0].mxu0 %v2481
      %v2918 = vpop.f32.mrb[0].mxu0
      %v2919 = vadd.f32 0.0, %v2918
      %v2920 = vpop.f32.mrb[0].mxu0
      %v2921 = vpop.f32.mrb[0].mxu0
      %v2922 = vadd.f32 0.0, %v2921
      %v2923 = vpop.f32.mrb[0].mxu0
      %2924 = vmatprep.mubr.bf16.mxu0 0
      %2925 = vmatmul.mubr.bf16.gmra.mrb[0].mxu0 %v2484
      %v2926 = vpop.f32.mrb[0].mxu0
      %v2927 = vadd.f32 0.0, %v2926
      %v2928 = vpop.f32.mrb[0].mxu0
      %v2929 = vpop.f32.mrb[0].mxu0
      %v2930 = vadd.f32 0.0, %v2929
      %v2931 = vpop.f32.mrb[0].mxu0
      %2932 = vmatprep.mubr.bf16.mxu0 0
      %2933 = vmatmul.mubr.bf16.gmra.mrb[0].mxu0 %v2487
      %v2934 = vpop.f32.mrb[0].mxu0
      %v2935 = vadd.f32 0.0, %v2934
      %v2936 = vpop.f32.mrb[0].mxu0
      %v2937 = vpop.f32.mrb[0].mxu0
      %v2938 = vadd.f32 0.0, %v2937
      %v2939 = vpop.f32.mrb[0].mxu0
      %2940 = vmatprep.mubr.bf16.mxu0 0
      %2941 = vmatmul.mubr.bf16.gmra.mrb[0].mxu0 %v2490
      %v2942 = vpop.f32.mrb[0].mxu0
      %v2943 = vadd.f32 0.0, %v2942
      %v2944 = vpop.f32.mrb[0].mxu0
      %v2945 = vpop.f32.mrb[0].mxu0
      %v2946 = vadd.f32 0.0, %v2945
      %v2947 = vpop.f32.mrb[0].mxu0
      %2948 = vmatprep.mubr.bf16.mxu0 0
      %2949 = vmatmul.mubr.bf16.gmra.mrb[0].mxu0 %v2493
      %v2950 = vpop.f32.mrb[0].mxu0
      %v2951 = vadd.f32 0.0, %v2950
      %v2952 = vpop.f32.mrb[0].mxu0
      %v2953 = vpop.f32.mrb[0].mxu0
      %v2954 = vadd.f32 0.0, %v2953
      %v2955 = vpop.f32.mrb[0].mxu0
      %2956 = vmatprep.mubr.bf16.mxu0 0
      %2957 = vmatmul.mubr.bf16.gmra.mrb[0].mxu0 %v2496
      %v2958 = vpop.f32.mrb[0].mxu0
      %v2959 = vadd.f32 0.0, %v2958
      %v2960 = vpop.f32.mrb[0].mxu0
      %v2961 = vpop.f32.mrb[0].mxu0
      %v2962 = vadd.f32 0.0, %v2961
      %v2963 = vpop.f32.mrb[0].mxu0
      %2964 = vmatprep.mubr.bf16.mxu0 0
      %2965 = vmatmul.mubr.bf16.gmra.mrb[0].mxu0 %v2499
      %v2966 = vpop.f32.mrb[0].mxu0
      %v2967 = vadd.f32 0.0, %v2966
      %v2968 = vpop.f32.mrb[0].mxu0
      %v2969 = vpop.f32.mrb[0].mxu0
      %v2970 = vadd.f32 0.0, %v2969
      %v2971 = vpop.f32.mrb[0].mxu0
      %2972 = vmatprep.mubr.bf16.mxu0 0
      %2973 = vmatmul.mubr.bf16.gmra.mrb[0].mxu0 %v2502
      %v2974 = vpop.f32.mrb[0].mxu0
      %v2975 = vadd.f32 0.0, %v2974
      %v2976 = vpop.f32.mrb[0].mxu0
      %v2977 = vpop.f32.mrb[0].mxu0
      %v2978 = vadd.f32 0.0, %v2977
      %v2979 = vpop.f32.mrb[0].mxu0
      %2980 = vmatprep.mubr.bf16.mxu0 0
      %2981 = vmatmul.mubr.bf16.gmra.mrb[0].mxu0 %v2505
      %v2982 = vpop.f32.mrb[0].mxu0
      %v2983 = vadd.f32 0.0, %v2982
      %v2984 = vpop.f32.mrb[0].mxu0
      %v2985 = vpop.f32.mrb[0].mxu0
      %v2986 = vadd.f32 0.0, %v2985
      %v2987 = vpop.f32.mrb[0].mxu0
      %2988 = vmatprep.mubr.bf16.mxu0 0
      %2989 = vmatmul.mubr.bf16.gmra.mrb[0].mxu0 %v2508
      %v2990 = vpop.f32.mrb[0].mxu0
      %v2991 = vadd.f32 0.0, %v2990
      %v2992 = vpop.f32.mrb[0].mxu0
      %v2993 = vpop.f32.mrb[0].mxu0
      %v2994 = vadd.f32 0.0, %v2993
      %v2995 = vpop.f32.mrb[0].mxu0
      %2996 = vmatprep.mubr.bf16.mxu0 0
      %2997 = vmatmul.mubr.bf16.gmra.mrb[0].mxu0 %v2511
      %v2998 = vpop.f32.mrb[0].mxu0
      %v2999 = vadd.f32 0.0, %v2998
      %v3000 = vpop.f32.mrb[0].mxu0
      %v3001 = vpop.f32.mrb[0].mxu0
      %v3002 = vadd.f32 0.0, %v3001
      %v3003 = vpop.f32.mrb[0].mxu0
      %3004 = vmatprep.mubr.bf16.mxu0 0
      %3005 = vmatmul.mubr.bf16.gmra.mrb[0].mxu0 %v2514
      %v3006 = vpop.f32.mrb[0].mxu0
      %v3007 = vadd.f32 0.0, %v3006
      %v3008 = vpop.f32.mrb[0].mxu0
      %v3009 = vpop.f32.mrb[0].mxu0
      %v3010 = vadd.f32 0.0, %v3009
      %v3011 = vpop.f32.mrb[0].mxu0
      %3012 = vmatprep.mubr.bf16.mxu0 0
      %3013 = vmatmul.mubr.bf16.gmra.mrb[0].mxu0 %v1464
      %v3014 = vpop.f32.mrb[0].mxu0
      %v3015 = vadd.f32 0.0, %v3014
      %v3016 = vpop.f32.mrb[0].mxu0
      %v3017 = vpop.f32.mrb[0].mxu0
      %v3018 = vadd.f32 0.0, %v3017
      %v3019 = vpop.f32.mrb[0].mxu0
      %3020 = vdwg.mxu0
      %v3021 = vadd.f32 %v2723, %v2895
      %v3022 = vadd.f32 %v2726, %v2898
      %v3023 = vadd.f32 %v2731, %v2903
      %v3024 = vadd.f32 %v2734, %v2906
      %v3025 = vadd.f32 %v2739, %v2911
      %v3026 = vadd.f32 %v2742, %v2914
      %v3027 = vadd.f32 %v2747, %v2919
      %v3028 = vadd.f32 %v2750, %v2922
      %v3029 = vadd.f32 %v2755, %v2927
      %v3030 = vadd.f32 %v2758, %v2930
      %v3031 = vadd.f32 %v2763, %v2935
      %v3032 = vadd.f32 %v2766, %v2938
      %v3033 = vadd.f32 %v2771, %v2943
      %v3034 = vadd.f32 %v2774, %v2946
      %v3035 = vadd.f32 %v2779, %v2951
      %v3036 = vadd.f32 %v2782, %v2954
      %v3037 = vadd.f32 %v2787, %v2959
      %v3038 = vadd.f32 %v2790, %v2962
      %v3039 = vadd.f32 %v2795, %v2967
      %v3040 = vadd.f32 %v2798, %v2970
      %v3041 = vadd.f32 %v2803, %v2975
      %v3042 = vadd.f32 %v2806, %v2978
      %v3043 = vadd.f32 %v2811, %v2983
      %v3044 = vadd.f32 %v2814, %v2986
      %v3045 = vadd.f32 %v2819, %v2991
      %v3046 = vadd.f32 %v2822, %v2994
      %v3047 = vadd.f32 %v2827, %v2999
      %v3048 = vadd.f32 %v2830, %v3002
      %v3049 = vadd.f32 %v2835, %v3007
      %v3050 = vadd.f32 %v2838, %v3010
      %v3051 = vadd.f32 %v2843, %v3015
      %v3052 = vadd.f32 %v2846, %v3018
      %v3053 = vadd.f32 %v1802, %v3021
      %v3054 = vadd.f32 %v1803, %v3022
      %v3055 = vadd.f32 %v1804, %v3023
      %v3056 = vadd.f32 %v1805, %v3024
      %v3057 = vadd.f32 %v1806, %v3025
      %v3058 = vadd.f32 %v1807, %v3026
      %v3059 = vadd.f32 %v1808, %v3027
      %v3060 = vadd.f32 %v1809, %v3028
      %v3061 = vadd.f32 %v1810, %v3029
      %v3062 = vadd.f32 %v1811, %v3030
      %v3063 = vadd.f32 %v1812, %v3031
      %v3064 = vadd.f32 %v1813, %v3032
      %v3065 = vadd.f32 %v1814, %v3033
      %v3066 = vadd.f32 %v1815, %v3034
      %v3067 = vadd.f32 %v1816, %v3035
      %v3068 = vadd.f32 %v1817, %v3036
      %v3069 = vadd.f32 %v1818, %v3037
      %v3070 = vadd.f32 %v1819, %v3038
      %v3071 = vadd.f32 %v1820, %v3039
      %v3072 = vadd.f32 %v1821, %v3040
      %v3073 = vadd.f32 %v1822, %v3041
      %v3074 = vadd.f32 %v1823, %v3042
      %v3075 = vadd.f32 %v1824, %v3043
      %v3076 = vadd.f32 %v1825, %v3044
      %v3077 = vadd.f32 %v1826, %v3045
      %v3078 = vadd.f32 %v1827, %v3046
      %v3079 = vadd.f32 %v1828, %v3047
      %v3080 = vadd.f32 %v1829, %v3048
      %v3081 = vadd.f32 %v1830, %v3049
      %v3082 = vadd.f32 %v1831, %v3050
      %v3083 = vadd.f32 %v1832, %v3051
      %v3084 = vadd.f32 %v1833, %v3052
      %3085 = vst.msk [vmem:[%s374] sm:$0xff] %vm1124, %v3053
      %3086 = vst.msk [vmem:[%s374 + $0x8] sm:$0xff] %vm1124, %v3054
      %3087 = vst.msk [vmem:[%s374 + $0x10] sm:$0xff] %vm1124, %v3055
      %3088 = vst.msk [vmem:[%s374 + $0x18] sm:$0xff] %vm1124, %v3056
      %3089 = vst.msk [vmem:[%s374 + $0x20] sm:$0xff] %vm1124, %v3057
      %3090 = vst.msk [vmem:[%s374 + $0x28] sm:$0xff] %vm1124, %v3058
      %3091 = vst.msk [vmem:[%s374 + $0x30] sm:$0xff] %vm1124, %v3059
      %3092 = vst.msk [vmem:[%s374 + $0x38] sm:$0xff] %vm1124, %v3060
      %3093 = vst.msk [vmem:[%s374 + $0x40] sm:$0xff] %vm1124, %v3061
      %3094 = vst.msk [vmem:[%s374 + $0x48] sm:$0xff] %vm1124, %v3062
      %3095 = vst.msk [vmem:[%s374 + $0x50] sm:$0xff] %vm1124, %v3063
      %3096 = vst.msk [vmem:[%s374 + $0x58] sm:$0xff] %vm1124, %v3064
      %3097 = vst.msk [vmem:[%s374 + $0x60] sm:$0xff] %vm1124, %v3065
      %3098 = vst.msk [vmem:[%s374 + $0x68] sm:$0xff] %vm1124, %v3066
      %3099 = vst.msk [vmem:[%s374 + $0x70] sm:$0xff] %vm1124, %v3067
      %3100 = vst.msk [vmem:[%s374 + $0x78] sm:$0xff] %vm1124, %v3068
      %3101 = vst.msk [vmem:[%s374 + $0x80] sm:$0xff] %vm1124, %v3069
      %3102 = vst.msk [vmem:[%s374 + $0x88] sm:$0xff] %vm1124, %v3070
      %3103 = vst.msk [vmem:[%s374 + $0x90] sm:$0xff] %vm1124, %v3071
      %3104 = vst.msk [vmem:[%s374 + $0x98] sm:$0xff] %vm1124, %v3072
      %3105 = vst.msk [vmem:[%s374 + $0xa0] sm:$0xff] %vm1124, %v3073
      %3106 = vst.msk [vmem:[%s374 + $0xa8] sm:$0xff] %vm1124, %v3074
      %3107 = vst.msk [vmem:[%s374 + $0xb0] sm:$0xff] %vm1124, %v3075
      %3108 = vst.msk [vmem:[%s374 + $0xb8] sm:$0xff] %vm1124, %v3076
      %3109 = vst.msk [vmem:[%s374 + $0xc0] sm:$0xff] %vm1124, %v3077
      %3110 = vst.msk [vmem:[%s374 + $0xc8] sm:$0xff] %vm1124, %v3078
      %3111 = vst.msk [vmem:[%s374 + $0xd0] sm:$0xff] %vm1124, %v3079
      %3112 = vst.msk [vmem:[%s374 + $0xd8] sm:$0xff] %vm1124, %v3080
      %3113 = vst.msk [vmem:[%s374 + $0xe0] sm:$0xff] %vm1124, %v3081
      %3114 = vst.msk [vmem:[%s374 + $0xe8] sm:$0xff] %vm1124, %v3082
      %3115 = vst.msk [vmem:[%s374 + $0xf0] sm:$0xff] %vm1124, %v3083
      %3116 = vst.msk [vmem:[%s374 + $0xf8] sm:$0xff] %vm1124, %v3084
      %v3117 = vld [vmem:[%s9] sm:$0x1]
      %v3118 = vsel %vm1124, %v3053, 0.0
      %v3119 = vsel %vm1124, %v3054, 0.0
      %v3120 = vadd.f32 %v3118, %v3119
      %v3121 = vsel %vm1124, %v3055, 0.0
      %v3122 = vadd.f32 %v3120, %v3121
      %v3123 = vsel %vm1124, %v3056, 0.0
      %v3124 = vadd.f32 %v3122, %v3123
      %v3125 = vsel %vm1124, %v3057, 0.0
      %v3126 = vadd.f32 %v3124, %v3125
      %v3127 = vsel %vm1124, %v3058, 0.0
      %v3128 = vadd.f32 %v3126, %v3127
      %v3129 = vsel %vm1124, %v3059, 0.0
      %v3130 = vadd.f32 %v3128, %v3129
      %v3131 = vsel %vm1124, %v3060, 0.0
      %v3132 = vadd.f32 %v3130, %v3131
      %v3133 = vsel %vm1124, %v3061, 0.0
      %v3134 = vadd.f32 %v3132, %v3133
      %v3135 = vsel %vm1124, %v3062, 0.0
      %v3136 = vadd.f32 %v3134, %v3135
      %v3137 = vsel %vm1124, %v3063, 0.0
      %v3138 = vadd.f32 %v3136, %v3137
      %v3139 = vsel %vm1124, %v3064, 0.0
      %v3140 = vadd.f32 %v3138, %v3139
      %v3141 = vsel %vm1124, %v3065, 0.0
      %v3142 = vadd.f32 %v3140, %v3141
      %v3143 = vsel %vm1124, %v3066, 0.0
      %v3144 = vadd.f32 %v3142, %v3143
      %v3145 = vsel %vm1124, %v3067, 0.0
      %v3146 = vadd.f32 %v3144, %v3145
      %v3147 = vsel %vm1124, %v3068, 0.0
      %v3148 = vadd.f32 %v3146, %v3147
      %v3149 = vsel %vm1124, %v3069, 0.0
      %v3150 = vadd.f32 %v3148, %v3149
      %v3151 = vsel %vm1124, %v3070, 0.0
      %v3152 = vadd.f32 %v3150, %v3151
      %v3153 = vsel %vm1124, %v3071, 0.0
      %v3154 = vadd.f32 %v3152, %v3153
      %v3155 = vsel %vm1124, %v3072, 0.0
      %v3156 = vadd.f32 %v3154, %v3155
      %v3157 = vsel %vm1124, %v3073, 0.0
      %v3158 = vadd.f32 %v3156, %v3157
      %v3159 = vsel %vm1124, %v3074, 0.0
      %v3160 = vadd.f32 %v3158, %v3159
      %v3161 = vsel %vm1124, %v3075, 0.0
      %v3162 = vadd.f32 %v3160, %v3161
      %v3163 = vsel %vm1124, %v3076, 0.0
      %v3164 = vadd.f32 %v3162, %v3163
      %v3165 = vsel %vm1124, %v3077, 0.0
      %v3166 = vadd.f32 %v3164, %v3165
      %v3167 = vsel %vm1124, %v3078, 0.0
      %v3168 = vadd.f32 %v3166, %v3167
      %v3169 = vsel %vm1124, %v3079, 0.0
      %v3170 = vadd.f32 %v3168, %v3169
      %v3171 = vsel %vm1124, %v3080, 0.0
      %v3172 = vadd.f32 %v3170, %v3171
      %v3173 = vsel %vm1124, %v3081, 0.0
      %v3174 = vadd.f32 %v3172, %v3173
      %v3175 = vsel %vm1124, %v3082, 0.0
      %v3176 = vadd.f32 %v3174, %v3175
      %v3177 = vsel %vm1124, %v3083, 0.0
      %v3178 = vadd.f32 %v3176, %v3177
      %v3179 = vsel %vm1124, %v3084, 0.0
      %v3180 = vadd.f32 %v3178, %v3179
      %v3181 = vrot.slane %v3180, 4
      %v3182 = vadd.f32 %v3180, %v3181
      %v3183 = vrot.slane %v3182, 2
      %v3184 = vadd.f32 %v3182, %v3183
      %v3185 = vrot.slane %v3184, 1
      %v3186 = vadd.f32 %v3184, %v3185
      %v3187 = vadd.f32 %v3117, %v3186
      %vm3188 = vcmask 24576
      %3189 = vst.msk [vmem:[%s9] sm:$0x1] %vm3188, %v3187
      %v3190 = vld [vmem:[%s10] sm:$0x1]
      %v3191 = vmul.f32 %v3053, %v3053
      %v3192 = vmul.f32 %v3054, %v3054
      %v3193 = vmul.f32 %v3055, %v3055
      %v3194 = vmul.f32 %v3056, %v3056
      %v3195 = vmul.f32 %v3057, %v3057
      %v3196 = vmul.f32 %v3058, %v3058
      %v3197 = vmul.f32 %v3059, %v3059
      %v3198 = vmul.f32 %v3060, %v3060
      %v3199 = vmul.f32 %v3061, %v3061
      %v3200 = vmul.f32 %v3062, %v3062
      %v3201 = vmul.f32 %v3063, %v3063
      %v3202 = vmul.f32 %v3064, %v3064
      %v3203 = vmul.f32 %v3065, %v3065
      %v3204 = vmul.f32 %v3066, %v3066
      %v3205 = vmul.f32 %v3067, %v3067
      %v3206 = vmul.f32 %v3068, %v3068
      %v3207 = vmul.f32 %v3069, %v3069
      %v3208 = vmul.f32 %v3070, %v3070
      %v3209 = vmul.f32 %v3071, %v3071
      %v3210 = vmul.f32 %v3072, %v3072
      %v3211 = vmul.f32 %v3073, %v3073
      %v3212 = vmul.f32 %v3074, %v3074
      %v3213 = vmul.f32 %v3075, %v3075
      %v3214 = vmul.f32 %v3076, %v3076
      %v3215 = vmul.f32 %v3077, %v3077
      %v3216 = vmul.f32 %v3078, %v3078
      %v3217 = vmul.f32 %v3079, %v3079
      %v3218 = vmul.f32 %v3080, %v3080
      %v3219 = vmul.f32 %v3081, %v3081
      %v3220 = vmul.f32 %v3082, %v3082
      %v3221 = vmul.f32 %v3083, %v3083
      %v3222 = vmul.f32 %v3084, %v3084
      %v3223 = vsel %vm1124, %v3191, 0.0
      %v3224 = vsel %vm1124, %v3192, 0.0
      %v3225 = vadd.f32 %v3223, %v3224
      %v3226 = vsel %vm1124, %v3193, 0.0
      %v3227 = vadd.f32 %v3225, %v3226
      %v3228 = vsel %vm1124, %v3194, 0.0
      %v3229 = vadd.f32 %v3227, %v3228
      %v3230 = vsel %vm1124, %v3195, 0.0
      %v3231 = vadd.f32 %v3229, %v3230
      %v3232 = vsel %vm1124, %v3196, 0.0
      %v3233 = vadd.f32 %v3231, %v3232
      %v3234 = vsel %vm1124, %v3197, 0.0
      %v3235 = vadd.f32 %v3233, %v3234
      %v3236 = vsel %vm1124, %v3198, 0.0
      %v3237 = vadd.f32 %v3235, %v3236
      %v3238 = vsel %vm1124, %v3199, 0.0
      %v3239 = vadd.f32 %v3237, %v3238
      %v3240 = vsel %vm1124, %v3200, 0.0
      %v3241 = vadd.f32 %v3239, %v3240
      %v3242 = vsel %vm1124, %v3201, 0.0
      %v3243 = vadd.f32 %v3241, %v3242
      %v3244 = vsel %vm1124, %v3202, 0.0
      %v3245 = vadd.f32 %v3243, %v3244
      %v3246 = vsel %vm1124, %v3203, 0.0
      %v3247 = vadd.f32 %v3245, %v3246
      %v3248 = vsel %vm1124, %v3204, 0.0
      %v3249 = vadd.f32 %v3247, %v3248
      %v3250 = vsel %vm1124, %v3205, 0.0
      %v3251 = vadd.f32 %v3249, %v3250
      %v3252 = vsel %vm1124, %v3206, 0.0
      %v3253 = vadd.f32 %v3251, %v3252
      %v3254 = vsel %vm1124, %v3207, 0.0
      %v3255 = vadd.f32 %v3253, %v3254
      %v3256 = vsel %vm1124, %v3208, 0.0
      %v3257 = vadd.f32 %v3255, %v3256
      %v3258 = vsel %vm1124, %v3209, 0.0
      %v3259 = vadd.f32 %v3257, %v3258
      %v3260 = vsel %vm1124, %v3210, 0.0
      %v3261 = vadd.f32 %v3259, %v3260
      %v3262 = vsel %vm1124, %v3211, 0.0
      %v3263 = vadd.f32 %v3261, %v3262
      %v3264 = vsel %vm1124, %v3212, 0.0
      %v3265 = vadd.f32 %v3263, %v3264
      %v3266 = vsel %vm1124, %v3213, 0.0
      %v3267 = vadd.f32 %v3265, %v3266
      %v3268 = vsel %vm1124, %v3214, 0.0
      %v3269 = vadd.f32 %v3267, %v3268
      %v3270 = vsel %vm1124, %v3215, 0.0
      %v3271 = vadd.f32 %v3269, %v3270
      %v3272 = vsel %vm1124, %v3216, 0.0
      %v3273 = vadd.f32 %v3271, %v3272
      %v3274 = vsel %vm1124, %v3217, 0.0
      %v3275 = vadd.f32 %v3273, %v3274
      %v3276 = vsel %vm1124, %v3218, 0.0
      %v3277 = vadd.f32 %v3275, %v3276
      %v3278 = vsel %vm1124, %v3219, 0.0
      %v3279 = vadd.f32 %v3277, %v3278
      %v3280 = vsel %vm1124, %v3220, 0.0
      %v3281 = vadd.f32 %v3279, %v3280
      %v3282 = vsel %vm1124, %v3221, 0.0
      %v3283 = vadd.f32 %v3281, %v3282
      %v3284 = vsel %vm1124, %v3222, 0.0
      %v3285 = vadd.f32 %v3283, %v3284
      %v3286 = vrot.slane %v3285, 4
      %v3287 = vadd.f32 %v3285, %v3286
      %v3288 = vrot.slane %v3287, 2
      %v3289 = vadd.f32 %v3287, %v3288
      %v3290 = vrot.slane %v3289, 1
      %v3291 = vadd.f32 %v3289, %v3290
      %v3292 = vadd.f32 %v3190, %v3291
      %3293 = vst.msk [vmem:[%s10] sm:$0x1] %vm3188, %v3292
      %p3294 = scmp.lt.s32.totalorder %s22, 1
      %s3295 = scalar_select %p3294, %s22, 1
      %s3296 = smul.addr %s3295, 32
      %s3297 = smul.addr %s3296, 8
      %s3298 = scalar_lea.vmem %s8, %s3297
      // Predicated region
      $region57: #{feature_up_forward.5} parent=51 // pred_check
        %p3299 = pneg %p218
      $region58: #{feature_up_forward.5} parent=51 // pred_check_branch
        %3301 = sbr.rel (%p3299) target = $region60
      $region59: #{feature_up_forward.5} parent=51 // pred_region
        _
      $region60: #{feature_up_forward.5} parent=51 // pred_fallthru
        _
      // Predicated region
      $region61: #{feature_up_forward.5} parent=51 // pred_check
        %p3302 = pneg %p239
      $region62: #{feature_up_forward.5} parent=51 // pred_check_branch
        %3304 = sbr.rel (%p3302) target = $region64
      $region63: #{feature_up_forward.5} parent=51 // pred_region
        _
      $region64: #{feature_up_forward.5} parent=51 // pred_fallthru
        _
      // Predicated region
      $region65: #{feature_up_forward.5} parent=51 // pred_check
        %p3305 = pneg %p260
      $region66: #{feature_up_forward.5} parent=51 // pred_check_branch
        %3307 = sbr.rel (%p3305) target = $region68
      $region67: #{feature_up_forward.5} parent=51 // pred_region
        _
      $region68: #{feature_up_forward.5} parent=51 // pred_fallthru
        _
      // Predicated region
      $region69: #{feature_up_forward.5} parent=51 // pred_check
        %p3308 = pneg %p239
      $region70: #{feature_up_forward.5} parent=51 // pred_check_branch
        %3310 = sbr.rel (%p3308) target = $region72
      $region71: #{feature_up_forward.5} parent=51 // pred_region
        _
      $region72: #{feature_up_forward.5} parent=51 // pred_fallthru
        _
      // Predicated region
      $region73: #{feature_up_forward.5} parent=51 // pred_check
        %p3311 = pneg %p260
      $region74: #{feature_up_forward.5} parent=51 // pred_check_branch
        %3313 = sbr.rel (%p3311) target = $region76
      $region75: #{feature_up_forward.5} parent=51 // pred_region
        _
      $region76: #{feature_up_forward.5} parent=51 // pred_fallthru
        _
    $region52: #{feature_up_forward.5} parent=5 // pred_fallthru
      _
    %p3314 = scmp.le.s32.totalorder 2, %s17
    // Predicated region
    $region77: #{feature_up_forward.5} parent=5 // pred_check
      %p3315 = pneg %p3314
    $region78: #{feature_up_forward.5} parent=5 // pred_check_branch
      %3317 = sbr.rel (%p3315) target = $region80
    $region79: #{feature_up_forward.5} parent=5 // pred_region
      %s3318 = ssub.s32 %s17, 2
      // Predicated region
      $region81: #{feature_up_forward.5} parent=79 // pred_check
        %p3319 = pneg %p224
      $region82: #{feature_up_forward.5} parent=79 // pred_check_branch
        %3321 = sbr.rel (%p3319) target = $region84
      $region83: #{feature_up_forward.5} parent=79 // pred_region
        %p3322 = scmp.lt.s32.totalorder %s23, 1
        %s3323 = scalar_select %p3322, %s23, 1
        %s3324 = smul.addr %s3323, 32
        %s3325 = smul.addr %s3324, 8
        %s3326 = scalar_lea.vmem %s8, %s3325
      $region84: #{feature_up_forward.5} parent=79 // pred_fallthru
        _
    $region80: #{feature_up_forward.5} parent=5 // pred_fallthru
      _
  $region6: #{feature_up_forward.5} parent=0 // loop_footer
    %s21 = sadd.s32 1, %s17
  $region7: #{feature_up_forward.5} parent=0 // loop_footer_branch
    %16 = sbr.rel target = $region3
  $region8: #{feature_up_forward.5} parent=0 // loop_exit
    _

</llo_original>
